<compile_context>
chip_gen: v7x
topology: tpu7x:2x2x1
jax: 0.10.0
libtpu: 0.0.40
codegen_flags: <defaults>
</compile_context>

<pallas_src>
import functools

import jax
import jax.numpy as jnp
from jax.experimental import pallas as pl
from jax.experimental.pallas import tpu as pltpu

# Full-precision f32 matmuls everywhere (host prep, reference, and the kernel's dots)
# so kernel-vs-reference comparison is tight.
jax.config.update("jax_default_matmul_precision", "highest")


def _inner_attention_kernel(am_ref, x_ref, win_ref, bin_ref, wk_ref, bk_ref,
                            wv_ref, bv_ref, qe_ref, wc_ref, bc_ref, o_ref,
                            *, tb, s, neg_slope):
    """Fused InnerAttention forward for one batch tile.

    am_ref : (TB*S, 1)   additive key-padding mask (0 valid / -1e30 padded)
    x_ref  : (TB, S, D)  input values
    win/bin: (D, A), (1, A)   input Dense (Linear + LeakyReLU)
    wk/bk  : (A, A), (1, A)   key projection
    wv/bv  : (A, A), (1, A)   value projection
    qe_ref : (A, A)      block-diagonal projected/scaled query matrix
    wc/bc  : (A, D), (1, D)   fused out_proj + output Dense linear
    o_ref  : (TB, D)     output
    """
    d = x_ref.shape[2]
    a = qe_ref.shape[1]

    # ---- input Dense: LeakyReLU(x @ W_in + b_in), batch folded into M ----
    x = x_ref[...].reshape(tb * s, d)                              # (M, D)
    h = jnp.dot(x, win_ref[...], preferred_element_type=jnp.float32) + bin_ref[...]
    h = jnp.where(h > 0, h, neg_slope * h)                         # (M, A)

    # ---- K / V projections ----
    k = jnp.dot(h, wk_ref[...], preferred_element_type=jnp.float32) + bk_ref[...]
    v = jnp.dot(h, wv_ref[...], preferred_element_type=jnp.float32) + bv_ref[...]

    # ---- per-head scores via block-diagonal query matrix (lane-dense) ----
    # scores[r, lane] = (q_head(lane) . k_head(lane)[r]) / sqrt(Dh), replicated over
    # each head's lanes.  Add the key-padding mask (broadcast across lanes).
    scores = jnp.dot(k, qe_ref[...], preferred_element_type=jnp.float32) + am_ref[...]
    scores = scores.reshape(tb, s, a)                              # (TB, S, A)

    # ---- softmax over the sequence (key) axis ----
    m = jnp.max(scores, axis=1, keepdims=True)                     # (TB, 1, A)
    p = jnp.exp(scores - m)
    denom = jnp.sum(p, axis=1, keepdims=True)                      # (TB, 1, A)
    w = p / denom                                                  # (TB, S, A)

    # ---- weighted sum of values (heads already concatenated along lanes) ----
    ctx = jnp.sum(w * v.reshape(tb, s, a), axis=1)                 # (TB, A)

    # ---- fused out_proj + output Dense (Linear) + LeakyReLU ----
    out = jnp.dot(ctx, wc_ref[...], preferred_element_type=jnp.float32) + bc_ref[...]
    o_ref[...] = jnp.where(out > 0, out, neg_slope * out).astype(o_ref.dtype)


def prepare_params(raw, num_heads):
    """Hoisted, one-time weight preparation (transposes + algebraic fusions)."""
    a, d = raw["w_in"].shape                  # Linear(dim, atten_dim).weight: [A, D]
    dh = a // num_heads
    assert a % num_heads == 0

    win = raw["w_in"].T                       # [D, A]
    b_in = raw["b_in"].reshape(1, a)

    ipw, ipb = raw["in_proj_w"], raw["in_proj_b"]
    wq, wk, wv = ipw[:a], ipw[a:2 * a], ipw[2 * a:]
    bq, bk, bv = ipb[:a], ipb[a:2 * a], ipb[2 * a:]

    wk_t = wk.T                               # [A, A]
    bk_r = bk.reshape(1, a)
    wv_t = wv.T
    bv_r = bv.reshape(1, a)

    # projected + scaled query (batch-independent), folded into a block-diagonal
    # matrix so scores are one matmul and already broadcast over each head's lanes.
    qvec = (raw["query_w"].reshape(a) @ wq.T + bq) * (dh ** -0.5)  # [A]
    head = jnp.arange(a) // dh
    same_head = (head[:, None] == head[None, :]).astype(jnp.float32)
    qe = qvec[:, None] * same_head                                 # [A, A]

    # out_proj (Linear A->A) followed by output Dense linear (A->D): both affine,
    # no activation in between -> fuse into one weight/bias.
    wcomb = raw["out_proj_w"].T @ raw["w_out"].T                   # [A, D]
    bcomb = (raw["out_proj_b"] @ raw["w_out"].T + raw["b_out"]).reshape(1, d)

    return (win, b_in, wk_t, bk_r, wv_t, bv_r, qe, wcomb, bcomb)


def inner_attention_forward(x, real_len, prepped, *, block_b=8, neg_slope=0.01):
    """x: [B, S, D] float32, real_len: [B] int (or None) -> [B, D]."""
    win, b_in, wk, bk, wv, bv, qe, wcomb, bcomb = prepped
    B, S, D = x.shape
    A = win.shape[1]
    assert block_b % 8 == 0, "batch tile must be sublane-aligned"
    assert S % 8 == 0, "seq_len must be a multiple of 8 for the M-fold layout"

    if real_len is None:
        real_len = jnp.full((B,), S, dtype=jnp.int32)
    real_len = real_len.astype(jnp.int32)

    # pad batch to a multiple of the batch tile
    Bp = ((B + block_b - 1) // block_b) * block_b
    if Bp != B:
        x = jnp.pad(x, ((0, Bp - B), (0, 0), (0, 0)))
        real_len = jnp.pad(real_len, (0, Bp - B), constant_values=1)

    # additive key-padding mask, one column per (batch, seq) row of the folded M dim
    valid = jnp.arange(S)[None, :] < real_len[:, None]              # (Bp, S)
    neg_mask = jnp.where(valid, 0.0, -1e30).astype(jnp.float32).reshape(Bp * S, 1)

    grid = (Bp // block_b,)
    kernel = functools.partial(_inner_attention_kernel, tb=block_b, s=S,
                               neg_slope=neg_slope)
    const = lambda i: (0, 0)  # weights resident across grid steps (no re-DMA)

    out = pl.pallas_call(
        kernel,
        out_shape=jax.ShapeDtypeStruct((Bp, D), x.dtype),
        grid_spec=pltpu.PrefetchScalarGridSpec(
            num_scalar_prefetch=0,
            grid=grid,
            in_specs=[
                pl.BlockSpec((block_b * S, 1), lambda i: (i, 0)),     # mask
                pl.BlockSpec((block_b, S, D), lambda i: (i, 0, 0)),   # x
                pl.BlockSpec((D, A), const),                          # W_in
                pl.BlockSpec((1, A), const),                          # b_in
                pl.BlockSpec((A, A), const),                          # W_k
                pl.BlockSpec((1, A), const),                          # b_k
                pl.BlockSpec((A, A), const),                          # W_v
                pl.BlockSpec((1, A), const),                          # b_v
                pl.BlockSpec((A, A), const),                          # qE
                pl.BlockSpec((A, D), const),                          # W_out (fused)
                pl.BlockSpec((1, D), const),                          # b_out (fused)
            ],
            out_specs=pl.BlockSpec((block_b, D), lambda i: (i, 0)),
        ),
        compiler_params=pltpu.CompilerParams(
            dimension_semantics=("parallel",)),
    )(neg_mask, x, win, b_in, wk, bk, wv, bv, qe, wcomb, bcomb)
    return out[:B]


def _reference(x, real_len, raw, num_heads, neg_slope=0.01):
    """Pure-jnp replica of the PyTorch InnerAttention forward (unfused weights)."""
    B, S, D = x.shape
    A = raw["w_in"].shape[0]
    Dh = A // num_heads

    h = x @ raw["w_in"].T + raw["b_in"]
    h = jnp.where(h > 0, h, neg_slope * h)                          # input Dense

    ipw, ipb = raw["in_proj_w"], raw["in_proj_b"]
    wq, wk, wv = ipw[:A], ipw[A:2 * A], ipw[2 * A:]
    bq, bk, bv = ipb[:A], ipb[A:2 * A], ipb[2 * A:]

    q = (raw["query_w"].reshape(1, A) @ wq.T + bq) * (Dh ** -0.5)   # [1, A]
    kp = h @ wk.T + bk                                              # [B, S, A]
    vp = h @ wv.T + bv

    qh = q.reshape(num_heads, Dh)
    kh = kp.reshape(B, S, num_heads, Dh)
    vh = vp.reshape(B, S, num_heads, Dh)

    scores = jnp.einsum("bshd,hd->bhs", kh, qh)                     # [B, H, S]
    valid = jnp.arange(S)[None, :] < real_len[:, None]              # [B, S]
    scores = jnp.where(valid[:, None, :], scores, -jnp.inf)
    w = jax.nn.softmax(scores, axis=-1)

    ctx = jnp.einsum("bhs,bshd->bhd", w, vh).reshape(B, A)
    attn = ctx @ raw["out_proj_w"].T + raw["out_proj_b"]            # out_proj
    y = attn @ raw["w_out"].T + raw["b_out"]                        # output Dense
    return jnp.where(y > 0, y, neg_slope * y)


if __name__ == "__main__":
    # Small shapes consistent with InnerAttention: values [B, S, dim], real_len [B].
    # (module defaults atten_dim=512/multihead=4; scaled to 128/4 to stay small but
    #  keep every dim lane-dense.)
    B, S, D = 16, 16, 128         # batch, seq_len, dim
    A, H = 128, 4                 # atten_dim, multihead

    key = jax.random.PRNGKey(0)
    keys = jax.random.split(key, 11)
    x = jax.random.normal(keys[0], (B, S, D), dtype=jnp.float32)
    real_len = jax.random.randint(keys[1], (B,), 1, S + 1)

    def _uni(k, shape, fan_in):
        bound = 1.0 / (fan_in ** 0.5)
        return jax.random.uniform(k, shape, jnp.float32, -bound, bound)

    raw = dict(
        w_in=_uni(keys[2], (A, D), D),          # Linear(dim, atten_dim)
        b_in=_uni(keys[3], (A,), D),
        in_proj_w=_uni(keys[4], (3 * A, A), A),  # nn.MultiheadAttention in_proj
        in_proj_b=_uni(keys[5], (3 * A,), A),
        out_proj_w=_uni(keys[6], (A, A), A),     # nn.MultiheadAttention out_proj
        out_proj_b=_uni(keys[7], (A,), A),
        query_w=jax.random.uniform(keys[8], (1, 1, A), jnp.float32, 0.0, 1.0),
        w_out=_uni(keys[9], (D, A), A),          # Linear(atten_dim, dim)
        b_out=_uni(keys[10], (D,), A),
    )

    # TODO(synk): nn.Dropout(p=0.0) inside MultiheadAttention is identity in forward;
    # the averaged attention-weights output is unused by InnerAttention, so neither is
    # materialized in the kernel.
    prepped = prepare_params(raw, num_heads=H)   # hoisted: computed once, not per call
    out = inner_attention_forward(x, real_len, prepped, block_b=8)
    out = jax.block_until_ready(out)

    ref = _reference(x, real_len, raw, num_heads=H)
    assert out.shape == (B, D), out.shape
    assert jnp.allclose(out, ref, atol=2e-3, rtol=2e-3), \
        float(jnp.max(jnp.abs(out - ref)))
    print("KERNEL_OK")
</pallas_src>

<mosaic_0001>
module attributes {stable_mosaic.version = 11 : i64} {
  func.func @_inner_attention_kernel(%arg0: i32, %arg1: memref<128x1xf32, #tpu.memory_space<vmem>>, %arg2: memref<8x16x128xf32, #tpu.memory_space<vmem>>, %arg3: memref<128x128xf32, #tpu.memory_space<vmem>>, %arg4: memref<1x128xf32, #tpu.memory_space<vmem>>, %arg5: memref<128x128xf32, #tpu.memory_space<vmem>>, %arg6: memref<1x128xf32, #tpu.memory_space<vmem>>, %arg7: memref<128x128xf32, #tpu.memory_space<vmem>>, %arg8: memref<1x128xf32, #tpu.memory_space<vmem>>, %arg9: memref<128x128xf32, #tpu.memory_space<vmem>>, %arg10: memref<128x128xf32, #tpu.memory_space<vmem>>, %arg11: memref<1x128xf32, #tpu.memory_space<vmem>>, %arg12: memref<8x128xf32, #tpu.memory_space<vmem>>) attributes {dimension_semantics = [#tpu.dimension_semantics<parallel>], iteration_bounds = array<i64: 2>, scalar_prefetch = 0 : i64, scratch_operands = 0 : i64, tpu.core_type = #tpu.core_type<tc>, window_params = [{transform_indices = @transform_0, window_bounds = array<i64: 128, 1>}, {transform_indices = @transform_1, window_bounds = array<i64: 8, 16, 128>}, {pipeline_mode = #tpu.pipeline_mode<synchronous>, transform_indices = @transform_2, window_bounds = array<i64: 128, 128>}, {pipeline_mode = #tpu.pipeline_mode<synchronous>, transform_indices = @transform_3, window_bounds = array<i64: 1, 128>}, {pipeline_mode = #tpu.pipeline_mode<synchronous>, transform_indices = @transform_4, window_bounds = array<i64: 128, 128>}, {pipeline_mode = #tpu.pipeline_mode<synchronous>, transform_indices = @transform_5, window_bounds = array<i64: 1, 128>}, {pipeline_mode = #tpu.pipeline_mode<synchronous>, transform_indices = @transform_6, window_bounds = array<i64: 128, 128>}, {pipeline_mode = #tpu.pipeline_mode<synchronous>, transform_indices = @transform_7, window_bounds = array<i64: 1, 128>}, {pipeline_mode = #tpu.pipeline_mode<synchronous>, transform_indices = @transform_8, window_bounds = array<i64: 128, 128>}, {pipeline_mode = #tpu.pipeline_mode<synchronous>, transform_indices = @transform_9, window_bounds = array<i64: 128, 128>}, {pipeline_mode = #tpu.pipeline_mode<synchronous>, transform_indices = @transform_10, window_bounds = array<i64: 1, 128>}, {transform_indices = @transform_11, window_bounds = array<i64: 8, 128>}]} {
    %c0 = arith.constant 0 : index
    %c0_0 = arith.constant 0 : index
    %c0_1 = arith.constant 0 : index
    %0 = vector.load %arg2[%c0, %c0_0, %c0_1] : memref<8x16x128xf32, #tpu.memory_space<vmem>>, vector<8x16x128xf32>
    %1 = vector.shape_cast %0 : vector<8x16x128xf32> to vector<128x128xf32>
    %c0_2 = arith.constant 0 : index
    %c0_3 = arith.constant 0 : index
    %2 = vector.load %arg3[%c0_2, %c0_3] : memref<128x128xf32, #tpu.memory_space<vmem>>, vector<128x128xf32>
    %cst = arith.constant dense<0.000000e+00> : vector<128x128xf32>
    %3 = tpu.matmul %1, %2, %cst {dimension_numbers = #tpu.dot_dimension_numbers<[1], [0], [0], [1], [0, 0, 1, 1], [], []>, precision = #tpu.contract_precision<fp32>} : vector<128x128xf32>, vector<128x128xf32>, vector<128x128xf32> -> vector<128x128xf32>
    %c0_4 = arith.constant 0 : index
    %c0_5 = arith.constant 0 : index
    %4 = vector.load %arg4[%c0_4, %c0_5] : memref<1x128xf32, #tpu.memory_space<vmem>>, vector<1x128xf32>
    %5 = vector.broadcast %4 : vector<1x128xf32> to vector<128x128xf32>
    %6 = arith.addf %3, %5 : vector<128x128xf32>
    %cst_6 = arith.constant 0.000000e+00 : f32
    %7 = vector.broadcast %cst_6 : f32 to vector<128x128xf32>
    %8 = arith.cmpf ogt, %6, %7 : vector<128x128xf32>
    %cst_7 = arith.constant 0.00999999977 : f32
    %9 = vector.broadcast %cst_7 : f32 to vector<128x128xf32>
    %10 = arith.mulf %9, %6 : vector<128x128xf32>
    %11 = arith.select %8, %6, %10 : vector<128x128xi1>, vector<128x128xf32>
    %c0_8 = arith.constant 0 : index
    %c0_9 = arith.constant 0 : index
    %12 = vector.load %arg5[%c0_8, %c0_9] : memref<128x128xf32, #tpu.memory_space<vmem>>, vector<128x128xf32>
    %cst_10 = arith.constant dense<0.000000e+00> : vector<128x128xf32>
    %13 = tpu.matmul %11, %12, %cst_10 {dimension_numbers = #tpu.dot_dimension_numbers<[1], [0], [0], [1], [0, 0, 1, 1], [], []>, precision = #tpu.contract_precision<fp32>} : vector<128x128xf32>, vector<128x128xf32>, vector<128x128xf32> -> vector<128x128xf32>
    %c0_11 = arith.constant 0 : index
    %c0_12 = arith.constant 0 : index
    %14 = vector.load %arg6[%c0_11, %c0_12] : memref<1x128xf32, #tpu.memory_space<vmem>>, vector<1x128xf32>
    %15 = vector.broadcast %14 : vector<1x128xf32> to vector<128x128xf32>
    %16 = arith.addf %13, %15 : vector<128x128xf32>
    %c0_13 = arith.constant 0 : index
    %c0_14 = arith.constant 0 : index
    %17 = vector.load %arg7[%c0_13, %c0_14] : memref<128x128xf32, #tpu.memory_space<vmem>>, vector<128x128xf32>
    %cst_15 = arith.constant dense<0.000000e+00> : vector<128x128xf32>
    %18 = tpu.matmul %11, %17, %cst_15 {dimension_numbers = #tpu.dot_dimension_numbers<[1], [0], [0], [1], [0, 0, 1, 1], [], []>, precision = #tpu.contract_precision<fp32>} : vector<128x128xf32>, vector<128x128xf32>, vector<128x128xf32> -> vector<128x128xf32>
    %c0_16 = arith.constant 0 : index
    %c0_17 = arith.constant 0 : index
    %19 = vector.load %arg8[%c0_16, %c0_17] : memref<1x128xf32, #tpu.memory_space<vmem>>, vector<1x128xf32>
    %20 = vector.broadcast %19 : vector<1x128xf32> to vector<128x128xf32>
    %21 = arith.addf %18, %20 : vector<128x128xf32>
    %c0_18 = arith.constant 0 : index
    %c0_19 = arith.constant 0 : index
    %22 = vector.load %arg9[%c0_18, %c0_19] : memref<128x128xf32, #tpu.memory_space<vmem>>, vector<128x128xf32>
    %cst_20 = arith.constant dense<0.000000e+00> : vector<128x128xf32>
    %23 = tpu.matmul %16, %22, %cst_20 {dimension_numbers = #tpu.dot_dimension_numbers<[1], [0], [0], [1], [0, 0, 1, 1], [], []>, precision = #tpu.contract_precision<fp32>} : vector<128x128xf32>, vector<128x128xf32>, vector<128x128xf32> -> vector<128x128xf32>
    %c0_21 = arith.constant 0 : index
    %c0_22 = arith.constant 0 : index
    %24 = vector.load %arg1[%c0_21, %c0_22] : memref<128x1xf32, #tpu.memory_space<vmem>>, vector<128x1xf32>
    %25 = vector.broadcast %24 : vector<128x1xf32> to vector<128x128xf32>
    %26 = arith.addf %23, %25 : vector<128x128xf32>
    %27 = vector.shape_cast %26 : vector<128x128xf32> to vector<8x16x128xf32>
    %cst_23 = arith.constant dense<0xFF800000> : vector<8x128xf32>
    %28 = vector.multi_reduction <maximumf>, %27, %cst_23 [1] : vector<8x16x128xf32> to vector<8x128xf32>
    %29 = vector.shape_cast %28 : vector<8x128xf32> to vector<8x1x128xf32>
    %30 = vector.broadcast %29 : vector<8x1x128xf32> to vector<8x16x128xf32>
    %31 = arith.subf %27, %30 : vector<8x16x128xf32>
    %32 = math.exp %31 : vector<8x16x128xf32>
    %cst_24 = arith.constant dense<0.000000e+00> : vector<8x128xf32>
    %33 = vector.multi_reduction <add>, %32, %cst_24 [1] : vector<8x16x128xf32> to vector<8x128xf32>
    %34 = vector.shape_cast %33 : vector<8x128xf32> to vector<8x1x128xf32>
    %35 = vector.broadcast %34 : vector<8x1x128xf32> to vector<8x16x128xf32>
    %36 = arith.divf %32, %35 : vector<8x16x128xf32>
    %37 = vector.shape_cast %21 : vector<128x128xf32> to vector<8x16x128xf32>
    %38 = arith.mulf %36, %37 : vector<8x16x128xf32>
    %cst_25 = arith.constant dense<0.000000e+00> : vector<8x128xf32>
    %39 = vector.multi_reduction <add>, %38, %cst_25 [1] : vector<8x16x128xf32> to vector<8x128xf32>
    %c0_26 = arith.constant 0 : index
    %c0_27 = arith.constant 0 : index
    %40 = vector.load %arg10[%c0_26, %c0_27] : memref<128x128xf32, #tpu.memory_space<vmem>>, vector<128x128xf32>
    %cst_28 = arith.constant dense<0.000000e+00> : vector<8x128xf32>
    %41 = tpu.matmul %39, %40, %cst_28 {dimension_numbers = #tpu.dot_dimension_numbers<[1], [0], [0], [1], [0, 0, 1, 1], [], []>, precision = #tpu.contract_precision<fp32>} : vector<8x128xf32>, vector<128x128xf32>, vector<8x128xf32> -> vector<8x128xf32>
    %c0_29 = arith.constant 0 : index
    %c0_30 = arith.constant 0 : index
    %42 = vector.load %arg11[%c0_29, %c0_30] : memref<1x128xf32, #tpu.memory_space<vmem>>, vector<1x128xf32>
    %43 = vector.broadcast %42 : vector<1x128xf32> to vector<8x128xf32>
    %44 = arith.addf %41, %43 : vector<8x128xf32>
    %cst_31 = arith.constant 0.000000e+00 : f32
    %45 = vector.broadcast %cst_31 : f32 to vector<8x128xf32>
    %46 = arith.cmpf ogt, %44, %45 : vector<8x128xf32>
    %cst_32 = arith.constant 0.00999999977 : f32
    %47 = vector.broadcast %cst_32 : f32 to vector<8x128xf32>
    %48 = arith.mulf %47, %44 : vector<8x128xf32>
    %49 = arith.select %46, %44, %48 : vector<8x128xi1>, vector<8x128xf32>
    %c0_33 = arith.constant 0 : index
    %c0_34 = arith.constant 0 : index
    %50 = vector.load %arg12[%c0_33, %c0_34] : memref<8x128xf32, #tpu.memory_space<vmem>>, vector<8x128xf32>
    tpu.vector_store %arg12[%c0_33, %c0_34], %49 {strides = array<i32>} : memref<8x128xf32, #tpu.memory_space<vmem>>, vector<8x128xf32>,
    return
  }
  func.func @transform_0(%arg0: i32) -> (i32, i32) {
    %c0_i32 = arith.constant 0 : i32
    %c0_i32_0 = arith.constant 0 : i32
    return %arg0, %c0_i32 : i32, i32
  }
  func.func @transform_1(%arg0: i32) -> (i32, i32, i32) {
    %c0_i32 = arith.constant 0 : i32
    %c0_i32_0 = arith.constant 0 : i32
    %c0_i32_1 = arith.constant 0 : i32
    return %arg0, %c0_i32, %c0_i32_0 : i32, i32, i32
  }
  func.func @transform_2(%arg0: i32) -> (i32, i32) {
    %c0_i32 = arith.constant 0 : i32
    %c0_i32_0 = arith.constant 0 : i32
    %c0_i32_1 = arith.constant 0 : i32
    return %c0_i32, %c0_i32_0 : i32, i32
  }
  func.func @transform_3(%arg0: i32) -> (i32, i32) {
    %c0_i32 = arith.constant 0 : i32
    %c0_i32_0 = arith.constant 0 : i32
    %c0_i32_1 = arith.constant 0 : i32
    return %c0_i32, %c0_i32_0 : i32, i32
  }
  func.func @transform_4(%arg0: i32) -> (i32, i32) {
    %c0_i32 = arith.constant 0 : i32
    %c0_i32_0 = arith.constant 0 : i32
    %c0_i32_1 = arith.constant 0 : i32
    return %c0_i32, %c0_i32_0 : i32, i32
  }
  func.func @transform_5(%arg0: i32) -> (i32, i32) {
    %c0_i32 = arith.constant 0 : i32
    %c0_i32_0 = arith.constant 0 : i32
    %c0_i32_1 = arith.constant 0 : i32
    return %c0_i32, %c0_i32_0 : i32, i32
  }
  func.func @transform_6(%arg0: i32) -> (i32, i32) {
    %c0_i32 = arith.constant 0 : i32
    %c0_i32_0 = arith.constant 0 : i32
    %c0_i32_1 = arith.constant 0 : i32
    return %c0_i32, %c0_i32_0 : i32, i32
  }
  func.func @transform_7(%arg0: i32) -> (i32, i32) {
    %c0_i32 = arith.constant 0 : i32
    %c0_i32_0 = arith.constant 0 : i32
    %c0_i32_1 = arith.constant 0 : i32
    return %c0_i32, %c0_i32_0 : i32, i32
  }
  func.func @transform_8(%arg0: i32) -> (i32, i32) {
    %c0_i32 = arith.constant 0 : i32
    %c0_i32_0 = arith.constant 0 : i32
    %c0_i32_1 = arith.constant 0 : i32
    return %c0_i32, %c0_i32_0 : i32, i32
  }
  func.func @transform_9(%arg0: i32) -> (i32, i32) {
    %c0_i32 = arith.constant 0 : i32
    %c0_i32_0 = arith.constant 0 : i32
    %c0_i32_1 = arith.constant 0 : i32
    return %c0_i32, %c0_i32_0 : i32, i32
  }
  func.func @transform_10(%arg0: i32) -> (i32, i32) {
    %c0_i32 = arith.constant 0 : i32
    %c0_i32_0 = arith.constant 0 : i32
    %c0_i32_1 = arith.constant 0 : i32
    return %c0_i32, %c0_i32_0 : i32, i32
  }
  func.func @transform_11(%arg0: i32) -> (i32, i32) {
    %c0_i32 = arith.constant 0 : i32
    %c0_i32_0 = arith.constant 0 : i32
    return %arg0, %c0_i32 : i32, i32
  }
}

</mosaic_0001>

<llo_original>
// kernel: tpu_custom_call.1
$region0: #{tpu_custom_call.1}
  #allocation0 [shape = 'u32[]', space=smem, size = 0x4, offset = 0x4, fixed_abs, tag = 'smem constant byte address 0x4 - core index']
  #allocation1 [shape = 'u32[144,128]{1,0:T(1,128)}', space=vmem, size = 0x12000, scoped, tag = 'internal scratch']
  %s0 = inlined_call_operand.vmem [shape: f32[256,1], index: 0, kind: input, shape index: {}]
  %s1 = inlined_call_operand.vmem [shape: f32[16,16,128], index: 1, kind: input, shape index: {}]
  %s2 = inlined_call_operand.hbm [shape: f32[128,128], index: 2, kind: input, shape index: {}]
  %s3 = inlined_call_operand.vmem [shape: f32[1,128], index: 3, kind: input, shape index: {}]
  %s4 = inlined_call_operand.hbm [shape: f32[128,128], index: 4, kind: input, shape index: {}]
  %s5 = inlined_call_operand.vmem [shape: f32[1,128], index: 5, kind: input, shape index: {}]
  %s6 = inlined_call_operand.hbm [shape: f32[128,128], index: 6, kind: input, shape index: {}]
  %s7 = inlined_call_operand.vmem [shape: f32[1,128], index: 7, kind: input, shape index: {}]
  %s8 = inlined_call_operand.hbm [shape: f32[128,128], index: 8, kind: input, shape index: {}]
  %s9 = inlined_call_operand.hbm [shape: f32[128,128], index: 9, kind: input, shape index: {}]
  %s10 = inlined_call_operand.vmem [shape: f32[1,128], index: 10, kind: input, shape index: {}]
  %s11 = inlined_call_operand.hbm [shape: f32[16,128], index: 11, kind: output, shape index: {}]
  %s12 = sld [smem:[#allocation0]]
  $region97: #{tpu_custom_call.1} parent=0
    _
  %s14 = ssub.s32 1, %s12
  %s15 = scalar_select 0, %s14, %s12
  $region1: #{tpu_custom_call.1} parent=0
    #allocation2 [shape = 'u8[65536]{0}', space=vmem, size = 0x10000, scoped, tag = 'input window, operand 2, single buffered']
    #allocation3 [shape = 's32[2]{0}', space=sflag, size = 0x8, scoped, tag = 'scoped memory for tpu_custom_call.1']
    #allocation4 [shape = 's32[2]{0}', space=sflag, size = 0x8, scoped, tag = 'scoped memory for tpu_custom_call.1']
    #allocation5 [shape = 'u8[65536]{0}', space=vmem, size = 0x10000, scoped, tag = 'input window, operand 4, single buffered']
    #allocation6 [shape = 's32[1]{0}', space=sflag, size = 0x4, scoped, tag = 'scoped memory for tpu_custom_call.1']
    #allocation7 [shape = 'u8[65536]{0}', space=vmem, size = 0x10000, scoped, tag = 'input window, operand 6, single buffered']
    #allocation8 [shape = 'u8[65536]{0}', space=vmem, size = 0x10000, scoped, tag = 'input window, operand 8, single buffered']
    #allocation9 [shape = 's32[1]{0}', space=sflag, size = 0x4, scoped, tag = 'scoped memory for tpu_custom_call.1']
    #allocation10 [shape = 'u8[65536]{0}', space=vmem, size = 0x10000, scoped, tag = 'input window, operand 9, single buffered']
    #allocation11 [shape = 'u8[8192]{0}', space=vmem, size = 0x2000, scoped, tag = 'output window, operand 0']
    %16 = vsyncpa [#allocation3], 0
    %17 = vsyncpa [#allocation6], 0
    %18 = vsyncpa [#allocation9], 0
    %19 = vsyncpa [#allocation4], 0
    %s20 = scalar_lea.sflag [#allocation4], 1
    %21 = vsyncpa %s20, 0
    loop: start=0, step=1, limit=4
    $region2: #{tpu_custom_call.1} parent=1 // loop_pre_header
      _
    $region3: #{tpu_custom_call.1} parent=1 // loop_header
      %s23 = sphi 0, %s27
      %p24 = scmp.ge.s32.totalorder %s23, 4
      %s33 = sphi 0, %s35
      %s36 = sphi 0, %s33
      %s37 = sphi 0, %s36
      %s53 = sphi 0, %s37
      %s59 = sphi 0, %s61
      %s62 = sphi 0, %s59
      %s63 = sphi 0, %s62
      %s79 = sphi 0, %s63
      %s83 = sphi 0, %s83
      %s85 = sphi 0, %s83
      %s86 = sphi 0, %s85
      %s100 = sphi 0, %s86
      %s104 = sphi 0, %s104
      %s106 = sphi 0, %s104
      %s107 = sphi 0, %s106
      %s121 = sphi 0, %s107
      %s125 = sphi 0, %s125
      %s127 = sphi 0, %s125
      %s128 = sphi 0, %s127
      %s142 = sphi 0, %s128
      %s146 = sphi 0, %s146
      %s148 = sphi 0, %s146
      %s149 = sphi 0, %s148
      %s163 = sphi 0, %s149
      %s167 = sphi 0, %s167
      %s169 = sphi 0, %s167
      %s170 = sphi 0, %s169
      %s184 = sphi 0, %s170
      %s188 = sphi 0, %s188
      %s190 = sphi 0, %s188
      %s191 = sphi 0, %s190
      %s205 = sphi 0, %s191
      %s209 = sphi 0, %s209
      %s211 = sphi 0, %s209
      %s212 = sphi 0, %s211
      %s226 = sphi 0, %s212
      %s230 = sphi 0, %s230
      %s232 = sphi 0, %s230
      %s233 = sphi 0, %s232
      %s247 = sphi 0, %s233
      %s251 = sphi 0, %s251
      %s253 = sphi 0, %s251
      %s254 = sphi 0, %s253
      %s268 = sphi 0, %s254
      %s274 = sphi 0, %s276
      %s277 = sphi 0, %s274
      %s278 = sphi 0, %s277
      %s294 = sphi 0, %s278
    $region4: #{tpu_custom_call.1} parent=1 // loop_header_branch
      %26 = sbr.rel (%p24) target = $region8
    $region5: #{tpu_custom_call.1} parent=1 // loop_body
      %s28 = ssub.s32 %s23, 1
      %s29 = ssub.s32 %s23, 2
      %s30 = sadd.s32 %s23, 1
      %s31 = ssub.s32 %s23, %s30
      %p32 = scmp.eq.s32.totalorder %s31, 0
      %s34 = sadd.s32 %s33, 1
      %s35 = scalar_select %p32, %s33, %s34
      %p38 = pneg %p32
      %p39 = scmp.eq.s32.totalorder %s23, 1
      %p40 = por %p38, %p39
      %p41 = scmp.ne.s32.totalorder %s33, %s36
      %p42 = scmp.eq.s32.totalorder %s23, 0
      %p43 = por %p41, %p42
      %p44 = scmp.ne.s32.totalorder %s33, %s36
      %p45 = scmp.eq.s32.totalorder %s28, 1
      %p46 = por %p44, %p45
      %p47 = scmp.ne.s32.totalorder %s36, %s37
      %p48 = scmp.eq.s32.totalorder %s28, 0
      %p49 = por %p47, %p48
      %p50 = scmp.ne.s32.totalorder %s36, %s37
      %p51 = scmp.eq.s32.totalorder %s29, 1
      %p52 = por %p50, %p51
      %p54 = scmp.ne.s32.totalorder %s37, %s53
      %p55 = scmp.eq.s32.totalorder %s29, 0
      %p56 = por %p54, %p55
      %s57 = ssub.s32 %s23, %s30
      %p58 = scmp.eq.s32.totalorder %s57, 0
      %s60 = sadd.s32 %s59, 1
      %s61 = scalar_select %p58, %s59, %s60
      %p64 = pneg %p58
      %p65 = scmp.eq.s32.totalorder %s23, 1
      %p66 = por %p64, %p65
      %p67 = scmp.ne.s32.totalorder %s59, %s62
      %p68 = scmp.eq.s32.totalorder %s23, 0
      %p69 = por %p67, %p68
      %p70 = scmp.ne.s32.totalorder %s59, %s62
      %p71 = scmp.eq.s32.totalorder %s28, 1
      %p72 = por %p70, %p71
      %p73 = scmp.ne.s32.totalorder %s62, %s63
      %p74 = scmp.eq.s32.totalorder %s28, 0
      %p75 = por %p73, %p74
      %p76 = scmp.ne.s32.totalorder %s62, %s63
      %p77 = scmp.eq.s32.totalorder %s29, 1
      %p78 = por %p76, %p77
      %p80 = scmp.ne.s32.totalorder %s63, %s79
      %p81 = scmp.eq.s32.totalorder %s29, 0
      %p82 = por %p80, %p81
      %s84 = sadd.s32 %s83, 1
      %p87 = scmp.eq.s32.totalorder %s23, 1
      %p88 = scmp.ne.s32.totalorder %s83, %s85
      %p89 = scmp.eq.s32.totalorder %s23, 0
      %p90 = por %p88, %p89
      %p91 = scmp.ne.s32.totalorder %s83, %s85
      %p92 = scmp.eq.s32.totalorder %s28, 1
      %p93 = por %p91, %p92
      %p94 = scmp.ne.s32.totalorder %s85, %s86
      %p95 = scmp.eq.s32.totalorder %s28, 0
      %p96 = por %p94, %p95
      %p97 = scmp.ne.s32.totalorder %s85, %s86
      %p98 = scmp.eq.s32.totalorder %s29, 1
      %p99 = por %p97, %p98
      %p101 = scmp.ne.s32.totalorder %s86, %s100
      %p102 = scmp.eq.s32.totalorder %s29, 0
      %p103 = por %p101, %p102
      %s105 = sadd.s32 %s104, 1
      %p108 = scmp.eq.s32.totalorder %s23, 1
      %p109 = scmp.ne.s32.totalorder %s104, %s106
      %p110 = scmp.eq.s32.totalorder %s23, 0
      %p111 = por %p109, %p110
      %p112 = scmp.ne.s32.totalorder %s104, %s106
      %p113 = scmp.eq.s32.totalorder %s28, 1
      %p114 = por %p112, %p113
      %p115 = scmp.ne.s32.totalorder %s106, %s107
      %p116 = scmp.eq.s32.totalorder %s28, 0
      %p117 = por %p115, %p116
      %p118 = scmp.ne.s32.totalorder %s106, %s107
      %p119 = scmp.eq.s32.totalorder %s29, 1
      %p120 = por %p118, %p119
      %p122 = scmp.ne.s32.totalorder %s107, %s121
      %p123 = scmp.eq.s32.totalorder %s29, 0
      %p124 = por %p122, %p123
      %s126 = sadd.s32 %s125, 1
      %p129 = scmp.eq.s32.totalorder %s23, 1
      %p130 = scmp.ne.s32.totalorder %s125, %s127
      %p131 = scmp.eq.s32.totalorder %s23, 0
      %p132 = por %p130, %p131
      %p133 = scmp.ne.s32.totalorder %s125, %s127
      %p134 = scmp.eq.s32.totalorder %s28, 1
      %p135 = por %p133, %p134
      %p136 = scmp.ne.s32.totalorder %s127, %s128
      %p137 = scmp.eq.s32.totalorder %s28, 0
      %p138 = por %p136, %p137
      %p139 = scmp.ne.s32.totalorder %s127, %s128
      %p140 = scmp.eq.s32.totalorder %s29, 1
      %p141 = por %p139, %p140
      %p143 = scmp.ne.s32.totalorder %s128, %s142
      %p144 = scmp.eq.s32.totalorder %s29, 0
      %p145 = por %p143, %p144
      %s147 = sadd.s32 %s146, 1
      %p150 = scmp.eq.s32.totalorder %s23, 1
      %p151 = scmp.ne.s32.totalorder %s146, %s148
      %p152 = scmp.eq.s32.totalorder %s23, 0
      %p153 = por %p151, %p152
      %p154 = scmp.ne.s32.totalorder %s146, %s148
      %p155 = scmp.eq.s32.totalorder %s28, 1
      %p156 = por %p154, %p155
      %p157 = scmp.ne.s32.totalorder %s148, %s149
      %p158 = scmp.eq.s32.totalorder %s28, 0
      %p159 = por %p157, %p158
      %p160 = scmp.ne.s32.totalorder %s148, %s149
      %p161 = scmp.eq.s32.totalorder %s29, 1
      %p162 = por %p160, %p161
      %p164 = scmp.ne.s32.totalorder %s149, %s163
      %p165 = scmp.eq.s32.totalorder %s29, 0
      %p166 = por %p164, %p165
      %s168 = sadd.s32 %s167, 1
      %p171 = scmp.eq.s32.totalorder %s23, 1
      %p172 = scmp.ne.s32.totalorder %s167, %s169
      %p173 = scmp.eq.s32.totalorder %s23, 0
      %p174 = por %p172, %p173
      %p175 = scmp.ne.s32.totalorder %s167, %s169
      %p176 = scmp.eq.s32.totalorder %s28, 1
      %p177 = por %p175, %p176
      %p178 = scmp.ne.s32.totalorder %s169, %s170
      %p179 = scmp.eq.s32.totalorder %s28, 0
      %p180 = por %p178, %p179
      %p181 = scmp.ne.s32.totalorder %s169, %s170
      %p182 = scmp.eq.s32.totalorder %s29, 1
      %p183 = por %p181, %p182
      %p185 = scmp.ne.s32.totalorder %s170, %s184
      %p186 = scmp.eq.s32.totalorder %s29, 0
      %p187 = por %p185, %p186
      %s189 = sadd.s32 %s188, 1
      %p192 = scmp.eq.s32.totalorder %s23, 1
      %p193 = scmp.ne.s32.totalorder %s188, %s190
      %p194 = scmp.eq.s32.totalorder %s23, 0
      %p195 = por %p193, %p194
      %p196 = scmp.ne.s32.totalorder %s188, %s190
      %p197 = scmp.eq.s32.totalorder %s28, 1
      %p198 = por %p196, %p197
      %p199 = scmp.ne.s32.totalorder %s190, %s191
      %p200 = scmp.eq.s32.totalorder %s28, 0
      %p201 = por %p199, %p200
      %p202 = scmp.ne.s32.totalorder %s190, %s191
      %p203 = scmp.eq.s32.totalorder %s29, 1
      %p204 = por %p202, %p203
      %p206 = scmp.ne.s32.totalorder %s191, %s205
      %p207 = scmp.eq.s32.totalorder %s29, 0
      %p208 = por %p206, %p207
      %s210 = sadd.s32 %s209, 1
      %p213 = scmp.eq.s32.totalorder %s23, 1
      %p214 = scmp.ne.s32.totalorder %s209, %s211
      %p215 = scmp.eq.s32.totalorder %s23, 0
      %p216 = por %p214, %p215
      %p217 = scmp.ne.s32.totalorder %s209, %s211
      %p218 = scmp.eq.s32.totalorder %s28, 1
      %p219 = por %p217, %p218
      %p220 = scmp.ne.s32.totalorder %s211, %s212
      %p221 = scmp.eq.s32.totalorder %s28, 0
      %p222 = por %p220, %p221
      %p223 = scmp.ne.s32.totalorder %s211, %s212
      %p224 = scmp.eq.s32.totalorder %s29, 1
      %p225 = por %p223, %p224
      %p227 = scmp.ne.s32.totalorder %s212, %s226
      %p228 = scmp.eq.s32.totalorder %s29, 0
      %p229 = por %p227, %p228
      %s231 = sadd.s32 %s230, 1
      %p234 = scmp.eq.s32.totalorder %s23, 1
      %p235 = scmp.ne.s32.totalorder %s230, %s232
      %p236 = scmp.eq.s32.totalorder %s23, 0
      %p237 = por %p235, %p236
      %p238 = scmp.ne.s32.totalorder %s230, %s232
      %p239 = scmp.eq.s32.totalorder %s28, 1
      %p240 = por %p238, %p239
      %p241 = scmp.ne.s32.totalorder %s232, %s233
      %p242 = scmp.eq.s32.totalorder %s28, 0
      %p243 = por %p241, %p242
      %p244 = scmp.ne.s32.totalorder %s232, %s233
      %p245 = scmp.eq.s32.totalorder %s29, 1
      %p246 = por %p244, %p245
      %p248 = scmp.ne.s32.totalorder %s233, %s247
      %p249 = scmp.eq.s32.totalorder %s29, 0
      %p250 = por %p248, %p249
      %s252 = sadd.s32 %s251, 1
      %p255 = scmp.eq.s32.totalorder %s23, 1
      %p256 = scmp.ne.s32.totalorder %s251, %s253
      %p257 = scmp.eq.s32.totalorder %s23, 0
      %p258 = por %p256, %p257
      %p259 = scmp.ne.s32.totalorder %s251, %s253
      %p260 = scmp.eq.s32.totalorder %s28, 1
      %p261 = por %p259, %p260
      %p262 = scmp.ne.s32.totalorder %s253, %s254
      %p263 = scmp.eq.s32.totalorder %s28, 0
      %p264 = por %p262, %p263
      %p265 = scmp.ne.s32.totalorder %s253, %s254
      %p266 = scmp.eq.s32.totalorder %s29, 1
      %p267 = por %p265, %p266
      %p269 = scmp.ne.s32.totalorder %s254, %s268
      %p270 = scmp.eq.s32.totalorder %s29, 0
      %p271 = por %p269, %p270
      %s272 = ssub.s32 %s23, %s30
      %p273 = scmp.eq.s32.totalorder %s272, 0
      %s275 = sadd.s32 %s274, 1
      %s276 = scalar_select %p273, %s274, %s275
      %p279 = pneg %p273
      %p280 = scmp.eq.s32.totalorder %s23, 1
      %p281 = por %p279, %p280
      %p282 = scmp.ne.s32.totalorder %s274, %s277
      %p283 = scmp.eq.s32.totalorder %s23, 0
      %p284 = por %p282, %p283
      %p285 = scmp.ne.s32.totalorder %s274, %s277
      %p286 = scmp.eq.s32.totalorder %s28, 1
      %p287 = por %p285, %p286
      %p288 = scmp.ne.s32.totalorder %s277, %s278
      %p289 = scmp.eq.s32.totalorder %s28, 0
      %p290 = por %p288, %p289
      %p291 = scmp.ne.s32.totalorder %s277, %s278
      %p292 = scmp.eq.s32.totalorder %s29, 1
      %p293 = por %p291, %p292
      %p295 = scmp.ne.s32.totalorder %s278, %s294
      %p296 = scmp.eq.s32.totalorder %s29, 0
      %p297 = por %p295, %p296
      %p298 = scmp.le.s32.totalorder 1, %s23
      %p299 = scmp.lt.s32.totalorder %s23, 3
      %p300 = pnand %p298, %p299
      %p301 = pneg %p300
      // Predicated region
      $region9: #{tpu_custom_call.1} parent=5 // pred_check
        _
      $region10: #{tpu_custom_call.1} parent=5 // pred_check_branch
        %303 = sbr.rel (%p300) target = $region12
      $region11: #{tpu_custom_call.1} parent=5 // pred_region
        %s304 = ssub.s32 %s23, 1
        // Predicated region
        $region13: #{tpu_custom_call.1} parent=11 // pred_check
          %p305 = pneg %p96
        $region14: #{tpu_custom_call.1} parent=11 // pred_check_branch
          %307 = sbr.rel (%p305) target = $region16
        $region15: #{tpu_custom_call.1} parent=11 // pred_region
          %s309 = ssub.s32 2048, 2048
          %310 = vsyncadd [#allocation3], %s309
          %s311 = sshll.u32 [#allocation2], 4
          %s312 = int_to_ptr.vmem [resolvable:$true] %s311
          %317 = dma.hbm_to_vmem [thread:$0]  %s2, 2048, %s312, [#allocation3], 128, 128, 8
        $region16: #{tpu_custom_call.1} parent=11 // pred_fallthru
          _
        // Predicated region
        $region17: #{tpu_custom_call.1} parent=11 // pred_check
          %p318 = pneg %p117
        $region18: #{tpu_custom_call.1} parent=11 // pred_check_branch
          %320 = sbr.rel (%p318) target = $region20
        $region19: #{tpu_custom_call.1} parent=11 // pred_region
          _
        $region20: #{tpu_custom_call.1} parent=11 // pred_fallthru
          _
        // Predicated region
        $region21: #{tpu_custom_call.1} parent=11 // pred_check
          %p321 = pneg %p138
        $region22: #{tpu_custom_call.1} parent=11 // pred_check_branch
          %323 = sbr.rel (%p321) target = $region24
        $region23: #{tpu_custom_call.1} parent=11 // pred_region
          %s325 = ssub.s32 2048, 2048
          %326 = vsyncadd [#allocation6], %s325
          %s327 = sshll.u32 [#allocation5], 4
          %s328 = int_to_ptr.vmem [resolvable:$true] %s327
          %333 = dma.hbm_to_vmem [thread:$0]  %s4, 2048, %s328, [#allocation6], 128, 128, 8
        $region24: #{tpu_custom_call.1} parent=11 // pred_fallthru
          _
        // Predicated region
        $region25: #{tpu_custom_call.1} parent=11 // pred_check
          %p334 = pneg %p159
        $region26: #{tpu_custom_call.1} parent=11 // pred_check_branch
          %336 = sbr.rel (%p334) target = $region28
        $region27: #{tpu_custom_call.1} parent=11 // pred_region
          _
        $region28: #{tpu_custom_call.1} parent=11 // pred_fallthru
          _
        // Predicated region
        $region29: #{tpu_custom_call.1} parent=11 // pred_check
          %p337 = pneg %p180
        $region30: #{tpu_custom_call.1} parent=11 // pred_check_branch
          %339 = sbr.rel (%p337) target = $region32
        $region31: #{tpu_custom_call.1} parent=11 // pred_region
          %s341 = ssub.s32 2048, 2048
          %342 = vsyncadd [#allocation6], %s341
          %s343 = sshll.u32 [#allocation7], 4
          %s344 = int_to_ptr.vmem [resolvable:$true] %s343
          %349 = dma.hbm_to_vmem [thread:$0]  %s6, 2048, %s344, [#allocation6], 128, 128, 8
        $region32: #{tpu_custom_call.1} parent=11 // pred_fallthru
          _
        // Predicated region
        $region33: #{tpu_custom_call.1} parent=11 // pred_check
          %p350 = pneg %p201
        $region34: #{tpu_custom_call.1} parent=11 // pred_check_branch
          %352 = sbr.rel (%p350) target = $region36
        $region35: #{tpu_custom_call.1} parent=11 // pred_region
          _
        $region36: #{tpu_custom_call.1} parent=11 // pred_fallthru
          _
        // Predicated region
        $region37: #{tpu_custom_call.1} parent=11 // pred_check
          %p353 = pneg %p222
        $region38: #{tpu_custom_call.1} parent=11 // pred_check_branch
          %355 = sbr.rel (%p353) target = $region40
        $region39: #{tpu_custom_call.1} parent=11 // pred_region
          %s357 = ssub.s32 2048, 2048
          %358 = vsyncadd [#allocation9], %s357
          %s359 = sshll.u32 [#allocation8], 4
          %s360 = int_to_ptr.vmem [resolvable:$true] %s359
          %365 = dma.hbm_to_vmem [thread:$0]  %s8, 2048, %s360, [#allocation9], 128, 128, 8
        $region40: #{tpu_custom_call.1} parent=11 // pred_fallthru
          _
        // Predicated region
        $region41: #{tpu_custom_call.1} parent=11 // pred_check
          %p366 = pneg %p243
        $region42: #{tpu_custom_call.1} parent=11 // pred_check_branch
          %368 = sbr.rel (%p366) target = $region44
        $region43: #{tpu_custom_call.1} parent=11 // pred_region
          %s370 = ssub.s32 2048, 2048
          %371 = vsyncadd [#allocation9], %s370
          %s372 = sshll.u32 [#allocation10], 4
          %s373 = int_to_ptr.vmem [resolvable:$true] %s372
          %378 = dma.hbm_to_vmem [thread:$0]  %s9, 2048, %s373, [#allocation9], 128, 128, 8
        $region44: #{tpu_custom_call.1} parent=11 // pred_fallthru
          _
        // Predicated region
        $region45: #{tpu_custom_call.1} parent=11 // pred_check
          %p379 = pneg %p264
        $region46: #{tpu_custom_call.1} parent=11 // pred_check_branch
          %381 = sbr.rel (%p379) target = $region48
        $region47: #{tpu_custom_call.1} parent=11 // pred_region
          _
        $region48: #{tpu_custom_call.1} parent=11 // pred_fallthru
          _
      $region12: #{tpu_custom_call.1} parent=5 // pred_fallthru
        _
      %p382 = scmp.lt.s32.totalorder %s23, 2
      // Predicated region
      $region49: #{tpu_custom_call.1} parent=5 // pred_check
        %p383 = pneg %p382
      $region50: #{tpu_custom_call.1} parent=5 // pred_check_branch
        %385 = sbr.rel (%p383) target = $region52
      $region51: #{tpu_custom_call.1} parent=5 // pred_region
        // Predicated region
        $region53: #{tpu_custom_call.1} parent=51 // pred_check
          %p386 = pneg %p43
        $region54: #{tpu_custom_call.1} parent=51 // pred_check_branch
          %388 = sbr.rel (%p386) target = $region56
        $region55: #{tpu_custom_call.1} parent=51 // pred_region
          %s389 = smul.u32 16, %s23
          %p390 = scmp.lt.s32.totalorder %s389, 31
          %s391 = scalar_select %p390, %s389, 31
          %s392 = smul.addr %s391, 8
          %s393 = scalar_lea.vmem %s0, %s392
          %s394 = smul.u32 16, %s23
        $region56: #{tpu_custom_call.1} parent=51 // pred_fallthru
          _
        // Predicated region
        $region57: #{tpu_custom_call.1} parent=51 // pred_check
          %p395 = pneg %p69
        $region58: #{tpu_custom_call.1} parent=51 // pred_check_branch
          %397 = sbr.rel (%p395) target = $region60
        $region59: #{tpu_custom_call.1} parent=51 // pred_region
          %s398 = smul.u32 8, %s23
          %p399 = scmp.lt.s32.totalorder %s398, 15
          %s400 = scalar_select %p399, %s398, 15
          %s401 = smul.addr %s400, 2
          %s402 = smul.addr %s401, 8
          %s403 = scalar_lea.vmem %s1, %s402
          %s404 = smul.u32 8, %s23
        $region60: #{tpu_custom_call.1} parent=51 // pred_fallthru
          _
      $region52: #{tpu_custom_call.1} parent=5 // pred_fallthru
        _
      %p405 = scmp.le.s32.totalorder 1, %s23
      %p406 = scmp.lt.s32.totalorder %s23, 3
      %p407 = pnand %p405, %p406
      %p408 = pneg %p407
      // Predicated region
      $region61: #{tpu_custom_call.1} parent=5 // pred_check
        _
      $region62: #{tpu_custom_call.1} parent=5 // pred_check_branch
        %410 = sbr.rel (%p407) target = $region64
      $region63: #{tpu_custom_call.1} parent=5 // pred_region
        %s411 = ssub.s32 %s23, 1
        // Predicated region
        $region65: #{tpu_custom_call.1} parent=63 // pred_check
          %p412 = pneg %p96
        $region66: #{tpu_custom_call.1} parent=63 // pred_check_branch
          %414 = sbr.rel (%p412) target = $region68
        $region67: #{tpu_custom_call.1} parent=63 // pred_region
          %415 = dma.done [#allocation3], 2048
        $region68: #{tpu_custom_call.1} parent=63 // pred_fallthru
          _
        // Predicated region
        $region69: #{tpu_custom_call.1} parent=63 // pred_check
          %p416 = pneg %p138
        $region70: #{tpu_custom_call.1} parent=63 // pred_check_branch
          %418 = sbr.rel (%p416) target = $region72
        $region71: #{tpu_custom_call.1} parent=63 // pred_region
          %419 = dma.done [#allocation6], 2048
        $region72: #{tpu_custom_call.1} parent=63 // pred_fallthru
          _
        // Predicated region
        $region73: #{tpu_custom_call.1} parent=63 // pred_check
          %p420 = pneg %p180
        $region74: #{tpu_custom_call.1} parent=63 // pred_check_branch
          %422 = sbr.rel (%p420) target = $region76
        $region75: #{tpu_custom_call.1} parent=63 // pred_region
          %423 = dma.done [#allocation6], 2048
        $region76: #{tpu_custom_call.1} parent=63 // pred_fallthru
          _
        // Predicated region
        $region77: #{tpu_custom_call.1} parent=63 // pred_check
          %p424 = pneg %p222
        $region78: #{tpu_custom_call.1} parent=63 // pred_check_branch
          %426 = sbr.rel (%p424) target = $region80
        $region79: #{tpu_custom_call.1} parent=63 // pred_region
          %427 = dma.done [#allocation9], 2048
        $region80: #{tpu_custom_call.1} parent=63 // pred_fallthru
          _
        // Predicated region
        $region81: #{tpu_custom_call.1} parent=63 // pred_check
          %p428 = pneg %p243
        $region82: #{tpu_custom_call.1} parent=63 // pred_check_branch
          %430 = sbr.rel (%p428) target = $region84
        $region83: #{tpu_custom_call.1} parent=63 // pred_region
          %431 = dma.done [#allocation9], 2048
        $region84: #{tpu_custom_call.1} parent=63 // pred_fallthru
          _
        %s432 = smul.u32 16, %s28
        %p433 = scmp.lt.s32.totalorder %s432, 31
        %s434 = scalar_select %p433, %s432, 31
        %s435 = smul.addr %s434, 8
        %s436 = scalar_lea.vmem %s0, %s435
        %p437 = pneg %p49
        %p438 = pneg %p46
        %s439 = smul.u32 8, %s28
        %p440 = scmp.lt.s32.totalorder %s439, 15
        %s441 = scalar_select %p440, %s439, 15
        %s442 = smul.addr %s441, 2
        %s443 = smul.addr %s442, 8
        %s444 = scalar_lea.vmem %s1, %s443
        %p445 = pneg %p75
        %p446 = pneg %p72
        %p447 = pneg %p96
        %p448 = pneg %p93
        %p449 = pneg %p117
        %p450 = pneg %p114
        %p451 = pneg %p138
        %p452 = pneg %p135
        %p453 = pneg %p159
        %p454 = pneg %p156
        %p455 = pneg %p180
        %p456 = pneg %p177
        %p457 = pneg %p201
        %p458 = pneg %p198
        %p459 = pneg %p222
        %p460 = pneg %p219
        %p461 = pneg %p243
        %p462 = pneg %p240
        %p463 = pneg %p264
        %p464 = pneg %p261
        %p465 = pneg %p290
        %p466 = pneg %p287
        %s467 = sand.u32 %s277, 1
        %s468 = scalar_lea.sflag [#allocation4], %s467
        %s469 = sand.u32 %s277, 1
        %s470 = smul.addr %s469, 8
        %s471 = scalar_lea.vmem [#allocation11], %s470
        %s472 = smul.u32 16, %s28
        %p473 = scmp.lt.s32.totalorder %s472, 31
        %s474 = scalar_select %p473, %s472, 31
        %s475 = smul.addr %s474, 8
        %s476 = scalar_lea.vmem %s0, %s475
        %s477 = smul.u32 16, %s28
        %s478 = smul.u32 8, %s28
        %p479 = scmp.lt.s32.totalorder %s478, 15
        %s480 = scalar_select %p479, %s478, 15
        %s481 = smul.addr %s480, 2
        %s482 = smul.addr %s481, 8
        %s483 = scalar_lea.vmem %s1, %s482
        %s484 = smul.u32 8, %s28
        %v485 = vld [vmem:[%s483] sm:$0xff]
        %v486 = vld [vmem:[%s483 + $0x8] sm:$0xff]
        %v487 = vld [vmem:[%s483 + $0x10] sm:$0xff]
        %v488 = vld [vmem:[%s483 + $0x18] sm:$0xff]
        %v489 = vld [vmem:[%s483 + $0x20] sm:$0xff]
        %v490 = vld [vmem:[%s483 + $0x28] sm:$0xff]
        %v491 = vld [vmem:[%s483 + $0x30] sm:$0xff]
        %v492 = vld [vmem:[%s483 + $0x38] sm:$0xff]
        %v493 = vld [vmem:[%s483 + $0x40] sm:$0xff]
        %v494 = vld [vmem:[%s483 + $0x48] sm:$0xff]
        %v495 = vld [vmem:[%s483 + $0x50] sm:$0xff]
        %v496 = vld [vmem:[%s483 + $0x58] sm:$0xff]
        %v497 = vld [vmem:[%s483 + $0x60] sm:$0xff]
        %v498 = vld [vmem:[%s483 + $0x68] sm:$0xff]
        %v499 = vld [vmem:[%s483 + $0x70] sm:$0xff]
        %v500 = vld [vmem:[%s483 + $0x78] sm:$0xff]
        %v501 = vld [vmem:[#allocation2] sm:$0xff]
        %v502 = vld [vmem:[#allocation2 + $0x8] sm:$0xff]
        %v503 = vld [vmem:[#allocation2 + $0x10] sm:$0xff]
        %v504 = vld [vmem:[#allocation2 + $0x18] sm:$0xff]
        %v505 = vld [vmem:[#allocation2 + $0x20] sm:$0xff]
        %v506 = vld [vmem:[#allocation2 + $0x28] sm:$0xff]
        %v507 = vld [vmem:[#allocation2 + $0x30] sm:$0xff]
        %v508 = vld [vmem:[#allocation2 + $0x38] sm:$0xff]
        %v509 = vld [vmem:[#allocation2 + $0x40] sm:$0xff]
        %v510 = vld [vmem:[#allocation2 + $0x48] sm:$0xff]
        %v511 = vld [vmem:[#allocation2 + $0x50] sm:$0xff]
        %v512 = vld [vmem:[#allocation2 + $0x58] sm:$0xff]
        %v513 = vld [vmem:[#allocation2 + $0x60] sm:$0xff]
        %v514 = vld [vmem:[#allocation2 + $0x68] sm:$0xff]
        %v515 = vld [vmem:[#allocation2 + $0x70] sm:$0xff]
        %v516 = vld [vmem:[#allocation2 + $0x78] sm:$0xff]
        %v517 = vld [vmem:[%s3] sm:$0x1]
        %v519 = vlaneseq
        %v520 = vshrl.u32 %v519, 7
        %v521 = vsub.s32 0, %v520
        %v522 = vrot.slane %v517, %v521
        %524 = vmatprep.subr.mxu0 0.0
        %v525 = vand.u32 %v501, 4294901760
        %526 = vmatpush1.msra.mxu0 %v525
        %527 = vmatprep.subr.mxu0 0.0
        %v528 = vand.u32 %v502, 4294901760
        %529 = vmatpush1.msra.mxu0 %v528
        %530 = vmatprep.subr.mxu0 0.0
        %v531 = vand.u32 %v503, 4294901760
        %532 = vmatpush1.msra.mxu0 %v531
        %533 = vmatprep.subr.mxu0 0.0
        %v534 = vand.u32 %v504, 4294901760
        %535 = vmatpush1.msra.mxu0 %v534
        %536 = vmatprep.subr.mxu0 0.0
        %v537 = vand.u32 %v505, 4294901760
        %538 = vmatpush1.msra.mxu0 %v537
        %539 = vmatprep.subr.mxu0 0.0
        %v540 = vand.u32 %v506, 4294901760
        %541 = vmatpush1.msra.mxu0 %v540
        %542 = vmatprep.subr.mxu0 0.0
        %v543 = vand.u32 %v507, 4294901760
        %544 = vmatpush1.msra.mxu0 %v543
        %545 = vmatprep.subr.mxu0 0.0
        %v546 = vand.u32 %v508, 4294901760
        %547 = vmatpush1.msra.mxu0 %v546
        %548 = vmatprep.subr.mxu0 0.0
        %v549 = vand.u32 %v509, 4294901760
        %550 = vmatpush1.msra.mxu0 %v549
        %551 = vmatprep.subr.mxu0 0.0
        %v552 = vand.u32 %v510, 4294901760
        %553 = vmatpush1.msra.mxu0 %v552
        %554 = vmatprep.subr.mxu0 0.0
        %v555 = vand.u32 %v511, 4294901760
        %556 = vmatpush1.msra.mxu0 %v555
        %557 = vmatprep.subr.mxu0 0.0
        %v558 = vand.u32 %v512, 4294901760
        %559 = vmatpush1.msra.mxu0 %v558
        %560 = vmatprep.subr.mxu0 0.0
        %v561 = vand.u32 %v513, 4294901760
        %562 = vmatpush1.msra.mxu0 %v561
        %563 = vmatprep.subr.mxu0 0.0
        %v564 = vand.u32 %v514, 4294901760
        %565 = vmatpush1.msra.mxu0 %v564
        %566 = vmatprep.subr.mxu0 0.0
        %v567 = vand.u32 %v515, 4294901760
        %568 = vmatpush1.msra.mxu0 %v567
        %569 = vmatprep.subr.mxu0 0.0
        %v570 = vand.u32 %v516, 4294901760
        %571 = vmatpush1.msra.mxu0 %v570
        %572 = vmatprep.subr.mxu0 0.0
        %573 = vmatpush1.msra.mxu0 0.0
        %574 = vmatprep.subr.mxu0 0.0
        %575 = vmatpush1.msra.mxu0 0.0
        %576 = vmatprep.subr.mxu0 0.0
        %577 = vmatpush1.msra.mxu0 0.0
        %578 = vmatprep.subr.mxu0 0.0
        %579 = vmatpush1.msra.mxu0 0.0
        %580 = vmatprep.subr.mxu0 0.0
        %581 = vmatpush1.msra.mxu0 0.0
        %582 = vmatprep.subr.mxu0 0.0
        %583 = vmatpush1.msra.mxu0 0.0
        %584 = vmatprep.subr.mxu0 0.0
        %585 = vmatpush1.msra.mxu0 0.0
        %586 = vmatprep.subr.mxu0 0.0
        %587 = vmatpush1.msra.mxu0 0.0
        %588 = vmatprep.subr.mxu0 0.0
        %589 = vmatpush1.msra.mxu0 0.0
        %590 = vmatprep.subr.mxu0 0.0
        %591 = vmatpush1.msra.mxu0 0.0
        %592 = vmatprep.subr.mxu0 0.0
        %593 = vmatpush1.msra.mxu0 0.0
        %594 = vmatprep.subr.mxu0 0.0
        %595 = vmatpush1.msra.mxu0 0.0
        %596 = vmatprep.subr.mxu0 0.0
        %597 = vmatpush1.msra.mxu0 0.0
        %598 = vmatprep.subr.mxu0 0.0
        %599 = vmatpush1.msra.mxu0 0.0
        %600 = vmatprep.subr.mxu0 0.0
        %601 = vmatpush1.msra.mxu0 0.0
        %602 = vmatprep.subr.mxu0 0.0
        %603 = vmatpush1.msra.mxu0 0.0
        %604 = vmatprep.mubr.f32.mxu0 0.0
        %v605 = vand.u32 %v485, 4294901760
        %v606 = vsub.f32 %v485, %v605
        %v607 = vand.u32 %v606, 4294901760
        %v608 = vsub.f32 %v606, %v607
        %v609 = vand.u32 %v608, 4294901760
        %610 = vmatmul.mubr.f32.gmra.mrb[0].mxu0 %v609
        %v611 = vpop.f32.mrb[0].mxu0
        %v612 = vadd.f32 %v522, %v611
        %v613 = vpop.f32.mrb[0].mxu0
        %614 = vmatprep.mubr.f32.mxu0 0.0
        %v615 = vand.u32 %v486, 4294901760
        %v616 = vsub.f32 %v486, %v615
        %v617 = vand.u32 %v616, 4294901760
        %v618 = vsub.f32 %v616, %v617
        %v619 = vand.u32 %v618, 4294901760
        %620 = vmatmul.mubr.f32.gmra.mrb[0].mxu0 %v619
        %v621 = vpop.f32.mrb[0].mxu0
        %v622 = vadd.f32 %v522, %v621
        %v623 = vpop.f32.mrb[0].mxu0
        %624 = vmatprep.mubr.f32.mxu0 0.0
        %v625 = vand.u32 %v487, 4294901760
        %v626 = vsub.f32 %v487, %v625
        %v627 = vand.u32 %v626, 4294901760
        %v628 = vsub.f32 %v626, %v627
        %v629 = vand.u32 %v628, 4294901760
        %630 = vmatmul.mubr.f32.gmra.mrb[0].mxu0 %v629
        %v631 = vpop.f32.mrb[0].mxu0
        %v632 = vadd.f32 %v522, %v631
        %v633 = vpop.f32.mrb[0].mxu0
        %634 = vmatprep.mubr.f32.mxu0 0.0
        %v635 = vand.u32 %v488, 4294901760
        %v636 = vsub.f32 %v488, %v635
        %v637 = vand.u32 %v636, 4294901760
        %v638 = vsub.f32 %v636, %v637
        %v639 = vand.u32 %v638, 4294901760
        %640 = vmatmul.mubr.f32.gmra.mrb[0].mxu0 %v639
        %v641 = vpop.f32.mrb[0].mxu0
        %v642 = vadd.f32 %v522, %v641
        %v643 = vpop.f32.mrb[0].mxu0
        %644 = vmatprep.mubr.f32.mxu0 0.0
        %v645 = vand.u32 %v489, 4294901760
        %v646 = vsub.f32 %v489, %v645
        %v647 = vand.u32 %v646, 4294901760
        %v648 = vsub.f32 %v646, %v647
        %v649 = vand.u32 %v648, 4294901760
        %650 = vmatmul.mubr.f32.gmra.mrb[0].mxu0 %v649
        %v651 = vpop.f32.mrb[0].mxu0
        %v652 = vadd.f32 %v522, %v651
        %v653 = vpop.f32.mrb[0].mxu0
        %654 = vmatprep.mubr.f32.mxu0 0.0
        %v655 = vand.u32 %v490, 4294901760
        %v656 = vsub.f32 %v490, %v655
        %v657 = vand.u32 %v656, 4294901760
        %v658 = vsub.f32 %v656, %v657
        %v659 = vand.u32 %v658, 4294901760
        %660 = vmatmul.mubr.f32.gmra.mrb[0].mxu0 %v659
        %v661 = vpop.f32.mrb[0].mxu0
        %v662 = vadd.f32 %v522, %v661
        %v663 = vpop.f32.mrb[0].mxu0
        %664 = vmatprep.mubr.f32.mxu0 0.0
        %v665 = vand.u32 %v491, 4294901760
        %v666 = vsub.f32 %v491, %v665
        %v667 = vand.u32 %v666, 4294901760
        %v668 = vsub.f32 %v666, %v667
        %v669 = vand.u32 %v668, 4294901760
        %670 = vmatmul.mubr.f32.gmra.mrb[0].mxu0 %v669
        %v671 = vpop.f32.mrb[0].mxu0
        %v672 = vadd.f32 %v522, %v671
        %v673 = vpop.f32.mrb[0].mxu0
        %674 = vmatprep.mubr.f32.mxu0 0.0
        %v675 = vand.u32 %v492, 4294901760
        %v676 = vsub.f32 %v492, %v675
        %v677 = vand.u32 %v676, 4294901760
        %v678 = vsub.f32 %v676, %v677
        %v679 = vand.u32 %v678, 4294901760
        %680 = vmatmul.mubr.f32.gmra.mrb[0].mxu0 %v679
        %v681 = vpop.f32.mrb[0].mxu0
        %v682 = vadd.f32 %v522, %v681
        %v683 = vpop.f32.mrb[0].mxu0
        %684 = vmatprep.mubr.f32.mxu0 0.0
        %v685 = vand.u32 %v493, 4294901760
        %v686 = vsub.f32 %v493, %v685
        %v687 = vand.u32 %v686, 4294901760
        %v688 = vsub.f32 %v686, %v687
        %v689 = vand.u32 %v688, 4294901760
        %690 = vmatmul.mubr.f32.gmra.mrb[0].mxu0 %v689
        %v691 = vpop.f32.mrb[0].mxu0
        %v692 = vadd.f32 %v522, %v691
        %v693 = vpop.f32.mrb[0].mxu0
        %694 = vmatprep.mubr.f32.mxu0 0.0
        %v695 = vand.u32 %v494, 4294901760
        %v696 = vsub.f32 %v494, %v695
        %v697 = vand.u32 %v696, 4294901760
        %v698 = vsub.f32 %v696, %v697
        %v699 = vand.u32 %v698, 4294901760
        %700 = vmatmul.mubr.f32.gmra.mrb[0].mxu0 %v699
        %v701 = vpop.f32.mrb[0].mxu0
        %v702 = vadd.f32 %v522, %v701
        %v703 = vpop.f32.mrb[0].mxu0
        %704 = vmatprep.mubr.f32.mxu0 0.0
        %v705 = vand.u32 %v495, 4294901760
        %v706 = vsub.f32 %v495, %v705
        %v707 = vand.u32 %v706, 4294901760
        %v708 = vsub.f32 %v706, %v707
        %v709 = vand.u32 %v708, 4294901760
        %710 = vmatmul.mubr.f32.gmra.mrb[0].mxu0 %v709
        %v711 = vpop.f32.mrb[0].mxu0
        %v712 = vadd.f32 %v522, %v711
        %v713 = vpop.f32.mrb[0].mxu0
        %714 = vmatprep.mubr.f32.mxu0 0.0
        %v715 = vand.u32 %v496, 4294901760
        %v716 = vsub.f32 %v496, %v715
        %v717 = vand.u32 %v716, 4294901760
        %v718 = vsub.f32 %v716, %v717
        %v719 = vand.u32 %v718, 4294901760
        %720 = vmatmul.mubr.f32.gmra.mrb[0].mxu0 %v719
        %v721 = vpop.f32.mrb[0].mxu0
        %v722 = vadd.f32 %v522, %v721
        %v723 = vpop.f32.mrb[0].mxu0
        %724 = vmatprep.mubr.f32.mxu0 0.0
        %v725 = vand.u32 %v497, 4294901760
        %v726 = vsub.f32 %v497, %v725
        %v727 = vand.u32 %v726, 4294901760
        %v728 = vsub.f32 %v726, %v727
        %v729 = vand.u32 %v728, 4294901760
        %730 = vmatmul.mubr.f32.gmra.mrb[0].mxu0 %v729
        %v731 = vpop.f32.mrb[0].mxu0
        %v732 = vadd.f32 %v522, %v731
        %v733 = vpop.f32.mrb[0].mxu0
        %734 = vmatprep.mubr.f32.mxu0 0.0
        %v735 = vand.u32 %v498, 4294901760
        %v736 = vsub.f32 %v498, %v735
        %v737 = vand.u32 %v736, 4294901760
        %v738 = vsub.f32 %v736, %v737
        %v739 = vand.u32 %v738, 4294901760
        %740 = vmatmul.mubr.f32.gmra.mrb[0].mxu0 %v739
        %v741 = vpop.f32.mrb[0].mxu0
        %v742 = vadd.f32 %v522, %v741
        %v743 = vpop.f32.mrb[0].mxu0
        %744 = vmatprep.mubr.f32.mxu0 0.0
        %v745 = vand.u32 %v499, 4294901760
        %v746 = vsub.f32 %v499, %v745
        %v747 = vand.u32 %v746, 4294901760
        %v748 = vsub.f32 %v746, %v747
        %v749 = vand.u32 %v748, 4294901760
        %750 = vmatmul.mubr.f32.gmra.mrb[0].mxu0 %v749
        %v751 = vpop.f32.mrb[0].mxu0
        %v752 = vadd.f32 %v522, %v751
        %v753 = vpop.f32.mrb[0].mxu0
        %754 = vmatprep.mubr.f32.mxu0 0.0
        %v755 = vand.u32 %v500, 4294901760
        %v756 = vsub.f32 %v500, %v755
        %v757 = vand.u32 %v756, 4294901760
        %v758 = vsub.f32 %v756, %v757
        %v759 = vand.u32 %v758, 4294901760
        %760 = vmatmul.mubr.f32.gmra.mrb[0].mxu0 %v759
        %v761 = vpop.f32.mrb[0].mxu0
        %v762 = vadd.f32 %v522, %v761
        %v763 = vpop.f32.mrb[0].mxu0
        %764 = vdwg.mxu0
        %765 = vmatprep.subr.mxu0 0.0
        %v766 = vand.u32 %v501, 4294901760
        %v767 = vsub.f32 %v501, %v766
        %v768 = vand.u32 %v767, 4294901760
        %v769 = vsub.f32 %v767, %v768
        %v770 = vand.u32 %v769, 4294901760
        %771 = vmatpush1.msra.mxu0 %v770
        %772 = vmatprep.subr.mxu0 0.0
        %v773 = vand.u32 %v502, 4294901760
        %v774 = vsub.f32 %v502, %v773
        %v775 = vand.u32 %v774, 4294901760
        %v776 = vsub.f32 %v774, %v775
        %v777 = vand.u32 %v776, 4294901760
        %778 = vmatpush1.msra.mxu0 %v777
        %779 = vmatprep.subr.mxu0 0.0
        %v780 = vand.u32 %v503, 4294901760
        %v781 = vsub.f32 %v503, %v780
        %v782 = vand.u32 %v781, 4294901760
        %v783 = vsub.f32 %v781, %v782
        %v784 = vand.u32 %v783, 4294901760
        %785 = vmatpush1.msra.mxu0 %v784
        %786 = vmatprep.subr.mxu0 0.0
        %v787 = vand.u32 %v504, 4294901760
        %v788 = vsub.f32 %v504, %v787
        %v789 = vand.u32 %v788, 4294901760
        %v790 = vsub.f32 %v788, %v789
        %v791 = vand.u32 %v790, 4294901760
        %792 = vmatpush1.msra.mxu0 %v791
        %793 = vmatprep.subr.mxu0 0.0
        %v794 = vand.u32 %v505, 4294901760
        %v795 = vsub.f32 %v505, %v794
        %v796 = vand.u32 %v795, 4294901760
        %v797 = vsub.f32 %v795, %v796
        %v798 = vand.u32 %v797, 4294901760
        %799 = vmatpush1.msra.mxu0 %v798
        %800 = vmatprep.subr.mxu0 0.0
        %v801 = vand.u32 %v506, 4294901760
        %v802 = vsub.f32 %v506, %v801
        %v803 = vand.u32 %v802, 4294901760
        %v804 = vsub.f32 %v802, %v803
        %v805 = vand.u32 %v804, 4294901760
        %806 = vmatpush1.msra.mxu0 %v805
        %807 = vmatprep.subr.mxu0 0.0
        %v808 = vand.u32 %v507, 4294901760
        %v809 = vsub.f32 %v507, %v808
        %v810 = vand.u32 %v809, 4294901760
        %v811 = vsub.f32 %v809, %v810
        %v812 = vand.u32 %v811, 4294901760
        %813 = vmatpush1.msra.mxu0 %v812
        %814 = vmatprep.subr.mxu0 0.0
        %v815 = vand.u32 %v508, 4294901760
        %v816 = vsub.f32 %v508, %v815
        %v817 = vand.u32 %v816, 4294901760
        %v818 = vsub.f32 %v816, %v817
        %v819 = vand.u32 %v818, 4294901760
        %820 = vmatpush1.msra.mxu0 %v819
        %821 = vmatprep.subr.mxu0 0.0
        %v822 = vand.u32 %v509, 4294901760
        %v823 = vsub.f32 %v509, %v822
        %v824 = vand.u32 %v823, 4294901760
        %v825 = vsub.f32 %v823, %v824
        %v826 = vand.u32 %v825, 4294901760
        %827 = vmatpush1.msra.mxu0 %v826
        %828 = vmatprep.subr.mxu0 0.0
        %v829 = vand.u32 %v510, 4294901760
        %v830 = vsub.f32 %v510, %v829
        %v831 = vand.u32 %v830, 4294901760
        %v832 = vsub.f32 %v830, %v831
        %v833 = vand.u32 %v832, 4294901760
        %834 = vmatpush1.msra.mxu0 %v833
        %835 = vmatprep.subr.mxu0 0.0
        %v836 = vand.u32 %v511, 4294901760
        %v837 = vsub.f32 %v511, %v836
        %v838 = vand.u32 %v837, 4294901760
        %v839 = vsub.f32 %v837, %v838
        %v840 = vand.u32 %v839, 4294901760
        %841 = vmatpush1.msra.mxu0 %v840
        %842 = vmatprep.subr.mxu0 0.0
        %v843 = vand.u32 %v512, 4294901760
        %v844 = vsub.f32 %v512, %v843
        %v845 = vand.u32 %v844, 4294901760
        %v846 = vsub.f32 %v844, %v845
        %v847 = vand.u32 %v846, 4294901760
        %848 = vmatpush1.msra.mxu0 %v847
        %849 = vmatprep.subr.mxu0 0.0
        %v850 = vand.u32 %v513, 4294901760
        %v851 = vsub.f32 %v513, %v850
        %v852 = vand.u32 %v851, 4294901760
        %v853 = vsub.f32 %v851, %v852
        %v854 = vand.u32 %v853, 4294901760
        %855 = vmatpush1.msra.mxu0 %v854
        %856 = vmatprep.subr.mxu0 0.0
        %v857 = vand.u32 %v514, 4294901760
        %v858 = vsub.f32 %v514, %v857
        %v859 = vand.u32 %v858, 4294901760
        %v860 = vsub.f32 %v858, %v859
        %v861 = vand.u32 %v860, 4294901760
        %862 = vmatpush1.msra.mxu0 %v861
        %863 = vmatprep.subr.mxu0 0.0
        %v864 = vand.u32 %v515, 4294901760
        %v865 = vsub.f32 %v515, %v864
        %v866 = vand.u32 %v865, 4294901760
        %v867 = vsub.f32 %v865, %v866
        %v868 = vand.u32 %v867, 4294901760
        %869 = vmatpush1.msra.mxu0 %v868
        %870 = vmatprep.subr.mxu0 0.0
        %v871 = vand.u32 %v516, 4294901760
        %v872 = vsub.f32 %v516, %v871
        %v873 = vand.u32 %v872, 4294901760
        %v874 = vsub.f32 %v872, %v873
        %v875 = vand.u32 %v874, 4294901760
        %876 = vmatpush1.msra.mxu0 %v875
        %877 = vmatprep.subr.mxu0 0.0
        %878 = vmatpush1.msra.mxu0 0.0
        %879 = vmatprep.subr.mxu0 0.0
        %880 = vmatpush1.msra.mxu0 0.0
        %881 = vmatprep.subr.mxu0 0.0
        %882 = vmatpush1.msra.mxu0 0.0
        %883 = vmatprep.subr.mxu0 0.0
        %884 = vmatpush1.msra.mxu0 0.0
        %885 = vmatprep.subr.mxu0 0.0
        %886 = vmatpush1.msra.mxu0 0.0
        %887 = vmatprep.subr.mxu0 0.0
        %888 = vmatpush1.msra.mxu0 0.0
        %889 = vmatprep.subr.mxu0 0.0
        %890 = vmatpush1.msra.mxu0 0.0
        %891 = vmatprep.subr.mxu0 0.0
        %892 = vmatpush1.msra.mxu0 0.0
        %893 = vmatprep.subr.mxu0 0.0
        %894 = vmatpush1.msra.mxu0 0.0
        %895 = vmatprep.subr.mxu0 0.0
        %896 = vmatpush1.msra.mxu0 0.0
        %897 = vmatprep.subr.mxu0 0.0
        %898 = vmatpush1.msra.mxu0 0.0
        %899 = vmatprep.subr.mxu0 0.0
        %900 = vmatpush1.msra.mxu0 0.0
        %901 = vmatprep.subr.mxu0 0.0
        %902 = vmatpush1.msra.mxu0 0.0
        %903 = vmatprep.subr.mxu0 0.0
        %904 = vmatpush1.msra.mxu0 0.0
        %905 = vmatprep.subr.mxu0 0.0
        %906 = vmatpush1.msra.mxu0 0.0
        %907 = vmatprep.subr.mxu0 0.0
        %908 = vmatpush1.msra.mxu0 0.0
        %909 = vmatprep.mubr.f32.mxu0 0.0
        %v910 = vand.u32 %v485, 4294901760
        %911 = vmatmul.mubr.f32.gmra.mrb[0].mxu0 %v910
        %v912 = vpop.f32.mrb[0].mxu0
        %v913 = vadd.f32 %v612, %v912
        %v914 = vpop.f32.mrb[0].mxu0
        %915 = vmatprep.mubr.f32.mxu0 0.0
        %v916 = vand.u32 %v486, 4294901760
        %917 = vmatmul.mubr.f32.gmra.mrb[0].mxu0 %v916
        %v918 = vpop.f32.mrb[0].mxu0
        %v919 = vadd.f32 %v622, %v918
        %v920 = vpop.f32.mrb[0].mxu0
        %921 = vmatprep.mubr.f32.mxu0 0.0
        %v922 = vand.u32 %v487, 4294901760
        %923 = vmatmul.mubr.f32.gmra.mrb[0].mxu0 %v922
        %v924 = vpop.f32.mrb[0].mxu0
        %v925 = vadd.f32 %v632, %v924
        %v926 = vpop.f32.mrb[0].mxu0
        %927 = vmatprep.mubr.f32.mxu0 0.0
        %v928 = vand.u32 %v488, 4294901760
        %929 = vmatmul.mubr.f32.gmra.mrb[0].mxu0 %v928
        %v930 = vpop.f32.mrb[0].mxu0
        %v931 = vadd.f32 %v642, %v930
        %v932 = vpop.f32.mrb[0].mxu0
        %933 = vmatprep.mubr.f32.mxu0 0.0
        %v934 = vand.u32 %v489, 4294901760
        %935 = vmatmul.mubr.f32.gmra.mrb[0].mxu0 %v934
        %v936 = vpop.f32.mrb[0].mxu0
        %v937 = vadd.f32 %v652, %v936
        %v938 = vpop.f32.mrb[0].mxu0
        %939 = vmatprep.mubr.f32.mxu0 0.0
        %v940 = vand.u32 %v490, 4294901760
        %941 = vmatmul.mubr.f32.gmra.mrb[0].mxu0 %v940
        %v942 = vpop.f32.mrb[0].mxu0
        %v943 = vadd.f32 %v662, %v942
        %v944 = vpop.f32.mrb[0].mxu0
        %945 = vmatprep.mubr.f32.mxu0 0.0
        %v946 = vand.u32 %v491, 4294901760
        %947 = vmatmul.mubr.f32.gmra.mrb[0].mxu0 %v946
        %v948 = vpop.f32.mrb[0].mxu0
        %v949 = vadd.f32 %v672, %v948
        %v950 = vpop.f32.mrb[0].mxu0
        %951 = vmatprep.mubr.f32.mxu0 0.0
        %v952 = vand.u32 %v492, 4294901760
        %953 = vmatmul.mubr.f32.gmra.mrb[0].mxu0 %v952
        %v954 = vpop.f32.mrb[0].mxu0
        %v955 = vadd.f32 %v682, %v954
        %v956 = vpop.f32.mrb[0].mxu0
        %957 = vmatprep.mubr.f32.mxu0 0.0
        %v958 = vand.u32 %v493, 4294901760
        %959 = vmatmul.mubr.f32.gmra.mrb[0].mxu0 %v958
        %v960 = vpop.f32.mrb[0].mxu0
        %v961 = vadd.f32 %v692, %v960
        %v962 = vpop.f32.mrb[0].mxu0
        %963 = vmatprep.mubr.f32.mxu0 0.0
        %v964 = vand.u32 %v494, 4294901760
        %965 = vmatmul.mubr.f32.gmra.mrb[0].mxu0 %v964
        %v966 = vpop.f32.mrb[0].mxu0
        %v967 = vadd.f32 %v702, %v966
        %v968 = vpop.f32.mrb[0].mxu0
        %969 = vmatprep.mubr.f32.mxu0 0.0
        %v970 = vand.u32 %v495, 4294901760
        %971 = vmatmul.mubr.f32.gmra.mrb[0].mxu0 %v970
        %v972 = vpop.f32.mrb[0].mxu0
        %v973 = vadd.f32 %v712, %v972
        %v974 = vpop.f32.mrb[0].mxu0
        %975 = vmatprep.mubr.f32.mxu0 0.0
        %v976 = vand.u32 %v496, 4294901760
        %977 = vmatmul.mubr.f32.gmra.mrb[0].mxu0 %v976
        %v978 = vpop.f32.mrb[0].mxu0
        %v979 = vadd.f32 %v722, %v978
        %v980 = vpop.f32.mrb[0].mxu0
        %981 = vmatprep.mubr.f32.mxu0 0.0
        %v982 = vand.u32 %v497, 4294901760
        %983 = vmatmul.mubr.f32.gmra.mrb[0].mxu0 %v982
        %v984 = vpop.f32.mrb[0].mxu0
        %v985 = vadd.f32 %v732, %v984
        %v986 = vpop.f32.mrb[0].mxu0
        %987 = vmatprep.mubr.f32.mxu0 0.0
        %v988 = vand.u32 %v498, 4294901760
        %989 = vmatmul.mubr.f32.gmra.mrb[0].mxu0 %v988
        %v990 = vpop.f32.mrb[0].mxu0
        %v991 = vadd.f32 %v742, %v990
        %v992 = vpop.f32.mrb[0].mxu0
        %993 = vmatprep.mubr.f32.mxu0 0.0
        %v994 = vand.u32 %v499, 4294901760
        %995 = vmatmul.mubr.f32.gmra.mrb[0].mxu0 %v994
        %v996 = vpop.f32.mrb[0].mxu0
        %v997 = vadd.f32 %v752, %v996
        %v998 = vpop.f32.mrb[0].mxu0
        %999 = vmatprep.mubr.f32.mxu0 0.0
        %v1000 = vand.u32 %v500, 4294901760
        %1001 = vmatmul.mubr.f32.gmra.mrb[0].mxu0 %v1000
        %v1002 = vpop.f32.mrb[0].mxu0
        %v1003 = vadd.f32 %v762, %v1002
        %v1004 = vpop.f32.mrb[0].mxu0
        %1005 = vdwg.mxu0
        %1006 = vmatprep.subr.mxu0 0.0
        %v1007 = vand.u32 %v501, 4294901760
        %v1008 = vsub.f32 %v501, %v1007
        %1009 = vmatpush1.msra.mxu0 %v1008
        %1010 = vmatprep.subr.mxu0 0.0
        %v1011 = vand.u32 %v502, 4294901760
        %v1012 = vsub.f32 %v502, %v1011
        %1013 = vmatpush1.msra.mxu0 %v1012
        %1014 = vmatprep.subr.mxu0 0.0
        %v1015 = vand.u32 %v503, 4294901760
        %v1016 = vsub.f32 %v503, %v1015
        %1017 = vmatpush1.msra.mxu0 %v1016
        %1018 = vmatprep.subr.mxu0 0.0
        %v1019 = vand.u32 %v504, 4294901760
        %v1020 = vsub.f32 %v504, %v1019
        %1021 = vmatpush1.msra.mxu0 %v1020
        %1022 = vmatprep.subr.mxu0 0.0
        %v1023 = vand.u32 %v505, 4294901760
        %v1024 = vsub.f32 %v505, %v1023
        %1025 = vmatpush1.msra.mxu0 %v1024
        %1026 = vmatprep.subr.mxu0 0.0
        %v1027 = vand.u32 %v506, 4294901760
        %v1028 = vsub.f32 %v506, %v1027
        %1029 = vmatpush1.msra.mxu0 %v1028
        %1030 = vmatprep.subr.mxu0 0.0
        %v1031 = vand.u32 %v507, 4294901760
        %v1032 = vsub.f32 %v507, %v1031
        %1033 = vmatpush1.msra.mxu0 %v1032
        %1034 = vmatprep.subr.mxu0 0.0
        %v1035 = vand.u32 %v508, 4294901760
        %v1036 = vsub.f32 %v508, %v1035
        %1037 = vmatpush1.msra.mxu0 %v1036
        %1038 = vmatprep.subr.mxu0 0.0
        %v1039 = vand.u32 %v509, 4294901760
        %v1040 = vsub.f32 %v509, %v1039
        %1041 = vmatpush1.msra.mxu0 %v1040
        %1042 = vmatprep.subr.mxu0 0.0
        %v1043 = vand.u32 %v510, 4294901760
        %v1044 = vsub.f32 %v510, %v1043
        %1045 = vmatpush1.msra.mxu0 %v1044
        %1046 = vmatprep.subr.mxu0 0.0
        %v1047 = vand.u32 %v511, 4294901760
        %v1048 = vsub.f32 %v511, %v1047
        %1049 = vmatpush1.msra.mxu0 %v1048
        %1050 = vmatprep.subr.mxu0 0.0
        %v1051 = vand.u32 %v512, 4294901760
        %v1052 = vsub.f32 %v512, %v1051
        %1053 = vmatpush1.msra.mxu0 %v1052
        %1054 = vmatprep.subr.mxu0 0.0
        %v1055 = vand.u32 %v513, 4294901760
        %v1056 = vsub.f32 %v513, %v1055
        %1057 = vmatpush1.msra.mxu0 %v1056
        %1058 = vmatprep.subr.mxu0 0.0
        %v1059 = vand.u32 %v514, 4294901760
        %v1060 = vsub.f32 %v514, %v1059
        %1061 = vmatpush1.msra.mxu0 %v1060
        %1062 = vmatprep.subr.mxu0 0.0
        %v1063 = vand.u32 %v515, 4294901760
        %v1064 = vsub.f32 %v515, %v1063
        %1065 = vmatpush1.msra.mxu0 %v1064
        %1066 = vmatprep.subr.mxu0 0.0
        %v1067 = vand.u32 %v516, 4294901760
        %v1068 = vsub.f32 %v516, %v1067
        %1069 = vmatpush1.msra.mxu0 %v1068
        %1070 = vmatprep.subr.mxu0 0.0
        %1071 = vmatpush1.msra.mxu0 0.0
        %1072 = vmatprep.subr.mxu0 0.0
        %1073 = vmatpush1.msra.mxu0 0.0
        %1074 = vmatprep.subr.mxu0 0.0
        %1075 = vmatpush1.msra.mxu0 0.0
        %1076 = vmatprep.subr.mxu0 0.0
        %1077 = vmatpush1.msra.mxu0 0.0
        %1078 = vmatprep.subr.mxu0 0.0
        %1079 = vmatpush1.msra.mxu0 0.0
        %1080 = vmatprep.subr.mxu0 0.0
        %1081 = vmatpush1.msra.mxu0 0.0
        %1082 = vmatprep.subr.mxu0 0.0
        %1083 = vmatpush1.msra.mxu0 0.0
        %1084 = vmatprep.subr.mxu0 0.0
        %1085 = vmatpush1.msra.mxu0 0.0
        %1086 = vmatprep.subr.mxu0 0.0
        %1087 = vmatpush1.msra.mxu0 0.0
        %1088 = vmatprep.subr.mxu0 0.0
        %1089 = vmatpush1.msra.mxu0 0.0
        %1090 = vmatprep.subr.mxu0 0.0
        %1091 = vmatpush1.msra.mxu0 0.0
        %1092 = vmatprep.subr.mxu0 0.0
        %1093 = vmatpush1.msra.mxu0 0.0
        %1094 = vmatprep.subr.mxu0 0.0
        %1095 = vmatpush1.msra.mxu0 0.0
        %1096 = vmatprep.subr.mxu0 0.0
        %1097 = vmatpush1.msra.mxu0 0.0
        %1098 = vmatprep.subr.mxu0 0.0
        %1099 = vmatpush1.msra.mxu0 0.0
        %1100 = vmatprep.subr.mxu0 0.0
        %1101 = vmatpush1.msra.mxu0 0.0
        %1102 = vmatprep.mubr.f32.mxu0 0.0
        %v1103 = vand.u32 %v485, 4294901760
        %v1104 = vsub.f32 %v485, %v1103
        %1105 = vmatmul.mubr.f32.gmra.mrb[0].mxu0 %v1104
        %v1106 = vpop.f32.mrb[0].mxu0
        %v1107 = vadd.f32 %v913, %v1106
        %v1108 = vpop.f32.mrb[0].mxu0
        %1109 = vmatprep.mubr.f32.mxu0 0.0
        %v1110 = vand.u32 %v486, 4294901760
        %v1111 = vsub.f32 %v486, %v1110
        %1112 = vmatmul.mubr.f32.gmra.mrb[0].mxu0 %v1111
        %v1113 = vpop.f32.mrb[0].mxu0
        %v1114 = vadd.f32 %v919, %v1113
        %v1115 = vpop.f32.mrb[0].mxu0
        %1116 = vmatprep.mubr.f32.mxu0 0.0
        %v1117 = vand.u32 %v487, 4294901760
        %v1118 = vsub.f32 %v487, %v1117
        %1119 = vmatmul.mubr.f32.gmra.mrb[0].mxu0 %v1118
        %v1120 = vpop.f32.mrb[0].mxu0
        %v1121 = vadd.f32 %v925, %v1120
        %v1122 = vpop.f32.mrb[0].mxu0
        %1123 = vmatprep.mubr.f32.mxu0 0.0
        %v1124 = vand.u32 %v488, 4294901760
        %v1125 = vsub.f32 %v488, %v1124
        %1126 = vmatmul.mubr.f32.gmra.mrb[0].mxu0 %v1125
        %v1127 = vpop.f32.mrb[0].mxu0
        %v1128 = vadd.f32 %v931, %v1127
        %v1129 = vpop.f32.mrb[0].mxu0
        %1130 = vmatprep.mubr.f32.mxu0 0.0
        %v1131 = vand.u32 %v489, 4294901760
        %v1132 = vsub.f32 %v489, %v1131
        %1133 = vmatmul.mubr.f32.gmra.mrb[0].mxu0 %v1132
        %v1134 = vpop.f32.mrb[0].mxu0
        %v1135 = vadd.f32 %v937, %v1134
        %v1136 = vpop.f32.mrb[0].mxu0
        %1137 = vmatprep.mubr.f32.mxu0 0.0
        %v1138 = vand.u32 %v490, 4294901760
        %v1139 = vsub.f32 %v490, %v1138
        %1140 = vmatmul.mubr.f32.gmra.mrb[0].mxu0 %v1139
        %v1141 = vpop.f32.mrb[0].mxu0
        %v1142 = vadd.f32 %v943, %v1141
        %v1143 = vpop.f32.mrb[0].mxu0
        %1144 = vmatprep.mubr.f32.mxu0 0.0
        %v1145 = vand.u32 %v491, 4294901760
        %v1146 = vsub.f32 %v491, %v1145
        %1147 = vmatmul.mubr.f32.gmra.mrb[0].mxu0 %v1146
        %v1148 = vpop.f32.mrb[0].mxu0
        %v1149 = vadd.f32 %v949, %v1148
        %v1150 = vpop.f32.mrb[0].mxu0
        %1151 = vmatprep.mubr.f32.mxu0 0.0
        %v1152 = vand.u32 %v492, 4294901760
        %v1153 = vsub.f32 %v492, %v1152
        %1154 = vmatmul.mubr.f32.gmra.mrb[0].mxu0 %v1153
        %v1155 = vpop.f32.mrb[0].mxu0
        %v1156 = vadd.f32 %v955, %v1155
        %v1157 = vpop.f32.mrb[0].mxu0
        %1158 = vmatprep.mubr.f32.mxu0 0.0
        %v1159 = vand.u32 %v493, 4294901760
        %v1160 = vsub.f32 %v493, %v1159
        %1161 = vmatmul.mubr.f32.gmra.mrb[0].mxu0 %v1160
        %v1162 = vpop.f32.mrb[0].mxu0
        %v1163 = vadd.f32 %v961, %v1162
        %v1164 = vpop.f32.mrb[0].mxu0
        %1165 = vmatprep.mubr.f32.mxu0 0.0
        %v1166 = vand.u32 %v494, 4294901760
        %v1167 = vsub.f32 %v494, %v1166
        %1168 = vmatmul.mubr.f32.gmra.mrb[0].mxu0 %v1167
        %v1169 = vpop.f32.mrb[0].mxu0
        %v1170 = vadd.f32 %v967, %v1169
        %v1171 = vpop.f32.mrb[0].mxu0
        %1172 = vmatprep.mubr.f32.mxu0 0.0
        %v1173 = vand.u32 %v495, 4294901760
        %v1174 = vsub.f32 %v495, %v1173
        %1175 = vmatmul.mubr.f32.gmra.mrb[0].mxu0 %v1174
        %v1176 = vpop.f32.mrb[0].mxu0
        %v1177 = vadd.f32 %v973, %v1176
        %v1178 = vpop.f32.mrb[0].mxu0
        %1179 = vmatprep.mubr.f32.mxu0 0.0
        %v1180 = vand.u32 %v496, 4294901760
        %v1181 = vsub.f32 %v496, %v1180
        %1182 = vmatmul.mubr.f32.gmra.mrb[0].mxu0 %v1181
        %v1183 = vpop.f32.mrb[0].mxu0
        %v1184 = vadd.f32 %v979, %v1183
        %v1185 = vpop.f32.mrb[0].mxu0
        %1186 = vmatprep.mubr.f32.mxu0 0.0
        %v1187 = vand.u32 %v497, 4294901760
        %v1188 = vsub.f32 %v497, %v1187
        %1189 = vmatmul.mubr.f32.gmra.mrb[0].mxu0 %v1188
        %v1190 = vpop.f32.mrb[0].mxu0
        %v1191 = vadd.f32 %v985, %v1190
        %v1192 = vpop.f32.mrb[0].mxu0
        %1193 = vmatprep.mubr.f32.mxu0 0.0
        %v1194 = vand.u32 %v498, 4294901760
        %v1195 = vsub.f32 %v498, %v1194
        %1196 = vmatmul.mubr.f32.gmra.mrb[0].mxu0 %v1195
        %v1197 = vpop.f32.mrb[0].mxu0
        %v1198 = vadd.f32 %v991, %v1197
        %v1199 = vpop.f32.mrb[0].mxu0
        %1200 = vmatprep.mubr.f32.mxu0 0.0
        %v1201 = vand.u32 %v499, 4294901760
        %v1202 = vsub.f32 %v499, %v1201
        %1203 = vmatmul.mubr.f32.gmra.mrb[0].mxu0 %v1202
        %v1204 = vpop.f32.mrb[0].mxu0
        %v1205 = vadd.f32 %v997, %v1204
        %v1206 = vpop.f32.mrb[0].mxu0
        %1207 = vmatprep.mubr.f32.mxu0 0.0
        %v1208 = vand.u32 %v500, 4294901760
        %v1209 = vsub.f32 %v500, %v1208
        %1210 = vmatmul.mubr.f32.gmra.mrb[0].mxu0 %v1209
        %v1211 = vpop.f32.mrb[0].mxu0
        %v1212 = vadd.f32 %v1003, %v1211
        %v1213 = vpop.f32.mrb[0].mxu0
        %1214 = vdwg.mxu0
        %1215 = vmatprep.subr.mxu0 0.0
        %v1216 = vand.u32 %v501, 4294901760
        %1217 = vmatpush1.msra.mxu0 %v1216
        %1218 = vmatprep.subr.mxu0 0.0
        %v1219 = vand.u32 %v502, 4294901760
        %1220 = vmatpush1.msra.mxu0 %v1219
        %1221 = vmatprep.subr.mxu0 0.0
        %v1222 = vand.u32 %v503, 4294901760
        %1223 = vmatpush1.msra.mxu0 %v1222
        %1224 = vmatprep.subr.mxu0 0.0
        %v1225 = vand.u32 %v504, 4294901760
        %1226 = vmatpush1.msra.mxu0 %v1225
        %1227 = vmatprep.subr.mxu0 0.0
        %v1228 = vand.u32 %v505, 4294901760
        %1229 = vmatpush1.msra.mxu0 %v1228
        %1230 = vmatprep.subr.mxu0 0.0
        %v1231 = vand.u32 %v506, 4294901760
        %1232 = vmatpush1.msra.mxu0 %v1231
        %1233 = vmatprep.subr.mxu0 0.0
        %v1234 = vand.u32 %v507, 4294901760
        %1235 = vmatpush1.msra.mxu0 %v1234
        %1236 = vmatprep.subr.mxu0 0.0
        %v1237 = vand.u32 %v508, 4294901760
        %1238 = vmatpush1.msra.mxu0 %v1237
        %1239 = vmatprep.subr.mxu0 0.0
        %v1240 = vand.u32 %v509, 4294901760
        %1241 = vmatpush1.msra.mxu0 %v1240
        %1242 = vmatprep.subr.mxu0 0.0
        %v1243 = vand.u32 %v510, 4294901760
        %1244 = vmatpush1.msra.mxu0 %v1243
        %1245 = vmatprep.subr.mxu0 0.0
        %v1246 = vand.u32 %v511, 4294901760
        %1247 = vmatpush1.msra.mxu0 %v1246
        %1248 = vmatprep.subr.mxu0 0.0
        %v1249 = vand.u32 %v512, 4294901760
        %1250 = vmatpush1.msra.mxu0 %v1249
        %1251 = vmatprep.subr.mxu0 0.0
        %v1252 = vand.u32 %v513, 4294901760
        %1253 = vmatpush1.msra.mxu0 %v1252
        %1254 = vmatprep.subr.mxu0 0.0
        %v1255 = vand.u32 %v514, 4294901760
        %1256 = vmatpush1.msra.mxu0 %v1255
        %1257 = vmatprep.subr.mxu0 0.0
        %v1258 = vand.u32 %v515, 4294901760
        %1259 = vmatpush1.msra.mxu0 %v1258
        %1260 = vmatprep.subr.mxu0 0.0
        %v1261 = vand.u32 %v516, 4294901760
        %1262 = vmatpush1.msra.mxu0 %v1261
        %1263 = vmatprep.subr.mxu0 0.0
        %1264 = vmatpush1.msra.mxu0 0.0
        %1265 = vmatprep.subr.mxu0 0.0
        %1266 = vmatpush1.msra.mxu0 0.0
        %1267 = vmatprep.subr.mxu0 0.0
        %1268 = vmatpush1.msra.mxu0 0.0
        %1269 = vmatprep.subr.mxu0 0.0
        %1270 = vmatpush1.msra.mxu0 0.0
        %1271 = vmatprep.subr.mxu0 0.0
        %1272 = vmatpush1.msra.mxu0 0.0
        %1273 = vmatprep.subr.mxu0 0.0
        %1274 = vmatpush1.msra.mxu0 0.0
        %1275 = vmatprep.subr.mxu0 0.0
        %1276 = vmatpush1.msra.mxu0 0.0
        %1277 = vmatprep.subr.mxu0 0.0
        %1278 = vmatpush1.msra.mxu0 0.0
        %1279 = vmatprep.subr.mxu0 0.0
        %1280 = vmatpush1.msra.mxu0 0.0
        %1281 = vmatprep.subr.mxu0 0.0
        %1282 = vmatpush1.msra.mxu0 0.0
        %1283 = vmatprep.subr.mxu0 0.0
        %1284 = vmatpush1.msra.mxu0 0.0
        %1285 = vmatprep.subr.mxu0 0.0
        %1286 = vmatpush1.msra.mxu0 0.0
        %1287 = vmatprep.subr.mxu0 0.0
        %1288 = vmatpush1.msra.mxu0 0.0
        %1289 = vmatprep.subr.mxu0 0.0
        %1290 = vmatpush1.msra.mxu0 0.0
        %1291 = vmatprep.subr.mxu0 0.0
        %1292 = vmatpush1.msra.mxu0 0.0
        %1293 = vmatprep.subr.mxu0 0.0
        %1294 = vmatpush1.msra.mxu0 0.0
        %1295 = vmatprep.mubr.f32.mxu0 0.0
        %v1296 = vand.u32 %v485, 4294901760
        %v1297 = vsub.f32 %v485, %v1296
        %v1298 = vand.u32 %v1297, 4294901760
        %1299 = vmatmul.mubr.f32.gmra.mrb[0].mxu0 %v1298
        %v1300 = vpop.f32.mrb[0].mxu0
        %v1301 = vadd.f32 %v1107, %v1300
        %v1302 = vpop.f32.mrb[0].mxu0
        %1303 = vmatprep.mubr.f32.mxu0 0.0
        %v1304 = vand.u32 %v486, 4294901760
        %v1305 = vsub.f32 %v486, %v1304
        %v1306 = vand.u32 %v1305, 4294901760
        %1307 = vmatmul.mubr.f32.gmra.mrb[0].mxu0 %v1306
        %v1308 = vpop.f32.mrb[0].mxu0
        %v1309 = vadd.f32 %v1114, %v1308
        %v1310 = vpop.f32.mrb[0].mxu0
        %1311 = vmatprep.mubr.f32.mxu0 0.0
        %v1312 = vand.u32 %v487, 4294901760
        %v1313 = vsub.f32 %v487, %v1312
        %v1314 = vand.u32 %v1313, 4294901760
        %1315 = vmatmul.mubr.f32.gmra.mrb[0].mxu0 %v1314
        %v1316 = vpop.f32.mrb[0].mxu0
        %v1317 = vadd.f32 %v1121, %v1316
        %v1318 = vpop.f32.mrb[0].mxu0
        %1319 = vmatprep.mubr.f32.mxu0 0.0
        %v1320 = vand.u32 %v488, 4294901760
        %v1321 = vsub.f32 %v488, %v1320
        %v1322 = vand.u32 %v1321, 4294901760
        %1323 = vmatmul.mubr.f32.gmra.mrb[0].mxu0 %v1322
        %v1324 = vpop.f32.mrb[0].mxu0
        %v1325 = vadd.f32 %v1128, %v1324
        %v1326 = vpop.f32.mrb[0].mxu0
        %1327 = vmatprep.mubr.f32.mxu0 0.0
        %v1328 = vand.u32 %v489, 4294901760
        %v1329 = vsub.f32 %v489, %v1328
        %v1330 = vand.u32 %v1329, 4294901760
        %1331 = vmatmul.mubr.f32.gmra.mrb[0].mxu0 %v1330
        %v1332 = vpop.f32.mrb[0].mxu0
        %v1333 = vadd.f32 %v1135, %v1332
        %v1334 = vpop.f32.mrb[0].mxu0
        %1335 = vmatprep.mubr.f32.mxu0 0.0
        %v1336 = vand.u32 %v490, 4294901760
        %v1337 = vsub.f32 %v490, %v1336
        %v1338 = vand.u32 %v1337, 4294901760
        %1339 = vmatmul.mubr.f32.gmra.mrb[0].mxu0 %v1338
        %v1340 = vpop.f32.mrb[0].mxu0
        %v1341 = vadd.f32 %v1142, %v1340
        %v1342 = vpop.f32.mrb[0].mxu0
        %1343 = vmatprep.mubr.f32.mxu0 0.0
        %v1344 = vand.u32 %v491, 4294901760
        %v1345 = vsub.f32 %v491, %v1344
        %v1346 = vand.u32 %v1345, 4294901760
        %1347 = vmatmul.mubr.f32.gmra.mrb[0].mxu0 %v1346
        %v1348 = vpop.f32.mrb[0].mxu0
        %v1349 = vadd.f32 %v1149, %v1348
        %v1350 = vpop.f32.mrb[0].mxu0
        %1351 = vmatprep.mubr.f32.mxu0 0.0
        %v1352 = vand.u32 %v492, 4294901760
        %v1353 = vsub.f32 %v492, %v1352
        %v1354 = vand.u32 %v1353, 4294901760
        %1355 = vmatmul.mubr.f32.gmra.mrb[0].mxu0 %v1354
        %v1356 = vpop.f32.mrb[0].mxu0
        %v1357 = vadd.f32 %v1156, %v1356
        %v1358 = vpop.f32.mrb[0].mxu0
        %1359 = vmatprep.mubr.f32.mxu0 0.0
        %v1360 = vand.u32 %v493, 4294901760
        %v1361 = vsub.f32 %v493, %v1360
        %v1362 = vand.u32 %v1361, 4294901760
        %1363 = vmatmul.mubr.f32.gmra.mrb[0].mxu0 %v1362
        %v1364 = vpop.f32.mrb[0].mxu0
        %v1365 = vadd.f32 %v1163, %v1364
        %v1366 = vpop.f32.mrb[0].mxu0
        %1367 = vmatprep.mubr.f32.mxu0 0.0
        %v1368 = vand.u32 %v494, 4294901760
        %v1369 = vsub.f32 %v494, %v1368
        %v1370 = vand.u32 %v1369, 4294901760
        %1371 = vmatmul.mubr.f32.gmra.mrb[0].mxu0 %v1370
        %v1372 = vpop.f32.mrb[0].mxu0
        %v1373 = vadd.f32 %v1170, %v1372
        %v1374 = vpop.f32.mrb[0].mxu0
        %1375 = vmatprep.mubr.f32.mxu0 0.0
        %v1376 = vand.u32 %v495, 4294901760
        %v1377 = vsub.f32 %v495, %v1376
        %v1378 = vand.u32 %v1377, 4294901760
        %1379 = vmatmul.mubr.f32.gmra.mrb[0].mxu0 %v1378
        %v1380 = vpop.f32.mrb[0].mxu0
        %v1381 = vadd.f32 %v1177, %v1380
        %v1382 = vpop.f32.mrb[0].mxu0
        %1383 = vmatprep.mubr.f32.mxu0 0.0
        %v1384 = vand.u32 %v496, 4294901760
        %v1385 = vsub.f32 %v496, %v1384
        %v1386 = vand.u32 %v1385, 4294901760
        %1387 = vmatmul.mubr.f32.gmra.mrb[0].mxu0 %v1386
        %v1388 = vpop.f32.mrb[0].mxu0
        %v1389 = vadd.f32 %v1184, %v1388
        %v1390 = vpop.f32.mrb[0].mxu0
        %1391 = vmatprep.mubr.f32.mxu0 0.0
        %v1392 = vand.u32 %v497, 4294901760
        %v1393 = vsub.f32 %v497, %v1392
        %v1394 = vand.u32 %v1393, 4294901760
        %1395 = vmatmul.mubr.f32.gmra.mrb[0].mxu0 %v1394
        %v1396 = vpop.f32.mrb[0].mxu0
        %v1397 = vadd.f32 %v1191, %v1396
        %v1398 = vpop.f32.mrb[0].mxu0
        %1399 = vmatprep.mubr.f32.mxu0 0.0
        %v1400 = vand.u32 %v498, 4294901760
        %v1401 = vsub.f32 %v498, %v1400
        %v1402 = vand.u32 %v1401, 4294901760
        %1403 = vmatmul.mubr.f32.gmra.mrb[0].mxu0 %v1402
        %v1404 = vpop.f32.mrb[0].mxu0
        %v1405 = vadd.f32 %v1198, %v1404
        %v1406 = vpop.f32.mrb[0].mxu0
        %1407 = vmatprep.mubr.f32.mxu0 0.0
        %v1408 = vand.u32 %v499, 4294901760
        %v1409 = vsub.f32 %v499, %v1408
        %v1410 = vand.u32 %v1409, 4294901760
        %1411 = vmatmul.mubr.f32.gmra.mrb[0].mxu0 %v1410
        %v1412 = vpop.f32.mrb[0].mxu0
        %v1413 = vadd.f32 %v1205, %v1412
        %v1414 = vpop.f32.mrb[0].mxu0
        %1415 = vmatprep.mubr.f32.mxu0 0.0
        %v1416 = vand.u32 %v500, 4294901760
        %v1417 = vsub.f32 %v500, %v1416
        %v1418 = vand.u32 %v1417, 4294901760
        %1419 = vmatmul.mubr.f32.gmra.mrb[0].mxu0 %v1418
        %v1420 = vpop.f32.mrb[0].mxu0
        %v1421 = vadd.f32 %v1212, %v1420
        %v1422 = vpop.f32.mrb[0].mxu0
        %1423 = vdwg.mxu0
        %1424 = vmatprep.subr.mxu0 0.0
        %v1425 = vand.u32 %v501, 4294901760
        %v1426 = vsub.f32 %v501, %v1425
        %v1427 = vand.u32 %v1426, 4294901760
        %1428 = vmatpush1.msra.mxu0 %v1427
        %1429 = vmatprep.subr.mxu0 0.0
        %v1430 = vand.u32 %v502, 4294901760
        %v1431 = vsub.f32 %v502, %v1430
        %v1432 = vand.u32 %v1431, 4294901760
        %1433 = vmatpush1.msra.mxu0 %v1432
        %1434 = vmatprep.subr.mxu0 0.0
        %v1435 = vand.u32 %v503, 4294901760
        %v1436 = vsub.f32 %v503, %v1435
        %v1437 = vand.u32 %v1436, 4294901760
        %1438 = vmatpush1.msra.mxu0 %v1437
        %1439 = vmatprep.subr.mxu0 0.0
        %v1440 = vand.u32 %v504, 4294901760
        %v1441 = vsub.f32 %v504, %v1440
        %v1442 = vand.u32 %v1441, 4294901760
        %1443 = vmatpush1.msra.mxu0 %v1442
        %1444 = vmatprep.subr.mxu0 0.0
        %v1445 = vand.u32 %v505, 4294901760
        %v1446 = vsub.f32 %v505, %v1445
        %v1447 = vand.u32 %v1446, 4294901760
        %1448 = vmatpush1.msra.mxu0 %v1447
        %1449 = vmatprep.subr.mxu0 0.0
        %v1450 = vand.u32 %v506, 4294901760
        %v1451 = vsub.f32 %v506, %v1450
        %v1452 = vand.u32 %v1451, 4294901760
        %1453 = vmatpush1.msra.mxu0 %v1452
        %1454 = vmatprep.subr.mxu0 0.0
        %v1455 = vand.u32 %v507, 4294901760
        %v1456 = vsub.f32 %v507, %v1455
        %v1457 = vand.u32 %v1456, 4294901760
        %1458 = vmatpush1.msra.mxu0 %v1457
        %1459 = vmatprep.subr.mxu0 0.0
        %v1460 = vand.u32 %v508, 4294901760
        %v1461 = vsub.f32 %v508, %v1460
        %v1462 = vand.u32 %v1461, 4294901760
        %1463 = vmatpush1.msra.mxu0 %v1462
        %1464 = vmatprep.subr.mxu0 0.0
        %v1465 = vand.u32 %v509, 4294901760
        %v1466 = vsub.f32 %v509, %v1465
        %v1467 = vand.u32 %v1466, 4294901760
        %1468 = vmatpush1.msra.mxu0 %v1467
        %1469 = vmatprep.subr.mxu0 0.0
        %v1470 = vand.u32 %v510, 4294901760
        %v1471 = vsub.f32 %v510, %v1470
        %v1472 = vand.u32 %v1471, 4294901760
        %1473 = vmatpush1.msra.mxu0 %v1472
        %1474 = vmatprep.subr.mxu0 0.0
        %v1475 = vand.u32 %v511, 4294901760
        %v1476 = vsub.f32 %v511, %v1475
        %v1477 = vand.u32 %v1476, 4294901760
        %1478 = vmatpush1.msra.mxu0 %v1477
        %1479 = vmatprep.subr.mxu0 0.0
        %v1480 = vand.u32 %v512, 4294901760
        %v1481 = vsub.f32 %v512, %v1480
        %v1482 = vand.u32 %v1481, 4294901760
        %1483 = vmatpush1.msra.mxu0 %v1482
        %1484 = vmatprep.subr.mxu0 0.0
        %v1485 = vand.u32 %v513, 4294901760
        %v1486 = vsub.f32 %v513, %v1485
        %v1487 = vand.u32 %v1486, 4294901760
        %1488 = vmatpush1.msra.mxu0 %v1487
        %1489 = vmatprep.subr.mxu0 0.0
        %v1490 = vand.u32 %v514, 4294901760
        %v1491 = vsub.f32 %v514, %v1490
        %v1492 = vand.u32 %v1491, 4294901760
        %1493 = vmatpush1.msra.mxu0 %v1492
        %1494 = vmatprep.subr.mxu0 0.0
        %v1495 = vand.u32 %v515, 4294901760
        %v1496 = vsub.f32 %v515, %v1495
        %v1497 = vand.u32 %v1496, 4294901760
        %1498 = vmatpush1.msra.mxu0 %v1497
        %1499 = vmatprep.subr.mxu0 0.0
        %v1500 = vand.u32 %v516, 4294901760
        %v1501 = vsub.f32 %v516, %v1500
        %v1502 = vand.u32 %v1501, 4294901760
        %1503 = vmatpush1.msra.mxu0 %v1502
        %1504 = vmatprep.subr.mxu0 0.0
        %1505 = vmatpush1.msra.mxu0 0.0
        %1506 = vmatprep.subr.mxu0 0.0
        %1507 = vmatpush1.msra.mxu0 0.0
        %1508 = vmatprep.subr.mxu0 0.0
        %1509 = vmatpush1.msra.mxu0 0.0
        %1510 = vmatprep.subr.mxu0 0.0
        %1511 = vmatpush1.msra.mxu0 0.0
        %1512 = vmatprep.subr.mxu0 0.0
        %1513 = vmatpush1.msra.mxu0 0.0
        %1514 = vmatprep.subr.mxu0 0.0
        %1515 = vmatpush1.msra.mxu0 0.0
        %1516 = vmatprep.subr.mxu0 0.0
        %1517 = vmatpush1.msra.mxu0 0.0
        %1518 = vmatprep.subr.mxu0 0.0
        %1519 = vmatpush1.msra.mxu0 0.0
        %1520 = vmatprep.subr.mxu0 0.0
        %1521 = vmatpush1.msra.mxu0 0.0
        %1522 = vmatprep.subr.mxu0 0.0
        %1523 = vmatpush1.msra.mxu0 0.0
        %1524 = vmatprep.subr.mxu0 0.0
        %1525 = vmatpush1.msra.mxu0 0.0
        %1526 = vmatprep.subr.mxu0 0.0
        %1527 = vmatpush1.msra.mxu0 0.0
        %1528 = vmatprep.subr.mxu0 0.0
        %1529 = vmatpush1.msra.mxu0 0.0
        %1530 = vmatprep.subr.mxu0 0.0
        %1531 = vmatpush1.msra.mxu0 0.0
        %1532 = vmatprep.subr.mxu0 0.0
        %1533 = vmatpush1.msra.mxu0 0.0
        %1534 = vmatprep.subr.mxu0 0.0
        %1535 = vmatpush1.msra.mxu0 0.0
        %1536 = vmatprep.mubr.f32.mxu0 0.0
        %v1537 = vand.u32 %v485, 4294901760
        %1538 = vmatmul.mubr.f32.gmra.mrb[0].mxu0 %v1537
        %v1539 = vpop.f32.mrb[0].mxu0
        %v1540 = vadd.f32 %v1301, %v1539
        %v1541 = vpop.f32.mrb[0].mxu0
        %1542 = vmatprep.mubr.f32.mxu0 0.0
        %v1543 = vand.u32 %v486, 4294901760
        %1544 = vmatmul.mubr.f32.gmra.mrb[0].mxu0 %v1543
        %v1545 = vpop.f32.mrb[0].mxu0
        %v1546 = vadd.f32 %v1309, %v1545
        %v1547 = vpop.f32.mrb[0].mxu0
        %1548 = vmatprep.mubr.f32.mxu0 0.0
        %v1549 = vand.u32 %v487, 4294901760
        %1550 = vmatmul.mubr.f32.gmra.mrb[0].mxu0 %v1549
        %v1551 = vpop.f32.mrb[0].mxu0
        %v1552 = vadd.f32 %v1317, %v1551
        %v1553 = vpop.f32.mrb[0].mxu0
        %1554 = vmatprep.mubr.f32.mxu0 0.0
        %v1555 = vand.u32 %v488, 4294901760
        %1556 = vmatmul.mubr.f32.gmra.mrb[0].mxu0 %v1555
        %v1557 = vpop.f32.mrb[0].mxu0
        %v1558 = vadd.f32 %v1325, %v1557
        %v1559 = vpop.f32.mrb[0].mxu0
        %1560 = vmatprep.mubr.f32.mxu0 0.0
        %v1561 = vand.u32 %v489, 4294901760
        %1562 = vmatmul.mubr.f32.gmra.mrb[0].mxu0 %v1561
        %v1563 = vpop.f32.mrb[0].mxu0
        %v1564 = vadd.f32 %v1333, %v1563
        %v1565 = vpop.f32.mrb[0].mxu0
        %1566 = vmatprep.mubr.f32.mxu0 0.0
        %v1567 = vand.u32 %v490, 4294901760
        %1568 = vmatmul.mubr.f32.gmra.mrb[0].mxu0 %v1567
        %v1569 = vpop.f32.mrb[0].mxu0
        %v1570 = vadd.f32 %v1341, %v1569
        %v1571 = vpop.f32.mrb[0].mxu0
        %1572 = vmatprep.mubr.f32.mxu0 0.0
        %v1573 = vand.u32 %v491, 4294901760
        %1574 = vmatmul.mubr.f32.gmra.mrb[0].mxu0 %v1573
        %v1575 = vpop.f32.mrb[0].mxu0
        %v1576 = vadd.f32 %v1349, %v1575
        %v1577 = vpop.f32.mrb[0].mxu0
        %1578 = vmatprep.mubr.f32.mxu0 0.0
        %v1579 = vand.u32 %v492, 4294901760
        %1580 = vmatmul.mubr.f32.gmra.mrb[0].mxu0 %v1579
        %v1581 = vpop.f32.mrb[0].mxu0
        %v1582 = vadd.f32 %v1357, %v1581
        %v1583 = vpop.f32.mrb[0].mxu0
        %1584 = vmatprep.mubr.f32.mxu0 0.0
        %v1585 = vand.u32 %v493, 4294901760
        %1586 = vmatmul.mubr.f32.gmra.mrb[0].mxu0 %v1585
        %v1587 = vpop.f32.mrb[0].mxu0
        %v1588 = vadd.f32 %v1365, %v1587
        %v1589 = vpop.f32.mrb[0].mxu0
        %1590 = vmatprep.mubr.f32.mxu0 0.0
        %v1591 = vand.u32 %v494, 4294901760
        %1592 = vmatmul.mubr.f32.gmra.mrb[0].mxu0 %v1591
        %v1593 = vpop.f32.mrb[0].mxu0
        %v1594 = vadd.f32 %v1373, %v1593
        %v1595 = vpop.f32.mrb[0].mxu0
        %1596 = vmatprep.mubr.f32.mxu0 0.0
        %v1597 = vand.u32 %v495, 4294901760
        %1598 = vmatmul.mubr.f32.gmra.mrb[0].mxu0 %v1597
        %v1599 = vpop.f32.mrb[0].mxu0
        %v1600 = vadd.f32 %v1381, %v1599
        %v1601 = vpop.f32.mrb[0].mxu0
        %1602 = vmatprep.mubr.f32.mxu0 0.0
        %v1603 = vand.u32 %v496, 4294901760
        %1604 = vmatmul.mubr.f32.gmra.mrb[0].mxu0 %v1603
        %v1605 = vpop.f32.mrb[0].mxu0
        %v1606 = vadd.f32 %v1389, %v1605
        %v1607 = vpop.f32.mrb[0].mxu0
        %1608 = vmatprep.mubr.f32.mxu0 0.0
        %v1609 = vand.u32 %v497, 4294901760
        %1610 = vmatmul.mubr.f32.gmra.mrb[0].mxu0 %v1609
        %v1611 = vpop.f32.mrb[0].mxu0
        %v1612 = vadd.f32 %v1397, %v1611
        %v1613 = vpop.f32.mrb[0].mxu0
        %1614 = vmatprep.mubr.f32.mxu0 0.0
        %v1615 = vand.u32 %v498, 4294901760
        %1616 = vmatmul.mubr.f32.gmra.mrb[0].mxu0 %v1615
        %v1617 = vpop.f32.mrb[0].mxu0
        %v1618 = vadd.f32 %v1405, %v1617
        %v1619 = vpop.f32.mrb[0].mxu0
        %1620 = vmatprep.mubr.f32.mxu0 0.0
        %v1621 = vand.u32 %v499, 4294901760
        %1622 = vmatmul.mubr.f32.gmra.mrb[0].mxu0 %v1621
        %v1623 = vpop.f32.mrb[0].mxu0
        %v1624 = vadd.f32 %v1413, %v1623
        %v1625 = vpop.f32.mrb[0].mxu0
        %1626 = vmatprep.mubr.f32.mxu0 0.0
        %v1627 = vand.u32 %v500, 4294901760
        %1628 = vmatmul.mubr.f32.gmra.mrb[0].mxu0 %v1627
        %v1629 = vpop.f32.mrb[0].mxu0
        %v1630 = vadd.f32 %v1421, %v1629
        %v1631 = vpop.f32.mrb[0].mxu0
        %1632 = vdwg.mxu0
        %1633 = vmatprep.subr.mxu0 0.0
        %v1634 = vand.u32 %v501, 4294901760
        %1635 = vmatpush1.msra.mxu0 %v1634
        %1636 = vmatprep.subr.mxu0 0.0
        %v1637 = vand.u32 %v502, 4294901760
        %1638 = vmatpush1.msra.mxu0 %v1637
        %1639 = vmatprep.subr.mxu0 0.0
        %v1640 = vand.u32 %v503, 4294901760
        %1641 = vmatpush1.msra.mxu0 %v1640
        %1642 = vmatprep.subr.mxu0 0.0
        %v1643 = vand.u32 %v504, 4294901760
        %1644 = vmatpush1.msra.mxu0 %v1643
        %1645 = vmatprep.subr.mxu0 0.0
        %v1646 = vand.u32 %v505, 4294901760
        %1647 = vmatpush1.msra.mxu0 %v1646
        %1648 = vmatprep.subr.mxu0 0.0
        %v1649 = vand.u32 %v506, 4294901760
        %1650 = vmatpush1.msra.mxu0 %v1649
        %1651 = vmatprep.subr.mxu0 0.0
        %v1652 = vand.u32 %v507, 4294901760
        %1653 = vmatpush1.msra.mxu0 %v1652
        %1654 = vmatprep.subr.mxu0 0.0
        %v1655 = vand.u32 %v508, 4294901760
        %1656 = vmatpush1.msra.mxu0 %v1655
        %1657 = vmatprep.subr.mxu0 0.0
        %v1658 = vand.u32 %v509, 4294901760
        %1659 = vmatpush1.msra.mxu0 %v1658
        %1660 = vmatprep.subr.mxu0 0.0
        %v1661 = vand.u32 %v510, 4294901760
        %1662 = vmatpush1.msra.mxu0 %v1661
        %1663 = vmatprep.subr.mxu0 0.0
        %v1664 = vand.u32 %v511, 4294901760
        %1665 = vmatpush1.msra.mxu0 %v1664
        %1666 = vmatprep.subr.mxu0 0.0
        %v1667 = vand.u32 %v512, 4294901760
        %1668 = vmatpush1.msra.mxu0 %v1667
        %1669 = vmatprep.subr.mxu0 0.0
        %v1670 = vand.u32 %v513, 4294901760
        %1671 = vmatpush1.msra.mxu0 %v1670
        %1672 = vmatprep.subr.mxu0 0.0
        %v1673 = vand.u32 %v514, 4294901760
        %1674 = vmatpush1.msra.mxu0 %v1673
        %1675 = vmatprep.subr.mxu0 0.0
        %v1676 = vand.u32 %v515, 4294901760
        %1677 = vmatpush1.msra.mxu0 %v1676
        %1678 = vmatprep.subr.mxu0 0.0
        %v1679 = vand.u32 %v516, 4294901760
        %1680 = vmatpush1.msra.mxu0 %v1679
        %1681 = vmatprep.subr.mxu0 0.0
        %1682 = vmatpush1.msra.mxu0 0.0
        %1683 = vmatprep.subr.mxu0 0.0
        %1684 = vmatpush1.msra.mxu0 0.0
        %1685 = vmatprep.subr.mxu0 0.0
        %1686 = vmatpush1.msra.mxu0 0.0
        %1687 = vmatprep.subr.mxu0 0.0
        %1688 = vmatpush1.msra.mxu0 0.0
        %1689 = vmatprep.subr.mxu0 0.0
        %1690 = vmatpush1.msra.mxu0 0.0
        %1691 = vmatprep.subr.mxu0 0.0
        %1692 = vmatpush1.msra.mxu0 0.0
        %1693 = vmatprep.subr.mxu0 0.0
        %1694 = vmatpush1.msra.mxu0 0.0
        %1695 = vmatprep.subr.mxu0 0.0
        %1696 = vmatpush1.msra.mxu0 0.0
        %1697 = vmatprep.subr.mxu0 0.0
        %1698 = vmatpush1.msra.mxu0 0.0
        %1699 = vmatprep.subr.mxu0 0.0
        %1700 = vmatpush1.msra.mxu0 0.0
        %1701 = vmatprep.subr.mxu0 0.0
        %1702 = vmatpush1.msra.mxu0 0.0
        %1703 = vmatprep.subr.mxu0 0.0
        %1704 = vmatpush1.msra.mxu0 0.0
        %1705 = vmatprep.subr.mxu0 0.0
        %1706 = vmatpush1.msra.mxu0 0.0
        %1707 = vmatprep.subr.mxu0 0.0
        %1708 = vmatpush1.msra.mxu0 0.0
        %1709 = vmatprep.subr.mxu0 0.0
        %1710 = vmatpush1.msra.mxu0 0.0
        %1711 = vmatprep.subr.mxu0 0.0
        %1712 = vmatpush1.msra.mxu0 0.0
        %1713 = vmatprep.mubr.f32.mxu0 0.0
        %v1714 = vand.u32 %v485, 4294901760
        %1715 = vmatmul.mubr.f32.gmra.mrb[0].mxu0 %v1714
        %v1716 = vpop.f32.mrb[0].mxu0
        %v1717 = vadd.f32 %v1540, %v1716
        %v1718 = vpop.f32.mrb[0].mxu0
        %1719 = vmatprep.mubr.f32.mxu0 0.0
        %v1720 = vand.u32 %v486, 4294901760
        %1721 = vmatmul.mubr.f32.gmra.mrb[0].mxu0 %v1720
        %v1722 = vpop.f32.mrb[0].mxu0
        %v1723 = vadd.f32 %v1546, %v1722
        %v1724 = vpop.f32.mrb[0].mxu0
        %1725 = vmatprep.mubr.f32.mxu0 0.0
        %v1726 = vand.u32 %v487, 4294901760
        %1727 = vmatmul.mubr.f32.gmra.mrb[0].mxu0 %v1726
        %v1728 = vpop.f32.mrb[0].mxu0
        %v1729 = vadd.f32 %v1552, %v1728
        %v1730 = vpop.f32.mrb[0].mxu0
        %1731 = vmatprep.mubr.f32.mxu0 0.0
        %v1732 = vand.u32 %v488, 4294901760
        %1733 = vmatmul.mubr.f32.gmra.mrb[0].mxu0 %v1732
        %v1734 = vpop.f32.mrb[0].mxu0
        %v1735 = vadd.f32 %v1558, %v1734
        %v1736 = vpop.f32.mrb[0].mxu0
        %1737 = vmatprep.mubr.f32.mxu0 0.0
        %v1738 = vand.u32 %v489, 4294901760
        %1739 = vmatmul.mubr.f32.gmra.mrb[0].mxu0 %v1738
        %v1740 = vpop.f32.mrb[0].mxu0
        %v1741 = vadd.f32 %v1564, %v1740
        %v1742 = vpop.f32.mrb[0].mxu0
        %1743 = vmatprep.mubr.f32.mxu0 0.0
        %v1744 = vand.u32 %v490, 4294901760
        %1745 = vmatmul.mubr.f32.gmra.mrb[0].mxu0 %v1744
        %v1746 = vpop.f32.mrb[0].mxu0
        %v1747 = vadd.f32 %v1570, %v1746
        %v1748 = vpop.f32.mrb[0].mxu0
        %1749 = vmatprep.mubr.f32.mxu0 0.0
        %v1750 = vand.u32 %v491, 4294901760
        %1751 = vmatmul.mubr.f32.gmra.mrb[0].mxu0 %v1750
        %v1752 = vpop.f32.mrb[0].mxu0
        %v1753 = vadd.f32 %v1576, %v1752
        %v1754 = vpop.f32.mrb[0].mxu0
        %1755 = vmatprep.mubr.f32.mxu0 0.0
        %v1756 = vand.u32 %v492, 4294901760
        %1757 = vmatmul.mubr.f32.gmra.mrb[0].mxu0 %v1756
        %v1758 = vpop.f32.mrb[0].mxu0
        %v1759 = vadd.f32 %v1582, %v1758
        %v1760 = vpop.f32.mrb[0].mxu0
        %1761 = vmatprep.mubr.f32.mxu0 0.0
        %v1762 = vand.u32 %v493, 4294901760
        %1763 = vmatmul.mubr.f32.gmra.mrb[0].mxu0 %v1762
        %v1764 = vpop.f32.mrb[0].mxu0
        %v1765 = vadd.f32 %v1588, %v1764
        %v1766 = vpop.f32.mrb[0].mxu0
        %1767 = vmatprep.mubr.f32.mxu0 0.0
        %v1768 = vand.u32 %v494, 4294901760
        %1769 = vmatmul.mubr.f32.gmra.mrb[0].mxu0 %v1768
        %v1770 = vpop.f32.mrb[0].mxu0
        %v1771 = vadd.f32 %v1594, %v1770
        %v1772 = vpop.f32.mrb[0].mxu0
        %1773 = vmatprep.mubr.f32.mxu0 0.0
        %v1774 = vand.u32 %v495, 4294901760
        %1775 = vmatmul.mubr.f32.gmra.mrb[0].mxu0 %v1774
        %v1776 = vpop.f32.mrb[0].mxu0
        %v1777 = vadd.f32 %v1600, %v1776
        %v1778 = vpop.f32.mrb[0].mxu0
        %1779 = vmatprep.mubr.f32.mxu0 0.0
        %v1780 = vand.u32 %v496, 4294901760
        %1781 = vmatmul.mubr.f32.gmra.mrb[0].mxu0 %v1780
        %v1782 = vpop.f32.mrb[0].mxu0
        %v1783 = vadd.f32 %v1606, %v1782
        %v1784 = vpop.f32.mrb[0].mxu0
        %1785 = vmatprep.mubr.f32.mxu0 0.0
        %v1786 = vand.u32 %v497, 4294901760
        %1787 = vmatmul.mubr.f32.gmra.mrb[0].mxu0 %v1786
        %v1788 = vpop.f32.mrb[0].mxu0
        %v1789 = vadd.f32 %v1612, %v1788
        %v1790 = vpop.f32.mrb[0].mxu0
        %1791 = vmatprep.mubr.f32.mxu0 0.0
        %v1792 = vand.u32 %v498, 4294901760
        %1793 = vmatmul.mubr.f32.gmra.mrb[0].mxu0 %v1792
        %v1794 = vpop.f32.mrb[0].mxu0
        %v1795 = vadd.f32 %v1618, %v1794
        %v1796 = vpop.f32.mrb[0].mxu0
        %1797 = vmatprep.mubr.f32.mxu0 0.0
        %v1798 = vand.u32 %v499, 4294901760
        %1799 = vmatmul.mubr.f32.gmra.mrb[0].mxu0 %v1798
        %v1800 = vpop.f32.mrb[0].mxu0
        %v1801 = vadd.f32 %v1624, %v1800
        %v1802 = vpop.f32.mrb[0].mxu0
        %1803 = vmatprep.mubr.f32.mxu0 0.0
        %v1804 = vand.u32 %v500, 4294901760
        %1805 = vmatmul.mubr.f32.gmra.mrb[0].mxu0 %v1804
        %v1806 = vpop.f32.mrb[0].mxu0
        %v1807 = vadd.f32 %v1630, %v1806
        %v1808 = vpop.f32.mrb[0].mxu0
        %1809 = vdwg.mxu0
        %vm1810 = vcmp.gt.f32.partialorder %v1717, 0.0
        %vm1811 = vcmp.gt.f32.partialorder %v1723, 0.0
        %vm1812 = vcmp.gt.f32.partialorder %v1729, 0.0
        %vm1813 = vcmp.gt.f32.partialorder %v1735, 0.0
        %vm1814 = vcmp.gt.f32.partialorder %v1741, 0.0
        %vm1815 = vcmp.gt.f32.partialorder %v1747, 0.0
        %vm1816 = vcmp.gt.f32.partialorder %v1753, 0.0
        %vm1817 = vcmp.gt.f32.partialorder %v1759, 0.0
        %vm1818 = vcmp.gt.f32.partialorder %v1765, 0.0
        %vm1819 = vcmp.gt.f32.partialorder %v1771, 0.0
        %vm1820 = vcmp.gt.f32.partialorder %v1777, 0.0
        %vm1821 = vcmp.gt.f32.partialorder %v1783, 0.0
        %vm1822 = vcmp.gt.f32.partialorder %v1789, 0.0
        %vm1823 = vcmp.gt.f32.partialorder %v1795, 0.0
        %vm1824 = vcmp.gt.f32.partialorder %v1801, 0.0
        %vm1825 = vcmp.gt.f32.partialorder %v1807, 0.0
        %v1826 = vmul.f32 %v1717, 0.01
        %v1827 = vmul.f32 %v1723, 0.01
        %v1828 = vmul.f32 %v1729, 0.01
        %v1829 = vmul.f32 %v1735, 0.01
        %v1830 = vmul.f32 %v1741, 0.01
        %v1831 = vmul.f32 %v1747, 0.01
        %v1832 = vmul.f32 %v1753, 0.01
        %v1833 = vmul.f32 %v1759, 0.01
        %v1834 = vmul.f32 %v1765, 0.01
        %v1835 = vmul.f32 %v1771, 0.01
        %v1836 = vmul.f32 %v1777, 0.01
        %v1837 = vmul.f32 %v1783, 0.01
        %v1838 = vmul.f32 %v1789, 0.01
        %v1839 = vmul.f32 %v1795, 0.01
        %v1840 = vmul.f32 %v1801, 0.01
        %v1841 = vmul.f32 %v1807, 0.01
        %v1842 = vsel %vm1810, %v1717, %v1826
        %v1843 = vsel %vm1811, %v1723, %v1827
        %v1844 = vsel %vm1812, %v1729, %v1828
        %v1845 = vsel %vm1813, %v1735, %v1829
        %v1846 = vsel %vm1814, %v1741, %v1830
        %v1847 = vsel %vm1815, %v1747, %v1831
        %v1848 = vsel %vm1816, %v1753, %v1832
        %v1849 = vsel %vm1817, %v1759, %v1833
        %v1850 = vsel %vm1818, %v1765, %v1834
        %v1851 = vsel %vm1819, %v1771, %v1835
        %v1852 = vsel %vm1820, %v1777, %v1836
        %v1853 = vsel %vm1821, %v1783, %v1837
        %v1854 = vsel %vm1822, %v1789, %v1838
        %v1855 = vsel %vm1823, %v1795, %v1839
        %v1856 = vsel %vm1824, %v1801, %v1840
        %v1857 = vsel %vm1825, %v1807, %v1841
        %v1858 = vld [vmem:[#allocation5] sm:$0xff]
        %v1859 = vld [vmem:[#allocation5 + $0x8] sm:$0xff]
        %v1860 = vld [vmem:[#allocation5 + $0x10] sm:$0xff]
        %v1861 = vld [vmem:[#allocation5 + $0x18] sm:$0xff]
        %v1862 = vld [vmem:[#allocation5 + $0x20] sm:$0xff]
        %v1863 = vld [vmem:[#allocation5 + $0x28] sm:$0xff]
        %v1864 = vld [vmem:[#allocation5 + $0x30] sm:$0xff]
        %v1865 = vld [vmem:[#allocation5 + $0x38] sm:$0xff]
        %v1866 = vld [vmem:[#allocation5 + $0x40] sm:$0xff]
        %v1867 = vld [vmem:[#allocation5 + $0x48] sm:$0xff]
        %v1868 = vld [vmem:[#allocation5 + $0x50] sm:$0xff]
        %v1869 = vld [vmem:[#allocation5 + $0x58] sm:$0xff]
        %v1870 = vld [vmem:[#allocation5 + $0x60] sm:$0xff]
        %v1871 = vld [vmem:[#allocation5 + $0x68] sm:$0xff]
        %v1872 = vld [vmem:[#allocation5 + $0x70] sm:$0xff]
        %v1873 = vld [vmem:[#allocation5 + $0x78] sm:$0xff]
        %v1874 = vld [vmem:[%s5] sm:$0x1]
        %v1876 = vlaneseq
        %v1877 = vshrl.u32 %v1876, 7
        %v1878 = vsub.s32 0, %v1877
        %v1879 = vrot.slane %v1874, %v1878
        %1881 = vmatprep.subr.mxu0 0.0
        %v1882 = vand.u32 %v1858, 4294901760
        %1883 = vmatpush1.msra.mxu0 %v1882
        %1884 = vmatprep.subr.mxu0 0.0
        %v1885 = vand.u32 %v1859, 4294901760
        %1886 = vmatpush1.msra.mxu0 %v1885
        %1887 = vmatprep.subr.mxu0 0.0
        %v1888 = vand.u32 %v1860, 4294901760
        %1889 = vmatpush1.msra.mxu0 %v1888
        %1890 = vmatprep.subr.mxu0 0.0
        %v1891 = vand.u32 %v1861, 4294901760
        %1892 = vmatpush1.msra.mxu0 %v1891
        %1893 = vmatprep.subr.mxu0 0.0
        %v1894 = vand.u32 %v1862, 4294901760
        %1895 = vmatpush1.msra.mxu0 %v1894
        %1896 = vmatprep.subr.mxu0 0.0
        %v1897 = vand.u32 %v1863, 4294901760
        %1898 = vmatpush1.msra.mxu0 %v1897
        %1899 = vmatprep.subr.mxu0 0.0
        %v1900 = vand.u32 %v1864, 4294901760
        %1901 = vmatpush1.msra.mxu0 %v1900
        %1902 = vmatprep.subr.mxu0 0.0
        %v1903 = vand.u32 %v1865, 4294901760
        %1904 = vmatpush1.msra.mxu0 %v1903
        %1905 = vmatprep.subr.mxu0 0.0
        %v1906 = vand.u32 %v1866, 4294901760
        %1907 = vmatpush1.msra.mxu0 %v1906
        %1908 = vmatprep.subr.mxu0 0.0
        %v1909 = vand.u32 %v1867, 4294901760
        %1910 = vmatpush1.msra.mxu0 %v1909
        %1911 = vmatprep.subr.mxu0 0.0
        %v1912 = vand.u32 %v1868, 4294901760
        %1913 = vmatpush1.msra.mxu0 %v1912
        %1914 = vmatprep.subr.mxu0 0.0
        %v1915 = vand.u32 %v1869, 4294901760
        %1916 = vmatpush1.msra.mxu0 %v1915
        %1917 = vmatprep.subr.mxu0 0.0
        %v1918 = vand.u32 %v1870, 4294901760
        %1919 = vmatpush1.msra.mxu0 %v1918
        %1920 = vmatprep.subr.mxu0 0.0
        %v1921 = vand.u32 %v1871, 4294901760
        %1922 = vmatpush1.msra.mxu0 %v1921
        %1923 = vmatprep.subr.mxu0 0.0
        %v1924 = vand.u32 %v1872, 4294901760
        %1925 = vmatpush1.msra.mxu0 %v1924
        %1926 = vmatprep.subr.mxu0 0.0
        %v1927 = vand.u32 %v1873, 4294901760
        %1928 = vmatpush1.msra.mxu0 %v1927
        %1929 = vmatprep.subr.mxu0 0.0
        %1930 = vmatpush1.msra.mxu0 0.0
        %1931 = vmatprep.subr.mxu0 0.0
        %1932 = vmatpush1.msra.mxu0 0.0
        %1933 = vmatprep.subr.mxu0 0.0
        %1934 = vmatpush1.msra.mxu0 0.0
        %1935 = vmatprep.subr.mxu0 0.0
        %1936 = vmatpush1.msra.mxu0 0.0
        %1937 = vmatprep.subr.mxu0 0.0
        %1938 = vmatpush1.msra.mxu0 0.0
        %1939 = vmatprep.subr.mxu0 0.0
        %1940 = vmatpush1.msra.mxu0 0.0
        %1941 = vmatprep.subr.mxu0 0.0
        %1942 = vmatpush1.msra.mxu0 0.0
        %1943 = vmatprep.subr.mxu0 0.0
        %1944 = vmatpush1.msra.mxu0 0.0
        %1945 = vmatprep.subr.mxu0 0.0
        %1946 = vmatpush1.msra.mxu0 0.0
        %1947 = vmatprep.subr.mxu0 0.0
        %1948 = vmatpush1.msra.mxu0 0.0
        %1949 = vmatprep.subr.mxu0 0.0
        %1950 = vmatpush1.msra.mxu0 0.0
        %1951 = vmatprep.subr.mxu0 0.0
        %1952 = vmatpush1.msra.mxu0 0.0
        %1953 = vmatprep.subr.mxu0 0.0
        %1954 = vmatpush1.msra.mxu0 0.0
        %1955 = vmatprep.subr.mxu0 0.0
        %1956 = vmatpush1.msra.mxu0 0.0
        %1957 = vmatprep.subr.mxu0 0.0
        %1958 = vmatpush1.msra.mxu0 0.0
        %1959 = vmatprep.subr.mxu0 0.0
        %1960 = vmatpush1.msra.mxu0 0.0
        %1961 = vmatprep.mubr.f32.mxu0 0.0
        %v1962 = vand.u32 %v1842, 4294901760
        %v1963 = vsub.f32 %v1842, %v1962
        %v1964 = vand.u32 %v1963, 4294901760
        %v1965 = vsub.f32 %v1963, %v1964
        %v1966 = vand.u32 %v1965, 4294901760
        %1967 = vmatmul.mubr.f32.gmra.mrb[0].mxu0 %v1966
        %v1968 = vpop.f32.mrb[0].mxu0
        %v1969 = vadd.f32 %v1879, %v1968
        %v1970 = vpop.f32.mrb[0].mxu0
        %1971 = vmatprep.mubr.f32.mxu0 0.0
        %v1972 = vand.u32 %v1843, 4294901760
        %v1973 = vsub.f32 %v1843, %v1972
        %v1974 = vand.u32 %v1973, 4294901760
        %v1975 = vsub.f32 %v1973, %v1974
        %v1976 = vand.u32 %v1975, 4294901760
        %1977 = vmatmul.mubr.f32.gmra.mrb[0].mxu0 %v1976
        %v1978 = vpop.f32.mrb[0].mxu0
        %v1979 = vadd.f32 %v1879, %v1978
        %v1980 = vpop.f32.mrb[0].mxu0
        %1981 = vmatprep.mubr.f32.mxu0 0.0
        %v1982 = vand.u32 %v1844, 4294901760
        %v1983 = vsub.f32 %v1844, %v1982
        %v1984 = vand.u32 %v1983, 4294901760
        %v1985 = vsub.f32 %v1983, %v1984
        %v1986 = vand.u32 %v1985, 4294901760
        %1987 = vmatmul.mubr.f32.gmra.mrb[0].mxu0 %v1986
        %v1988 = vpop.f32.mrb[0].mxu0
        %v1989 = vadd.f32 %v1879, %v1988
        %v1990 = vpop.f32.mrb[0].mxu0
        %1991 = vmatprep.mubr.f32.mxu0 0.0
        %v1992 = vand.u32 %v1845, 4294901760
        %v1993 = vsub.f32 %v1845, %v1992
        %v1994 = vand.u32 %v1993, 4294901760
        %v1995 = vsub.f32 %v1993, %v1994
        %v1996 = vand.u32 %v1995, 4294901760
        %1997 = vmatmul.mubr.f32.gmra.mrb[0].mxu0 %v1996
        %v1998 = vpop.f32.mrb[0].mxu0
        %v1999 = vadd.f32 %v1879, %v1998
        %v2000 = vpop.f32.mrb[0].mxu0
        %2001 = vmatprep.mubr.f32.mxu0 0.0
        %v2002 = vand.u32 %v1846, 4294901760
        %v2003 = vsub.f32 %v1846, %v2002
        %v2004 = vand.u32 %v2003, 4294901760
        %v2005 = vsub.f32 %v2003, %v2004
        %v2006 = vand.u32 %v2005, 4294901760
        %2007 = vmatmul.mubr.f32.gmra.mrb[0].mxu0 %v2006
        %v2008 = vpop.f32.mrb[0].mxu0
        %v2009 = vadd.f32 %v1879, %v2008
        %v2010 = vpop.f32.mrb[0].mxu0
        %2011 = vmatprep.mubr.f32.mxu0 0.0
        %v2012 = vand.u32 %v1847, 4294901760
        %v2013 = vsub.f32 %v1847, %v2012
        %v2014 = vand.u32 %v2013, 4294901760
        %v2015 = vsub.f32 %v2013, %v2014
        %v2016 = vand.u32 %v2015, 4294901760
        %2017 = vmatmul.mubr.f32.gmra.mrb[0].mxu0 %v2016
        %v2018 = vpop.f32.mrb[0].mxu0
        %v2019 = vadd.f32 %v1879, %v2018
        %v2020 = vpop.f32.mrb[0].mxu0
        %2021 = vmatprep.mubr.f32.mxu0 0.0
        %v2022 = vand.u32 %v1848, 4294901760
        %v2023 = vsub.f32 %v1848, %v2022
        %v2024 = vand.u32 %v2023, 4294901760
        %v2025 = vsub.f32 %v2023, %v2024
        %v2026 = vand.u32 %v2025, 4294901760
        %2027 = vmatmul.mubr.f32.gmra.mrb[0].mxu0 %v2026
        %v2028 = vpop.f32.mrb[0].mxu0
        %v2029 = vadd.f32 %v1879, %v2028
        %v2030 = vpop.f32.mrb[0].mxu0
        %2031 = vmatprep.mubr.f32.mxu0 0.0
        %v2032 = vand.u32 %v1849, 4294901760
        %v2033 = vsub.f32 %v1849, %v2032
        %v2034 = vand.u32 %v2033, 4294901760
        %v2035 = vsub.f32 %v2033, %v2034
        %v2036 = vand.u32 %v2035, 4294901760
        %2037 = vmatmul.mubr.f32.gmra.mrb[0].mxu0 %v2036
        %v2038 = vpop.f32.mrb[0].mxu0
        %v2039 = vadd.f32 %v1879, %v2038
        %v2040 = vpop.f32.mrb[0].mxu0
        %2041 = vmatprep.mubr.f32.mxu0 0.0
        %v2042 = vand.u32 %v1850, 4294901760
        %v2043 = vsub.f32 %v1850, %v2042
        %v2044 = vand.u32 %v2043, 4294901760
        %v2045 = vsub.f32 %v2043, %v2044
        %v2046 = vand.u32 %v2045, 4294901760
        %2047 = vmatmul.mubr.f32.gmra.mrb[0].mxu0 %v2046
        %v2048 = vpop.f32.mrb[0].mxu0
        %v2049 = vadd.f32 %v1879, %v2048
        %v2050 = vpop.f32.mrb[0].mxu0
        %2051 = vmatprep.mubr.f32.mxu0 0.0
        %v2052 = vand.u32 %v1851, 4294901760
        %v2053 = vsub.f32 %v1851, %v2052
        %v2054 = vand.u32 %v2053, 4294901760
        %v2055 = vsub.f32 %v2053, %v2054
        %v2056 = vand.u32 %v2055, 4294901760
        %2057 = vmatmul.mubr.f32.gmra.mrb[0].mxu0 %v2056
        %v2058 = vpop.f32.mrb[0].mxu0
        %v2059 = vadd.f32 %v1879, %v2058
        %v2060 = vpop.f32.mrb[0].mxu0
        %2061 = vmatprep.mubr.f32.mxu0 0.0
        %v2062 = vand.u32 %v1852, 4294901760
        %v2063 = vsub.f32 %v1852, %v2062
        %v2064 = vand.u32 %v2063, 4294901760
        %v2065 = vsub.f32 %v2063, %v2064
        %v2066 = vand.u32 %v2065, 4294901760
        %2067 = vmatmul.mubr.f32.gmra.mrb[0].mxu0 %v2066
        %v2068 = vpop.f32.mrb[0].mxu0
        %v2069 = vadd.f32 %v1879, %v2068
        %v2070 = vpop.f32.mrb[0].mxu0
        %2071 = vmatprep.mubr.f32.mxu0 0.0
        %v2072 = vand.u32 %v1853, 4294901760
        %v2073 = vsub.f32 %v1853, %v2072
        %v2074 = vand.u32 %v2073, 4294901760
        %v2075 = vsub.f32 %v2073, %v2074
        %v2076 = vand.u32 %v2075, 4294901760
        %2077 = vmatmul.mubr.f32.gmra.mrb[0].mxu0 %v2076
        %v2078 = vpop.f32.mrb[0].mxu0
        %v2079 = vadd.f32 %v1879, %v2078
        %v2080 = vpop.f32.mrb[0].mxu0
        %2081 = vmatprep.mubr.f32.mxu0 0.0
        %v2082 = vand.u32 %v1854, 4294901760
        %v2083 = vsub.f32 %v1854, %v2082
        %v2084 = vand.u32 %v2083, 4294901760
        %v2085 = vsub.f32 %v2083, %v2084
        %v2086 = vand.u32 %v2085, 4294901760
        %2087 = vmatmul.mubr.f32.gmra.mrb[0].mxu0 %v2086
        %v2088 = vpop.f32.mrb[0].mxu0
        %v2089 = vadd.f32 %v1879, %v2088
        %v2090 = vpop.f32.mrb[0].mxu0
        %2091 = vmatprep.mubr.f32.mxu0 0.0
        %v2092 = vand.u32 %v1855, 4294901760
        %v2093 = vsub.f32 %v1855, %v2092
        %v2094 = vand.u32 %v2093, 4294901760
        %v2095 = vsub.f32 %v2093, %v2094
        %v2096 = vand.u32 %v2095, 4294901760
        %2097 = vmatmul.mubr.f32.gmra.mrb[0].mxu0 %v2096
        %v2098 = vpop.f32.mrb[0].mxu0
        %v2099 = vadd.f32 %v1879, %v2098
        %v2100 = vpop.f32.mrb[0].mxu0
        %2101 = vmatprep.mubr.f32.mxu0 0.0
        %v2102 = vand.u32 %v1856, 4294901760
        %v2103 = vsub.f32 %v1856, %v2102
        %v2104 = vand.u32 %v2103, 4294901760
        %v2105 = vsub.f32 %v2103, %v2104
        %v2106 = vand.u32 %v2105, 4294901760
        %2107 = vmatmul.mubr.f32.gmra.mrb[0].mxu0 %v2106
        %v2108 = vpop.f32.mrb[0].mxu0
        %v2109 = vadd.f32 %v1879, %v2108
        %v2110 = vpop.f32.mrb[0].mxu0
        %2111 = vmatprep.mubr.f32.mxu0 0.0
        %v2112 = vand.u32 %v1857, 4294901760
        %v2113 = vsub.f32 %v1857, %v2112
        %v2114 = vand.u32 %v2113, 4294901760
        %v2115 = vsub.f32 %v2113, %v2114
        %v2116 = vand.u32 %v2115, 4294901760
        %2117 = vmatmul.mubr.f32.gmra.mrb[0].mxu0 %v2116
        %v2118 = vpop.f32.mrb[0].mxu0
        %v2119 = vadd.f32 %v1879, %v2118
        %v2120 = vpop.f32.mrb[0].mxu0
        %2121 = vdwg.mxu0
        %2122 = vmatprep.subr.mxu0 0.0
        %v2123 = vand.u32 %v1858, 4294901760
        %v2124 = vsub.f32 %v1858, %v2123
        %v2125 = vand.u32 %v2124, 4294901760
        %v2126 = vsub.f32 %v2124, %v2125
        %v2127 = vand.u32 %v2126, 4294901760
        %2128 = vmatpush1.msra.mxu0 %v2127
        %2129 = vmatprep.subr.mxu0 0.0
        %v2130 = vand.u32 %v1859, 4294901760
        %v2131 = vsub.f32 %v1859, %v2130
        %v2132 = vand.u32 %v2131, 4294901760
        %v2133 = vsub.f32 %v2131, %v2132
        %v2134 = vand.u32 %v2133, 4294901760
        %2135 = vmatpush1.msra.mxu0 %v2134
        %2136 = vmatprep.subr.mxu0 0.0
        %v2137 = vand.u32 %v1860, 4294901760
        %v2138 = vsub.f32 %v1860, %v2137
        %v2139 = vand.u32 %v2138, 4294901760
        %v2140 = vsub.f32 %v2138, %v2139
        %v2141 = vand.u32 %v2140, 4294901760
        %2142 = vmatpush1.msra.mxu0 %v2141
        %2143 = vmatprep.subr.mxu0 0.0
        %v2144 = vand.u32 %v1861, 4294901760
        %v2145 = vsub.f32 %v1861, %v2144
        %v2146 = vand.u32 %v2145, 4294901760
        %v2147 = vsub.f32 %v2145, %v2146
        %v2148 = vand.u32 %v2147, 4294901760
        %2149 = vmatpush1.msra.mxu0 %v2148
        %2150 = vmatprep.subr.mxu0 0.0
        %v2151 = vand.u32 %v1862, 4294901760
        %v2152 = vsub.f32 %v1862, %v2151
        %v2153 = vand.u32 %v2152, 4294901760
        %v2154 = vsub.f32 %v2152, %v2153
        %v2155 = vand.u32 %v2154, 4294901760
        %2156 = vmatpush1.msra.mxu0 %v2155
        %2157 = vmatprep.subr.mxu0 0.0
        %v2158 = vand.u32 %v1863, 4294901760
        %v2159 = vsub.f32 %v1863, %v2158
        %v2160 = vand.u32 %v2159, 4294901760
        %v2161 = vsub.f32 %v2159, %v2160
        %v2162 = vand.u32 %v2161, 4294901760
        %2163 = vmatpush1.msra.mxu0 %v2162
        %2164 = vmatprep.subr.mxu0 0.0
        %v2165 = vand.u32 %v1864, 4294901760
        %v2166 = vsub.f32 %v1864, %v2165
        %v2167 = vand.u32 %v2166, 4294901760
        %v2168 = vsub.f32 %v2166, %v2167
        %v2169 = vand.u32 %v2168, 4294901760
        %2170 = vmatpush1.msra.mxu0 %v2169
        %2171 = vmatprep.subr.mxu0 0.0
        %v2172 = vand.u32 %v1865, 4294901760
        %v2173 = vsub.f32 %v1865, %v2172
        %v2174 = vand.u32 %v2173, 4294901760
        %v2175 = vsub.f32 %v2173, %v2174
        %v2176 = vand.u32 %v2175, 4294901760
        %2177 = vmatpush1.msra.mxu0 %v2176
        %2178 = vmatprep.subr.mxu0 0.0
        %v2179 = vand.u32 %v1866, 4294901760
        %v2180 = vsub.f32 %v1866, %v2179
        %v2181 = vand.u32 %v2180, 4294901760
        %v2182 = vsub.f32 %v2180, %v2181
        %v2183 = vand.u32 %v2182, 4294901760
        %2184 = vmatpush1.msra.mxu0 %v2183
        %2185 = vmatprep.subr.mxu0 0.0
        %v2186 = vand.u32 %v1867, 4294901760
        %v2187 = vsub.f32 %v1867, %v2186
        %v2188 = vand.u32 %v2187, 4294901760
        %v2189 = vsub.f32 %v2187, %v2188
        %v2190 = vand.u32 %v2189, 4294901760
        %2191 = vmatpush1.msra.mxu0 %v2190
        %2192 = vmatprep.subr.mxu0 0.0
        %v2193 = vand.u32 %v1868, 4294901760
        %v2194 = vsub.f32 %v1868, %v2193
        %v2195 = vand.u32 %v2194, 4294901760
        %v2196 = vsub.f32 %v2194, %v2195
        %v2197 = vand.u32 %v2196, 4294901760
        %2198 = vmatpush1.msra.mxu0 %v2197
        %2199 = vmatprep.subr.mxu0 0.0
        %v2200 = vand.u32 %v1869, 4294901760
        %v2201 = vsub.f32 %v1869, %v2200
        %v2202 = vand.u32 %v2201, 4294901760
        %v2203 = vsub.f32 %v2201, %v2202
        %v2204 = vand.u32 %v2203, 4294901760
        %2205 = vmatpush1.msra.mxu0 %v2204
        %2206 = vmatprep.subr.mxu0 0.0
        %v2207 = vand.u32 %v1870, 4294901760
        %v2208 = vsub.f32 %v1870, %v2207
        %v2209 = vand.u32 %v2208, 4294901760
        %v2210 = vsub.f32 %v2208, %v2209
        %v2211 = vand.u32 %v2210, 4294901760
        %2212 = vmatpush1.msra.mxu0 %v2211
        %2213 = vmatprep.subr.mxu0 0.0
        %v2214 = vand.u32 %v1871, 4294901760
        %v2215 = vsub.f32 %v1871, %v2214
        %v2216 = vand.u32 %v2215, 4294901760
        %v2217 = vsub.f32 %v2215, %v2216
        %v2218 = vand.u32 %v2217, 4294901760
        %2219 = vmatpush1.msra.mxu0 %v2218
        %2220 = vmatprep.subr.mxu0 0.0
        %v2221 = vand.u32 %v1872, 4294901760
        %v2222 = vsub.f32 %v1872, %v2221
        %v2223 = vand.u32 %v2222, 4294901760
        %v2224 = vsub.f32 %v2222, %v2223
        %v2225 = vand.u32 %v2224, 4294901760
        %2226 = vmatpush1.msra.mxu0 %v2225
        %2227 = vmatprep.subr.mxu0 0.0
        %v2228 = vand.u32 %v1873, 4294901760
        %v2229 = vsub.f32 %v1873, %v2228
        %v2230 = vand.u32 %v2229, 4294901760
        %v2231 = vsub.f32 %v2229, %v2230
        %v2232 = vand.u32 %v2231, 4294901760
        %2233 = vmatpush1.msra.mxu0 %v2232
        %2234 = vmatprep.subr.mxu0 0.0
        %2235 = vmatpush1.msra.mxu0 0.0
        %2236 = vmatprep.subr.mxu0 0.0
        %2237 = vmatpush1.msra.mxu0 0.0
        %2238 = vmatprep.subr.mxu0 0.0
        %2239 = vmatpush1.msra.mxu0 0.0
        %2240 = vmatprep.subr.mxu0 0.0
        %2241 = vmatpush1.msra.mxu0 0.0
        %2242 = vmatprep.subr.mxu0 0.0
        %2243 = vmatpush1.msra.mxu0 0.0
        %2244 = vmatprep.subr.mxu0 0.0
        %2245 = vmatpush1.msra.mxu0 0.0
        %2246 = vmatprep.subr.mxu0 0.0
        %2247 = vmatpush1.msra.mxu0 0.0
        %2248 = vmatprep.subr.mxu0 0.0
        %2249 = vmatpush1.msra.mxu0 0.0
        %2250 = vmatprep.subr.mxu0 0.0
        %2251 = vmatpush1.msra.mxu0 0.0
        %2252 = vmatprep.subr.mxu0 0.0
        %2253 = vmatpush1.msra.mxu0 0.0
        %2254 = vmatprep.subr.mxu0 0.0
        %2255 = vmatpush1.msra.mxu0 0.0
        %2256 = vmatprep.subr.mxu0 0.0
        %2257 = vmatpush1.msra.mxu0 0.0
        %2258 = vmatprep.subr.mxu0 0.0
        %2259 = vmatpush1.msra.mxu0 0.0
        %2260 = vmatprep.subr.mxu0 0.0
        %2261 = vmatpush1.msra.mxu0 0.0
        %2262 = vmatprep.subr.mxu0 0.0
        %2263 = vmatpush1.msra.mxu0 0.0
        %2264 = vmatprep.subr.mxu0 0.0
        %2265 = vmatpush1.msra.mxu0 0.0
        %2266 = vmatprep.mubr.f32.mxu0 0.0
        %v2267 = vand.u32 %v1842, 4294901760
        %2268 = vmatmul.mubr.f32.gmra.mrb[0].mxu0 %v2267
        %v2269 = vpop.f32.mrb[0].mxu0
        %v2270 = vadd.f32 %v1969, %v2269
        %v2271 = vpop.f32.mrb[0].mxu0
        %2272 = vmatprep.mubr.f32.mxu0 0.0
        %v2273 = vand.u32 %v1843, 4294901760
        %2274 = vmatmul.mubr.f32.gmra.mrb[0].mxu0 %v2273
        %v2275 = vpop.f32.mrb[0].mxu0
        %v2276 = vadd.f32 %v1979, %v2275
        %v2277 = vpop.f32.mrb[0].mxu0
        %2278 = vmatprep.mubr.f32.mxu0 0.0
        %v2279 = vand.u32 %v1844, 4294901760
        %2280 = vmatmul.mubr.f32.gmra.mrb[0].mxu0 %v2279
        %v2281 = vpop.f32.mrb[0].mxu0
        %v2282 = vadd.f32 %v1989, %v2281
        %v2283 = vpop.f32.mrb[0].mxu0
        %2284 = vmatprep.mubr.f32.mxu0 0.0
        %v2285 = vand.u32 %v1845, 4294901760
        %2286 = vmatmul.mubr.f32.gmra.mrb[0].mxu0 %v2285
        %v2287 = vpop.f32.mrb[0].mxu0
        %v2288 = vadd.f32 %v1999, %v2287
        %v2289 = vpop.f32.mrb[0].mxu0
        %2290 = vmatprep.mubr.f32.mxu0 0.0
        %v2291 = vand.u32 %v1846, 4294901760
        %2292 = vmatmul.mubr.f32.gmra.mrb[0].mxu0 %v2291
        %v2293 = vpop.f32.mrb[0].mxu0
        %v2294 = vadd.f32 %v2009, %v2293
        %v2295 = vpop.f32.mrb[0].mxu0
        %2296 = vmatprep.mubr.f32.mxu0 0.0
        %v2297 = vand.u32 %v1847, 4294901760
        %2298 = vmatmul.mubr.f32.gmra.mrb[0].mxu0 %v2297
        %v2299 = vpop.f32.mrb[0].mxu0
        %v2300 = vadd.f32 %v2019, %v2299
        %v2301 = vpop.f32.mrb[0].mxu0
        %2302 = vmatprep.mubr.f32.mxu0 0.0
        %v2303 = vand.u32 %v1848, 4294901760
        %2304 = vmatmul.mubr.f32.gmra.mrb[0].mxu0 %v2303
        %v2305 = vpop.f32.mrb[0].mxu0
        %v2306 = vadd.f32 %v2029, %v2305
        %v2307 = vpop.f32.mrb[0].mxu0
        %2308 = vmatprep.mubr.f32.mxu0 0.0
        %v2309 = vand.u32 %v1849, 4294901760
        %2310 = vmatmul.mubr.f32.gmra.mrb[0].mxu0 %v2309
        %v2311 = vpop.f32.mrb[0].mxu0
        %v2312 = vadd.f32 %v2039, %v2311
        %v2313 = vpop.f32.mrb[0].mxu0
        %2314 = vmatprep.mubr.f32.mxu0 0.0
        %v2315 = vand.u32 %v1850, 4294901760
        %2316 = vmatmul.mubr.f32.gmra.mrb[0].mxu0 %v2315
        %v2317 = vpop.f32.mrb[0].mxu0
        %v2318 = vadd.f32 %v2049, %v2317
        %v2319 = vpop.f32.mrb[0].mxu0
        %2320 = vmatprep.mubr.f32.mxu0 0.0
        %v2321 = vand.u32 %v1851, 4294901760
        %2322 = vmatmul.mubr.f32.gmra.mrb[0].mxu0 %v2321
        %v2323 = vpop.f32.mrb[0].mxu0
        %v2324 = vadd.f32 %v2059, %v2323
        %v2325 = vpop.f32.mrb[0].mxu0
        %2326 = vmatprep.mubr.f32.mxu0 0.0
        %v2327 = vand.u32 %v1852, 4294901760
        %2328 = vmatmul.mubr.f32.gmra.mrb[0].mxu0 %v2327
        %v2329 = vpop.f32.mrb[0].mxu0
        %v2330 = vadd.f32 %v2069, %v2329
        %v2331 = vpop.f32.mrb[0].mxu0
        %2332 = vmatprep.mubr.f32.mxu0 0.0
        %v2333 = vand.u32 %v1853, 4294901760
        %2334 = vmatmul.mubr.f32.gmra.mrb[0].mxu0 %v2333
        %v2335 = vpop.f32.mrb[0].mxu0
        %v2336 = vadd.f32 %v2079, %v2335
        %v2337 = vpop.f32.mrb[0].mxu0
        %2338 = vmatprep.mubr.f32.mxu0 0.0
        %v2339 = vand.u32 %v1854, 4294901760
        %2340 = vmatmul.mubr.f32.gmra.mrb[0].mxu0 %v2339
        %v2341 = vpop.f32.mrb[0].mxu0
        %v2342 = vadd.f32 %v2089, %v2341
        %v2343 = vpop.f32.mrb[0].mxu0
        %2344 = vmatprep.mubr.f32.mxu0 0.0
        %v2345 = vand.u32 %v1855, 4294901760
        %2346 = vmatmul.mubr.f32.gmra.mrb[0].mxu0 %v2345
        %v2347 = vpop.f32.mrb[0].mxu0
        %v2348 = vadd.f32 %v2099, %v2347
        %v2349 = vpop.f32.mrb[0].mxu0
        %2350 = vmatprep.mubr.f32.mxu0 0.0
        %v2351 = vand.u32 %v1856, 4294901760
        %2352 = vmatmul.mubr.f32.gmra.mrb[0].mxu0 %v2351
        %v2353 = vpop.f32.mrb[0].mxu0
        %v2354 = vadd.f32 %v2109, %v2353
        %v2355 = vpop.f32.mrb[0].mxu0
        %2356 = vmatprep.mubr.f32.mxu0 0.0
        %v2357 = vand.u32 %v1857, 4294901760
        %2358 = vmatmul.mubr.f32.gmra.mrb[0].mxu0 %v2357
        %v2359 = vpop.f32.mrb[0].mxu0
        %v2360 = vadd.f32 %v2119, %v2359
        %v2361 = vpop.f32.mrb[0].mxu0
        %2362 = vdwg.mxu0
        %2363 = vmatprep.subr.mxu0 0.0
        %v2364 = vand.u32 %v1858, 4294901760
        %v2365 = vsub.f32 %v1858, %v2364
        %2366 = vmatpush1.msra.mxu0 %v2365
        %2367 = vmatprep.subr.mxu0 0.0
        %v2368 = vand.u32 %v1859, 4294901760
        %v2369 = vsub.f32 %v1859, %v2368
        %2370 = vmatpush1.msra.mxu0 %v2369
        %2371 = vmatprep.subr.mxu0 0.0
        %v2372 = vand.u32 %v1860, 4294901760
        %v2373 = vsub.f32 %v1860, %v2372
        %2374 = vmatpush1.msra.mxu0 %v2373
        %2375 = vmatprep.subr.mxu0 0.0
        %v2376 = vand.u32 %v1861, 4294901760
        %v2377 = vsub.f32 %v1861, %v2376
        %2378 = vmatpush1.msra.mxu0 %v2377
        %2379 = vmatprep.subr.mxu0 0.0
        %v2380 = vand.u32 %v1862, 4294901760
        %v2381 = vsub.f32 %v1862, %v2380
        %2382 = vmatpush1.msra.mxu0 %v2381
        %2383 = vmatprep.subr.mxu0 0.0
        %v2384 = vand.u32 %v1863, 4294901760
        %v2385 = vsub.f32 %v1863, %v2384
        %2386 = vmatpush1.msra.mxu0 %v2385
        %2387 = vmatprep.subr.mxu0 0.0
        %v2388 = vand.u32 %v1864, 4294901760
        %v2389 = vsub.f32 %v1864, %v2388
        %2390 = vmatpush1.msra.mxu0 %v2389
        %2391 = vmatprep.subr.mxu0 0.0
        %v2392 = vand.u32 %v1865, 4294901760
        %v2393 = vsub.f32 %v1865, %v2392
        %2394 = vmatpush1.msra.mxu0 %v2393
        %2395 = vmatprep.subr.mxu0 0.0
        %v2396 = vand.u32 %v1866, 4294901760
        %v2397 = vsub.f32 %v1866, %v2396
        %2398 = vmatpush1.msra.mxu0 %v2397
        %2399 = vmatprep.subr.mxu0 0.0
        %v2400 = vand.u32 %v1867, 4294901760
        %v2401 = vsub.f32 %v1867, %v2400
        %2402 = vmatpush1.msra.mxu0 %v2401
        %2403 = vmatprep.subr.mxu0 0.0
        %v2404 = vand.u32 %v1868, 4294901760
        %v2405 = vsub.f32 %v1868, %v2404
        %2406 = vmatpush1.msra.mxu0 %v2405
        %2407 = vmatprep.subr.mxu0 0.0
        %v2408 = vand.u32 %v1869, 4294901760
        %v2409 = vsub.f32 %v1869, %v2408
        %2410 = vmatpush1.msra.mxu0 %v2409
        %2411 = vmatprep.subr.mxu0 0.0
        %v2412 = vand.u32 %v1870, 4294901760
        %v2413 = vsub.f32 %v1870, %v2412
        %2414 = vmatpush1.msra.mxu0 %v2413
        %2415 = vmatprep.subr.mxu0 0.0
        %v2416 = vand.u32 %v1871, 4294901760
        %v2417 = vsub.f32 %v1871, %v2416
        %2418 = vmatpush1.msra.mxu0 %v2417
        %2419 = vmatprep.subr.mxu0 0.0
        %v2420 = vand.u32 %v1872, 4294901760
        %v2421 = vsub.f32 %v1872, %v2420
        %2422 = vmatpush1.msra.mxu0 %v2421
        %2423 = vmatprep.subr.mxu0 0.0
        %v2424 = vand.u32 %v1873, 4294901760
        %v2425 = vsub.f32 %v1873, %v2424
        %2426 = vmatpush1.msra.mxu0 %v2425
        %2427 = vmatprep.subr.mxu0 0.0
        %2428 = vmatpush1.msra.mxu0 0.0
        %2429 = vmatprep.subr.mxu0 0.0
        %2430 = vmatpush1.msra.mxu0 0.0
        %2431 = vmatprep.subr.mxu0 0.0
        %2432 = vmatpush1.msra.mxu0 0.0
        %2433 = vmatprep.subr.mxu0 0.0
        %2434 = vmatpush1.msra.mxu0 0.0
        %2435 = vmatprep.subr.mxu0 0.0
        %2436 = vmatpush1.msra.mxu0 0.0
        %2437 = vmatprep.subr.mxu0 0.0
        %2438 = vmatpush1.msra.mxu0 0.0
        %2439 = vmatprep.subr.mxu0 0.0
        %2440 = vmatpush1.msra.mxu0 0.0
        %2441 = vmatprep.subr.mxu0 0.0
        %2442 = vmatpush1.msra.mxu0 0.0
        %2443 = vmatprep.subr.mxu0 0.0
        %2444 = vmatpush1.msra.mxu0 0.0
        %2445 = vmatprep.subr.mxu0 0.0
        %2446 = vmatpush1.msra.mxu0 0.0
        %2447 = vmatprep.subr.mxu0 0.0
        %2448 = vmatpush1.msra.mxu0 0.0
        %2449 = vmatprep.subr.mxu0 0.0
        %2450 = vmatpush1.msra.mxu0 0.0
        %2451 = vmatprep.subr.mxu0 0.0
        %2452 = vmatpush1.msra.mxu0 0.0
        %2453 = vmatprep.subr.mxu0 0.0
        %2454 = vmatpush1.msra.mxu0 0.0
        %2455 = vmatprep.subr.mxu0 0.0
        %2456 = vmatpush1.msra.mxu0 0.0
        %2457 = vmatprep.subr.mxu0 0.0
        %2458 = vmatpush1.msra.mxu0 0.0
        %2459 = vmatprep.mubr.f32.mxu0 0.0
        %v2460 = vand.u32 %v1842, 4294901760
        %v2461 = vsub.f32 %v1842, %v2460
        %2462 = vmatmul.mubr.f32.gmra.mrb[0].mxu0 %v2461
        %v2463 = vpop.f32.mrb[0].mxu0
        %v2464 = vadd.f32 %v2270, %v2463
        %v2465 = vpop.f32.mrb[0].mxu0
        %2466 = vmatprep.mubr.f32.mxu0 0.0
        %v2467 = vand.u32 %v1843, 4294901760
        %v2468 = vsub.f32 %v1843, %v2467
        %2469 = vmatmul.mubr.f32.gmra.mrb[0].mxu0 %v2468
        %v2470 = vpop.f32.mrb[0].mxu0
        %v2471 = vadd.f32 %v2276, %v2470
        %v2472 = vpop.f32.mrb[0].mxu0
        %2473 = vmatprep.mubr.f32.mxu0 0.0
        %v2474 = vand.u32 %v1844, 4294901760
        %v2475 = vsub.f32 %v1844, %v2474
        %2476 = vmatmul.mubr.f32.gmra.mrb[0].mxu0 %v2475
        %v2477 = vpop.f32.mrb[0].mxu0
        %v2478 = vadd.f32 %v2282, %v2477
        %v2479 = vpop.f32.mrb[0].mxu0
        %2480 = vmatprep.mubr.f32.mxu0 0.0
        %v2481 = vand.u32 %v1845, 4294901760
        %v2482 = vsub.f32 %v1845, %v2481
        %2483 = vmatmul.mubr.f32.gmra.mrb[0].mxu0 %v2482
        %v2484 = vpop.f32.mrb[0].mxu0
        %v2485 = vadd.f32 %v2288, %v2484
        %v2486 = vpop.f32.mrb[0].mxu0
        %2487 = vmatprep.mubr.f32.mxu0 0.0
        %v2488 = vand.u32 %v1846, 4294901760
        %v2489 = vsub.f32 %v1846, %v2488
        %2490 = vmatmul.mubr.f32.gmra.mrb[0].mxu0 %v2489
        %v2491 = vpop.f32.mrb[0].mxu0
        %v2492 = vadd.f32 %v2294, %v2491
        %v2493 = vpop.f32.mrb[0].mxu0
        %2494 = vmatprep.mubr.f32.mxu0 0.0
        %v2495 = vand.u32 %v1847, 4294901760
        %v2496 = vsub.f32 %v1847, %v2495
        %2497 = vmatmul.mubr.f32.gmra.mrb[0].mxu0 %v2496
        %v2498 = vpop.f32.mrb[0].mxu0
        %v2499 = vadd.f32 %v2300, %v2498
        %v2500 = vpop.f32.mrb[0].mxu0
        %2501 = vmatprep.mubr.f32.mxu0 0.0
        %v2502 = vand.u32 %v1848, 4294901760
        %v2503 = vsub.f32 %v1848, %v2502
        %2504 = vmatmul.mubr.f32.gmra.mrb[0].mxu0 %v2503
        %v2505 = vpop.f32.mrb[0].mxu0
        %v2506 = vadd.f32 %v2306, %v2505
        %v2507 = vpop.f32.mrb[0].mxu0
        %2508 = vmatprep.mubr.f32.mxu0 0.0
        %v2509 = vand.u32 %v1849, 4294901760
        %v2510 = vsub.f32 %v1849, %v2509
        %2511 = vmatmul.mubr.f32.gmra.mrb[0].mxu0 %v2510
        %v2512 = vpop.f32.mrb[0].mxu0
        %v2513 = vadd.f32 %v2312, %v2512
        %v2514 = vpop.f32.mrb[0].mxu0
        %2515 = vmatprep.mubr.f32.mxu0 0.0
        %v2516 = vand.u32 %v1850, 4294901760
        %v2517 = vsub.f32 %v1850, %v2516
        %2518 = vmatmul.mubr.f32.gmra.mrb[0].mxu0 %v2517
        %v2519 = vpop.f32.mrb[0].mxu0
        %v2520 = vadd.f32 %v2318, %v2519
        %v2521 = vpop.f32.mrb[0].mxu0
        %2522 = vmatprep.mubr.f32.mxu0 0.0
        %v2523 = vand.u32 %v1851, 4294901760
        %v2524 = vsub.f32 %v1851, %v2523
        %2525 = vmatmul.mubr.f32.gmra.mrb[0].mxu0 %v2524
        %v2526 = vpop.f32.mrb[0].mxu0
        %v2527 = vadd.f32 %v2324, %v2526
        %v2528 = vpop.f32.mrb[0].mxu0
        %2529 = vmatprep.mubr.f32.mxu0 0.0
        %v2530 = vand.u32 %v1852, 4294901760
        %v2531 = vsub.f32 %v1852, %v2530
        %2532 = vmatmul.mubr.f32.gmra.mrb[0].mxu0 %v2531
        %v2533 = vpop.f32.mrb[0].mxu0
        %v2534 = vadd.f32 %v2330, %v2533
        %v2535 = vpop.f32.mrb[0].mxu0
        %2536 = vmatprep.mubr.f32.mxu0 0.0
        %v2537 = vand.u32 %v1853, 4294901760
        %v2538 = vsub.f32 %v1853, %v2537
        %2539 = vmatmul.mubr.f32.gmra.mrb[0].mxu0 %v2538
        %v2540 = vpop.f32.mrb[0].mxu0
        %v2541 = vadd.f32 %v2336, %v2540
        %v2542 = vpop.f32.mrb[0].mxu0
        %2543 = vmatprep.mubr.f32.mxu0 0.0
        %v2544 = vand.u32 %v1854, 4294901760
        %v2545 = vsub.f32 %v1854, %v2544
        %2546 = vmatmul.mubr.f32.gmra.mrb[0].mxu0 %v2545
        %v2547 = vpop.f32.mrb[0].mxu0
        %v2548 = vadd.f32 %v2342, %v2547
        %v2549 = vpop.f32.mrb[0].mxu0
        %2550 = vmatprep.mubr.f32.mxu0 0.0
        %v2551 = vand.u32 %v1855, 4294901760
        %v2552 = vsub.f32 %v1855, %v2551
        %2553 = vmatmul.mubr.f32.gmra.mrb[0].mxu0 %v2552
        %v2554 = vpop.f32.mrb[0].mxu0
        %v2555 = vadd.f32 %v2348, %v2554
        %v2556 = vpop.f32.mrb[0].mxu0
        %2557 = vmatprep.mubr.f32.mxu0 0.0
        %v2558 = vand.u32 %v1856, 4294901760
        %v2559 = vsub.f32 %v1856, %v2558
        %2560 = vmatmul.mubr.f32.gmra.mrb[0].mxu0 %v2559
        %v2561 = vpop.f32.mrb[0].mxu0
        %v2562 = vadd.f32 %v2354, %v2561
        %v2563 = vpop.f32.mrb[0].mxu0
        %2564 = vmatprep.mubr.f32.mxu0 0.0
        %v2565 = vand.u32 %v1857, 4294901760
        %v2566 = vsub.f32 %v1857, %v2565
        %2567 = vmatmul.mubr.f32.gmra.mrb[0].mxu0 %v2566
        %v2568 = vpop.f32.mrb[0].mxu0
        %v2569 = vadd.f32 %v2360, %v2568
        %v2570 = vpop.f32.mrb[0].mxu0
        %2571 = vdwg.mxu0
        %2572 = vmatprep.subr.mxu0 0.0
        %v2573 = vand.u32 %v1858, 4294901760
        %2574 = vmatpush1.msra.mxu0 %v2573
        %2575 = vmatprep.subr.mxu0 0.0
        %v2576 = vand.u32 %v1859, 4294901760
        %2577 = vmatpush1.msra.mxu0 %v2576
        %2578 = vmatprep.subr.mxu0 0.0
        %v2579 = vand.u32 %v1860, 4294901760
        %2580 = vmatpush1.msra.mxu0 %v2579
        %2581 = vmatprep.subr.mxu0 0.0
        %v2582 = vand.u32 %v1861, 4294901760
        %2583 = vmatpush1.msra.mxu0 %v2582
        %2584 = vmatprep.subr.mxu0 0.0
        %v2585 = vand.u32 %v1862, 4294901760
        %2586 = vmatpush1.msra.mxu0 %v2585
        %2587 = vmatprep.subr.mxu0 0.0
        %v2588 = vand.u32 %v1863, 4294901760
        %2589 = vmatpush1.msra.mxu0 %v2588
        %2590 = vmatprep.subr.mxu0 0.0
        %v2591 = vand.u32 %v1864, 4294901760
        %2592 = vmatpush1.msra.mxu0 %v2591
        %2593 = vmatprep.subr.mxu0 0.0
        %v2594 = vand.u32 %v1865, 4294901760
        %2595 = vmatpush1.msra.mxu0 %v2594
        %2596 = vmatprep.subr.mxu0 0.0
        %v2597 = vand.u32 %v1866, 4294901760
        %2598 = vmatpush1.msra.mxu0 %v2597
        %2599 = vmatprep.subr.mxu0 0.0
        %v2600 = vand.u32 %v1867, 4294901760
        %2601 = vmatpush1.msra.mxu0 %v2600
        %2602 = vmatprep.subr.mxu0 0.0
        %v2603 = vand.u32 %v1868, 4294901760
        %2604 = vmatpush1.msra.mxu0 %v2603
        %2605 = vmatprep.subr.mxu0 0.0
        %v2606 = vand.u32 %v1869, 4294901760
        %2607 = vmatpush1.msra.mxu0 %v2606
        %2608 = vmatprep.subr.mxu0 0.0
        %v2609 = vand.u32 %v1870, 4294901760
        %2610 = vmatpush1.msra.mxu0 %v2609
        %2611 = vmatprep.subr.mxu0 0.0
        %v2612 = vand.u32 %v1871, 4294901760
        %2613 = vmatpush1.msra.mxu0 %v2612
        %2614 = vmatprep.subr.mxu0 0.0
        %v2615 = vand.u32 %v1872, 4294901760
        %2616 = vmatpush1.msra.mxu0 %v2615
        %2617 = vmatprep.subr.mxu0 0.0
        %v2618 = vand.u32 %v1873, 4294901760
        %2619 = vmatpush1.msra.mxu0 %v2618
        %2620 = vmatprep.subr.mxu0 0.0
        %2621 = vmatpush1.msra.mxu0 0.0
        %2622 = vmatprep.subr.mxu0 0.0
        %2623 = vmatpush1.msra.mxu0 0.0
        %2624 = vmatprep.subr.mxu0 0.0
        %2625 = vmatpush1.msra.mxu0 0.0
        %2626 = vmatprep.subr.mxu0 0.0
        %2627 = vmatpush1.msra.mxu0 0.0
        %2628 = vmatprep.subr.mxu0 0.0
        %2629 = vmatpush1.msra.mxu0 0.0
        %2630 = vmatprep.subr.mxu0 0.0
        %2631 = vmatpush1.msra.mxu0 0.0
        %2632 = vmatprep.subr.mxu0 0.0
        %2633 = vmatpush1.msra.mxu0 0.0
        %2634 = vmatprep.subr.mxu0 0.0
        %2635 = vmatpush1.msra.mxu0 0.0
        %2636 = vmatprep.subr.mxu0 0.0
        %2637 = vmatpush1.msra.mxu0 0.0
        %2638 = vmatprep.subr.mxu0 0.0
        %2639 = vmatpush1.msra.mxu0 0.0
        %2640 = vmatprep.subr.mxu0 0.0
        %2641 = vmatpush1.msra.mxu0 0.0
        %2642 = vmatprep.subr.mxu0 0.0
        %2643 = vmatpush1.msra.mxu0 0.0
        %2644 = vmatprep.subr.mxu0 0.0
        %2645 = vmatpush1.msra.mxu0 0.0
        %2646 = vmatprep.subr.mxu0 0.0
        %2647 = vmatpush1.msra.mxu0 0.0
        %2648 = vmatprep.subr.mxu0 0.0
        %2649 = vmatpush1.msra.mxu0 0.0
        %2650 = vmatprep.subr.mxu0 0.0
        %2651 = vmatpush1.msra.mxu0 0.0
        %2652 = vmatprep.mubr.f32.mxu0 0.0
        %v2653 = vand.u32 %v1842, 4294901760
        %v2654 = vsub.f32 %v1842, %v2653
        %v2655 = vand.u32 %v2654, 4294901760
        %2656 = vmatmul.mubr.f32.gmra.mrb[0].mxu0 %v2655
        %v2657 = vpop.f32.mrb[0].mxu0
        %v2658 = vadd.f32 %v2464, %v2657
        %v2659 = vpop.f32.mrb[0].mxu0
        %2660 = vmatprep.mubr.f32.mxu0 0.0
        %v2661 = vand.u32 %v1843, 4294901760
        %v2662 = vsub.f32 %v1843, %v2661
        %v2663 = vand.u32 %v2662, 4294901760
        %2664 = vmatmul.mubr.f32.gmra.mrb[0].mxu0 %v2663
        %v2665 = vpop.f32.mrb[0].mxu0
        %v2666 = vadd.f32 %v2471, %v2665
        %v2667 = vpop.f32.mrb[0].mxu0
        %2668 = vmatprep.mubr.f32.mxu0 0.0
        %v2669 = vand.u32 %v1844, 4294901760
        %v2670 = vsub.f32 %v1844, %v2669
        %v2671 = vand.u32 %v2670, 4294901760
        %2672 = vmatmul.mubr.f32.gmra.mrb[0].mxu0 %v2671
        %v2673 = vpop.f32.mrb[0].mxu0
        %v2674 = vadd.f32 %v2478, %v2673
        %v2675 = vpop.f32.mrb[0].mxu0
        %2676 = vmatprep.mubr.f32.mxu0 0.0
        %v2677 = vand.u32 %v1845, 4294901760
        %v2678 = vsub.f32 %v1845, %v2677
        %v2679 = vand.u32 %v2678, 4294901760
        %2680 = vmatmul.mubr.f32.gmra.mrb[0].mxu0 %v2679
        %v2681 = vpop.f32.mrb[0].mxu0
        %v2682 = vadd.f32 %v2485, %v2681
        %v2683 = vpop.f32.mrb[0].mxu0
        %2684 = vmatprep.mubr.f32.mxu0 0.0
        %v2685 = vand.u32 %v1846, 4294901760
        %v2686 = vsub.f32 %v1846, %v2685
        %v2687 = vand.u32 %v2686, 4294901760
        %2688 = vmatmul.mubr.f32.gmra.mrb[0].mxu0 %v2687
        %v2689 = vpop.f32.mrb[0].mxu0
        %v2690 = vadd.f32 %v2492, %v2689
        %v2691 = vpop.f32.mrb[0].mxu0
        %2692 = vmatprep.mubr.f32.mxu0 0.0
        %v2693 = vand.u32 %v1847, 4294901760
        %v2694 = vsub.f32 %v1847, %v2693
        %v2695 = vand.u32 %v2694, 4294901760
        %2696 = vmatmul.mubr.f32.gmra.mrb[0].mxu0 %v2695
        %v2697 = vpop.f32.mrb[0].mxu0
        %v2698 = vadd.f32 %v2499, %v2697
        %v2699 = vpop.f32.mrb[0].mxu0
        %2700 = vmatprep.mubr.f32.mxu0 0.0
        %v2701 = vand.u32 %v1848, 4294901760
        %v2702 = vsub.f32 %v1848, %v2701
        %v2703 = vand.u32 %v2702, 4294901760
        %2704 = vmatmul.mubr.f32.gmra.mrb[0].mxu0 %v2703
        %v2705 = vpop.f32.mrb[0].mxu0
        %v2706 = vadd.f32 %v2506, %v2705
        %v2707 = vpop.f32.mrb[0].mxu0
        %2708 = vmatprep.mubr.f32.mxu0 0.0
        %v2709 = vand.u32 %v1849, 4294901760
        %v2710 = vsub.f32 %v1849, %v2709
        %v2711 = vand.u32 %v2710, 4294901760
        %2712 = vmatmul.mubr.f32.gmra.mrb[0].mxu0 %v2711
        %v2713 = vpop.f32.mrb[0].mxu0
        %v2714 = vadd.f32 %v2513, %v2713
        %v2715 = vpop.f32.mrb[0].mxu0
        %2716 = vmatprep.mubr.f32.mxu0 0.0
        %v2717 = vand.u32 %v1850, 4294901760
        %v2718 = vsub.f32 %v1850, %v2717
        %v2719 = vand.u32 %v2718, 4294901760
        %2720 = vmatmul.mubr.f32.gmra.mrb[0].mxu0 %v2719
        %v2721 = vpop.f32.mrb[0].mxu0
        %v2722 = vadd.f32 %v2520, %v2721
        %v2723 = vpop.f32.mrb[0].mxu0
        %2724 = vmatprep.mubr.f32.mxu0 0.0
        %v2725 = vand.u32 %v1851, 4294901760
        %v2726 = vsub.f32 %v1851, %v2725
        %v2727 = vand.u32 %v2726, 4294901760
        %2728 = vmatmul.mubr.f32.gmra.mrb[0].mxu0 %v2727
        %v2729 = vpop.f32.mrb[0].mxu0
        %v2730 = vadd.f32 %v2527, %v2729
        %v2731 = vpop.f32.mrb[0].mxu0
        %2732 = vmatprep.mubr.f32.mxu0 0.0
        %v2733 = vand.u32 %v1852, 4294901760
        %v2734 = vsub.f32 %v1852, %v2733
        %v2735 = vand.u32 %v2734, 4294901760
        %2736 = vmatmul.mubr.f32.gmra.mrb[0].mxu0 %v2735
        %v2737 = vpop.f32.mrb[0].mxu0
        %v2738 = vadd.f32 %v2534, %v2737
        %v2739 = vpop.f32.mrb[0].mxu0
        %2740 = vmatprep.mubr.f32.mxu0 0.0
        %v2741 = vand.u32 %v1853, 4294901760
        %v2742 = vsub.f32 %v1853, %v2741
        %v2743 = vand.u32 %v2742, 4294901760
        %2744 = vmatmul.mubr.f32.gmra.mrb[0].mxu0 %v2743
        %v2745 = vpop.f32.mrb[0].mxu0
        %v2746 = vadd.f32 %v2541, %v2745
        %v2747 = vpop.f32.mrb[0].mxu0
        %2748 = vmatprep.mubr.f32.mxu0 0.0
        %v2749 = vand.u32 %v1854, 4294901760
        %v2750 = vsub.f32 %v1854, %v2749
        %v2751 = vand.u32 %v2750, 4294901760
        %2752 = vmatmul.mubr.f32.gmra.mrb[0].mxu0 %v2751
        %v2753 = vpop.f32.mrb[0].mxu0
        %v2754 = vadd.f32 %v2548, %v2753
        %v2755 = vpop.f32.mrb[0].mxu0
        %2756 = vmatprep.mubr.f32.mxu0 0.0
        %v2757 = vand.u32 %v1855, 4294901760
        %v2758 = vsub.f32 %v1855, %v2757
        %v2759 = vand.u32 %v2758, 4294901760
        %2760 = vmatmul.mubr.f32.gmra.mrb[0].mxu0 %v2759
        %v2761 = vpop.f32.mrb[0].mxu0
        %v2762 = vadd.f32 %v2555, %v2761
        %v2763 = vpop.f32.mrb[0].mxu0
        %2764 = vmatprep.mubr.f32.mxu0 0.0
        %v2765 = vand.u32 %v1856, 4294901760
        %v2766 = vsub.f32 %v1856, %v2765
        %v2767 = vand.u32 %v2766, 4294901760
        %2768 = vmatmul.mubr.f32.gmra.mrb[0].mxu0 %v2767
        %v2769 = vpop.f32.mrb[0].mxu0
        %v2770 = vadd.f32 %v2562, %v2769
        %v2771 = vpop.f32.mrb[0].mxu0
        %2772 = vmatprep.mubr.f32.mxu0 0.0
        %v2773 = vand.u32 %v1857, 4294901760
        %v2774 = vsub.f32 %v1857, %v2773
        %v2775 = vand.u32 %v2774, 4294901760
        %2776 = vmatmul.mubr.f32.gmra.mrb[0].mxu0 %v2775
        %v2777 = vpop.f32.mrb[0].mxu0
        %v2778 = vadd.f32 %v2569, %v2777
        %v2779 = vpop.f32.mrb[0].mxu0
        %2780 = vdwg.mxu0
        %2781 = vmatprep.subr.mxu0 0.0
        %v2782 = vand.u32 %v1858, 4294901760
        %v2783 = vsub.f32 %v1858, %v2782
        %v2784 = vand.u32 %v2783, 4294901760
        %2785 = vmatpush1.msra.mxu0 %v2784
        %2786 = vmatprep.subr.mxu0 0.0
        %v2787 = vand.u32 %v1859, 4294901760
        %v2788 = vsub.f32 %v1859, %v2787
        %v2789 = vand.u32 %v2788, 4294901760
        %2790 = vmatpush1.msra.mxu0 %v2789
        %2791 = vmatprep.subr.mxu0 0.0
        %v2792 = vand.u32 %v1860, 4294901760
        %v2793 = vsub.f32 %v1860, %v2792
        %v2794 = vand.u32 %v2793, 4294901760
        %2795 = vmatpush1.msra.mxu0 %v2794
        %2796 = vmatprep.subr.mxu0 0.0
        %v2797 = vand.u32 %v1861, 4294901760
        %v2798 = vsub.f32 %v1861, %v2797
        %v2799 = vand.u32 %v2798, 4294901760
        %2800 = vmatpush1.msra.mxu0 %v2799
        %2801 = vmatprep.subr.mxu0 0.0
        %v2802 = vand.u32 %v1862, 4294901760
        %v2803 = vsub.f32 %v1862, %v2802
        %v2804 = vand.u32 %v2803, 4294901760
        %2805 = vmatpush1.msra.mxu0 %v2804
        %2806 = vmatprep.subr.mxu0 0.0
        %v2807 = vand.u32 %v1863, 4294901760
        %v2808 = vsub.f32 %v1863, %v2807
        %v2809 = vand.u32 %v2808, 4294901760
        %2810 = vmatpush1.msra.mxu0 %v2809
        %2811 = vmatprep.subr.mxu0 0.0
        %v2812 = vand.u32 %v1864, 4294901760
        %v2813 = vsub.f32 %v1864, %v2812
        %v2814 = vand.u32 %v2813, 4294901760
        %2815 = vmatpush1.msra.mxu0 %v2814
        %2816 = vmatprep.subr.mxu0 0.0
        %v2817 = vand.u32 %v1865, 4294901760
        %v2818 = vsub.f32 %v1865, %v2817
        %v2819 = vand.u32 %v2818, 4294901760
        %2820 = vmatpush1.msra.mxu0 %v2819
        %2821 = vmatprep.subr.mxu0 0.0
        %v2822 = vand.u32 %v1866, 4294901760
        %v2823 = vsub.f32 %v1866, %v2822
        %v2824 = vand.u32 %v2823, 4294901760
        %2825 = vmatpush1.msra.mxu0 %v2824
        %2826 = vmatprep.subr.mxu0 0.0
        %v2827 = vand.u32 %v1867, 4294901760
        %v2828 = vsub.f32 %v1867, %v2827
        %v2829 = vand.u32 %v2828, 4294901760
        %2830 = vmatpush1.msra.mxu0 %v2829
        %2831 = vmatprep.subr.mxu0 0.0
        %v2832 = vand.u32 %v1868, 4294901760
        %v2833 = vsub.f32 %v1868, %v2832
        %v2834 = vand.u32 %v2833, 4294901760
        %2835 = vmatpush1.msra.mxu0 %v2834
        %2836 = vmatprep.subr.mxu0 0.0
        %v2837 = vand.u32 %v1869, 4294901760
        %v2838 = vsub.f32 %v1869, %v2837
        %v2839 = vand.u32 %v2838, 4294901760
        %2840 = vmatpush1.msra.mxu0 %v2839
        %2841 = vmatprep.subr.mxu0 0.0
        %v2842 = vand.u32 %v1870, 4294901760
        %v2843 = vsub.f32 %v1870, %v2842
        %v2844 = vand.u32 %v2843, 4294901760
        %2845 = vmatpush1.msra.mxu0 %v2844
        %2846 = vmatprep.subr.mxu0 0.0
        %v2847 = vand.u32 %v1871, 4294901760
        %v2848 = vsub.f32 %v1871, %v2847
        %v2849 = vand.u32 %v2848, 4294901760
        %2850 = vmatpush1.msra.mxu0 %v2849
        %2851 = vmatprep.subr.mxu0 0.0
        %v2852 = vand.u32 %v1872, 4294901760
        %v2853 = vsub.f32 %v1872, %v2852
        %v2854 = vand.u32 %v2853, 4294901760
        %2855 = vmatpush1.msra.mxu0 %v2854
        %2856 = vmatprep.subr.mxu0 0.0
        %v2857 = vand.u32 %v1873, 4294901760
        %v2858 = vsub.f32 %v1873, %v2857
        %v2859 = vand.u32 %v2858, 4294901760
        %2860 = vmatpush1.msra.mxu0 %v2859
        %2861 = vmatprep.subr.mxu0 0.0
        %2862 = vmatpush1.msra.mxu0 0.0
        %2863 = vmatprep.subr.mxu0 0.0
        %2864 = vmatpush1.msra.mxu0 0.0
        %2865 = vmatprep.subr.mxu0 0.0
        %2866 = vmatpush1.msra.mxu0 0.0
        %2867 = vmatprep.subr.mxu0 0.0
        %2868 = vmatpush1.msra.mxu0 0.0
        %2869 = vmatprep.subr.mxu0 0.0
        %2870 = vmatpush1.msra.mxu0 0.0
        %2871 = vmatprep.subr.mxu0 0.0
        %2872 = vmatpush1.msra.mxu0 0.0
        %2873 = vmatprep.subr.mxu0 0.0
        %2874 = vmatpush1.msra.mxu0 0.0
        %2875 = vmatprep.subr.mxu0 0.0
        %2876 = vmatpush1.msra.mxu0 0.0
        %2877 = vmatprep.subr.mxu0 0.0
        %2878 = vmatpush1.msra.mxu0 0.0
        %2879 = vmatprep.subr.mxu0 0.0
        %2880 = vmatpush1.msra.mxu0 0.0
        %2881 = vmatprep.subr.mxu0 0.0
        %2882 = vmatpush1.msra.mxu0 0.0
        %2883 = vmatprep.subr.mxu0 0.0
        %2884 = vmatpush1.msra.mxu0 0.0
        %2885 = vmatprep.subr.mxu0 0.0
        %2886 = vmatpush1.msra.mxu0 0.0
        %2887 = vmatprep.subr.mxu0 0.0
        %2888 = vmatpush1.msra.mxu0 0.0
        %2889 = vmatprep.subr.mxu0 0.0
        %2890 = vmatpush1.msra.mxu0 0.0
        %2891 = vmatprep.subr.mxu0 0.0
        %2892 = vmatpush1.msra.mxu0 0.0
        %2893 = vmatprep.mubr.f32.mxu0 0.0
        %v2894 = vand.u32 %v1842, 4294901760
        %2895 = vmatmul.mubr.f32.gmra.mrb[0].mxu0 %v2894
        %v2896 = vpop.f32.mrb[0].mxu0
        %v2897 = vadd.f32 %v2658, %v2896
        %v2898 = vpop.f32.mrb[0].mxu0
        %2899 = vmatprep.mubr.f32.mxu0 0.0
        %v2900 = vand.u32 %v1843, 4294901760
        %2901 = vmatmul.mubr.f32.gmra.mrb[0].mxu0 %v2900
        %v2902 = vpop.f32.mrb[0].mxu0
        %v2903 = vadd.f32 %v2666, %v2902
        %v2904 = vpop.f32.mrb[0].mxu0
        %2905 = vmatprep.mubr.f32.mxu0 0.0
        %v2906 = vand.u32 %v1844, 4294901760
        %2907 = vmatmul.mubr.f32.gmra.mrb[0].mxu0 %v2906
        %v2908 = vpop.f32.mrb[0].mxu0
        %v2909 = vadd.f32 %v2674, %v2908
        %v2910 = vpop.f32.mrb[0].mxu0
        %2911 = vmatprep.mubr.f32.mxu0 0.0
        %v2912 = vand.u32 %v1845, 4294901760
        %2913 = vmatmul.mubr.f32.gmra.mrb[0].mxu0 %v2912
        %v2914 = vpop.f32.mrb[0].mxu0
        %v2915 = vadd.f32 %v2682, %v2914
        %v2916 = vpop.f32.mrb[0].mxu0
        %2917 = vmatprep.mubr.f32.mxu0 0.0
        %v2918 = vand.u32 %v1846, 4294901760
        %2919 = vmatmul.mubr.f32.gmra.mrb[0].mxu0 %v2918
        %v2920 = vpop.f32.mrb[0].mxu0
        %v2921 = vadd.f32 %v2690, %v2920
        %v2922 = vpop.f32.mrb[0].mxu0
        %2923 = vmatprep.mubr.f32.mxu0 0.0
        %v2924 = vand.u32 %v1847, 4294901760
        %2925 = vmatmul.mubr.f32.gmra.mrb[0].mxu0 %v2924
        %v2926 = vpop.f32.mrb[0].mxu0
        %v2927 = vadd.f32 %v2698, %v2926
        %v2928 = vpop.f32.mrb[0].mxu0
        %2929 = vmatprep.mubr.f32.mxu0 0.0
        %v2930 = vand.u32 %v1848, 4294901760
        %2931 = vmatmul.mubr.f32.gmra.mrb[0].mxu0 %v2930
        %v2932 = vpop.f32.mrb[0].mxu0
        %v2933 = vadd.f32 %v2706, %v2932
        %v2934 = vpop.f32.mrb[0].mxu0
        %2935 = vmatprep.mubr.f32.mxu0 0.0
        %v2936 = vand.u32 %v1849, 4294901760
        %2937 = vmatmul.mubr.f32.gmra.mrb[0].mxu0 %v2936
        %v2938 = vpop.f32.mrb[0].mxu0
        %v2939 = vadd.f32 %v2714, %v2938
        %v2940 = vpop.f32.mrb[0].mxu0
        %2941 = vmatprep.mubr.f32.mxu0 0.0
        %v2942 = vand.u32 %v1850, 4294901760
        %2943 = vmatmul.mubr.f32.gmra.mrb[0].mxu0 %v2942
        %v2944 = vpop.f32.mrb[0].mxu0
        %v2945 = vadd.f32 %v2722, %v2944
        %v2946 = vpop.f32.mrb[0].mxu0
        %2947 = vmatprep.mubr.f32.mxu0 0.0
        %v2948 = vand.u32 %v1851, 4294901760
        %2949 = vmatmul.mubr.f32.gmra.mrb[0].mxu0 %v2948
        %v2950 = vpop.f32.mrb[0].mxu0
        %v2951 = vadd.f32 %v2730, %v2950
        %v2952 = vpop.f32.mrb[0].mxu0
        %2953 = vmatprep.mubr.f32.mxu0 0.0
        %v2954 = vand.u32 %v1852, 4294901760
        %2955 = vmatmul.mubr.f32.gmra.mrb[0].mxu0 %v2954
        %v2956 = vpop.f32.mrb[0].mxu0
        %v2957 = vadd.f32 %v2738, %v2956
        %v2958 = vpop.f32.mrb[0].mxu0
        %2959 = vmatprep.mubr.f32.mxu0 0.0
        %v2960 = vand.u32 %v1853, 4294901760
        %2961 = vmatmul.mubr.f32.gmra.mrb[0].mxu0 %v2960
        %v2962 = vpop.f32.mrb[0].mxu0
        %v2963 = vadd.f32 %v2746, %v2962
        %v2964 = vpop.f32.mrb[0].mxu0
        %2965 = vmatprep.mubr.f32.mxu0 0.0
        %v2966 = vand.u32 %v1854, 4294901760
        %2967 = vmatmul.mubr.f32.gmra.mrb[0].mxu0 %v2966
        %v2968 = vpop.f32.mrb[0].mxu0
        %v2969 = vadd.f32 %v2754, %v2968
        %v2970 = vpop.f32.mrb[0].mxu0
        %2971 = vmatprep.mubr.f32.mxu0 0.0
        %v2972 = vand.u32 %v1855, 4294901760
        %2973 = vmatmul.mubr.f32.gmra.mrb[0].mxu0 %v2972
        %v2974 = vpop.f32.mrb[0].mxu0
        %v2975 = vadd.f32 %v2762, %v2974
        %v2976 = vpop.f32.mrb[0].mxu0
        %2977 = vmatprep.mubr.f32.mxu0 0.0
        %v2978 = vand.u32 %v1856, 4294901760
        %2979 = vmatmul.mubr.f32.gmra.mrb[0].mxu0 %v2978
        %v2980 = vpop.f32.mrb[0].mxu0
        %v2981 = vadd.f32 %v2770, %v2980
        %v2982 = vpop.f32.mrb[0].mxu0
        %2983 = vmatprep.mubr.f32.mxu0 0.0
        %v2984 = vand.u32 %v1857, 4294901760
        %2985 = vmatmul.mubr.f32.gmra.mrb[0].mxu0 %v2984
        %v2986 = vpop.f32.mrb[0].mxu0
        %v2987 = vadd.f32 %v2778, %v2986
        %v2988 = vpop.f32.mrb[0].mxu0
        %2989 = vdwg.mxu0
        %2990 = vmatprep.subr.mxu0 0.0
        %v2991 = vand.u32 %v1858, 4294901760
        %2992 = vmatpush1.msra.mxu0 %v2991
        %2993 = vmatprep.subr.mxu0 0.0
        %v2994 = vand.u32 %v1859, 4294901760
        %2995 = vmatpush1.msra.mxu0 %v2994
        %2996 = vmatprep.subr.mxu0 0.0
        %v2997 = vand.u32 %v1860, 4294901760
        %2998 = vmatpush1.msra.mxu0 %v2997
        %2999 = vmatprep.subr.mxu0 0.0
        %v3000 = vand.u32 %v1861, 4294901760
        %3001 = vmatpush1.msra.mxu0 %v3000
        %3002 = vmatprep.subr.mxu0 0.0
        %v3003 = vand.u32 %v1862, 4294901760
        %3004 = vmatpush1.msra.mxu0 %v3003
        %3005 = vmatprep.subr.mxu0 0.0
        %v3006 = vand.u32 %v1863, 4294901760
        %3007 = vmatpush1.msra.mxu0 %v3006
        %3008 = vmatprep.subr.mxu0 0.0
        %v3009 = vand.u32 %v1864, 4294901760
        %3010 = vmatpush1.msra.mxu0 %v3009
        %3011 = vmatprep.subr.mxu0 0.0
        %v3012 = vand.u32 %v1865, 4294901760
        %3013 = vmatpush1.msra.mxu0 %v3012
        %3014 = vmatprep.subr.mxu0 0.0
        %v3015 = vand.u32 %v1866, 4294901760
        %3016 = vmatpush1.msra.mxu0 %v3015
        %3017 = vmatprep.subr.mxu0 0.0
        %v3018 = vand.u32 %v1867, 4294901760
        %3019 = vmatpush1.msra.mxu0 %v3018
        %3020 = vmatprep.subr.mxu0 0.0
        %v3021 = vand.u32 %v1868, 4294901760
        %3022 = vmatpush1.msra.mxu0 %v3021
        %3023 = vmatprep.subr.mxu0 0.0
        %v3024 = vand.u32 %v1869, 4294901760
        %3025 = vmatpush1.msra.mxu0 %v3024
        %3026 = vmatprep.subr.mxu0 0.0
        %v3027 = vand.u32 %v1870, 4294901760
        %3028 = vmatpush1.msra.mxu0 %v3027
        %3029 = vmatprep.subr.mxu0 0.0
        %v3030 = vand.u32 %v1871, 4294901760
        %3031 = vmatpush1.msra.mxu0 %v3030
        %3032 = vmatprep.subr.mxu0 0.0
        %v3033 = vand.u32 %v1872, 4294901760
        %3034 = vmatpush1.msra.mxu0 %v3033
        %3035 = vmatprep.subr.mxu0 0.0
        %v3036 = vand.u32 %v1873, 4294901760
        %3037 = vmatpush1.msra.mxu0 %v3036
        %3038 = vmatprep.subr.mxu0 0.0
        %3039 = vmatpush1.msra.mxu0 0.0
        %3040 = vmatprep.subr.mxu0 0.0
        %3041 = vmatpush1.msra.mxu0 0.0
        %3042 = vmatprep.subr.mxu0 0.0
        %3043 = vmatpush1.msra.mxu0 0.0
        %3044 = vmatprep.subr.mxu0 0.0
        %3045 = vmatpush1.msra.mxu0 0.0
        %3046 = vmatprep.subr.mxu0 0.0
        %3047 = vmatpush1.msra.mxu0 0.0
        %3048 = vmatprep.subr.mxu0 0.0
        %3049 = vmatpush1.msra.mxu0 0.0
        %3050 = vmatprep.subr.mxu0 0.0
        %3051 = vmatpush1.msra.mxu0 0.0
        %3052 = vmatprep.subr.mxu0 0.0
        %3053 = vmatpush1.msra.mxu0 0.0
        %3054 = vmatprep.subr.mxu0 0.0
        %3055 = vmatpush1.msra.mxu0 0.0
        %3056 = vmatprep.subr.mxu0 0.0
        %3057 = vmatpush1.msra.mxu0 0.0
        %3058 = vmatprep.subr.mxu0 0.0
        %3059 = vmatpush1.msra.mxu0 0.0
        %3060 = vmatprep.subr.mxu0 0.0
        %3061 = vmatpush1.msra.mxu0 0.0
        %3062 = vmatprep.subr.mxu0 0.0
        %3063 = vmatpush1.msra.mxu0 0.0
        %3064 = vmatprep.subr.mxu0 0.0
        %3065 = vmatpush1.msra.mxu0 0.0
        %3066 = vmatprep.subr.mxu0 0.0
        %3067 = vmatpush1.msra.mxu0 0.0
        %3068 = vmatprep.subr.mxu0 0.0
        %3069 = vmatpush1.msra.mxu0 0.0
        %3070 = vmatprep.mubr.f32.mxu0 0.0
        %v3071 = vand.u32 %v1842, 4294901760
        %3072 = vmatmul.mubr.f32.gmra.mrb[0].mxu0 %v3071
        %v3073 = vpop.f32.mrb[0].mxu0
        %v3074 = vadd.f32 %v2897, %v3073
        %v3075 = vpop.f32.mrb[0].mxu0
        %3076 = vmatprep.mubr.f32.mxu0 0.0
        %v3077 = vand.u32 %v1843, 4294901760
        %3078 = vmatmul.mubr.f32.gmra.mrb[0].mxu0 %v3077
        %v3079 = vpop.f32.mrb[0].mxu0
        %v3080 = vadd.f32 %v2903, %v3079
        %v3081 = vpop.f32.mrb[0].mxu0
        %3082 = vmatprep.mubr.f32.mxu0 0.0
        %v3083 = vand.u32 %v1844, 4294901760
        %3084 = vmatmul.mubr.f32.gmra.mrb[0].mxu0 %v3083
        %v3085 = vpop.f32.mrb[0].mxu0
        %v3086 = vadd.f32 %v2909, %v3085
        %v3087 = vpop.f32.mrb[0].mxu0
        %3088 = vmatprep.mubr.f32.mxu0 0.0
        %v3089 = vand.u32 %v1845, 4294901760
        %3090 = vmatmul.mubr.f32.gmra.mrb[0].mxu0 %v3089
        %v3091 = vpop.f32.mrb[0].mxu0
        %v3092 = vadd.f32 %v2915, %v3091
        %v3093 = vpop.f32.mrb[0].mxu0
        %3094 = vmatprep.mubr.f32.mxu0 0.0
        %v3095 = vand.u32 %v1846, 4294901760
        %3096 = vmatmul.mubr.f32.gmra.mrb[0].mxu0 %v3095
        %v3097 = vpop.f32.mrb[0].mxu0
        %v3098 = vadd.f32 %v2921, %v3097
        %v3099 = vpop.f32.mrb[0].mxu0
        %3100 = vmatprep.mubr.f32.mxu0 0.0
        %v3101 = vand.u32 %v1847, 4294901760
        %3102 = vmatmul.mubr.f32.gmra.mrb[0].mxu0 %v3101
        %v3103 = vpop.f32.mrb[0].mxu0
        %v3104 = vadd.f32 %v2927, %v3103
        %v3105 = vpop.f32.mrb[0].mxu0
        %3106 = vmatprep.mubr.f32.mxu0 0.0
        %v3107 = vand.u32 %v1848, 4294901760
        %3108 = vmatmul.mubr.f32.gmra.mrb[0].mxu0 %v3107
        %v3109 = vpop.f32.mrb[0].mxu0
        %v3110 = vadd.f32 %v2933, %v3109
        %v3111 = vpop.f32.mrb[0].mxu0
        %3112 = vmatprep.mubr.f32.mxu0 0.0
        %v3113 = vand.u32 %v1849, 4294901760
        %3114 = vmatmul.mubr.f32.gmra.mrb[0].mxu0 %v3113
        %v3115 = vpop.f32.mrb[0].mxu0
        %v3116 = vadd.f32 %v2939, %v3115
        %v3117 = vpop.f32.mrb[0].mxu0
        %3118 = vmatprep.mubr.f32.mxu0 0.0
        %v3119 = vand.u32 %v1850, 4294901760
        %3120 = vmatmul.mubr.f32.gmra.mrb[0].mxu0 %v3119
        %v3121 = vpop.f32.mrb[0].mxu0
        %v3122 = vadd.f32 %v2945, %v3121
        %v3123 = vpop.f32.mrb[0].mxu0
        %3124 = vmatprep.mubr.f32.mxu0 0.0
        %v3125 = vand.u32 %v1851, 4294901760
        %3126 = vmatmul.mubr.f32.gmra.mrb[0].mxu0 %v3125
        %v3127 = vpop.f32.mrb[0].mxu0
        %v3128 = vadd.f32 %v2951, %v3127
        %v3129 = vpop.f32.mrb[0].mxu0
        %3130 = vmatprep.mubr.f32.mxu0 0.0
        %v3131 = vand.u32 %v1852, 4294901760
        %3132 = vmatmul.mubr.f32.gmra.mrb[0].mxu0 %v3131
        %v3133 = vpop.f32.mrb[0].mxu0
        %v3134 = vadd.f32 %v2957, %v3133
        %v3135 = vpop.f32.mrb[0].mxu0
        %3136 = vmatprep.mubr.f32.mxu0 0.0
        %v3137 = vand.u32 %v1853, 4294901760
        %3138 = vmatmul.mubr.f32.gmra.mrb[0].mxu0 %v3137
        %v3139 = vpop.f32.mrb[0].mxu0
        %v3140 = vadd.f32 %v2963, %v3139
        %v3141 = vpop.f32.mrb[0].mxu0
        %3142 = vmatprep.mubr.f32.mxu0 0.0
        %v3143 = vand.u32 %v1854, 4294901760
        %3144 = vmatmul.mubr.f32.gmra.mrb[0].mxu0 %v3143
        %v3145 = vpop.f32.mrb[0].mxu0
        %v3146 = vadd.f32 %v2969, %v3145
        %v3147 = vpop.f32.mrb[0].mxu0
        %3148 = vmatprep.mubr.f32.mxu0 0.0
        %v3149 = vand.u32 %v1855, 4294901760
        %3150 = vmatmul.mubr.f32.gmra.mrb[0].mxu0 %v3149
        %v3151 = vpop.f32.mrb[0].mxu0
        %v3152 = vadd.f32 %v2975, %v3151
        %v3153 = vpop.f32.mrb[0].mxu0
        %3154 = vmatprep.mubr.f32.mxu0 0.0
        %v3155 = vand.u32 %v1856, 4294901760
        %3156 = vmatmul.mubr.f32.gmra.mrb[0].mxu0 %v3155
        %v3157 = vpop.f32.mrb[0].mxu0
        %v3158 = vadd.f32 %v2981, %v3157
        %v3159 = vpop.f32.mrb[0].mxu0
        %3160 = vmatprep.mubr.f32.mxu0 0.0
        %v3161 = vand.u32 %v1857, 4294901760
        %3162 = vmatmul.mubr.f32.gmra.mrb[0].mxu0 %v3161
        %v3163 = vpop.f32.mrb[0].mxu0
        %v3164 = vadd.f32 %v2987, %v3163
        %v3165 = vpop.f32.mrb[0].mxu0
        %3166 = vdwg.mxu0
        %v3167 = vld [vmem:[#allocation7] sm:$0xff]
        %v3168 = vld [vmem:[#allocation7 + $0x8] sm:$0xff]
        %v3169 = vld [vmem:[#allocation7 + $0x10] sm:$0xff]
        %v3170 = vld [vmem:[#allocation7 + $0x18] sm:$0xff]
        %v3171 = vld [vmem:[#allocation7 + $0x20] sm:$0xff]
        %v3172 = vld [vmem:[#allocation7 + $0x28] sm:$0xff]
        %v3173 = vld [vmem:[#allocation7 + $0x30] sm:$0xff]
        %v3174 = vld [vmem:[#allocation7 + $0x38] sm:$0xff]
        %v3175 = vld [vmem:[#allocation7 + $0x40] sm:$0xff]
        %v3176 = vld [vmem:[#allocation7 + $0x48] sm:$0xff]
        %v3177 = vld [vmem:[#allocation7 + $0x50] sm:$0xff]
        %v3178 = vld [vmem:[#allocation7 + $0x58] sm:$0xff]
        %v3179 = vld [vmem:[#allocation7 + $0x60] sm:$0xff]
        %v3180 = vld [vmem:[#allocation7 + $0x68] sm:$0xff]
        %v3181 = vld [vmem:[#allocation7 + $0x70] sm:$0xff]
        %v3182 = vld [vmem:[#allocation7 + $0x78] sm:$0xff]
        %v3183 = vld [vmem:[%s7] sm:$0x1]
        %v3185 = vlaneseq
        %v3186 = vshrl.u32 %v3185, 7
        %v3187 = vsub.s32 0, %v3186
        %v3188 = vrot.slane %v3183, %v3187
        %3190 = vmatprep.subr.mxu0 0.0
        %v3191 = vand.u32 %v3167, 4294901760
        %3192 = vmatpush1.msra.mxu0 %v3191
        %3193 = vmatprep.subr.mxu0 0.0
        %v3194 = vand.u32 %v3168, 4294901760
        %3195 = vmatpush1.msra.mxu0 %v3194
        %3196 = vmatprep.subr.mxu0 0.0
        %v3197 = vand.u32 %v3169, 4294901760
        %3198 = vmatpush1.msra.mxu0 %v3197
        %3199 = vmatprep.subr.mxu0 0.0
        %v3200 = vand.u32 %v3170, 4294901760
        %3201 = vmatpush1.msra.mxu0 %v3200
        %3202 = vmatprep.subr.mxu0 0.0
        %v3203 = vand.u32 %v3171, 4294901760
        %3204 = vmatpush1.msra.mxu0 %v3203
        %3205 = vmatprep.subr.mxu0 0.0
        %v3206 = vand.u32 %v3172, 4294901760
        %3207 = vmatpush1.msra.mxu0 %v3206
        %3208 = vmatprep.subr.mxu0 0.0
        %v3209 = vand.u32 %v3173, 4294901760
        %3210 = vmatpush1.msra.mxu0 %v3209
        %3211 = vmatprep.subr.mxu0 0.0
        %v3212 = vand.u32 %v3174, 4294901760
        %3213 = vmatpush1.msra.mxu0 %v3212
        %3214 = vmatprep.subr.mxu0 0.0
        %v3215 = vand.u32 %v3175, 4294901760
        %3216 = vmatpush1.msra.mxu0 %v3215
        %3217 = vmatprep.subr.mxu0 0.0
        %v3218 = vand.u32 %v3176, 4294901760
        %3219 = vmatpush1.msra.mxu0 %v3218
        %3220 = vmatprep.subr.mxu0 0.0
        %v3221 = vand.u32 %v3177, 4294901760
        %3222 = vmatpush1.msra.mxu0 %v3221
        %3223 = vmatprep.subr.mxu0 0.0
        %v3224 = vand.u32 %v3178, 4294901760
        %3225 = vmatpush1.msra.mxu0 %v3224
        %3226 = vmatprep.subr.mxu0 0.0
        %v3227 = vand.u32 %v3179, 4294901760
        %3228 = vmatpush1.msra.mxu0 %v3227
        %3229 = vmatprep.subr.mxu0 0.0
        %v3230 = vand.u32 %v3180, 4294901760
        %3231 = vmatpush1.msra.mxu0 %v3230
        %3232 = vmatprep.subr.mxu0 0.0
        %v3233 = vand.u32 %v3181, 4294901760
        %3234 = vmatpush1.msra.mxu0 %v3233
        %3235 = vmatprep.subr.mxu0 0.0
        %v3236 = vand.u32 %v3182, 4294901760
        %3237 = vmatpush1.msra.mxu0 %v3236
        %3238 = vmatprep.subr.mxu0 0.0
        %3239 = vmatpush1.msra.mxu0 0.0
        %3240 = vmatprep.subr.mxu0 0.0
        %3241 = vmatpush1.msra.mxu0 0.0
        %3242 = vmatprep.subr.mxu0 0.0
        %3243 = vmatpush1.msra.mxu0 0.0
        %3244 = vmatprep.subr.mxu0 0.0
        %3245 = vmatpush1.msra.mxu0 0.0
        %3246 = vmatprep.subr.mxu0 0.0
        %3247 = vmatpush1.msra.mxu0 0.0
        %3248 = vmatprep.subr.mxu0 0.0
        %3249 = vmatpush1.msra.mxu0 0.0
        %3250 = vmatprep.subr.mxu0 0.0
        %3251 = vmatpush1.msra.mxu0 0.0
        %3252 = vmatprep.subr.mxu0 0.0
        %3253 = vmatpush1.msra.mxu0 0.0
        %3254 = vmatprep.subr.mxu0 0.0
        %3255 = vmatpush1.msra.mxu0 0.0
        %3256 = vmatprep.subr.mxu0 0.0
        %3257 = vmatpush1.msra.mxu0 0.0
        %3258 = vmatprep.subr.mxu0 0.0
        %3259 = vmatpush1.msra.mxu0 0.0
        %3260 = vmatprep.subr.mxu0 0.0
        %3261 = vmatpush1.msra.mxu0 0.0
        %3262 = vmatprep.subr.mxu0 0.0
        %3263 = vmatpush1.msra.mxu0 0.0
        %3264 = vmatprep.subr.mxu0 0.0
        %3265 = vmatpush1.msra.mxu0 0.0
        %3266 = vmatprep.subr.mxu0 0.0
        %3267 = vmatpush1.msra.mxu0 0.0
        %3268 = vmatprep.subr.mxu0 0.0
        %3269 = vmatpush1.msra.mxu0 0.0
        %3270 = vmatprep.mubr.f32.mxu0 0.0
        %v3271 = vand.u32 %v1842, 4294901760
        %v3272 = vsub.f32 %v1842, %v3271
        %v3273 = vand.u32 %v3272, 4294901760
        %v3274 = vsub.f32 %v3272, %v3273
        %v3275 = vand.u32 %v3274, 4294901760
        %3276 = vmatmul.mubr.f32.gmra.mrb[0].mxu0 %v3275
        %v3277 = vpop.f32.mrb[0].mxu0
        %v3278 = vadd.f32 %v3188, %v3277
        %v3279 = vpop.f32.mrb[0].mxu0
        %3280 = vmatprep.mubr.f32.mxu0 0.0
        %v3281 = vand.u32 %v1843, 4294901760
        %v3282 = vsub.f32 %v1843, %v3281
        %v3283 = vand.u32 %v3282, 4294901760
        %v3284 = vsub.f32 %v3282, %v3283
        %v3285 = vand.u32 %v3284, 4294901760
        %3286 = vmatmul.mubr.f32.gmra.mrb[0].mxu0 %v3285
        %v3287 = vpop.f32.mrb[0].mxu0
        %v3288 = vadd.f32 %v3188, %v3287
        %v3289 = vpop.f32.mrb[0].mxu0
        %3290 = vmatprep.mubr.f32.mxu0 0.0
        %v3291 = vand.u32 %v1844, 4294901760
        %v3292 = vsub.f32 %v1844, %v3291
        %v3293 = vand.u32 %v3292, 4294901760
        %v3294 = vsub.f32 %v3292, %v3293
        %v3295 = vand.u32 %v3294, 4294901760
        %3296 = vmatmul.mubr.f32.gmra.mrb[0].mxu0 %v3295
        %v3297 = vpop.f32.mrb[0].mxu0
        %v3298 = vadd.f32 %v3188, %v3297
        %v3299 = vpop.f32.mrb[0].mxu0
        %3300 = vmatprep.mubr.f32.mxu0 0.0
        %v3301 = vand.u32 %v1845, 4294901760
        %v3302 = vsub.f32 %v1845, %v3301
        %v3303 = vand.u32 %v3302, 4294901760
        %v3304 = vsub.f32 %v3302, %v3303
        %v3305 = vand.u32 %v3304, 4294901760
        %3306 = vmatmul.mubr.f32.gmra.mrb[0].mxu0 %v3305
        %v3307 = vpop.f32.mrb[0].mxu0
        %v3308 = vadd.f32 %v3188, %v3307
        %v3309 = vpop.f32.mrb[0].mxu0
        %3310 = vmatprep.mubr.f32.mxu0 0.0
        %v3311 = vand.u32 %v1846, 4294901760
        %v3312 = vsub.f32 %v1846, %v3311
        %v3313 = vand.u32 %v3312, 4294901760
        %v3314 = vsub.f32 %v3312, %v3313
        %v3315 = vand.u32 %v3314, 4294901760
        %3316 = vmatmul.mubr.f32.gmra.mrb[0].mxu0 %v3315
        %v3317 = vpop.f32.mrb[0].mxu0
        %v3318 = vadd.f32 %v3188, %v3317
        %v3319 = vpop.f32.mrb[0].mxu0
        %3320 = vmatprep.mubr.f32.mxu0 0.0
        %v3321 = vand.u32 %v1847, 4294901760
        %v3322 = vsub.f32 %v1847, %v3321
        %v3323 = vand.u32 %v3322, 4294901760
        %v3324 = vsub.f32 %v3322, %v3323
        %v3325 = vand.u32 %v3324, 4294901760
        %3326 = vmatmul.mubr.f32.gmra.mrb[0].mxu0 %v3325
        %v3327 = vpop.f32.mrb[0].mxu0
        %v3328 = vadd.f32 %v3188, %v3327
        %v3329 = vpop.f32.mrb[0].mxu0
        %3330 = vmatprep.mubr.f32.mxu0 0.0
        %v3331 = vand.u32 %v1848, 4294901760
        %v3332 = vsub.f32 %v1848, %v3331
        %v3333 = vand.u32 %v3332, 4294901760
        %v3334 = vsub.f32 %v3332, %v3333
        %v3335 = vand.u32 %v3334, 4294901760
        %3336 = vmatmul.mubr.f32.gmra.mrb[0].mxu0 %v3335
        %v3337 = vpop.f32.mrb[0].mxu0
        %v3338 = vadd.f32 %v3188, %v3337
        %v3339 = vpop.f32.mrb[0].mxu0
        %3340 = vmatprep.mubr.f32.mxu0 0.0
        %v3341 = vand.u32 %v1849, 4294901760
        %v3342 = vsub.f32 %v1849, %v3341
        %v3343 = vand.u32 %v3342, 4294901760
        %v3344 = vsub.f32 %v3342, %v3343
        %v3345 = vand.u32 %v3344, 4294901760
        %3346 = vmatmul.mubr.f32.gmra.mrb[0].mxu0 %v3345
        %v3347 = vpop.f32.mrb[0].mxu0
        %v3348 = vadd.f32 %v3188, %v3347
        %v3349 = vpop.f32.mrb[0].mxu0
        %3350 = vmatprep.mubr.f32.mxu0 0.0
        %v3351 = vand.u32 %v1850, 4294901760
        %v3352 = vsub.f32 %v1850, %v3351
        %v3353 = vand.u32 %v3352, 4294901760
        %v3354 = vsub.f32 %v3352, %v3353
        %v3355 = vand.u32 %v3354, 4294901760
        %3356 = vmatmul.mubr.f32.gmra.mrb[0].mxu0 %v3355
        %v3357 = vpop.f32.mrb[0].mxu0
        %v3358 = vadd.f32 %v3188, %v3357
        %v3359 = vpop.f32.mrb[0].mxu0
        %3360 = vmatprep.mubr.f32.mxu0 0.0
        %v3361 = vand.u32 %v1851, 4294901760
        %v3362 = vsub.f32 %v1851, %v3361
        %v3363 = vand.u32 %v3362, 4294901760
        %v3364 = vsub.f32 %v3362, %v3363
        %v3365 = vand.u32 %v3364, 4294901760
        %3366 = vmatmul.mubr.f32.gmra.mrb[0].mxu0 %v3365
        %v3367 = vpop.f32.mrb[0].mxu0
        %v3368 = vadd.f32 %v3188, %v3367
        %v3369 = vpop.f32.mrb[0].mxu0
        %3370 = vmatprep.mubr.f32.mxu0 0.0
        %v3371 = vand.u32 %v1852, 4294901760
        %v3372 = vsub.f32 %v1852, %v3371
        %v3373 = vand.u32 %v3372, 4294901760
        %v3374 = vsub.f32 %v3372, %v3373
        %v3375 = vand.u32 %v3374, 4294901760
        %3376 = vmatmul.mubr.f32.gmra.mrb[0].mxu0 %v3375
        %v3377 = vpop.f32.mrb[0].mxu0
        %v3378 = vadd.f32 %v3188, %v3377
        %v3379 = vpop.f32.mrb[0].mxu0
        %3380 = vmatprep.mubr.f32.mxu0 0.0
        %v3381 = vand.u32 %v1853, 4294901760
        %v3382 = vsub.f32 %v1853, %v3381
        %v3383 = vand.u32 %v3382, 4294901760
        %v3384 = vsub.f32 %v3382, %v3383
        %v3385 = vand.u32 %v3384, 4294901760
        %3386 = vmatmul.mubr.f32.gmra.mrb[0].mxu0 %v3385
        %v3387 = vpop.f32.mrb[0].mxu0
        %v3388 = vadd.f32 %v3188, %v3387
        %v3389 = vpop.f32.mrb[0].mxu0
        %3390 = vmatprep.mubr.f32.mxu0 0.0
        %v3391 = vand.u32 %v1854, 4294901760
        %v3392 = vsub.f32 %v1854, %v3391
        %v3393 = vand.u32 %v3392, 4294901760
        %v3394 = vsub.f32 %v3392, %v3393
        %v3395 = vand.u32 %v3394, 4294901760
        %3396 = vmatmul.mubr.f32.gmra.mrb[0].mxu0 %v3395
        %v3397 = vpop.f32.mrb[0].mxu0
        %v3398 = vadd.f32 %v3188, %v3397
        %v3399 = vpop.f32.mrb[0].mxu0
        %3400 = vmatprep.mubr.f32.mxu0 0.0
        %v3401 = vand.u32 %v1855, 4294901760
        %v3402 = vsub.f32 %v1855, %v3401
        %v3403 = vand.u32 %v3402, 4294901760
        %v3404 = vsub.f32 %v3402, %v3403
        %v3405 = vand.u32 %v3404, 4294901760
        %3406 = vmatmul.mubr.f32.gmra.mrb[0].mxu0 %v3405
        %v3407 = vpop.f32.mrb[0].mxu0
        %v3408 = vadd.f32 %v3188, %v3407
        %v3409 = vpop.f32.mrb[0].mxu0
        %3410 = vmatprep.mubr.f32.mxu0 0.0
        %v3411 = vand.u32 %v1856, 4294901760
        %v3412 = vsub.f32 %v1856, %v3411
        %v3413 = vand.u32 %v3412, 4294901760
        %v3414 = vsub.f32 %v3412, %v3413
        %v3415 = vand.u32 %v3414, 4294901760
        %3416 = vmatmul.mubr.f32.gmra.mrb[0].mxu0 %v3415
        %v3417 = vpop.f32.mrb[0].mxu0
        %v3418 = vadd.f32 %v3188, %v3417
        %v3419 = vpop.f32.mrb[0].mxu0
        %3420 = vmatprep.mubr.f32.mxu0 0.0
        %v3421 = vand.u32 %v1857, 4294901760
        %v3422 = vsub.f32 %v1857, %v3421
        %v3423 = vand.u32 %v3422, 4294901760
        %v3424 = vsub.f32 %v3422, %v3423
        %v3425 = vand.u32 %v3424, 4294901760
        %3426 = vmatmul.mubr.f32.gmra.mrb[0].mxu0 %v3425
        %v3427 = vpop.f32.mrb[0].mxu0
        %v3428 = vadd.f32 %v3188, %v3427
        %v3429 = vpop.f32.mrb[0].mxu0
        %3430 = vdwg.mxu0
        %3431 = vmatprep.subr.mxu0 0.0
        %v3432 = vand.u32 %v3167, 4294901760
        %v3433 = vsub.f32 %v3167, %v3432
        %v3434 = vand.u32 %v3433, 4294901760
        %v3435 = vsub.f32 %v3433, %v3434
        %v3436 = vand.u32 %v3435, 4294901760
        %3437 = vmatpush1.msra.mxu0 %v3436
        %3438 = vmatprep.subr.mxu0 0.0
        %v3439 = vand.u32 %v3168, 4294901760
        %v3440 = vsub.f32 %v3168, %v3439
        %v3441 = vand.u32 %v3440, 4294901760
        %v3442 = vsub.f32 %v3440, %v3441
        %v3443 = vand.u32 %v3442, 4294901760
        %3444 = vmatpush1.msra.mxu0 %v3443
        %3445 = vmatprep.subr.mxu0 0.0
        %v3446 = vand.u32 %v3169, 4294901760
        %v3447 = vsub.f32 %v3169, %v3446
        %v3448 = vand.u32 %v3447, 4294901760
        %v3449 = vsub.f32 %v3447, %v3448
        %v3450 = vand.u32 %v3449, 4294901760
        %3451 = vmatpush1.msra.mxu0 %v3450
        %3452 = vmatprep.subr.mxu0 0.0
        %v3453 = vand.u32 %v3170, 4294901760
        %v3454 = vsub.f32 %v3170, %v3453
        %v3455 = vand.u32 %v3454, 4294901760
        %v3456 = vsub.f32 %v3454, %v3455
        %v3457 = vand.u32 %v3456, 4294901760
        %3458 = vmatpush1.msra.mxu0 %v3457
        %3459 = vmatprep.subr.mxu0 0.0
        %v3460 = vand.u32 %v3171, 4294901760
        %v3461 = vsub.f32 %v3171, %v3460
        %v3462 = vand.u32 %v3461, 4294901760
        %v3463 = vsub.f32 %v3461, %v3462
        %v3464 = vand.u32 %v3463, 4294901760
        %3465 = vmatpush1.msra.mxu0 %v3464
        %3466 = vmatprep.subr.mxu0 0.0
        %v3467 = vand.u32 %v3172, 4294901760
        %v3468 = vsub.f32 %v3172, %v3467
        %v3469 = vand.u32 %v3468, 4294901760
        %v3470 = vsub.f32 %v3468, %v3469
        %v3471 = vand.u32 %v3470, 4294901760
        %3472 = vmatpush1.msra.mxu0 %v3471
        %3473 = vmatprep.subr.mxu0 0.0
        %v3474 = vand.u32 %v3173, 4294901760
        %v3475 = vsub.f32 %v3173, %v3474
        %v3476 = vand.u32 %v3475, 4294901760
        %v3477 = vsub.f32 %v3475, %v3476
        %v3478 = vand.u32 %v3477, 4294901760
        %3479 = vmatpush1.msra.mxu0 %v3478
        %3480 = vmatprep.subr.mxu0 0.0
        %v3481 = vand.u32 %v3174, 4294901760
        %v3482 = vsub.f32 %v3174, %v3481
        %v3483 = vand.u32 %v3482, 4294901760
        %v3484 = vsub.f32 %v3482, %v3483
        %v3485 = vand.u32 %v3484, 4294901760
        %3486 = vmatpush1.msra.mxu0 %v3485
        %3487 = vmatprep.subr.mxu0 0.0
        %v3488 = vand.u32 %v3175, 4294901760
        %v3489 = vsub.f32 %v3175, %v3488
        %v3490 = vand.u32 %v3489, 4294901760
        %v3491 = vsub.f32 %v3489, %v3490
        %v3492 = vand.u32 %v3491, 4294901760
        %3493 = vmatpush1.msra.mxu0 %v3492
        %3494 = vmatprep.subr.mxu0 0.0
        %v3495 = vand.u32 %v3176, 4294901760
        %v3496 = vsub.f32 %v3176, %v3495
        %v3497 = vand.u32 %v3496, 4294901760
        %v3498 = vsub.f32 %v3496, %v3497
        %v3499 = vand.u32 %v3498, 4294901760
        %3500 = vmatpush1.msra.mxu0 %v3499
        %3501 = vmatprep.subr.mxu0 0.0
        %v3502 = vand.u32 %v3177, 4294901760
        %v3503 = vsub.f32 %v3177, %v3502
        %v3504 = vand.u32 %v3503, 4294901760
        %v3505 = vsub.f32 %v3503, %v3504
        %v3506 = vand.u32 %v3505, 4294901760
        %3507 = vmatpush1.msra.mxu0 %v3506
        %3508 = vmatprep.subr.mxu0 0.0
        %v3509 = vand.u32 %v3178, 4294901760
        %v3510 = vsub.f32 %v3178, %v3509
        %v3511 = vand.u32 %v3510, 4294901760
        %v3512 = vsub.f32 %v3510, %v3511
        %v3513 = vand.u32 %v3512, 4294901760
        %3514 = vmatpush1.msra.mxu0 %v3513
        %3515 = vmatprep.subr.mxu0 0.0
        %v3516 = vand.u32 %v3179, 4294901760
        %v3517 = vsub.f32 %v3179, %v3516
        %v3518 = vand.u32 %v3517, 4294901760
        %v3519 = vsub.f32 %v3517, %v3518
        %v3520 = vand.u32 %v3519, 4294901760
        %3521 = vmatpush1.msra.mxu0 %v3520
        %3522 = vmatprep.subr.mxu0 0.0
        %v3523 = vand.u32 %v3180, 4294901760
        %v3524 = vsub.f32 %v3180, %v3523
        %v3525 = vand.u32 %v3524, 4294901760
        %v3526 = vsub.f32 %v3524, %v3525
        %v3527 = vand.u32 %v3526, 4294901760
        %3528 = vmatpush1.msra.mxu0 %v3527
        %3529 = vmatprep.subr.mxu0 0.0
        %v3530 = vand.u32 %v3181, 4294901760
        %v3531 = vsub.f32 %v3181, %v3530
        %v3532 = vand.u32 %v3531, 4294901760
        %v3533 = vsub.f32 %v3531, %v3532
        %v3534 = vand.u32 %v3533, 4294901760
        %3535 = vmatpush1.msra.mxu0 %v3534
        %3536 = vmatprep.subr.mxu0 0.0
        %v3537 = vand.u32 %v3182, 4294901760
        %v3538 = vsub.f32 %v3182, %v3537
        %v3539 = vand.u32 %v3538, 4294901760
        %v3540 = vsub.f32 %v3538, %v3539
        %v3541 = vand.u32 %v3540, 4294901760
        %3542 = vmatpush1.msra.mxu0 %v3541
        %3543 = vmatprep.subr.mxu0 0.0
        %3544 = vmatpush1.msra.mxu0 0.0
        %3545 = vmatprep.subr.mxu0 0.0
        %3546 = vmatpush1.msra.mxu0 0.0
        %3547 = vmatprep.subr.mxu0 0.0
        %3548 = vmatpush1.msra.mxu0 0.0
        %3549 = vmatprep.subr.mxu0 0.0
        %3550 = vmatpush1.msra.mxu0 0.0
        %3551 = vmatprep.subr.mxu0 0.0
        %3552 = vmatpush1.msra.mxu0 0.0
        %3553 = vmatprep.subr.mxu0 0.0
        %3554 = vmatpush1.msra.mxu0 0.0
        %3555 = vmatprep.subr.mxu0 0.0
        %3556 = vmatpush1.msra.mxu0 0.0
        %3557 = vmatprep.subr.mxu0 0.0
        %3558 = vmatpush1.msra.mxu0 0.0
        %3559 = vmatprep.subr.mxu0 0.0
        %3560 = vmatpush1.msra.mxu0 0.0
        %3561 = vmatprep.subr.mxu0 0.0
        %3562 = vmatpush1.msra.mxu0 0.0
        %3563 = vmatprep.subr.mxu0 0.0
        %3564 = vmatpush1.msra.mxu0 0.0
        %3565 = vmatprep.subr.mxu0 0.0
        %3566 = vmatpush1.msra.mxu0 0.0
        %3567 = vmatprep.subr.mxu0 0.0
        %3568 = vmatpush1.msra.mxu0 0.0
        %3569 = vmatprep.subr.mxu0 0.0
        %3570 = vmatpush1.msra.mxu0 0.0
        %3571 = vmatprep.subr.mxu0 0.0
        %3572 = vmatpush1.msra.mxu0 0.0
        %3573 = vmatprep.subr.mxu0 0.0
        %3574 = vmatpush1.msra.mxu0 0.0
        %3575 = vmatprep.mubr.f32.mxu0 0.0
        %v3576 = vand.u32 %v1842, 4294901760
        %3577 = vmatmul.mubr.f32.gmra.mrb[0].mxu0 %v3576
        %v3578 = vpop.f32.mrb[0].mxu0
        %v3579 = vadd.f32 %v3278, %v3578
        %v3580 = vpop.f32.mrb[0].mxu0
        %3581 = vmatprep.mubr.f32.mxu0 0.0
        %v3582 = vand.u32 %v1843, 4294901760
        %3583 = vmatmul.mubr.f32.gmra.mrb[0].mxu0 %v3582
        %v3584 = vpop.f32.mrb[0].mxu0
        %v3585 = vadd.f32 %v3288, %v3584
        %v3586 = vpop.f32.mrb[0].mxu0
        %3587 = vmatprep.mubr.f32.mxu0 0.0
        %v3588 = vand.u32 %v1844, 4294901760
        %3589 = vmatmul.mubr.f32.gmra.mrb[0].mxu0 %v3588
        %v3590 = vpop.f32.mrb[0].mxu0
        %v3591 = vadd.f32 %v3298, %v3590
        %v3592 = vpop.f32.mrb[0].mxu0
        %3593 = vmatprep.mubr.f32.mxu0 0.0
        %v3594 = vand.u32 %v1845, 4294901760
        %3595 = vmatmul.mubr.f32.gmra.mrb[0].mxu0 %v3594
        %v3596 = vpop.f32.mrb[0].mxu0
        %v3597 = vadd.f32 %v3308, %v3596
        %v3598 = vpop.f32.mrb[0].mxu0
        %3599 = vmatprep.mubr.f32.mxu0 0.0
        %v3600 = vand.u32 %v1846, 4294901760
        %3601 = vmatmul.mubr.f32.gmra.mrb[0].mxu0 %v3600
        %v3602 = vpop.f32.mrb[0].mxu0
        %v3603 = vadd.f32 %v3318, %v3602
        %v3604 = vpop.f32.mrb[0].mxu0
        %3605 = vmatprep.mubr.f32.mxu0 0.0
        %v3606 = vand.u32 %v1847, 4294901760
        %3607 = vmatmul.mubr.f32.gmra.mrb[0].mxu0 %v3606
        %v3608 = vpop.f32.mrb[0].mxu0
        %v3609 = vadd.f32 %v3328, %v3608
        %v3610 = vpop.f32.mrb[0].mxu0
        %3611 = vmatprep.mubr.f32.mxu0 0.0
        %v3612 = vand.u32 %v1848, 4294901760
        %3613 = vmatmul.mubr.f32.gmra.mrb[0].mxu0 %v3612
        %v3614 = vpop.f32.mrb[0].mxu0
        %v3615 = vadd.f32 %v3338, %v3614
        %v3616 = vpop.f32.mrb[0].mxu0
        %3617 = vmatprep.mubr.f32.mxu0 0.0
        %v3618 = vand.u32 %v1849, 4294901760
        %3619 = vmatmul.mubr.f32.gmra.mrb[0].mxu0 %v3618
        %v3620 = vpop.f32.mrb[0].mxu0
        %v3621 = vadd.f32 %v3348, %v3620
        %v3622 = vpop.f32.mrb[0].mxu0
        %3623 = vmatprep.mubr.f32.mxu0 0.0
        %v3624 = vand.u32 %v1850, 4294901760
        %3625 = vmatmul.mubr.f32.gmra.mrb[0].mxu0 %v3624
        %v3626 = vpop.f32.mrb[0].mxu0
        %v3627 = vadd.f32 %v3358, %v3626
        %v3628 = vpop.f32.mrb[0].mxu0
        %3629 = vmatprep.mubr.f32.mxu0 0.0
        %v3630 = vand.u32 %v1851, 4294901760
        %3631 = vmatmul.mubr.f32.gmra.mrb[0].mxu0 %v3630
        %v3632 = vpop.f32.mrb[0].mxu0
        %v3633 = vadd.f32 %v3368, %v3632
        %v3634 = vpop.f32.mrb[0].mxu0
        %3635 = vmatprep.mubr.f32.mxu0 0.0
        %v3636 = vand.u32 %v1852, 4294901760
        %3637 = vmatmul.mubr.f32.gmra.mrb[0].mxu0 %v3636
        %v3638 = vpop.f32.mrb[0].mxu0
        %v3639 = vadd.f32 %v3378, %v3638
        %v3640 = vpop.f32.mrb[0].mxu0
        %3641 = vmatprep.mubr.f32.mxu0 0.0
        %v3642 = vand.u32 %v1853, 4294901760
        %3643 = vmatmul.mubr.f32.gmra.mrb[0].mxu0 %v3642
        %v3644 = vpop.f32.mrb[0].mxu0
        %v3645 = vadd.f32 %v3388, %v3644
        %v3646 = vpop.f32.mrb[0].mxu0
        %3647 = vmatprep.mubr.f32.mxu0 0.0
        %v3648 = vand.u32 %v1854, 4294901760
        %3649 = vmatmul.mubr.f32.gmra.mrb[0].mxu0 %v3648
        %v3650 = vpop.f32.mrb[0].mxu0
        %v3651 = vadd.f32 %v3398, %v3650
        %v3652 = vpop.f32.mrb[0].mxu0
        %3653 = vmatprep.mubr.f32.mxu0 0.0
        %v3654 = vand.u32 %v1855, 4294901760
        %3655 = vmatmul.mubr.f32.gmra.mrb[0].mxu0 %v3654
        %v3656 = vpop.f32.mrb[0].mxu0
        %v3657 = vadd.f32 %v3408, %v3656
        %v3658 = vpop.f32.mrb[0].mxu0
        %3659 = vmatprep.mubr.f32.mxu0 0.0
        %v3660 = vand.u32 %v1856, 4294901760
        %3661 = vmatmul.mubr.f32.gmra.mrb[0].mxu0 %v3660
        %v3662 = vpop.f32.mrb[0].mxu0
        %v3663 = vadd.f32 %v3418, %v3662
        %v3664 = vpop.f32.mrb[0].mxu0
        %3665 = vmatprep.mubr.f32.mxu0 0.0
        %v3666 = vand.u32 %v1857, 4294901760
        %3667 = vmatmul.mubr.f32.gmra.mrb[0].mxu0 %v3666
        %v3668 = vpop.f32.mrb[0].mxu0
        %v3669 = vadd.f32 %v3428, %v3668
        %v3670 = vpop.f32.mrb[0].mxu0
        %3671 = vdwg.mxu0
        %3672 = vmatprep.subr.mxu0 0.0
        %v3673 = vand.u32 %v3167, 4294901760
        %v3674 = vsub.f32 %v3167, %v3673
        %3675 = vmatpush1.msra.mxu0 %v3674
        %3676 = vmatprep.subr.mxu0 0.0
        %v3677 = vand.u32 %v3168, 4294901760
        %v3678 = vsub.f32 %v3168, %v3677
        %3679 = vmatpush1.msra.mxu0 %v3678
        %3680 = vmatprep.subr.mxu0 0.0
        %v3681 = vand.u32 %v3169, 4294901760
        %v3682 = vsub.f32 %v3169, %v3681
        %3683 = vmatpush1.msra.mxu0 %v3682
        %3684 = vmatprep.subr.mxu0 0.0
        %v3685 = vand.u32 %v3170, 4294901760
        %v3686 = vsub.f32 %v3170, %v3685
        %3687 = vmatpush1.msra.mxu0 %v3686
        %3688 = vmatprep.subr.mxu0 0.0
        %v3689 = vand.u32 %v3171, 4294901760
        %v3690 = vsub.f32 %v3171, %v3689
        %3691 = vmatpush1.msra.mxu0 %v3690
        %3692 = vmatprep.subr.mxu0 0.0
        %v3693 = vand.u32 %v3172, 4294901760
        %v3694 = vsub.f32 %v3172, %v3693
        %3695 = vmatpush1.msra.mxu0 %v3694
        %3696 = vmatprep.subr.mxu0 0.0
        %v3697 = vand.u32 %v3173, 4294901760
        %v3698 = vsub.f32 %v3173, %v3697
        %3699 = vmatpush1.msra.mxu0 %v3698
        %3700 = vmatprep.subr.mxu0 0.0
        %v3701 = vand.u32 %v3174, 4294901760
        %v3702 = vsub.f32 %v3174, %v3701
        %3703 = vmatpush1.msra.mxu0 %v3702
        %3704 = vmatprep.subr.mxu0 0.0
        %v3705 = vand.u32 %v3175, 4294901760
        %v3706 = vsub.f32 %v3175, %v3705
        %3707 = vmatpush1.msra.mxu0 %v3706
        %3708 = vmatprep.subr.mxu0 0.0
        %v3709 = vand.u32 %v3176, 4294901760
        %v3710 = vsub.f32 %v3176, %v3709
        %3711 = vmatpush1.msra.mxu0 %v3710
        %3712 = vmatprep.subr.mxu0 0.0
        %v3713 = vand.u32 %v3177, 4294901760
        %v3714 = vsub.f32 %v3177, %v3713
        %3715 = vmatpush1.msra.mxu0 %v3714
        %3716 = vmatprep.subr.mxu0 0.0
        %v3717 = vand.u32 %v3178, 4294901760
        %v3718 = vsub.f32 %v3178, %v3717
        %3719 = vmatpush1.msra.mxu0 %v3718
        %3720 = vmatprep.subr.mxu0 0.0
        %v3721 = vand.u32 %v3179, 4294901760
        %v3722 = vsub.f32 %v3179, %v3721
        %3723 = vmatpush1.msra.mxu0 %v3722
        %3724 = vmatprep.subr.mxu0 0.0
        %v3725 = vand.u32 %v3180, 4294901760
        %v3726 = vsub.f32 %v3180, %v3725
        %3727 = vmatpush1.msra.mxu0 %v3726
        %3728 = vmatprep.subr.mxu0 0.0
        %v3729 = vand.u32 %v3181, 4294901760
        %v3730 = vsub.f32 %v3181, %v3729
        %3731 = vmatpush1.msra.mxu0 %v3730
        %3732 = vmatprep.subr.mxu0 0.0
        %v3733 = vand.u32 %v3182, 4294901760
        %v3734 = vsub.f32 %v3182, %v3733
        %3735 = vmatpush1.msra.mxu0 %v3734
        %3736 = vmatprep.subr.mxu0 0.0
        %3737 = vmatpush1.msra.mxu0 0.0
        %3738 = vmatprep.subr.mxu0 0.0
        %3739 = vmatpush1.msra.mxu0 0.0
        %3740 = vmatprep.subr.mxu0 0.0
        %3741 = vmatpush1.msra.mxu0 0.0
        %3742 = vmatprep.subr.mxu0 0.0
        %3743 = vmatpush1.msra.mxu0 0.0
        %3744 = vmatprep.subr.mxu0 0.0
        %3745 = vmatpush1.msra.mxu0 0.0
        %3746 = vmatprep.subr.mxu0 0.0
        %3747 = vmatpush1.msra.mxu0 0.0
        %3748 = vmatprep.subr.mxu0 0.0
        %3749 = vmatpush1.msra.mxu0 0.0
        %3750 = vmatprep.subr.mxu0 0.0
        %3751 = vmatpush1.msra.mxu0 0.0
        %3752 = vmatprep.subr.mxu0 0.0
        %3753 = vmatpush1.msra.mxu0 0.0
        %3754 = vmatprep.subr.mxu0 0.0
        %3755 = vmatpush1.msra.mxu0 0.0
        %3756 = vmatprep.subr.mxu0 0.0
        %3757 = vmatpush1.msra.mxu0 0.0
        %3758 = vmatprep.subr.mxu0 0.0
        %3759 = vmatpush1.msra.mxu0 0.0
        %3760 = vmatprep.subr.mxu0 0.0
        %3761 = vmatpush1.msra.mxu0 0.0
        %3762 = vmatprep.subr.mxu0 0.0
        %3763 = vmatpush1.msra.mxu0 0.0
        %3764 = vmatprep.subr.mxu0 0.0
        %3765 = vmatpush1.msra.mxu0 0.0
        %3766 = vmatprep.subr.mxu0 0.0
        %3767 = vmatpush1.msra.mxu0 0.0
        %3768 = vmatprep.mubr.f32.mxu0 0.0
        %v3769 = vand.u32 %v1842, 4294901760
        %v3770 = vsub.f32 %v1842, %v3769
        %3771 = vmatmul.mubr.f32.gmra.mrb[0].mxu0 %v3770
        %v3772 = vpop.f32.mrb[0].mxu0
        %v3773 = vadd.f32 %v3579, %v3772
        %v3774 = vpop.f32.mrb[0].mxu0
        %3775 = vmatprep.mubr.f32.mxu0 0.0
        %v3776 = vand.u32 %v1843, 4294901760
        %v3777 = vsub.f32 %v1843, %v3776
        %3778 = vmatmul.mubr.f32.gmra.mrb[0].mxu0 %v3777
        %v3779 = vpop.f32.mrb[0].mxu0
        %v3780 = vadd.f32 %v3585, %v3779
        %v3781 = vpop.f32.mrb[0].mxu0
        %3782 = vmatprep.mubr.f32.mxu0 0.0
        %v3783 = vand.u32 %v1844, 4294901760
        %v3784 = vsub.f32 %v1844, %v3783
        %3785 = vmatmul.mubr.f32.gmra.mrb[0].mxu0 %v3784
        %v3786 = vpop.f32.mrb[0].mxu0
        %v3787 = vadd.f32 %v3591, %v3786
        %v3788 = vpop.f32.mrb[0].mxu0
        %3789 = vmatprep.mubr.f32.mxu0 0.0
        %v3790 = vand.u32 %v1845, 4294901760
        %v3791 = vsub.f32 %v1845, %v3790
        %3792 = vmatmul.mubr.f32.gmra.mrb[0].mxu0 %v3791
        %v3793 = vpop.f32.mrb[0].mxu0
        %v3794 = vadd.f32 %v3597, %v3793
        %v3795 = vpop.f32.mrb[0].mxu0
        %3796 = vmatprep.mubr.f32.mxu0 0.0
        %v3797 = vand.u32 %v1846, 4294901760
        %v3798 = vsub.f32 %v1846, %v3797
        %3799 = vmatmul.mubr.f32.gmra.mrb[0].mxu0 %v3798
        %v3800 = vpop.f32.mrb[0].mxu0
        %v3801 = vadd.f32 %v3603, %v3800
        %v3802 = vpop.f32.mrb[0].mxu0
        %3803 = vmatprep.mubr.f32.mxu0 0.0
        %v3804 = vand.u32 %v1847, 4294901760
        %v3805 = vsub.f32 %v1847, %v3804
        %3806 = vmatmul.mubr.f32.gmra.mrb[0].mxu0 %v3805
        %v3807 = vpop.f32.mrb[0].mxu0
        %v3808 = vadd.f32 %v3609, %v3807
        %v3809 = vpop.f32.mrb[0].mxu0
        %3810 = vmatprep.mubr.f32.mxu0 0.0
        %v3811 = vand.u32 %v1848, 4294901760
        %v3812 = vsub.f32 %v1848, %v3811
        %3813 = vmatmul.mubr.f32.gmra.mrb[0].mxu0 %v3812
        %v3814 = vpop.f32.mrb[0].mxu0
        %v3815 = vadd.f32 %v3615, %v3814
        %v3816 = vpop.f32.mrb[0].mxu0
        %3817 = vmatprep.mubr.f32.mxu0 0.0
        %v3818 = vand.u32 %v1849, 4294901760
        %v3819 = vsub.f32 %v1849, %v3818
        %3820 = vmatmul.mubr.f32.gmra.mrb[0].mxu0 %v3819
        %v3821 = vpop.f32.mrb[0].mxu0
        %v3822 = vadd.f32 %v3621, %v3821
        %v3823 = vpop.f32.mrb[0].mxu0
        %3824 = vmatprep.mubr.f32.mxu0 0.0
        %v3825 = vand.u32 %v1850, 4294901760
        %v3826 = vsub.f32 %v1850, %v3825
        %3827 = vmatmul.mubr.f32.gmra.mrb[0].mxu0 %v3826
        %v3828 = vpop.f32.mrb[0].mxu0
        %v3829 = vadd.f32 %v3627, %v3828
        %v3830 = vpop.f32.mrb[0].mxu0
        %3831 = vmatprep.mubr.f32.mxu0 0.0
        %v3832 = vand.u32 %v1851, 4294901760
        %v3833 = vsub.f32 %v1851, %v3832
        %3834 = vmatmul.mubr.f32.gmra.mrb[0].mxu0 %v3833
        %v3835 = vpop.f32.mrb[0].mxu0
        %v3836 = vadd.f32 %v3633, %v3835
        %v3837 = vpop.f32.mrb[0].mxu0
        %3838 = vmatprep.mubr.f32.mxu0 0.0
        %v3839 = vand.u32 %v1852, 4294901760
        %v3840 = vsub.f32 %v1852, %v3839
        %3841 = vmatmul.mubr.f32.gmra.mrb[0].mxu0 %v3840
        %v3842 = vpop.f32.mrb[0].mxu0
        %v3843 = vadd.f32 %v3639, %v3842
        %v3844 = vpop.f32.mrb[0].mxu0
        %3845 = vmatprep.mubr.f32.mxu0 0.0
        %v3846 = vand.u32 %v1853, 4294901760
        %v3847 = vsub.f32 %v1853, %v3846
        %3848 = vmatmul.mubr.f32.gmra.mrb[0].mxu0 %v3847
        %v3849 = vpop.f32.mrb[0].mxu0
        %v3850 = vadd.f32 %v3645, %v3849
        %v3851 = vpop.f32.mrb[0].mxu0
        %3852 = vmatprep.mubr.f32.mxu0 0.0
        %v3853 = vand.u32 %v1854, 4294901760
        %v3854 = vsub.f32 %v1854, %v3853
        %3855 = vmatmul.mubr.f32.gmra.mrb[0].mxu0 %v3854
        %v3856 = vpop.f32.mrb[0].mxu0
        %v3857 = vadd.f32 %v3651, %v3856
        %v3858 = vpop.f32.mrb[0].mxu0
        %3859 = vmatprep.mubr.f32.mxu0 0.0
        %v3860 = vand.u32 %v1855, 4294901760
        %v3861 = vsub.f32 %v1855, %v3860
        %3862 = vmatmul.mubr.f32.gmra.mrb[0].mxu0 %v3861
        %v3863 = vpop.f32.mrb[0].mxu0
        %v3864 = vadd.f32 %v3657, %v3863
        %v3865 = vpop.f32.mrb[0].mxu0
        %3866 = vmatprep.mubr.f32.mxu0 0.0
        %v3867 = vand.u32 %v1856, 4294901760
        %v3868 = vsub.f32 %v1856, %v3867
        %3869 = vmatmul.mubr.f32.gmra.mrb[0].mxu0 %v3868
        %v3870 = vpop.f32.mrb[0].mxu0
        %v3871 = vadd.f32 %v3663, %v3870
        %v3872 = vpop.f32.mrb[0].mxu0
        %3873 = vmatprep.mubr.f32.mxu0 0.0
        %v3874 = vand.u32 %v1857, 4294901760
        %v3875 = vsub.f32 %v1857, %v3874
        %3876 = vmatmul.mubr.f32.gmra.mrb[0].mxu0 %v3875
        %v3877 = vpop.f32.mrb[0].mxu0
        %v3878 = vadd.f32 %v3669, %v3877
        %v3879 = vpop.f32.mrb[0].mxu0
        %3880 = vdwg.mxu0
        %3881 = vmatprep.subr.mxu0 0.0
        %v3882 = vand.u32 %v3167, 4294901760
        %3883 = vmatpush1.msra.mxu0 %v3882
        %3884 = vmatprep.subr.mxu0 0.0
        %v3885 = vand.u32 %v3168, 4294901760
        %3886 = vmatpush1.msra.mxu0 %v3885
        %3887 = vmatprep.subr.mxu0 0.0
        %v3888 = vand.u32 %v3169, 4294901760
        %3889 = vmatpush1.msra.mxu0 %v3888
        %3890 = vmatprep.subr.mxu0 0.0
        %v3891 = vand.u32 %v3170, 4294901760
        %3892 = vmatpush1.msra.mxu0 %v3891
        %3893 = vmatprep.subr.mxu0 0.0
        %v3894 = vand.u32 %v3171, 4294901760
        %3895 = vmatpush1.msra.mxu0 %v3894
        %3896 = vmatprep.subr.mxu0 0.0
        %v3897 = vand.u32 %v3172, 4294901760
        %3898 = vmatpush1.msra.mxu0 %v3897
        %3899 = vmatprep.subr.mxu0 0.0
        %v3900 = vand.u32 %v3173, 4294901760
        %3901 = vmatpush1.msra.mxu0 %v3900
        %3902 = vmatprep.subr.mxu0 0.0
        %v3903 = vand.u32 %v3174, 4294901760
        %3904 = vmatpush1.msra.mxu0 %v3903
        %3905 = vmatprep.subr.mxu0 0.0
        %v3906 = vand.u32 %v3175, 4294901760
        %3907 = vmatpush1.msra.mxu0 %v3906
        %3908 = vmatprep.subr.mxu0 0.0
        %v3909 = vand.u32 %v3176, 4294901760
        %3910 = vmatpush1.msra.mxu0 %v3909
        %3911 = vmatprep.subr.mxu0 0.0
        %v3912 = vand.u32 %v3177, 4294901760
        %3913 = vmatpush1.msra.mxu0 %v3912
        %3914 = vmatprep.subr.mxu0 0.0
        %v3915 = vand.u32 %v3178, 4294901760
        %3916 = vmatpush1.msra.mxu0 %v3915
        %3917 = vmatprep.subr.mxu0 0.0
        %v3918 = vand.u32 %v3179, 4294901760
        %3919 = vmatpush1.msra.mxu0 %v3918
        %3920 = vmatprep.subr.mxu0 0.0
        %v3921 = vand.u32 %v3180, 4294901760
        %3922 = vmatpush1.msra.mxu0 %v3921
        %3923 = vmatprep.subr.mxu0 0.0
        %v3924 = vand.u32 %v3181, 4294901760
        %3925 = vmatpush1.msra.mxu0 %v3924
        %3926 = vmatprep.subr.mxu0 0.0
        %v3927 = vand.u32 %v3182, 4294901760
        %3928 = vmatpush1.msra.mxu0 %v3927
        %3929 = vmatprep.subr.mxu0 0.0
        %3930 = vmatpush1.msra.mxu0 0.0
        %3931 = vmatprep.subr.mxu0 0.0
        %3932 = vmatpush1.msra.mxu0 0.0
        %3933 = vmatprep.subr.mxu0 0.0
        %3934 = vmatpush1.msra.mxu0 0.0
        %3935 = vmatprep.subr.mxu0 0.0
        %3936 = vmatpush1.msra.mxu0 0.0
        %3937 = vmatprep.subr.mxu0 0.0
        %3938 = vmatpush1.msra.mxu0 0.0
        %3939 = vmatprep.subr.mxu0 0.0
        %3940 = vmatpush1.msra.mxu0 0.0
        %3941 = vmatprep.subr.mxu0 0.0
        %3942 = vmatpush1.msra.mxu0 0.0
        %3943 = vmatprep.subr.mxu0 0.0
        %3944 = vmatpush1.msra.mxu0 0.0
        %3945 = vmatprep.subr.mxu0 0.0
        %3946 = vmatpush1.msra.mxu0 0.0
        %3947 = vmatprep.subr.mxu0 0.0
        %3948 = vmatpush1.msra.mxu0 0.0
        %3949 = vmatprep.subr.mxu0 0.0
        %3950 = vmatpush1.msra.mxu0 0.0
        %3951 = vmatprep.subr.mxu0 0.0
        %3952 = vmatpush1.msra.mxu0 0.0
        %3953 = vmatprep.subr.mxu0 0.0
        %3954 = vmatpush1.msra.mxu0 0.0
        %3955 = vmatprep.subr.mxu0 0.0
        %3956 = vmatpush1.msra.mxu0 0.0
        %3957 = vmatprep.subr.mxu0 0.0
        %3958 = vmatpush1.msra.mxu0 0.0
        %3959 = vmatprep.subr.mxu0 0.0
        %3960 = vmatpush1.msra.mxu0 0.0
        %3961 = vmatprep.mubr.f32.mxu0 0.0
        %v3962 = vand.u32 %v1842, 4294901760
        %v3963 = vsub.f32 %v1842, %v3962
        %v3964 = vand.u32 %v3963, 4294901760
        %3965 = vmatmul.mubr.f32.gmra.mrb[0].mxu0 %v3964
        %v3966 = vpop.f32.mrb[0].mxu0
        %v3967 = vadd.f32 %v3773, %v3966
        %v3968 = vpop.f32.mrb[0].mxu0
        %3969 = vmatprep.mubr.f32.mxu0 0.0
        %v3970 = vand.u32 %v1843, 4294901760
        %v3971 = vsub.f32 %v1843, %v3970
        %v3972 = vand.u32 %v3971, 4294901760
        %3973 = vmatmul.mubr.f32.gmra.mrb[0].mxu0 %v3972
        %v3974 = vpop.f32.mrb[0].mxu0
        %v3975 = vadd.f32 %v3780, %v3974
        %v3976 = vpop.f32.mrb[0].mxu0
        %3977 = vmatprep.mubr.f32.mxu0 0.0
        %v3978 = vand.u32 %v1844, 4294901760
        %v3979 = vsub.f32 %v1844, %v3978
        %v3980 = vand.u32 %v3979, 4294901760
        %3981 = vmatmul.mubr.f32.gmra.mrb[0].mxu0 %v3980
        %v3982 = vpop.f32.mrb[0].mxu0
        %v3983 = vadd.f32 %v3787, %v3982
        %v3984 = vpop.f32.mrb[0].mxu0
        %3985 = vmatprep.mubr.f32.mxu0 0.0
        %v3986 = vand.u32 %v1845, 4294901760
        %v3987 = vsub.f32 %v1845, %v3986
        %v3988 = vand.u32 %v3987, 4294901760
        %3989 = vmatmul.mubr.f32.gmra.mrb[0].mxu0 %v3988
        %v3990 = vpop.f32.mrb[0].mxu0
        %v3991 = vadd.f32 %v3794, %v3990
        %v3992 = vpop.f32.mrb[0].mxu0
        %3993 = vmatprep.mubr.f32.mxu0 0.0
        %v3994 = vand.u32 %v1846, 4294901760
        %v3995 = vsub.f32 %v1846, %v3994
        %v3996 = vand.u32 %v3995, 4294901760
        %3997 = vmatmul.mubr.f32.gmra.mrb[0].mxu0 %v3996
        %v3998 = vpop.f32.mrb[0].mxu0
        %v3999 = vadd.f32 %v3801, %v3998
        %v4000 = vpop.f32.mrb[0].mxu0
        %4001 = vmatprep.mubr.f32.mxu0 0.0
        %v4002 = vand.u32 %v1847, 4294901760
        %v4003 = vsub.f32 %v1847, %v4002
        %v4004 = vand.u32 %v4003, 4294901760
        %4005 = vmatmul.mubr.f32.gmra.mrb[0].mxu0 %v4004
        %v4006 = vpop.f32.mrb[0].mxu0
        %v4007 = vadd.f32 %v3808, %v4006
        %v4008 = vpop.f32.mrb[0].mxu0
        %4009 = vmatprep.mubr.f32.mxu0 0.0
        %v4010 = vand.u32 %v1848, 4294901760
        %v4011 = vsub.f32 %v1848, %v4010
        %v4012 = vand.u32 %v4011, 4294901760
        %4013 = vmatmul.mubr.f32.gmra.mrb[0].mxu0 %v4012
        %v4014 = vpop.f32.mrb[0].mxu0
        %v4015 = vadd.f32 %v3815, %v4014
        %v4016 = vpop.f32.mrb[0].mxu0
        %4017 = vmatprep.mubr.f32.mxu0 0.0
        %v4018 = vand.u32 %v1849, 4294901760
        %v4019 = vsub.f32 %v1849, %v4018
        %v4020 = vand.u32 %v4019, 4294901760
        %4021 = vmatmul.mubr.f32.gmra.mrb[0].mxu0 %v4020
        %v4022 = vpop.f32.mrb[0].mxu0
        %v4023 = vadd.f32 %v3822, %v4022
        %v4024 = vpop.f32.mrb[0].mxu0
        %4025 = vmatprep.mubr.f32.mxu0 0.0
        %v4026 = vand.u32 %v1850, 4294901760
        %v4027 = vsub.f32 %v1850, %v4026
        %v4028 = vand.u32 %v4027, 4294901760
        %4029 = vmatmul.mubr.f32.gmra.mrb[0].mxu0 %v4028
        %v4030 = vpop.f32.mrb[0].mxu0
        %v4031 = vadd.f32 %v3829, %v4030
        %v4032 = vpop.f32.mrb[0].mxu0
        %4033 = vmatprep.mubr.f32.mxu0 0.0
        %v4034 = vand.u32 %v1851, 4294901760
        %v4035 = vsub.f32 %v1851, %v4034
        %v4036 = vand.u32 %v4035, 4294901760
        %4037 = vmatmul.mubr.f32.gmra.mrb[0].mxu0 %v4036
        %v4038 = vpop.f32.mrb[0].mxu0
        %v4039 = vadd.f32 %v3836, %v4038
        %v4040 = vpop.f32.mrb[0].mxu0
        %4041 = vmatprep.mubr.f32.mxu0 0.0
        %v4042 = vand.u32 %v1852, 4294901760
        %v4043 = vsub.f32 %v1852, %v4042
        %v4044 = vand.u32 %v4043, 4294901760
        %4045 = vmatmul.mubr.f32.gmra.mrb[0].mxu0 %v4044
        %v4046 = vpop.f32.mrb[0].mxu0
        %v4047 = vadd.f32 %v3843, %v4046
        %v4048 = vpop.f32.mrb[0].mxu0
        %4049 = vmatprep.mubr.f32.mxu0 0.0
        %v4050 = vand.u32 %v1853, 4294901760
        %v4051 = vsub.f32 %v1853, %v4050
        %v4052 = vand.u32 %v4051, 4294901760
        %4053 = vmatmul.mubr.f32.gmra.mrb[0].mxu0 %v4052
        %v4054 = vpop.f32.mrb[0].mxu0
        %v4055 = vadd.f32 %v3850, %v4054
        %v4056 = vpop.f32.mrb[0].mxu0
        %4057 = vmatprep.mubr.f32.mxu0 0.0
        %v4058 = vand.u32 %v1854, 4294901760
        %v4059 = vsub.f32 %v1854, %v4058
        %v4060 = vand.u32 %v4059, 4294901760
        %4061 = vmatmul.mubr.f32.gmra.mrb[0].mxu0 %v4060
        %v4062 = vpop.f32.mrb[0].mxu0
        %v4063 = vadd.f32 %v3857, %v4062
        %v4064 = vpop.f32.mrb[0].mxu0
        %4065 = vmatprep.mubr.f32.mxu0 0.0
        %v4066 = vand.u32 %v1855, 4294901760
        %v4067 = vsub.f32 %v1855, %v4066
        %v4068 = vand.u32 %v4067, 4294901760
        %4069 = vmatmul.mubr.f32.gmra.mrb[0].mxu0 %v4068
        %v4070 = vpop.f32.mrb[0].mxu0
        %v4071 = vadd.f32 %v3864, %v4070
        %v4072 = vpop.f32.mrb[0].mxu0
        %4073 = vmatprep.mubr.f32.mxu0 0.0
        %v4074 = vand.u32 %v1856, 4294901760
        %v4075 = vsub.f32 %v1856, %v4074
        %v4076 = vand.u32 %v4075, 4294901760
        %4077 = vmatmul.mubr.f32.gmra.mrb[0].mxu0 %v4076
        %v4078 = vpop.f32.mrb[0].mxu0
        %v4079 = vadd.f32 %v3871, %v4078
        %v4080 = vpop.f32.mrb[0].mxu0
        %4081 = vmatprep.mubr.f32.mxu0 0.0
        %v4082 = vand.u32 %v1857, 4294901760
        %v4083 = vsub.f32 %v1857, %v4082
        %v4084 = vand.u32 %v4083, 4294901760
        %4085 = vmatmul.mubr.f32.gmra.mrb[0].mxu0 %v4084
        %v4086 = vpop.f32.mrb[0].mxu0
        %v4087 = vadd.f32 %v3878, %v4086
        %v4088 = vpop.f32.mrb[0].mxu0
        %4089 = vdwg.mxu0
        %4090 = vmatprep.subr.mxu0 0.0
        %v4091 = vand.u32 %v3167, 4294901760
        %v4092 = vsub.f32 %v3167, %v4091
        %v4093 = vand.u32 %v4092, 4294901760
        %4094 = vmatpush1.msra.mxu0 %v4093
        %4095 = vmatprep.subr.mxu0 0.0
        %v4096 = vand.u32 %v3168, 4294901760
        %v4097 = vsub.f32 %v3168, %v4096
        %v4098 = vand.u32 %v4097, 4294901760
        %4099 = vmatpush1.msra.mxu0 %v4098
        %4100 = vmatprep.subr.mxu0 0.0
        %v4101 = vand.u32 %v3169, 4294901760
        %v4102 = vsub.f32 %v3169, %v4101
        %v4103 = vand.u32 %v4102, 4294901760
        %4104 = vmatpush1.msra.mxu0 %v4103
        %4105 = vmatprep.subr.mxu0 0.0
        %v4106 = vand.u32 %v3170, 4294901760
        %v4107 = vsub.f32 %v3170, %v4106
        %v4108 = vand.u32 %v4107, 4294901760
        %4109 = vmatpush1.msra.mxu0 %v4108
        %4110 = vmatprep.subr.mxu0 0.0
        %v4111 = vand.u32 %v3171, 4294901760
        %v4112 = vsub.f32 %v3171, %v4111
        %v4113 = vand.u32 %v4112, 4294901760
        %4114 = vmatpush1.msra.mxu0 %v4113
        %4115 = vmatprep.subr.mxu0 0.0
        %v4116 = vand.u32 %v3172, 4294901760
        %v4117 = vsub.f32 %v3172, %v4116
        %v4118 = vand.u32 %v4117, 4294901760
        %4119 = vmatpush1.msra.mxu0 %v4118
        %4120 = vmatprep.subr.mxu0 0.0
        %v4121 = vand.u32 %v3173, 4294901760
        %v4122 = vsub.f32 %v3173, %v4121
        %v4123 = vand.u32 %v4122, 4294901760
        %4124 = vmatpush1.msra.mxu0 %v4123
        %4125 = vmatprep.subr.mxu0 0.0
        %v4126 = vand.u32 %v3174, 4294901760
        %v4127 = vsub.f32 %v3174, %v4126
        %v4128 = vand.u32 %v4127, 4294901760
        %4129 = vmatpush1.msra.mxu0 %v4128
        %4130 = vmatprep.subr.mxu0 0.0
        %v4131 = vand.u32 %v3175, 4294901760
        %v4132 = vsub.f32 %v3175, %v4131
        %v4133 = vand.u32 %v4132, 4294901760
        %4134 = vmatpush1.msra.mxu0 %v4133
        %4135 = vmatprep.subr.mxu0 0.0
        %v4136 = vand.u32 %v3176, 4294901760
        %v4137 = vsub.f32 %v3176, %v4136
        %v4138 = vand.u32 %v4137, 4294901760
        %4139 = vmatpush1.msra.mxu0 %v4138
        %4140 = vmatprep.subr.mxu0 0.0
        %v4141 = vand.u32 %v3177, 4294901760
        %v4142 = vsub.f32 %v3177, %v4141
        %v4143 = vand.u32 %v4142, 4294901760
        %4144 = vmatpush1.msra.mxu0 %v4143
        %4145 = vmatprep.subr.mxu0 0.0
        %v4146 = vand.u32 %v3178, 4294901760
        %v4147 = vsub.f32 %v3178, %v4146
        %v4148 = vand.u32 %v4147, 4294901760
        %4149 = vmatpush1.msra.mxu0 %v4148
        %4150 = vmatprep.subr.mxu0 0.0
        %v4151 = vand.u32 %v3179, 4294901760
        %v4152 = vsub.f32 %v3179, %v4151
        %v4153 = vand.u32 %v4152, 4294901760
        %4154 = vmatpush1.msra.mxu0 %v4153
        %4155 = vmatprep.subr.mxu0 0.0
        %v4156 = vand.u32 %v3180, 4294901760
        %v4157 = vsub.f32 %v3180, %v4156
        %v4158 = vand.u32 %v4157, 4294901760
        %4159 = vmatpush1.msra.mxu0 %v4158
        %4160 = vmatprep.subr.mxu0 0.0
        %v4161 = vand.u32 %v3181, 4294901760
        %v4162 = vsub.f32 %v3181, %v4161
        %v4163 = vand.u32 %v4162, 4294901760
        %4164 = vmatpush1.msra.mxu0 %v4163
        %4165 = vmatprep.subr.mxu0 0.0
        %v4166 = vand.u32 %v3182, 4294901760
        %v4167 = vsub.f32 %v3182, %v4166
        %v4168 = vand.u32 %v4167, 4294901760
        %4169 = vmatpush1.msra.mxu0 %v4168
        %4170 = vmatprep.subr.mxu0 0.0
        %4171 = vmatpush1.msra.mxu0 0.0
        %4172 = vmatprep.subr.mxu0 0.0
        %4173 = vmatpush1.msra.mxu0 0.0
        %4174 = vmatprep.subr.mxu0 0.0
        %4175 = vmatpush1.msra.mxu0 0.0
        %4176 = vmatprep.subr.mxu0 0.0
        %4177 = vmatpush1.msra.mxu0 0.0
        %4178 = vmatprep.subr.mxu0 0.0
        %4179 = vmatpush1.msra.mxu0 0.0
        %4180 = vmatprep.subr.mxu0 0.0
        %4181 = vmatpush1.msra.mxu0 0.0
        %4182 = vmatprep.subr.mxu0 0.0
        %4183 = vmatpush1.msra.mxu0 0.0
        %4184 = vmatprep.subr.mxu0 0.0
        %4185 = vmatpush1.msra.mxu0 0.0
        %4186 = vmatprep.subr.mxu0 0.0
        %4187 = vmatpush1.msra.mxu0 0.0
        %4188 = vmatprep.subr.mxu0 0.0
        %4189 = vmatpush1.msra.mxu0 0.0
        %4190 = vmatprep.subr.mxu0 0.0
        %4191 = vmatpush1.msra.mxu0 0.0
        %4192 = vmatprep.subr.mxu0 0.0
        %4193 = vmatpush1.msra.mxu0 0.0
        %4194 = vmatprep.subr.mxu0 0.0
        %4195 = vmatpush1.msra.mxu0 0.0
        %4196 = vmatprep.subr.mxu0 0.0
        %4197 = vmatpush1.msra.mxu0 0.0
        %4198 = vmatprep.subr.mxu0 0.0
        %4199 = vmatpush1.msra.mxu0 0.0
        %4200 = vmatprep.subr.mxu0 0.0
        %4201 = vmatpush1.msra.mxu0 0.0
        %4202 = vmatprep.mubr.f32.mxu0 0.0
        %v4203 = vand.u32 %v1842, 4294901760
        %4204 = vmatmul.mubr.f32.gmra.mrb[0].mxu0 %v4203
        %v4205 = vpop.f32.mrb[0].mxu0
        %v4206 = vadd.f32 %v3967, %v4205
        %v4207 = vpop.f32.mrb[0].mxu0
        %4208 = vmatprep.mubr.f32.mxu0 0.0
        %v4209 = vand.u32 %v1843, 4294901760
        %4210 = vmatmul.mubr.f32.gmra.mrb[0].mxu0 %v4209
        %v4211 = vpop.f32.mrb[0].mxu0
        %v4212 = vadd.f32 %v3975, %v4211
        %v4213 = vpop.f32.mrb[0].mxu0
        %4214 = vmatprep.mubr.f32.mxu0 0.0
        %v4215 = vand.u32 %v1844, 4294901760
        %4216 = vmatmul.mubr.f32.gmra.mrb[0].mxu0 %v4215
        %v4217 = vpop.f32.mrb[0].mxu0
        %v4218 = vadd.f32 %v3983, %v4217
        %v4219 = vpop.f32.mrb[0].mxu0
        %4220 = vmatprep.mubr.f32.mxu0 0.0
        %v4221 = vand.u32 %v1845, 4294901760
        %4222 = vmatmul.mubr.f32.gmra.mrb[0].mxu0 %v4221
        %v4223 = vpop.f32.mrb[0].mxu0
        %v4224 = vadd.f32 %v3991, %v4223
        %v4225 = vpop.f32.mrb[0].mxu0
        %4226 = vmatprep.mubr.f32.mxu0 0.0
        %v4227 = vand.u32 %v1846, 4294901760
        %4228 = vmatmul.mubr.f32.gmra.mrb[0].mxu0 %v4227
        %v4229 = vpop.f32.mrb[0].mxu0
        %v4230 = vadd.f32 %v3999, %v4229
        %v4231 = vpop.f32.mrb[0].mxu0
        %4232 = vmatprep.mubr.f32.mxu0 0.0
        %v4233 = vand.u32 %v1847, 4294901760
        %4234 = vmatmul.mubr.f32.gmra.mrb[0].mxu0 %v4233
        %v4235 = vpop.f32.mrb[0].mxu0
        %v4236 = vadd.f32 %v4007, %v4235
        %v4237 = vpop.f32.mrb[0].mxu0
        %4238 = vmatprep.mubr.f32.mxu0 0.0
        %v4239 = vand.u32 %v1848, 4294901760
        %4240 = vmatmul.mubr.f32.gmra.mrb[0].mxu0 %v4239
        %v4241 = vpop.f32.mrb[0].mxu0
        %v4242 = vadd.f32 %v4015, %v4241
        %v4243 = vpop.f32.mrb[0].mxu0
        %4244 = vmatprep.mubr.f32.mxu0 0.0
        %v4245 = vand.u32 %v1849, 4294901760
        %4246 = vmatmul.mubr.f32.gmra.mrb[0].mxu0 %v4245
        %v4247 = vpop.f32.mrb[0].mxu0
        %v4248 = vadd.f32 %v4023, %v4247
        %v4249 = vpop.f32.mrb[0].mxu0
        %4250 = vmatprep.mubr.f32.mxu0 0.0
        %v4251 = vand.u32 %v1850, 4294901760
        %4252 = vmatmul.mubr.f32.gmra.mrb[0].mxu0 %v4251
        %v4253 = vpop.f32.mrb[0].mxu0
        %v4254 = vadd.f32 %v4031, %v4253
        %v4255 = vpop.f32.mrb[0].mxu0
        %4256 = vmatprep.mubr.f32.mxu0 0.0
        %v4257 = vand.u32 %v1851, 4294901760
        %4258 = vmatmul.mubr.f32.gmra.mrb[0].mxu0 %v4257
        %v4259 = vpop.f32.mrb[0].mxu0
        %v4260 = vadd.f32 %v4039, %v4259
        %v4261 = vpop.f32.mrb[0].mxu0
        %4262 = vmatprep.mubr.f32.mxu0 0.0
        %v4263 = vand.u32 %v1852, 4294901760
        %4264 = vmatmul.mubr.f32.gmra.mrb[0].mxu0 %v4263
        %v4265 = vpop.f32.mrb[0].mxu0
        %v4266 = vadd.f32 %v4047, %v4265
        %v4267 = vpop.f32.mrb[0].mxu0
        %4268 = vmatprep.mubr.f32.mxu0 0.0
        %v4269 = vand.u32 %v1853, 4294901760
        %4270 = vmatmul.mubr.f32.gmra.mrb[0].mxu0 %v4269
        %v4271 = vpop.f32.mrb[0].mxu0
        %v4272 = vadd.f32 %v4055, %v4271
        %v4273 = vpop.f32.mrb[0].mxu0
        %4274 = vmatprep.mubr.f32.mxu0 0.0
        %v4275 = vand.u32 %v1854, 4294901760
        %4276 = vmatmul.mubr.f32.gmra.mrb[0].mxu0 %v4275
        %v4277 = vpop.f32.mrb[0].mxu0
        %v4278 = vadd.f32 %v4063, %v4277
        %v4279 = vpop.f32.mrb[0].mxu0
        %4280 = vmatprep.mubr.f32.mxu0 0.0
        %v4281 = vand.u32 %v1855, 4294901760
        %4282 = vmatmul.mubr.f32.gmra.mrb[0].mxu0 %v4281
        %v4283 = vpop.f32.mrb[0].mxu0
        %v4284 = vadd.f32 %v4071, %v4283
        %v4285 = vpop.f32.mrb[0].mxu0
        %4286 = vmatprep.mubr.f32.mxu0 0.0
        %v4287 = vand.u32 %v1856, 4294901760
        %4288 = vmatmul.mubr.f32.gmra.mrb[0].mxu0 %v4287
        %v4289 = vpop.f32.mrb[0].mxu0
        %v4290 = vadd.f32 %v4079, %v4289
        %v4291 = vpop.f32.mrb[0].mxu0
        %4292 = vmatprep.mubr.f32.mxu0 0.0
        %v4293 = vand.u32 %v1857, 4294901760
        %4294 = vmatmul.mubr.f32.gmra.mrb[0].mxu0 %v4293
        %v4295 = vpop.f32.mrb[0].mxu0
        %v4296 = vadd.f32 %v4087, %v4295
        %v4297 = vpop.f32.mrb[0].mxu0
        %4298 = vdwg.mxu0
        %4299 = vmatprep.subr.mxu0 0.0
        %v4300 = vand.u32 %v3167, 4294901760
        %4301 = vmatpush1.msra.mxu0 %v4300
        %4302 = vmatprep.subr.mxu0 0.0
        %v4303 = vand.u32 %v3168, 4294901760
        %4304 = vmatpush1.msra.mxu0 %v4303
        %4305 = vmatprep.subr.mxu0 0.0
        %v4306 = vand.u32 %v3169, 4294901760
        %4307 = vmatpush1.msra.mxu0 %v4306
        %4308 = vmatprep.subr.mxu0 0.0
        %v4309 = vand.u32 %v3170, 4294901760
        %4310 = vmatpush1.msra.mxu0 %v4309
        %4311 = vmatprep.subr.mxu0 0.0
        %v4312 = vand.u32 %v3171, 4294901760
        %4313 = vmatpush1.msra.mxu0 %v4312
        %4314 = vmatprep.subr.mxu0 0.0
        %v4315 = vand.u32 %v3172, 4294901760
        %4316 = vmatpush1.msra.mxu0 %v4315
        %4317 = vmatprep.subr.mxu0 0.0
        %v4318 = vand.u32 %v3173, 4294901760
        %4319 = vmatpush1.msra.mxu0 %v4318
        %4320 = vmatprep.subr.mxu0 0.0
        %v4321 = vand.u32 %v3174, 4294901760
        %4322 = vmatpush1.msra.mxu0 %v4321
        %4323 = vmatprep.subr.mxu0 0.0
        %v4324 = vand.u32 %v3175, 4294901760
        %4325 = vmatpush1.msra.mxu0 %v4324
        %4326 = vmatprep.subr.mxu0 0.0
        %v4327 = vand.u32 %v3176, 4294901760
        %4328 = vmatpush1.msra.mxu0 %v4327
        %4329 = vmatprep.subr.mxu0 0.0
        %v4330 = vand.u32 %v3177, 4294901760
        %4331 = vmatpush1.msra.mxu0 %v4330
        %4332 = vmatprep.subr.mxu0 0.0
        %v4333 = vand.u32 %v3178, 4294901760
        %4334 = vmatpush1.msra.mxu0 %v4333
        %4335 = vmatprep.subr.mxu0 0.0
        %v4336 = vand.u32 %v3179, 4294901760
        %4337 = vmatpush1.msra.mxu0 %v4336
        %4338 = vmatprep.subr.mxu0 0.0
        %v4339 = vand.u32 %v3180, 4294901760
        %4340 = vmatpush1.msra.mxu0 %v4339
        %4341 = vmatprep.subr.mxu0 0.0
        %v4342 = vand.u32 %v3181, 4294901760
        %4343 = vmatpush1.msra.mxu0 %v4342
        %4344 = vmatprep.subr.mxu0 0.0
        %v4345 = vand.u32 %v3182, 4294901760
        %4346 = vmatpush1.msra.mxu0 %v4345
        %4347 = vmatprep.subr.mxu0 0.0
        %4348 = vmatpush1.msra.mxu0 0.0
        %4349 = vmatprep.subr.mxu0 0.0
        %4350 = vmatpush1.msra.mxu0 0.0
        %4351 = vmatprep.subr.mxu0 0.0
        %4352 = vmatpush1.msra.mxu0 0.0
        %4353 = vmatprep.subr.mxu0 0.0
        %4354 = vmatpush1.msra.mxu0 0.0
        %4355 = vmatprep.subr.mxu0 0.0
        %4356 = vmatpush1.msra.mxu0 0.0
        %4357 = vmatprep.subr.mxu0 0.0
        %4358 = vmatpush1.msra.mxu0 0.0
        %4359 = vmatprep.subr.mxu0 0.0
        %4360 = vmatpush1.msra.mxu0 0.0
        %4361 = vmatprep.subr.mxu0 0.0
        %4362 = vmatpush1.msra.mxu0 0.0
        %4363 = vmatprep.subr.mxu0 0.0
        %4364 = vmatpush1.msra.mxu0 0.0
        %4365 = vmatprep.subr.mxu0 0.0
        %4366 = vmatpush1.msra.mxu0 0.0
        %4367 = vmatprep.subr.mxu0 0.0
        %4368 = vmatpush1.msra.mxu0 0.0
        %4369 = vmatprep.subr.mxu0 0.0
        %4370 = vmatpush1.msra.mxu0 0.0
        %4371 = vmatprep.subr.mxu0 0.0
        %4372 = vmatpush1.msra.mxu0 0.0
        %4373 = vmatprep.subr.mxu0 0.0
        %4374 = vmatpush1.msra.mxu0 0.0
        %4375 = vmatprep.subr.mxu0 0.0
        %4376 = vmatpush1.msra.mxu0 0.0
        %4377 = vmatprep.subr.mxu0 0.0
        %4378 = vmatpush1.msra.mxu0 0.0
        %4379 = vmatprep.mubr.f32.mxu0 0.0
        %v4380 = vand.u32 %v1842, 4294901760
        %4381 = vmatmul.mubr.f32.gmra.mrb[0].mxu0 %v4380
        %v4382 = vpop.f32.mrb[0].mxu0
        %v4383 = vadd.f32 %v4206, %v4382
        %v4384 = vpop.f32.mrb[0].mxu0
        %4385 = vmatprep.mubr.f32.mxu0 0.0
        %v4386 = vand.u32 %v1843, 4294901760
        %4387 = vmatmul.mubr.f32.gmra.mrb[0].mxu0 %v4386
        %v4388 = vpop.f32.mrb[0].mxu0
        %v4389 = vadd.f32 %v4212, %v4388
        %v4390 = vpop.f32.mrb[0].mxu0
        %4391 = vmatprep.mubr.f32.mxu0 0.0
        %v4392 = vand.u32 %v1844, 4294901760
        %4393 = vmatmul.mubr.f32.gmra.mrb[0].mxu0 %v4392
        %v4394 = vpop.f32.mrb[0].mxu0
        %v4395 = vadd.f32 %v4218, %v4394
        %v4396 = vpop.f32.mrb[0].mxu0
        %4397 = vmatprep.mubr.f32.mxu0 0.0
        %v4398 = vand.u32 %v1845, 4294901760
        %4399 = vmatmul.mubr.f32.gmra.mrb[0].mxu0 %v4398
        %v4400 = vpop.f32.mrb[0].mxu0
        %v4401 = vadd.f32 %v4224, %v4400
        %v4402 = vpop.f32.mrb[0].mxu0
        %4403 = vmatprep.mubr.f32.mxu0 0.0
        %v4404 = vand.u32 %v1846, 4294901760
        %4405 = vmatmul.mubr.f32.gmra.mrb[0].mxu0 %v4404
        %v4406 = vpop.f32.mrb[0].mxu0
        %v4407 = vadd.f32 %v4230, %v4406
        %v4408 = vpop.f32.mrb[0].mxu0
        %4409 = vmatprep.mubr.f32.mxu0 0.0
        %v4410 = vand.u32 %v1847, 4294901760
        %4411 = vmatmul.mubr.f32.gmra.mrb[0].mxu0 %v4410
        %v4412 = vpop.f32.mrb[0].mxu0
        %v4413 = vadd.f32 %v4236, %v4412
        %v4414 = vpop.f32.mrb[0].mxu0
        %4415 = vmatprep.mubr.f32.mxu0 0.0
        %v4416 = vand.u32 %v1848, 4294901760
        %4417 = vmatmul.mubr.f32.gmra.mrb[0].mxu0 %v4416
        %v4418 = vpop.f32.mrb[0].mxu0
        %v4419 = vadd.f32 %v4242, %v4418
        %v4420 = vpop.f32.mrb[0].mxu0
        %4421 = vmatprep.mubr.f32.mxu0 0.0
        %v4422 = vand.u32 %v1849, 4294901760
        %4423 = vmatmul.mubr.f32.gmra.mrb[0].mxu0 %v4422
        %v4424 = vpop.f32.mrb[0].mxu0
        %v4425 = vadd.f32 %v4248, %v4424
        %v4426 = vpop.f32.mrb[0].mxu0
        %4427 = vmatprep.mubr.f32.mxu0 0.0
        %v4428 = vand.u32 %v1850, 4294901760
        %4429 = vmatmul.mubr.f32.gmra.mrb[0].mxu0 %v4428
        %v4430 = vpop.f32.mrb[0].mxu0
        %v4431 = vadd.f32 %v4254, %v4430
        %v4432 = vpop.f32.mrb[0].mxu0
        %4433 = vmatprep.mubr.f32.mxu0 0.0
        %v4434 = vand.u32 %v1851, 4294901760
        %4435 = vmatmul.mubr.f32.gmra.mrb[0].mxu0 %v4434
        %v4436 = vpop.f32.mrb[0].mxu0
        %v4437 = vadd.f32 %v4260, %v4436
        %v4438 = vpop.f32.mrb[0].mxu0
        %4439 = vmatprep.mubr.f32.mxu0 0.0
        %v4440 = vand.u32 %v1852, 4294901760
        %4441 = vmatmul.mubr.f32.gmra.mrb[0].mxu0 %v4440
        %v4442 = vpop.f32.mrb[0].mxu0
        %v4443 = vadd.f32 %v4266, %v4442
        %v4444 = vpop.f32.mrb[0].mxu0
        %4445 = vmatprep.mubr.f32.mxu0 0.0
        %v4446 = vand.u32 %v1853, 4294901760
        %4447 = vmatmul.mubr.f32.gmra.mrb[0].mxu0 %v4446
        %v4448 = vpop.f32.mrb[0].mxu0
        %v4449 = vadd.f32 %v4272, %v4448
        %v4450 = vpop.f32.mrb[0].mxu0
        %4451 = vmatprep.mubr.f32.mxu0 0.0
        %v4452 = vand.u32 %v1854, 4294901760
        %4453 = vmatmul.mubr.f32.gmra.mrb[0].mxu0 %v4452
        %v4454 = vpop.f32.mrb[0].mxu0
        %v4455 = vadd.f32 %v4278, %v4454
        %v4456 = vpop.f32.mrb[0].mxu0
        %4457 = vmatprep.mubr.f32.mxu0 0.0
        %v4458 = vand.u32 %v1855, 4294901760
        %4459 = vmatmul.mubr.f32.gmra.mrb[0].mxu0 %v4458
        %v4460 = vpop.f32.mrb[0].mxu0
        %v4461 = vadd.f32 %v4284, %v4460
        %v4462 = vpop.f32.mrb[0].mxu0
        %4463 = vmatprep.mubr.f32.mxu0 0.0
        %v4464 = vand.u32 %v1856, 4294901760
        %4465 = vmatmul.mubr.f32.gmra.mrb[0].mxu0 %v4464
        %v4466 = vpop.f32.mrb[0].mxu0
        %v4467 = vadd.f32 %v4290, %v4466
        %v4468 = vpop.f32.mrb[0].mxu0
        %4469 = vmatprep.mubr.f32.mxu0 0.0
        %v4470 = vand.u32 %v1857, 4294901760
        %4471 = vmatmul.mubr.f32.gmra.mrb[0].mxu0 %v4470
        %v4472 = vpop.f32.mrb[0].mxu0
        %v4473 = vadd.f32 %v4296, %v4472
        %v4474 = vpop.f32.mrb[0].mxu0
        %4475 = vdwg.mxu0
        %v4476 = vld [vmem:[#allocation8] sm:$0xff]
        %v4477 = vld [vmem:[#allocation8 + $0x8] sm:$0xff]
        %v4478 = vld [vmem:[#allocation8 + $0x10] sm:$0xff]
        %v4479 = vld [vmem:[#allocation8 + $0x18] sm:$0xff]
        %v4480 = vld [vmem:[#allocation8 + $0x20] sm:$0xff]
        %v4481 = vld [vmem:[#allocation8 + $0x28] sm:$0xff]
        %v4482 = vld [vmem:[#allocation8 + $0x30] sm:$0xff]
        %v4483 = vld [vmem:[#allocation8 + $0x38] sm:$0xff]
        %v4484 = vld [vmem:[#allocation8 + $0x40] sm:$0xff]
        %v4485 = vld [vmem:[#allocation8 + $0x48] sm:$0xff]
        %v4486 = vld [vmem:[#allocation8 + $0x50] sm:$0xff]
        %v4487 = vld [vmem:[#allocation8 + $0x58] sm:$0xff]
        %v4488 = vld [vmem:[#allocation8 + $0x60] sm:$0xff]
        %v4489 = vld [vmem:[#allocation8 + $0x68] sm:$0xff]
        %v4490 = vld [vmem:[#allocation8 + $0x70] sm:$0xff]
        %v4491 = vld [vmem:[#allocation8 + $0x78] sm:$0xff]
        %v4492 = vld [vmem:[%s476] sm:$0xff]
        %v4493 = vld [vmem:[%s476 + $0x8] sm:$0xff]
        %v4494 = vld [vmem:[%s476 + $0x10] sm:$0xff]
        %v4495 = vld [vmem:[%s476 + $0x18] sm:$0xff]
        %v4496 = vld [vmem:[%s476 + $0x20] sm:$0xff]
        %v4497 = vld [vmem:[%s476 + $0x28] sm:$0xff]
        %v4498 = vld [vmem:[%s476 + $0x30] sm:$0xff]
        %v4499 = vld [vmem:[%s476 + $0x38] sm:$0xff]
        %v4500 = vld [vmem:[%s476 + $0x40] sm:$0xff]
        %v4501 = vld [vmem:[%s476 + $0x48] sm:$0xff]
        %v4502 = vld [vmem:[%s476 + $0x50] sm:$0xff]
        %v4503 = vld [vmem:[%s476 + $0x58] sm:$0xff]
        %v4504 = vld [vmem:[%s476 + $0x60] sm:$0xff]
        %v4505 = vld [vmem:[%s476 + $0x68] sm:$0xff]
        %v4506 = vld [vmem:[%s476 + $0x70] sm:$0xff]
        %v4507 = vld [vmem:[%s476 + $0x78] sm:$0xff]
        %4509 = vset.pattern.permute.xlu0 0
        %4510 = vperm.xlu0 %4509, %v4492
        %v4511 = vpop.permute.xlu0 %4510
        %4514 = vset.pattern.permute.xlu0 0
        %4515 = vperm.xlu0 %4514, %v4493
        %v4516 = vpop.permute.xlu0 %4515
        %4519 = vset.pattern.permute.xlu0 0
        %4520 = vperm.xlu0 %4519, %v4494
        %v4521 = vpop.permute.xlu0 %4520
        %4524 = vset.pattern.permute.xlu0 0
        %4525 = vperm.xlu0 %4524, %v4495
        %v4526 = vpop.permute.xlu0 %4525
        %4529 = vset.pattern.permute.xlu0 0
        %4530 = vperm.xlu0 %4529, %v4496
        %v4531 = vpop.permute.xlu0 %4530
        %4534 = vset.pattern.permute.xlu0 0
        %4535 = vperm.xlu0 %4534, %v4497
        %v4536 = vpop.permute.xlu0 %4535
        %4539 = vset.pattern.permute.xlu0 0
        %4540 = vperm.xlu0 %4539, %v4498
        %v4541 = vpop.permute.xlu0 %4540
        %4544 = vset.pattern.permute.xlu0 0
        %4545 = vperm.xlu0 %4544, %v4499
        %v4546 = vpop.permute.xlu0 %4545
        %4549 = vset.pattern.permute.xlu0 0
        %4550 = vperm.xlu0 %4549, %v4500
        %v4551 = vpop.permute.xlu0 %4550
        %4554 = vset.pattern.permute.xlu0 0
        %4555 = vperm.xlu0 %4554, %v4501
        %v4556 = vpop.permute.xlu0 %4555
        %4559 = vset.pattern.permute.xlu0 0
        %4560 = vperm.xlu0 %4559, %v4502
        %v4561 = vpop.permute.xlu0 %4560
        %4564 = vset.pattern.permute.xlu0 0
        %4565 = vperm.xlu0 %4564, %v4503
        %v4566 = vpop.permute.xlu0 %4565
        %4569 = vset.pattern.permute.xlu0 0
        %4570 = vperm.xlu0 %4569, %v4504
        %v4571 = vpop.permute.xlu0 %4570
        %4574 = vset.pattern.permute.xlu0 0
        %4575 = vperm.xlu0 %4574, %v4505
        %v4576 = vpop.permute.xlu0 %4575
        %4579 = vset.pattern.permute.xlu0 0
        %4580 = vperm.xlu0 %4579, %v4506
        %v4581 = vpop.permute.xlu0 %4580
        %4584 = vset.pattern.permute.xlu0 0
        %4585 = vperm.xlu0 %4584, %v4507
        %v4586 = vpop.permute.xlu0 %4585
        %4588 = vmatprep.subr.mxu0 0.0
        %v4589 = vand.u32 %v4476, 4294901760
        %4590 = vmatpush1.msra.mxu0 %v4589
        %4591 = vmatprep.subr.mxu0 0.0
        %v4592 = vand.u32 %v4477, 4294901760
        %4593 = vmatpush1.msra.mxu0 %v4592
        %4594 = vmatprep.subr.mxu0 0.0
        %v4595 = vand.u32 %v4478, 4294901760
        %4596 = vmatpush1.msra.mxu0 %v4595
        %4597 = vmatprep.subr.mxu0 0.0
        %v4598 = vand.u32 %v4479, 4294901760
        %4599 = vmatpush1.msra.mxu0 %v4598
        %4600 = vmatprep.subr.mxu0 0.0
        %v4601 = vand.u32 %v4480, 4294901760
        %4602 = vmatpush1.msra.mxu0 %v4601
        %4603 = vmatprep.subr.mxu0 0.0
        %v4604 = vand.u32 %v4481, 4294901760
        %4605 = vmatpush1.msra.mxu0 %v4604
        %4606 = vmatprep.subr.mxu0 0.0
        %v4607 = vand.u32 %v4482, 4294901760
        %4608 = vmatpush1.msra.mxu0 %v4607
        %4609 = vmatprep.subr.mxu0 0.0
        %v4610 = vand.u32 %v4483, 4294901760
        %4611 = vmatpush1.msra.mxu0 %v4610
        %4612 = vmatprep.subr.mxu0 0.0
        %v4613 = vand.u32 %v4484, 4294901760
        %4614 = vmatpush1.msra.mxu0 %v4613
        %4615 = vmatprep.subr.mxu0 0.0
        %v4616 = vand.u32 %v4485, 4294901760
        %4617 = vmatpush1.msra.mxu0 %v4616
        %4618 = vmatprep.subr.mxu0 0.0
        %v4619 = vand.u32 %v4486, 4294901760
        %4620 = vmatpush1.msra.mxu0 %v4619
        %4621 = vmatprep.subr.mxu0 0.0
        %v4622 = vand.u32 %v4487, 4294901760
        %4623 = vmatpush1.msra.mxu0 %v4622
        %4624 = vmatprep.subr.mxu0 0.0
        %v4625 = vand.u32 %v4488, 4294901760
        %4626 = vmatpush1.msra.mxu0 %v4625
        %4627 = vmatprep.subr.mxu0 0.0
        %v4628 = vand.u32 %v4489, 4294901760
        %4629 = vmatpush1.msra.mxu0 %v4628
        %4630 = vmatprep.subr.mxu0 0.0
        %v4631 = vand.u32 %v4490, 4294901760
        %4632 = vmatpush1.msra.mxu0 %v4631
        %4633 = vmatprep.subr.mxu0 0.0
        %v4634 = vand.u32 %v4491, 4294901760
        %4635 = vmatpush1.msra.mxu0 %v4634
        %4636 = vmatprep.subr.mxu0 0.0
        %4637 = vmatpush1.msra.mxu0 0.0
        %4638 = vmatprep.subr.mxu0 0.0
        %4639 = vmatpush1.msra.mxu0 0.0
        %4640 = vmatprep.subr.mxu0 0.0
        %4641 = vmatpush1.msra.mxu0 0.0
        %4642 = vmatprep.subr.mxu0 0.0
        %4643 = vmatpush1.msra.mxu0 0.0
        %4644 = vmatprep.subr.mxu0 0.0
        %4645 = vmatpush1.msra.mxu0 0.0
        %4646 = vmatprep.subr.mxu0 0.0
        %4647 = vmatpush1.msra.mxu0 0.0
        %4648 = vmatprep.subr.mxu0 0.0
        %4649 = vmatpush1.msra.mxu0 0.0
        %4650 = vmatprep.subr.mxu0 0.0
        %4651 = vmatpush1.msra.mxu0 0.0
        %4652 = vmatprep.subr.mxu0 0.0
        %4653 = vmatpush1.msra.mxu0 0.0
        %4654 = vmatprep.subr.mxu0 0.0
        %4655 = vmatpush1.msra.mxu0 0.0
        %4656 = vmatprep.subr.mxu0 0.0
        %4657 = vmatpush1.msra.mxu0 0.0
        %4658 = vmatprep.subr.mxu0 0.0
        %4659 = vmatpush1.msra.mxu0 0.0
        %4660 = vmatprep.subr.mxu0 0.0
        %4661 = vmatpush1.msra.mxu0 0.0
        %4662 = vmatprep.subr.mxu0 0.0
        %4663 = vmatpush1.msra.mxu0 0.0
        %4664 = vmatprep.subr.mxu0 0.0
        %4665 = vmatpush1.msra.mxu0 0.0
        %4666 = vmatprep.subr.mxu0 0.0
        %4667 = vmatpush1.msra.mxu0 0.0
        %4668 = vmatprep.mubr.f32.mxu0 0.0
        %v4669 = vand.u32 %v3074, 4294901760
        %v4670 = vsub.f32 %v3074, %v4669
        %v4671 = vand.u32 %v4670, 4294901760
        %v4672 = vsub.f32 %v4670, %v4671
        %v4673 = vand.u32 %v4672, 4294901760
        %4674 = vmatmul.mubr.f32.gmra.mrb[0].mxu0 %v4673
        %v4675 = vpop.f32.mrb[0].mxu0
        %v4676 = vadd.f32 %v4511, %v4675
        %v4677 = vpop.f32.mrb[0].mxu0
        %4678 = vmatprep.mubr.f32.mxu0 0.0
        %v4679 = vand.u32 %v3080, 4294901760
        %v4680 = vsub.f32 %v3080, %v4679
        %v4681 = vand.u32 %v4680, 4294901760
        %v4682 = vsub.f32 %v4680, %v4681
        %v4683 = vand.u32 %v4682, 4294901760
        %4684 = vmatmul.mubr.f32.gmra.mrb[0].mxu0 %v4683
        %v4685 = vpop.f32.mrb[0].mxu0
        %v4686 = vadd.f32 %v4516, %v4685
        %v4687 = vpop.f32.mrb[0].mxu0
        %4688 = vmatprep.mubr.f32.mxu0 0.0
        %v4689 = vand.u32 %v3086, 4294901760
        %v4690 = vsub.f32 %v3086, %v4689
        %v4691 = vand.u32 %v4690, 4294901760
        %v4692 = vsub.f32 %v4690, %v4691
        %v4693 = vand.u32 %v4692, 4294901760
        %4694 = vmatmul.mubr.f32.gmra.mrb[0].mxu0 %v4693
        %v4695 = vpop.f32.mrb[0].mxu0
        %v4696 = vadd.f32 %v4521, %v4695
        %v4697 = vpop.f32.mrb[0].mxu0
        %4698 = vmatprep.mubr.f32.mxu0 0.0
        %v4699 = vand.u32 %v3092, 4294901760
        %v4700 = vsub.f32 %v3092, %v4699
        %v4701 = vand.u32 %v4700, 4294901760
        %v4702 = vsub.f32 %v4700, %v4701
        %v4703 = vand.u32 %v4702, 4294901760
        %4704 = vmatmul.mubr.f32.gmra.mrb[0].mxu0 %v4703
        %v4705 = vpop.f32.mrb[0].mxu0
        %v4706 = vadd.f32 %v4526, %v4705
        %v4707 = vpop.f32.mrb[0].mxu0
        %4708 = vmatprep.mubr.f32.mxu0 0.0
        %v4709 = vand.u32 %v3098, 4294901760
        %v4710 = vsub.f32 %v3098, %v4709
        %v4711 = vand.u32 %v4710, 4294901760
        %v4712 = vsub.f32 %v4710, %v4711
        %v4713 = vand.u32 %v4712, 4294901760
        %4714 = vmatmul.mubr.f32.gmra.mrb[0].mxu0 %v4713
        %v4715 = vpop.f32.mrb[0].mxu0
        %v4716 = vadd.f32 %v4531, %v4715
        %v4717 = vpop.f32.mrb[0].mxu0
        %4718 = vmatprep.mubr.f32.mxu0 0.0
        %v4719 = vand.u32 %v3104, 4294901760
        %v4720 = vsub.f32 %v3104, %v4719
        %v4721 = vand.u32 %v4720, 4294901760
        %v4722 = vsub.f32 %v4720, %v4721
        %v4723 = vand.u32 %v4722, 4294901760
        %4724 = vmatmul.mubr.f32.gmra.mrb[0].mxu0 %v4723
        %v4725 = vpop.f32.mrb[0].mxu0
        %v4726 = vadd.f32 %v4536, %v4725
        %v4727 = vpop.f32.mrb[0].mxu0
        %4728 = vmatprep.mubr.f32.mxu0 0.0
        %v4729 = vand.u32 %v3110, 4294901760
        %v4730 = vsub.f32 %v3110, %v4729
        %v4731 = vand.u32 %v4730, 4294901760
        %v4732 = vsub.f32 %v4730, %v4731
        %v4733 = vand.u32 %v4732, 4294901760
        %4734 = vmatmul.mubr.f32.gmra.mrb[0].mxu0 %v4733
        %v4735 = vpop.f32.mrb[0].mxu0
        %v4736 = vadd.f32 %v4541, %v4735
        %v4737 = vpop.f32.mrb[0].mxu0
        %4738 = vmatprep.mubr.f32.mxu0 0.0
        %v4739 = vand.u32 %v3116, 4294901760
        %v4740 = vsub.f32 %v3116, %v4739
        %v4741 = vand.u32 %v4740, 4294901760
        %v4742 = vsub.f32 %v4740, %v4741
        %v4743 = vand.u32 %v4742, 4294901760
        %4744 = vmatmul.mubr.f32.gmra.mrb[0].mxu0 %v4743
        %v4745 = vpop.f32.mrb[0].mxu0
        %v4746 = vadd.f32 %v4546, %v4745
        %v4747 = vpop.f32.mrb[0].mxu0
        %4748 = vmatprep.mubr.f32.mxu0 0.0
        %v4749 = vand.u32 %v3122, 4294901760
        %v4750 = vsub.f32 %v3122, %v4749
        %v4751 = vand.u32 %v4750, 4294901760
        %v4752 = vsub.f32 %v4750, %v4751
        %v4753 = vand.u32 %v4752, 4294901760
        %4754 = vmatmul.mubr.f32.gmra.mrb[0].mxu0 %v4753
        %v4755 = vpop.f32.mrb[0].mxu0
        %v4756 = vadd.f32 %v4551, %v4755
        %v4757 = vpop.f32.mrb[0].mxu0
        %4758 = vmatprep.mubr.f32.mxu0 0.0
        %v4759 = vand.u32 %v3128, 4294901760
        %v4760 = vsub.f32 %v3128, %v4759
        %v4761 = vand.u32 %v4760, 4294901760
        %v4762 = vsub.f32 %v4760, %v4761
        %v4763 = vand.u32 %v4762, 4294901760
        %4764 = vmatmul.mubr.f32.gmra.mrb[0].mxu0 %v4763
        %v4765 = vpop.f32.mrb[0].mxu0
        %v4766 = vadd.f32 %v4556, %v4765
        %v4767 = vpop.f32.mrb[0].mxu0
        %4768 = vmatprep.mubr.f32.mxu0 0.0
        %v4769 = vand.u32 %v3134, 4294901760
        %v4770 = vsub.f32 %v3134, %v4769
        %v4771 = vand.u32 %v4770, 4294901760
        %v4772 = vsub.f32 %v4770, %v4771
        %v4773 = vand.u32 %v4772, 4294901760
        %4774 = vmatmul.mubr.f32.gmra.mrb[0].mxu0 %v4773
        %v4775 = vpop.f32.mrb[0].mxu0
        %v4776 = vadd.f32 %v4561, %v4775
        %v4777 = vpop.f32.mrb[0].mxu0
        %4778 = vmatprep.mubr.f32.mxu0 0.0
        %v4779 = vand.u32 %v3140, 4294901760
        %v4780 = vsub.f32 %v3140, %v4779
        %v4781 = vand.u32 %v4780, 4294901760
        %v4782 = vsub.f32 %v4780, %v4781
        %v4783 = vand.u32 %v4782, 4294901760
        %4784 = vmatmul.mubr.f32.gmra.mrb[0].mxu0 %v4783
        %v4785 = vpop.f32.mrb[0].mxu0
        %v4786 = vadd.f32 %v4566, %v4785
        %v4787 = vpop.f32.mrb[0].mxu0
        %4788 = vmatprep.mubr.f32.mxu0 0.0
        %v4789 = vand.u32 %v3146, 4294901760
        %v4790 = vsub.f32 %v3146, %v4789
        %v4791 = vand.u32 %v4790, 4294901760
        %v4792 = vsub.f32 %v4790, %v4791
        %v4793 = vand.u32 %v4792, 4294901760
        %4794 = vmatmul.mubr.f32.gmra.mrb[0].mxu0 %v4793
        %v4795 = vpop.f32.mrb[0].mxu0
        %v4796 = vadd.f32 %v4571, %v4795
        %v4797 = vpop.f32.mrb[0].mxu0
        %4798 = vmatprep.mubr.f32.mxu0 0.0
        %v4799 = vand.u32 %v3152, 4294901760
        %v4800 = vsub.f32 %v3152, %v4799
        %v4801 = vand.u32 %v4800, 4294901760
        %v4802 = vsub.f32 %v4800, %v4801
        %v4803 = vand.u32 %v4802, 4294901760
        %4804 = vmatmul.mubr.f32.gmra.mrb[0].mxu0 %v4803
        %v4805 = vpop.f32.mrb[0].mxu0
        %v4806 = vadd.f32 %v4576, %v4805
        %v4807 = vpop.f32.mrb[0].mxu0
        %4808 = vmatprep.mubr.f32.mxu0 0.0
        %v4809 = vand.u32 %v3158, 4294901760
        %v4810 = vsub.f32 %v3158, %v4809
        %v4811 = vand.u32 %v4810, 4294901760
        %v4812 = vsub.f32 %v4810, %v4811
        %v4813 = vand.u32 %v4812, 4294901760
        %4814 = vmatmul.mubr.f32.gmra.mrb[0].mxu0 %v4813
        %v4815 = vpop.f32.mrb[0].mxu0
        %v4816 = vadd.f32 %v4581, %v4815
        %v4817 = vpop.f32.mrb[0].mxu0
        %4818 = vmatprep.mubr.f32.mxu0 0.0
        %v4819 = vand.u32 %v3164, 4294901760
        %v4820 = vsub.f32 %v3164, %v4819
        %v4821 = vand.u32 %v4820, 4294901760
        %v4822 = vsub.f32 %v4820, %v4821
        %v4823 = vand.u32 %v4822, 4294901760
        %4824 = vmatmul.mubr.f32.gmra.mrb[0].mxu0 %v4823
        %v4825 = vpop.f32.mrb[0].mxu0
        %v4826 = vadd.f32 %v4586, %v4825
        %v4827 = vpop.f32.mrb[0].mxu0
        %4828 = vdwg.mxu0
        %4829 = vmatprep.subr.mxu0 0.0
        %v4830 = vand.u32 %v4476, 4294901760
        %v4831 = vsub.f32 %v4476, %v4830
        %v4832 = vand.u32 %v4831, 4294901760
        %v4833 = vsub.f32 %v4831, %v4832
        %v4834 = vand.u32 %v4833, 4294901760
        %4835 = vmatpush1.msra.mxu0 %v4834
        %4836 = vmatprep.subr.mxu0 0.0
        %v4837 = vand.u32 %v4477, 4294901760
        %v4838 = vsub.f32 %v4477, %v4837
        %v4839 = vand.u32 %v4838, 4294901760
        %v4840 = vsub.f32 %v4838, %v4839
        %v4841 = vand.u32 %v4840, 4294901760
        %4842 = vmatpush1.msra.mxu0 %v4841
        %4843 = vmatprep.subr.mxu0 0.0
        %v4844 = vand.u32 %v4478, 4294901760
        %v4845 = vsub.f32 %v4478, %v4844
        %v4846 = vand.u32 %v4845, 4294901760
        %v4847 = vsub.f32 %v4845, %v4846
        %v4848 = vand.u32 %v4847, 4294901760
        %4849 = vmatpush1.msra.mxu0 %v4848
        %4850 = vmatprep.subr.mxu0 0.0
        %v4851 = vand.u32 %v4479, 4294901760
        %v4852 = vsub.f32 %v4479, %v4851
        %v4853 = vand.u32 %v4852, 4294901760
        %v4854 = vsub.f32 %v4852, %v4853
        %v4855 = vand.u32 %v4854, 4294901760
        %4856 = vmatpush1.msra.mxu0 %v4855
        %4857 = vmatprep.subr.mxu0 0.0
        %v4858 = vand.u32 %v4480, 4294901760
        %v4859 = vsub.f32 %v4480, %v4858
        %v4860 = vand.u32 %v4859, 4294901760
        %v4861 = vsub.f32 %v4859, %v4860
        %v4862 = vand.u32 %v4861, 4294901760
        %4863 = vmatpush1.msra.mxu0 %v4862
        %4864 = vmatprep.subr.mxu0 0.0
        %v4865 = vand.u32 %v4481, 4294901760
        %v4866 = vsub.f32 %v4481, %v4865
        %v4867 = vand.u32 %v4866, 4294901760
        %v4868 = vsub.f32 %v4866, %v4867
        %v4869 = vand.u32 %v4868, 4294901760
        %4870 = vmatpush1.msra.mxu0 %v4869
        %4871 = vmatprep.subr.mxu0 0.0
        %v4872 = vand.u32 %v4482, 4294901760
        %v4873 = vsub.f32 %v4482, %v4872
        %v4874 = vand.u32 %v4873, 4294901760
        %v4875 = vsub.f32 %v4873, %v4874
        %v4876 = vand.u32 %v4875, 4294901760
        %4877 = vmatpush1.msra.mxu0 %v4876
        %4878 = vmatprep.subr.mxu0 0.0
        %v4879 = vand.u32 %v4483, 4294901760
        %v4880 = vsub.f32 %v4483, %v4879
        %v4881 = vand.u32 %v4880, 4294901760
        %v4882 = vsub.f32 %v4880, %v4881
        %v4883 = vand.u32 %v4882, 4294901760
        %4884 = vmatpush1.msra.mxu0 %v4883
        %4885 = vmatprep.subr.mxu0 0.0
        %v4886 = vand.u32 %v4484, 4294901760
        %v4887 = vsub.f32 %v4484, %v4886
        %v4888 = vand.u32 %v4887, 4294901760
        %v4889 = vsub.f32 %v4887, %v4888
        %v4890 = vand.u32 %v4889, 4294901760
        %4891 = vmatpush1.msra.mxu0 %v4890
        %4892 = vmatprep.subr.mxu0 0.0
        %v4893 = vand.u32 %v4485, 4294901760
        %v4894 = vsub.f32 %v4485, %v4893
        %v4895 = vand.u32 %v4894, 4294901760
        %v4896 = vsub.f32 %v4894, %v4895
        %v4897 = vand.u32 %v4896, 4294901760
        %4898 = vmatpush1.msra.mxu0 %v4897
        %4899 = vmatprep.subr.mxu0 0.0
        %v4900 = vand.u32 %v4486, 4294901760
        %v4901 = vsub.f32 %v4486, %v4900
        %v4902 = vand.u32 %v4901, 4294901760
        %v4903 = vsub.f32 %v4901, %v4902
        %v4904 = vand.u32 %v4903, 4294901760
        %4905 = vmatpush1.msra.mxu0 %v4904
        %4906 = vmatprep.subr.mxu0 0.0
        %v4907 = vand.u32 %v4487, 4294901760
        %v4908 = vsub.f32 %v4487, %v4907
        %v4909 = vand.u32 %v4908, 4294901760
        %v4910 = vsub.f32 %v4908, %v4909
        %v4911 = vand.u32 %v4910, 4294901760
        %4912 = vmatpush1.msra.mxu0 %v4911
        %4913 = vmatprep.subr.mxu0 0.0
        %v4914 = vand.u32 %v4488, 4294901760
        %v4915 = vsub.f32 %v4488, %v4914
        %v4916 = vand.u32 %v4915, 4294901760
        %v4917 = vsub.f32 %v4915, %v4916
        %v4918 = vand.u32 %v4917, 4294901760
        %4919 = vmatpush1.msra.mxu0 %v4918
        %4920 = vmatprep.subr.mxu0 0.0
        %v4921 = vand.u32 %v4489, 4294901760
        %v4922 = vsub.f32 %v4489, %v4921
        %v4923 = vand.u32 %v4922, 4294901760
        %v4924 = vsub.f32 %v4922, %v4923
        %v4925 = vand.u32 %v4924, 4294901760
        %4926 = vmatpush1.msra.mxu0 %v4925
        %4927 = vmatprep.subr.mxu0 0.0
        %v4928 = vand.u32 %v4490, 4294901760
        %v4929 = vsub.f32 %v4490, %v4928
        %v4930 = vand.u32 %v4929, 4294901760
        %v4931 = vsub.f32 %v4929, %v4930
        %v4932 = vand.u32 %v4931, 4294901760
        %4933 = vmatpush1.msra.mxu0 %v4932
        %4934 = vmatprep.subr.mxu0 0.0
        %v4935 = vand.u32 %v4491, 4294901760
        %v4936 = vsub.f32 %v4491, %v4935
        %v4937 = vand.u32 %v4936, 4294901760
        %v4938 = vsub.f32 %v4936, %v4937
        %v4939 = vand.u32 %v4938, 4294901760
        %4940 = vmatpush1.msra.mxu0 %v4939
        %4941 = vmatprep.subr.mxu0 0.0
        %4942 = vmatpush1.msra.mxu0 0.0
        %4943 = vmatprep.subr.mxu0 0.0
        %4944 = vmatpush1.msra.mxu0 0.0
        %4945 = vmatprep.subr.mxu0 0.0
        %4946 = vmatpush1.msra.mxu0 0.0
        %4947 = vmatprep.subr.mxu0 0.0
        %4948 = vmatpush1.msra.mxu0 0.0
        %4949 = vmatprep.subr.mxu0 0.0
        %4950 = vmatpush1.msra.mxu0 0.0
        %4951 = vmatprep.subr.mxu0 0.0
        %4952 = vmatpush1.msra.mxu0 0.0
        %4953 = vmatprep.subr.mxu0 0.0
        %4954 = vmatpush1.msra.mxu0 0.0
        %4955 = vmatprep.subr.mxu0 0.0
        %4956 = vmatpush1.msra.mxu0 0.0
        %4957 = vmatprep.subr.mxu0 0.0
        %4958 = vmatpush1.msra.mxu0 0.0
        %4959 = vmatprep.subr.mxu0 0.0
        %4960 = vmatpush1.msra.mxu0 0.0
        %4961 = vmatprep.subr.mxu0 0.0
        %4962 = vmatpush1.msra.mxu0 0.0
        %4963 = vmatprep.subr.mxu0 0.0
        %4964 = vmatpush1.msra.mxu0 0.0
        %4965 = vmatprep.subr.mxu0 0.0
        %4966 = vmatpush1.msra.mxu0 0.0
        %4967 = vmatprep.subr.mxu0 0.0
        %4968 = vmatpush1.msra.mxu0 0.0
        %4969 = vmatprep.subr.mxu0 0.0
        %4970 = vmatpush1.msra.mxu0 0.0
        %4971 = vmatprep.subr.mxu0 0.0
        %4972 = vmatpush1.msra.mxu0 0.0
        %4973 = vmatprep.mubr.f32.mxu0 0.0
        %v4974 = vand.u32 %v3074, 4294901760
        %4975 = vmatmul.mubr.f32.gmra.mrb[0].mxu0 %v4974
        %v4976 = vpop.f32.mrb[0].mxu0
        %v4977 = vadd.f32 %v4676, %v4976
        %v4978 = vpop.f32.mrb[0].mxu0
        %4979 = vmatprep.mubr.f32.mxu0 0.0
        %v4980 = vand.u32 %v3080, 4294901760
        %4981 = vmatmul.mubr.f32.gmra.mrb[0].mxu0 %v4980
        %v4982 = vpop.f32.mrb[0].mxu0
        %v4983 = vadd.f32 %v4686, %v4982
        %v4984 = vpop.f32.mrb[0].mxu0
        %4985 = vmatprep.mubr.f32.mxu0 0.0
        %v4986 = vand.u32 %v3086, 4294901760
        %4987 = vmatmul.mubr.f32.gmra.mrb[0].mxu0 %v4986
        %v4988 = vpop.f32.mrb[0].mxu0
        %v4989 = vadd.f32 %v4696, %v4988
        %v4990 = vpop.f32.mrb[0].mxu0
        %4991 = vmatprep.mubr.f32.mxu0 0.0
        %v4992 = vand.u32 %v3092, 4294901760
        %4993 = vmatmul.mubr.f32.gmra.mrb[0].mxu0 %v4992
        %v4994 = vpop.f32.mrb[0].mxu0
        %v4995 = vadd.f32 %v4706, %v4994
        %v4996 = vpop.f32.mrb[0].mxu0
        %4997 = vmatprep.mubr.f32.mxu0 0.0
        %v4998 = vand.u32 %v3098, 4294901760
        %4999 = vmatmul.mubr.f32.gmra.mrb[0].mxu0 %v4998
        %v5000 = vpop.f32.mrb[0].mxu0
        %v5001 = vadd.f32 %v4716, %v5000
        %v5002 = vpop.f32.mrb[0].mxu0
        %5003 = vmatprep.mubr.f32.mxu0 0.0
        %v5004 = vand.u32 %v3104, 4294901760
        %5005 = vmatmul.mubr.f32.gmra.mrb[0].mxu0 %v5004
        %v5006 = vpop.f32.mrb[0].mxu0
        %v5007 = vadd.f32 %v4726, %v5006
        %v5008 = vpop.f32.mrb[0].mxu0
        %5009 = vmatprep.mubr.f32.mxu0 0.0
        %v5010 = vand.u32 %v3110, 4294901760
        %5011 = vmatmul.mubr.f32.gmra.mrb[0].mxu0 %v5010
        %v5012 = vpop.f32.mrb[0].mxu0
        %v5013 = vadd.f32 %v4736, %v5012
        %v5014 = vpop.f32.mrb[0].mxu0
        %5015 = vmatprep.mubr.f32.mxu0 0.0
        %v5016 = vand.u32 %v3116, 4294901760
        %5017 = vmatmul.mubr.f32.gmra.mrb[0].mxu0 %v5016
        %v5018 = vpop.f32.mrb[0].mxu0
        %v5019 = vadd.f32 %v4746, %v5018
        %v5020 = vpop.f32.mrb[0].mxu0
        %5021 = vmatprep.mubr.f32.mxu0 0.0
        %v5022 = vand.u32 %v3122, 4294901760
        %5023 = vmatmul.mubr.f32.gmra.mrb[0].mxu0 %v5022
        %v5024 = vpop.f32.mrb[0].mxu0
        %v5025 = vadd.f32 %v4756, %v5024
        %v5026 = vpop.f32.mrb[0].mxu0
        %5027 = vmatprep.mubr.f32.mxu0 0.0
        %v5028 = vand.u32 %v3128, 4294901760
        %5029 = vmatmul.mubr.f32.gmra.mrb[0].mxu0 %v5028
        %v5030 = vpop.f32.mrb[0].mxu0
        %v5031 = vadd.f32 %v4766, %v5030
        %v5032 = vpop.f32.mrb[0].mxu0
        %5033 = vmatprep.mubr.f32.mxu0 0.0
        %v5034 = vand.u32 %v3134, 4294901760
        %5035 = vmatmul.mubr.f32.gmra.mrb[0].mxu0 %v5034
        %v5036 = vpop.f32.mrb[0].mxu0
        %v5037 = vadd.f32 %v4776, %v5036
        %v5038 = vpop.f32.mrb[0].mxu0
        %5039 = vmatprep.mubr.f32.mxu0 0.0
        %v5040 = vand.u32 %v3140, 4294901760
        %5041 = vmatmul.mubr.f32.gmra.mrb[0].mxu0 %v5040
        %v5042 = vpop.f32.mrb[0].mxu0
        %v5043 = vadd.f32 %v4786, %v5042
        %v5044 = vpop.f32.mrb[0].mxu0
        %5045 = vmatprep.mubr.f32.mxu0 0.0
        %v5046 = vand.u32 %v3146, 4294901760
        %5047 = vmatmul.mubr.f32.gmra.mrb[0].mxu0 %v5046
        %v5048 = vpop.f32.mrb[0].mxu0
        %v5049 = vadd.f32 %v4796, %v5048
        %v5050 = vpop.f32.mrb[0].mxu0
        %5051 = vmatprep.mubr.f32.mxu0 0.0
        %v5052 = vand.u32 %v3152, 4294901760
        %5053 = vmatmul.mubr.f32.gmra.mrb[0].mxu0 %v5052
        %v5054 = vpop.f32.mrb[0].mxu0
        %v5055 = vadd.f32 %v4806, %v5054
        %v5056 = vpop.f32.mrb[0].mxu0
        %5057 = vmatprep.mubr.f32.mxu0 0.0
        %v5058 = vand.u32 %v3158, 4294901760
        %5059 = vmatmul.mubr.f32.gmra.mrb[0].mxu0 %v5058
        %v5060 = vpop.f32.mrb[0].mxu0
        %v5061 = vadd.f32 %v4816, %v5060
        %v5062 = vpop.f32.mrb[0].mxu0
        %5063 = vmatprep.mubr.f32.mxu0 0.0
        %v5064 = vand.u32 %v3164, 4294901760
        %5065 = vmatmul.mubr.f32.gmra.mrb[0].mxu0 %v5064
        %v5066 = vpop.f32.mrb[0].mxu0
        %v5067 = vadd.f32 %v4826, %v5066
        %v5068 = vpop.f32.mrb[0].mxu0
        %5069 = vdwg.mxu0
        %5070 = vmatprep.subr.mxu0 0.0
        %v5071 = vand.u32 %v4476, 4294901760
        %v5072 = vsub.f32 %v4476, %v5071
        %5073 = vmatpush1.msra.mxu0 %v5072
        %5074 = vmatprep.subr.mxu0 0.0
        %v5075 = vand.u32 %v4477, 4294901760
        %v5076 = vsub.f32 %v4477, %v5075
        %5077 = vmatpush1.msra.mxu0 %v5076
        %5078 = vmatprep.subr.mxu0 0.0
        %v5079 = vand.u32 %v4478, 4294901760
        %v5080 = vsub.f32 %v4478, %v5079
        %5081 = vmatpush1.msra.mxu0 %v5080
        %5082 = vmatprep.subr.mxu0 0.0
        %v5083 = vand.u32 %v4479, 4294901760
        %v5084 = vsub.f32 %v4479, %v5083
        %5085 = vmatpush1.msra.mxu0 %v5084
        %5086 = vmatprep.subr.mxu0 0.0
        %v5087 = vand.u32 %v4480, 4294901760
        %v5088 = vsub.f32 %v4480, %v5087
        %5089 = vmatpush1.msra.mxu0 %v5088
        %5090 = vmatprep.subr.mxu0 0.0
        %v5091 = vand.u32 %v4481, 4294901760
        %v5092 = vsub.f32 %v4481, %v5091
        %5093 = vmatpush1.msra.mxu0 %v5092
        %5094 = vmatprep.subr.mxu0 0.0
        %v5095 = vand.u32 %v4482, 4294901760
        %v5096 = vsub.f32 %v4482, %v5095
        %5097 = vmatpush1.msra.mxu0 %v5096
        %5098 = vmatprep.subr.mxu0 0.0
        %v5099 = vand.u32 %v4483, 4294901760
        %v5100 = vsub.f32 %v4483, %v5099
        %5101 = vmatpush1.msra.mxu0 %v5100
        %5102 = vmatprep.subr.mxu0 0.0
        %v5103 = vand.u32 %v4484, 4294901760
        %v5104 = vsub.f32 %v4484, %v5103
        %5105 = vmatpush1.msra.mxu0 %v5104
        %5106 = vmatprep.subr.mxu0 0.0
        %v5107 = vand.u32 %v4485, 4294901760
        %v5108 = vsub.f32 %v4485, %v5107
        %5109 = vmatpush1.msra.mxu0 %v5108
        %5110 = vmatprep.subr.mxu0 0.0
        %v5111 = vand.u32 %v4486, 4294901760
        %v5112 = vsub.f32 %v4486, %v5111
        %5113 = vmatpush1.msra.mxu0 %v5112
        %5114 = vmatprep.subr.mxu0 0.0
        %v5115 = vand.u32 %v4487, 4294901760
        %v5116 = vsub.f32 %v4487, %v5115
        %5117 = vmatpush1.msra.mxu0 %v5116
        %5118 = vmatprep.subr.mxu0 0.0
        %v5119 = vand.u32 %v4488, 4294901760
        %v5120 = vsub.f32 %v4488, %v5119
        %5121 = vmatpush1.msra.mxu0 %v5120
        %5122 = vmatprep.subr.mxu0 0.0
        %v5123 = vand.u32 %v4489, 4294901760
        %v5124 = vsub.f32 %v4489, %v5123
        %5125 = vmatpush1.msra.mxu0 %v5124
        %5126 = vmatprep.subr.mxu0 0.0
        %v5127 = vand.u32 %v4490, 4294901760
        %v5128 = vsub.f32 %v4490, %v5127
        %5129 = vmatpush1.msra.mxu0 %v5128
        %5130 = vmatprep.subr.mxu0 0.0
        %v5131 = vand.u32 %v4491, 4294901760
        %v5132 = vsub.f32 %v4491, %v5131
        %5133 = vmatpush1.msra.mxu0 %v5132
        %5134 = vmatprep.subr.mxu0 0.0
        %5135 = vmatpush1.msra.mxu0 0.0
        %5136 = vmatprep.subr.mxu0 0.0
        %5137 = vmatpush1.msra.mxu0 0.0
        %5138 = vmatprep.subr.mxu0 0.0
        %5139 = vmatpush1.msra.mxu0 0.0
        %5140 = vmatprep.subr.mxu0 0.0
        %5141 = vmatpush1.msra.mxu0 0.0
        %5142 = vmatprep.subr.mxu0 0.0
        %5143 = vmatpush1.msra.mxu0 0.0
        %5144 = vmatprep.subr.mxu0 0.0
        %5145 = vmatpush1.msra.mxu0 0.0
        %5146 = vmatprep.subr.mxu0 0.0
        %5147 = vmatpush1.msra.mxu0 0.0
        %5148 = vmatprep.subr.mxu0 0.0
        %5149 = vmatpush1.msra.mxu0 0.0
        %5150 = vmatprep.subr.mxu0 0.0
        %5151 = vmatpush1.msra.mxu0 0.0
        %5152 = vmatprep.subr.mxu0 0.0
        %5153 = vmatpush1.msra.mxu0 0.0
        %5154 = vmatprep.subr.mxu0 0.0
        %5155 = vmatpush1.msra.mxu0 0.0
        %5156 = vmatprep.subr.mxu0 0.0
        %5157 = vmatpush1.msra.mxu0 0.0
        %5158 = vmatprep.subr.mxu0 0.0
        %5159 = vmatpush1.msra.mxu0 0.0
        %5160 = vmatprep.subr.mxu0 0.0
        %5161 = vmatpush1.msra.mxu0 0.0
        %5162 = vmatprep.subr.mxu0 0.0
        %5163 = vmatpush1.msra.mxu0 0.0
        %5164 = vmatprep.subr.mxu0 0.0
        %5165 = vmatpush1.msra.mxu0 0.0
        %5166 = vmatprep.mubr.f32.mxu0 0.0
        %v5167 = vand.u32 %v3074, 4294901760
        %v5168 = vsub.f32 %v3074, %v5167
        %5169 = vmatmul.mubr.f32.gmra.mrb[0].mxu0 %v5168
        %v5170 = vpop.f32.mrb[0].mxu0
        %v5171 = vadd.f32 %v4977, %v5170
        %v5172 = vpop.f32.mrb[0].mxu0
        %5173 = vmatprep.mubr.f32.mxu0 0.0
        %v5174 = vand.u32 %v3080, 4294901760
        %v5175 = vsub.f32 %v3080, %v5174
        %5176 = vmatmul.mubr.f32.gmra.mrb[0].mxu0 %v5175
        %v5177 = vpop.f32.mrb[0].mxu0
        %v5178 = vadd.f32 %v4983, %v5177
        %v5179 = vpop.f32.mrb[0].mxu0
        %5180 = vmatprep.mubr.f32.mxu0 0.0
        %v5181 = vand.u32 %v3086, 4294901760
        %v5182 = vsub.f32 %v3086, %v5181
        %5183 = vmatmul.mubr.f32.gmra.mrb[0].mxu0 %v5182
        %v5184 = vpop.f32.mrb[0].mxu0
        %v5185 = vadd.f32 %v4989, %v5184
        %v5186 = vpop.f32.mrb[0].mxu0
        %5187 = vmatprep.mubr.f32.mxu0 0.0
        %v5188 = vand.u32 %v3092, 4294901760
        %v5189 = vsub.f32 %v3092, %v5188
        %5190 = vmatmul.mubr.f32.gmra.mrb[0].mxu0 %v5189
        %v5191 = vpop.f32.mrb[0].mxu0
        %v5192 = vadd.f32 %v4995, %v5191
        %v5193 = vpop.f32.mrb[0].mxu0
        %5194 = vmatprep.mubr.f32.mxu0 0.0
        %v5195 = vand.u32 %v3098, 4294901760
        %v5196 = vsub.f32 %v3098, %v5195
        %5197 = vmatmul.mubr.f32.gmra.mrb[0].mxu0 %v5196
        %v5198 = vpop.f32.mrb[0].mxu0
        %v5199 = vadd.f32 %v5001, %v5198
        %v5200 = vpop.f32.mrb[0].mxu0
        %5201 = vmatprep.mubr.f32.mxu0 0.0
        %v5202 = vand.u32 %v3104, 4294901760
        %v5203 = vsub.f32 %v3104, %v5202
        %5204 = vmatmul.mubr.f32.gmra.mrb[0].mxu0 %v5203
        %v5205 = vpop.f32.mrb[0].mxu0
        %v5206 = vadd.f32 %v5007, %v5205
        %v5207 = vpop.f32.mrb[0].mxu0
        %5208 = vmatprep.mubr.f32.mxu0 0.0
        %v5209 = vand.u32 %v3110, 4294901760
        %v5210 = vsub.f32 %v3110, %v5209
        %5211 = vmatmul.mubr.f32.gmra.mrb[0].mxu0 %v5210
        %v5212 = vpop.f32.mrb[0].mxu0
        %v5213 = vadd.f32 %v5013, %v5212
        %v5214 = vpop.f32.mrb[0].mxu0
        %5215 = vmatprep.mubr.f32.mxu0 0.0
        %v5216 = vand.u32 %v3116, 4294901760
        %v5217 = vsub.f32 %v3116, %v5216
        %5218 = vmatmul.mubr.f32.gmra.mrb[0].mxu0 %v5217
        %v5219 = vpop.f32.mrb[0].mxu0
        %v5220 = vadd.f32 %v5019, %v5219
        %v5221 = vpop.f32.mrb[0].mxu0
        %5222 = vmatprep.mubr.f32.mxu0 0.0
        %v5223 = vand.u32 %v3122, 4294901760
        %v5224 = vsub.f32 %v3122, %v5223
        %5225 = vmatmul.mubr.f32.gmra.mrb[0].mxu0 %v5224
        %v5226 = vpop.f32.mrb[0].mxu0
        %v5227 = vadd.f32 %v5025, %v5226
        %v5228 = vpop.f32.mrb[0].mxu0
        %5229 = vmatprep.mubr.f32.mxu0 0.0
        %v5230 = vand.u32 %v3128, 4294901760
        %v5231 = vsub.f32 %v3128, %v5230
        %5232 = vmatmul.mubr.f32.gmra.mrb[0].mxu0 %v5231
        %v5233 = vpop.f32.mrb[0].mxu0
        %v5234 = vadd.f32 %v5031, %v5233
        %v5235 = vpop.f32.mrb[0].mxu0
        %5236 = vmatprep.mubr.f32.mxu0 0.0
        %v5237 = vand.u32 %v3134, 4294901760
        %v5238 = vsub.f32 %v3134, %v5237
        %5239 = vmatmul.mubr.f32.gmra.mrb[0].mxu0 %v5238
        %v5240 = vpop.f32.mrb[0].mxu0
        %v5241 = vadd.f32 %v5037, %v5240
        %v5242 = vpop.f32.mrb[0].mxu0
        %5243 = vmatprep.mubr.f32.mxu0 0.0
        %v5244 = vand.u32 %v3140, 4294901760
        %v5245 = vsub.f32 %v3140, %v5244
        %5246 = vmatmul.mubr.f32.gmra.mrb[0].mxu0 %v5245
        %v5247 = vpop.f32.mrb[0].mxu0
        %v5248 = vadd.f32 %v5043, %v5247
        %v5249 = vpop.f32.mrb[0].mxu0
        %5250 = vmatprep.mubr.f32.mxu0 0.0
        %v5251 = vand.u32 %v3146, 4294901760
        %v5252 = vsub.f32 %v3146, %v5251
        %5253 = vmatmul.mubr.f32.gmra.mrb[0].mxu0 %v5252
        %v5254 = vpop.f32.mrb[0].mxu0
        %v5255 = vadd.f32 %v5049, %v5254
        %v5256 = vpop.f32.mrb[0].mxu0
        %5257 = vmatprep.mubr.f32.mxu0 0.0
        %v5258 = vand.u32 %v3152, 4294901760
        %v5259 = vsub.f32 %v3152, %v5258
        %5260 = vmatmul.mubr.f32.gmra.mrb[0].mxu0 %v5259
        %v5261 = vpop.f32.mrb[0].mxu0
        %v5262 = vadd.f32 %v5055, %v5261
        %v5263 = vpop.f32.mrb[0].mxu0
        %5264 = vmatprep.mubr.f32.mxu0 0.0
        %v5265 = vand.u32 %v3158, 4294901760
        %v5266 = vsub.f32 %v3158, %v5265
        %5267 = vmatmul.mubr.f32.gmra.mrb[0].mxu0 %v5266
        %v5268 = vpop.f32.mrb[0].mxu0
        %v5269 = vadd.f32 %v5061, %v5268
        %v5270 = vpop.f32.mrb[0].mxu0
        %5271 = vmatprep.mubr.f32.mxu0 0.0
        %v5272 = vand.u32 %v3164, 4294901760
        %v5273 = vsub.f32 %v3164, %v5272
        %5274 = vmatmul.mubr.f32.gmra.mrb[0].mxu0 %v5273
        %v5275 = vpop.f32.mrb[0].mxu0
        %v5276 = vadd.f32 %v5067, %v5275
        %v5277 = vpop.f32.mrb[0].mxu0
        %5278 = vdwg.mxu0
        %5279 = vmatprep.subr.mxu0 0.0
        %v5280 = vand.u32 %v4476, 4294901760
        %5281 = vmatpush1.msra.mxu0 %v5280
        %5282 = vmatprep.subr.mxu0 0.0
        %v5283 = vand.u32 %v4477, 4294901760
        %5284 = vmatpush1.msra.mxu0 %v5283
        %5285 = vmatprep.subr.mxu0 0.0
        %v5286 = vand.u32 %v4478, 4294901760
        %5287 = vmatpush1.msra.mxu0 %v5286
        %5288 = vmatprep.subr.mxu0 0.0
        %v5289 = vand.u32 %v4479, 4294901760
        %5290 = vmatpush1.msra.mxu0 %v5289
        %5291 = vmatprep.subr.mxu0 0.0
        %v5292 = vand.u32 %v4480, 4294901760
        %5293 = vmatpush1.msra.mxu0 %v5292
        %5294 = vmatprep.subr.mxu0 0.0
        %v5295 = vand.u32 %v4481, 4294901760
        %5296 = vmatpush1.msra.mxu0 %v5295
        %5297 = vmatprep.subr.mxu0 0.0
        %v5298 = vand.u32 %v4482, 4294901760
        %5299 = vmatpush1.msra.mxu0 %v5298
        %5300 = vmatprep.subr.mxu0 0.0
        %v5301 = vand.u32 %v4483, 4294901760
        %5302 = vmatpush1.msra.mxu0 %v5301
        %5303 = vmatprep.subr.mxu0 0.0
        %v5304 = vand.u32 %v4484, 4294901760
        %5305 = vmatpush1.msra.mxu0 %v5304
        %5306 = vmatprep.subr.mxu0 0.0
        %v5307 = vand.u32 %v4485, 4294901760
        %5308 = vmatpush1.msra.mxu0 %v5307
        %5309 = vmatprep.subr.mxu0 0.0
        %v5310 = vand.u32 %v4486, 4294901760
        %5311 = vmatpush1.msra.mxu0 %v5310
        %5312 = vmatprep.subr.mxu0 0.0
        %v5313 = vand.u32 %v4487, 4294901760
        %5314 = vmatpush1.msra.mxu0 %v5313
        %5315 = vmatprep.subr.mxu0 0.0
        %v5316 = vand.u32 %v4488, 4294901760
        %5317 = vmatpush1.msra.mxu0 %v5316
        %5318 = vmatprep.subr.mxu0 0.0
        %v5319 = vand.u32 %v4489, 4294901760
        %5320 = vmatpush1.msra.mxu0 %v5319
        %5321 = vmatprep.subr.mxu0 0.0
        %v5322 = vand.u32 %v4490, 4294901760
        %5323 = vmatpush1.msra.mxu0 %v5322
        %5324 = vmatprep.subr.mxu0 0.0
        %v5325 = vand.u32 %v4491, 4294901760
        %5326 = vmatpush1.msra.mxu0 %v5325
        %5327 = vmatprep.subr.mxu0 0.0
        %5328 = vmatpush1.msra.mxu0 0.0
        %5329 = vmatprep.subr.mxu0 0.0
        %5330 = vmatpush1.msra.mxu0 0.0
        %5331 = vmatprep.subr.mxu0 0.0
        %5332 = vmatpush1.msra.mxu0 0.0
        %5333 = vmatprep.subr.mxu0 0.0
        %5334 = vmatpush1.msra.mxu0 0.0
        %5335 = vmatprep.subr.mxu0 0.0
        %5336 = vmatpush1.msra.mxu0 0.0
        %5337 = vmatprep.subr.mxu0 0.0
        %5338 = vmatpush1.msra.mxu0 0.0
        %5339 = vmatprep.subr.mxu0 0.0
        %5340 = vmatpush1.msra.mxu0 0.0
        %5341 = vmatprep.subr.mxu0 0.0
        %5342 = vmatpush1.msra.mxu0 0.0
        %5343 = vmatprep.subr.mxu0 0.0
        %5344 = vmatpush1.msra.mxu0 0.0
        %5345 = vmatprep.subr.mxu0 0.0
        %5346 = vmatpush1.msra.mxu0 0.0
        %5347 = vmatprep.subr.mxu0 0.0
        %5348 = vmatpush1.msra.mxu0 0.0
        %5349 = vmatprep.subr.mxu0 0.0
        %5350 = vmatpush1.msra.mxu0 0.0
        %5351 = vmatprep.subr.mxu0 0.0
        %5352 = vmatpush1.msra.mxu0 0.0
        %5353 = vmatprep.subr.mxu0 0.0
        %5354 = vmatpush1.msra.mxu0 0.0
        %5355 = vmatprep.subr.mxu0 0.0
        %5356 = vmatpush1.msra.mxu0 0.0
        %5357 = vmatprep.subr.mxu0 0.0
        %5358 = vmatpush1.msra.mxu0 0.0
        %5359 = vmatprep.mubr.f32.mxu0 0.0
        %v5360 = vand.u32 %v3074, 4294901760
        %v5361 = vsub.f32 %v3074, %v5360
        %v5362 = vand.u32 %v5361, 4294901760
        %5363 = vmatmul.mubr.f32.gmra.mrb[0].mxu0 %v5362
        %v5364 = vpop.f32.mrb[0].mxu0
        %v5365 = vadd.f32 %v5171, %v5364
        %v5366 = vpop.f32.mrb[0].mxu0
        %5367 = vmatprep.mubr.f32.mxu0 0.0
        %v5368 = vand.u32 %v3080, 4294901760
        %v5369 = vsub.f32 %v3080, %v5368
        %v5370 = vand.u32 %v5369, 4294901760
        %5371 = vmatmul.mubr.f32.gmra.mrb[0].mxu0 %v5370
        %v5372 = vpop.f32.mrb[0].mxu0
        %v5373 = vadd.f32 %v5178, %v5372
        %v5374 = vpop.f32.mrb[0].mxu0
        %5375 = vmatprep.mubr.f32.mxu0 0.0
        %v5376 = vand.u32 %v3086, 4294901760
        %v5377 = vsub.f32 %v3086, %v5376
        %v5378 = vand.u32 %v5377, 4294901760
        %5379 = vmatmul.mubr.f32.gmra.mrb[0].mxu0 %v5378
        %v5380 = vpop.f32.mrb[0].mxu0
        %v5381 = vadd.f32 %v5185, %v5380
        %v5382 = vpop.f32.mrb[0].mxu0
        %5383 = vmatprep.mubr.f32.mxu0 0.0
        %v5384 = vand.u32 %v3092, 4294901760
        %v5385 = vsub.f32 %v3092, %v5384
        %v5386 = vand.u32 %v5385, 4294901760
        %5387 = vmatmul.mubr.f32.gmra.mrb[0].mxu0 %v5386
        %v5388 = vpop.f32.mrb[0].mxu0
        %v5389 = vadd.f32 %v5192, %v5388
        %v5390 = vpop.f32.mrb[0].mxu0
        %5391 = vmatprep.mubr.f32.mxu0 0.0
        %v5392 = vand.u32 %v3098, 4294901760
        %v5393 = vsub.f32 %v3098, %v5392
        %v5394 = vand.u32 %v5393, 4294901760
        %5395 = vmatmul.mubr.f32.gmra.mrb[0].mxu0 %v5394
        %v5396 = vpop.f32.mrb[0].mxu0
        %v5397 = vadd.f32 %v5199, %v5396
        %v5398 = vpop.f32.mrb[0].mxu0
        %5399 = vmatprep.mubr.f32.mxu0 0.0
        %v5400 = vand.u32 %v3104, 4294901760
        %v5401 = vsub.f32 %v3104, %v5400
        %v5402 = vand.u32 %v5401, 4294901760
        %5403 = vmatmul.mubr.f32.gmra.mrb[0].mxu0 %v5402
        %v5404 = vpop.f32.mrb[0].mxu0
        %v5405 = vadd.f32 %v5206, %v5404
        %v5406 = vpop.f32.mrb[0].mxu0
        %5407 = vmatprep.mubr.f32.mxu0 0.0
        %v5408 = vand.u32 %v3110, 4294901760
        %v5409 = vsub.f32 %v3110, %v5408
        %v5410 = vand.u32 %v5409, 4294901760
        %5411 = vmatmul.mubr.f32.gmra.mrb[0].mxu0 %v5410
        %v5412 = vpop.f32.mrb[0].mxu0
        %v5413 = vadd.f32 %v5213, %v5412
        %v5414 = vpop.f32.mrb[0].mxu0
        %5415 = vmatprep.mubr.f32.mxu0 0.0
        %v5416 = vand.u32 %v3116, 4294901760
        %v5417 = vsub.f32 %v3116, %v5416
        %v5418 = vand.u32 %v5417, 4294901760
        %5419 = vmatmul.mubr.f32.gmra.mrb[0].mxu0 %v5418
        %v5420 = vpop.f32.mrb[0].mxu0
        %v5421 = vadd.f32 %v5220, %v5420
        %v5422 = vpop.f32.mrb[0].mxu0
        %5423 = vmatprep.mubr.f32.mxu0 0.0
        %v5424 = vand.u32 %v3122, 4294901760
        %v5425 = vsub.f32 %v3122, %v5424
        %v5426 = vand.u32 %v5425, 4294901760
        %5427 = vmatmul.mubr.f32.gmra.mrb[0].mxu0 %v5426
        %v5428 = vpop.f32.mrb[0].mxu0
        %v5429 = vadd.f32 %v5227, %v5428
        %v5430 = vpop.f32.mrb[0].mxu0
        %5431 = vmatprep.mubr.f32.mxu0 0.0
        %v5432 = vand.u32 %v3128, 4294901760
        %v5433 = vsub.f32 %v3128, %v5432
        %v5434 = vand.u32 %v5433, 4294901760
        %5435 = vmatmul.mubr.f32.gmra.mrb[0].mxu0 %v5434
        %v5436 = vpop.f32.mrb[0].mxu0
        %v5437 = vadd.f32 %v5234, %v5436
        %v5438 = vpop.f32.mrb[0].mxu0
        %5439 = vmatprep.mubr.f32.mxu0 0.0
        %v5440 = vand.u32 %v3134, 4294901760
        %v5441 = vsub.f32 %v3134, %v5440
        %v5442 = vand.u32 %v5441, 4294901760
        %5443 = vmatmul.mubr.f32.gmra.mrb[0].mxu0 %v5442
        %v5444 = vpop.f32.mrb[0].mxu0
        %v5445 = vadd.f32 %v5241, %v5444
        %v5446 = vpop.f32.mrb[0].mxu0
        %5447 = vmatprep.mubr.f32.mxu0 0.0
        %v5448 = vand.u32 %v3140, 4294901760
        %v5449 = vsub.f32 %v3140, %v5448
        %v5450 = vand.u32 %v5449, 4294901760
        %5451 = vmatmul.mubr.f32.gmra.mrb[0].mxu0 %v5450
        %v5452 = vpop.f32.mrb[0].mxu0
        %v5453 = vadd.f32 %v5248, %v5452
        %v5454 = vpop.f32.mrb[0].mxu0
        %5455 = vmatprep.mubr.f32.mxu0 0.0
        %v5456 = vand.u32 %v3146, 4294901760
        %v5457 = vsub.f32 %v3146, %v5456
        %v5458 = vand.u32 %v5457, 4294901760
        %5459 = vmatmul.mubr.f32.gmra.mrb[0].mxu0 %v5458
        %v5460 = vpop.f32.mrb[0].mxu0
        %v5461 = vadd.f32 %v5255, %v5460
        %v5462 = vpop.f32.mrb[0].mxu0
        %5463 = vmatprep.mubr.f32.mxu0 0.0
        %v5464 = vand.u32 %v3152, 4294901760
        %v5465 = vsub.f32 %v3152, %v5464
        %v5466 = vand.u32 %v5465, 4294901760
        %5467 = vmatmul.mubr.f32.gmra.mrb[0].mxu0 %v5466
        %v5468 = vpop.f32.mrb[0].mxu0
        %v5469 = vadd.f32 %v5262, %v5468
        %v5470 = vpop.f32.mrb[0].mxu0
        %5471 = vmatprep.mubr.f32.mxu0 0.0
        %v5472 = vand.u32 %v3158, 4294901760
        %v5473 = vsub.f32 %v3158, %v5472
        %v5474 = vand.u32 %v5473, 4294901760
        %5475 = vmatmul.mubr.f32.gmra.mrb[0].mxu0 %v5474
        %v5476 = vpop.f32.mrb[0].mxu0
        %v5477 = vadd.f32 %v5269, %v5476
        %v5478 = vpop.f32.mrb[0].mxu0
        %5479 = vmatprep.mubr.f32.mxu0 0.0
        %v5480 = vand.u32 %v3164, 4294901760
        %v5481 = vsub.f32 %v3164, %v5480
        %v5482 = vand.u32 %v5481, 4294901760
        %5483 = vmatmul.mubr.f32.gmra.mrb[0].mxu0 %v5482
        %v5484 = vpop.f32.mrb[0].mxu0
        %v5485 = vadd.f32 %v5276, %v5484
        %v5486 = vpop.f32.mrb[0].mxu0
        %5487 = vdwg.mxu0
        %5488 = vmatprep.subr.mxu0 0.0
        %v5489 = vand.u32 %v4476, 4294901760
        %v5490 = vsub.f32 %v4476, %v5489
        %v5491 = vand.u32 %v5490, 4294901760
        %5492 = vmatpush1.msra.mxu0 %v5491
        %5493 = vmatprep.subr.mxu0 0.0
        %v5494 = vand.u32 %v4477, 4294901760
        %v5495 = vsub.f32 %v4477, %v5494
        %v5496 = vand.u32 %v5495, 4294901760
        %5497 = vmatpush1.msra.mxu0 %v5496
        %5498 = vmatprep.subr.mxu0 0.0
        %v5499 = vand.u32 %v4478, 4294901760
        %v5500 = vsub.f32 %v4478, %v5499
        %v5501 = vand.u32 %v5500, 4294901760
        %5502 = vmatpush1.msra.mxu0 %v5501
        %5503 = vmatprep.subr.mxu0 0.0
        %v5504 = vand.u32 %v4479, 4294901760
        %v5505 = vsub.f32 %v4479, %v5504
        %v5506 = vand.u32 %v5505, 4294901760
        %5507 = vmatpush1.msra.mxu0 %v5506
        %5508 = vmatprep.subr.mxu0 0.0
        %v5509 = vand.u32 %v4480, 4294901760
        %v5510 = vsub.f32 %v4480, %v5509
        %v5511 = vand.u32 %v5510, 4294901760
        %5512 = vmatpush1.msra.mxu0 %v5511
        %5513 = vmatprep.subr.mxu0 0.0
        %v5514 = vand.u32 %v4481, 4294901760
        %v5515 = vsub.f32 %v4481, %v5514
        %v5516 = vand.u32 %v5515, 4294901760
        %5517 = vmatpush1.msra.mxu0 %v5516
        %5518 = vmatprep.subr.mxu0 0.0
        %v5519 = vand.u32 %v4482, 4294901760
        %v5520 = vsub.f32 %v4482, %v5519
        %v5521 = vand.u32 %v5520, 4294901760
        %5522 = vmatpush1.msra.mxu0 %v5521
        %5523 = vmatprep.subr.mxu0 0.0
        %v5524 = vand.u32 %v4483, 4294901760
        %v5525 = vsub.f32 %v4483, %v5524
        %v5526 = vand.u32 %v5525, 4294901760
        %5527 = vmatpush1.msra.mxu0 %v5526
        %5528 = vmatprep.subr.mxu0 0.0
        %v5529 = vand.u32 %v4484, 4294901760
        %v5530 = vsub.f32 %v4484, %v5529
        %v5531 = vand.u32 %v5530, 4294901760
        %5532 = vmatpush1.msra.mxu0 %v5531
        %5533 = vmatprep.subr.mxu0 0.0
        %v5534 = vand.u32 %v4485, 4294901760
        %v5535 = vsub.f32 %v4485, %v5534
        %v5536 = vand.u32 %v5535, 4294901760
        %5537 = vmatpush1.msra.mxu0 %v5536
        %5538 = vmatprep.subr.mxu0 0.0
        %v5539 = vand.u32 %v4486, 4294901760
        %v5540 = vsub.f32 %v4486, %v5539
        %v5541 = vand.u32 %v5540, 4294901760
        %5542 = vmatpush1.msra.mxu0 %v5541
        %5543 = vmatprep.subr.mxu0 0.0
        %v5544 = vand.u32 %v4487, 4294901760
        %v5545 = vsub.f32 %v4487, %v5544
        %v5546 = vand.u32 %v5545, 4294901760
        %5547 = vmatpush1.msra.mxu0 %v5546
        %5548 = vmatprep.subr.mxu0 0.0
        %v5549 = vand.u32 %v4488, 4294901760
        %v5550 = vsub.f32 %v4488, %v5549
        %v5551 = vand.u32 %v5550, 4294901760
        %5552 = vmatpush1.msra.mxu0 %v5551
        %5553 = vmatprep.subr.mxu0 0.0
        %v5554 = vand.u32 %v4489, 4294901760
        %v5555 = vsub.f32 %v4489, %v5554
        %v5556 = vand.u32 %v5555, 4294901760
        %5557 = vmatpush1.msra.mxu0 %v5556
        %5558 = vmatprep.subr.mxu0 0.0
        %v5559 = vand.u32 %v4490, 4294901760
        %v5560 = vsub.f32 %v4490, %v5559
        %v5561 = vand.u32 %v5560, 4294901760
        %5562 = vmatpush1.msra.mxu0 %v5561
        %5563 = vmatprep.subr.mxu0 0.0
        %v5564 = vand.u32 %v4491, 4294901760
        %v5565 = vsub.f32 %v4491, %v5564
        %v5566 = vand.u32 %v5565, 4294901760
        %5567 = vmatpush1.msra.mxu0 %v5566
        %5568 = vmatprep.subr.mxu0 0.0
        %5569 = vmatpush1.msra.mxu0 0.0
        %5570 = vmatprep.subr.mxu0 0.0
        %5571 = vmatpush1.msra.mxu0 0.0
        %5572 = vmatprep.subr.mxu0 0.0
        %5573 = vmatpush1.msra.mxu0 0.0
        %5574 = vmatprep.subr.mxu0 0.0
        %5575 = vmatpush1.msra.mxu0 0.0
        %5576 = vmatprep.subr.mxu0 0.0
        %5577 = vmatpush1.msra.mxu0 0.0
        %5578 = vmatprep.subr.mxu0 0.0
        %5579 = vmatpush1.msra.mxu0 0.0
        %5580 = vmatprep.subr.mxu0 0.0
        %5581 = vmatpush1.msra.mxu0 0.0
        %5582 = vmatprep.subr.mxu0 0.0
        %5583 = vmatpush1.msra.mxu0 0.0
        %5584 = vmatprep.subr.mxu0 0.0
        %5585 = vmatpush1.msra.mxu0 0.0
        %5586 = vmatprep.subr.mxu0 0.0
        %5587 = vmatpush1.msra.mxu0 0.0
        %5588 = vmatprep.subr.mxu0 0.0
        %5589 = vmatpush1.msra.mxu0 0.0
        %5590 = vmatprep.subr.mxu0 0.0
        %5591 = vmatpush1.msra.mxu0 0.0
        %5592 = vmatprep.subr.mxu0 0.0
        %5593 = vmatpush1.msra.mxu0 0.0
        %5594 = vmatprep.subr.mxu0 0.0
        %5595 = vmatpush1.msra.mxu0 0.0
        %5596 = vmatprep.subr.mxu0 0.0
        %5597 = vmatpush1.msra.mxu0 0.0
        %5598 = vmatprep.subr.mxu0 0.0
        %5599 = vmatpush1.msra.mxu0 0.0
        %5600 = vmatprep.mubr.f32.mxu0 0.0
        %v5601 = vand.u32 %v3074, 4294901760
        %5602 = vmatmul.mubr.f32.gmra.mrb[0].mxu0 %v5601
        %v5603 = vpop.f32.mrb[0].mxu0
        %v5604 = vadd.f32 %v5365, %v5603
        %v5605 = vpop.f32.mrb[0].mxu0
        %5606 = vmatprep.mubr.f32.mxu0 0.0
        %v5607 = vand.u32 %v3080, 4294901760
        %5608 = vmatmul.mubr.f32.gmra.mrb[0].mxu0 %v5607
        %v5609 = vpop.f32.mrb[0].mxu0
        %v5610 = vadd.f32 %v5373, %v5609
        %v5611 = vpop.f32.mrb[0].mxu0
        %5612 = vmatprep.mubr.f32.mxu0 0.0
        %v5613 = vand.u32 %v3086, 4294901760
        %5614 = vmatmul.mubr.f32.gmra.mrb[0].mxu0 %v5613
        %v5615 = vpop.f32.mrb[0].mxu0
        %v5616 = vadd.f32 %v5381, %v5615
        %v5617 = vpop.f32.mrb[0].mxu0
        %5618 = vmatprep.mubr.f32.mxu0 0.0
        %v5619 = vand.u32 %v3092, 4294901760
        %5620 = vmatmul.mubr.f32.gmra.mrb[0].mxu0 %v5619
        %v5621 = vpop.f32.mrb[0].mxu0
        %v5622 = vadd.f32 %v5389, %v5621
        %v5623 = vpop.f32.mrb[0].mxu0
        %5624 = vmatprep.mubr.f32.mxu0 0.0
        %v5625 = vand.u32 %v3098, 4294901760
        %5626 = vmatmul.mubr.f32.gmra.mrb[0].mxu0 %v5625
        %v5627 = vpop.f32.mrb[0].mxu0
        %v5628 = vadd.f32 %v5397, %v5627
        %v5629 = vpop.f32.mrb[0].mxu0
        %5630 = vmatprep.mubr.f32.mxu0 0.0
        %v5631 = vand.u32 %v3104, 4294901760
        %5632 = vmatmul.mubr.f32.gmra.mrb[0].mxu0 %v5631
        %v5633 = vpop.f32.mrb[0].mxu0
        %v5634 = vadd.f32 %v5405, %v5633
        %v5635 = vpop.f32.mrb[0].mxu0
        %5636 = vmatprep.mubr.f32.mxu0 0.0
        %v5637 = vand.u32 %v3110, 4294901760
        %5638 = vmatmul.mubr.f32.gmra.mrb[0].mxu0 %v5637
        %v5639 = vpop.f32.mrb[0].mxu0
        %v5640 = vadd.f32 %v5413, %v5639
        %v5641 = vpop.f32.mrb[0].mxu0
        %5642 = vmatprep.mubr.f32.mxu0 0.0
        %v5643 = vand.u32 %v3116, 4294901760
        %5644 = vmatmul.mubr.f32.gmra.mrb[0].mxu0 %v5643
        %v5645 = vpop.f32.mrb[0].mxu0
        %v5646 = vadd.f32 %v5421, %v5645
        %v5647 = vpop.f32.mrb[0].mxu0
        %5648 = vmatprep.mubr.f32.mxu0 0.0
        %v5649 = vand.u32 %v3122, 4294901760
        %5650 = vmatmul.mubr.f32.gmra.mrb[0].mxu0 %v5649
        %v5651 = vpop.f32.mrb[0].mxu0
        %v5652 = vadd.f32 %v5429, %v5651
        %v5653 = vpop.f32.mrb[0].mxu0
        %5654 = vmatprep.mubr.f32.mxu0 0.0
        %v5655 = vand.u32 %v3128, 4294901760
        %5656 = vmatmul.mubr.f32.gmra.mrb[0].mxu0 %v5655
        %v5657 = vpop.f32.mrb[0].mxu0
        %v5658 = vadd.f32 %v5437, %v5657
        %v5659 = vpop.f32.mrb[0].mxu0
        %5660 = vmatprep.mubr.f32.mxu0 0.0
        %v5661 = vand.u32 %v3134, 4294901760
        %5662 = vmatmul.mubr.f32.gmra.mrb[0].mxu0 %v5661
        %v5663 = vpop.f32.mrb[0].mxu0
        %v5664 = vadd.f32 %v5445, %v5663
        %v5665 = vpop.f32.mrb[0].mxu0
        %5666 = vmatprep.mubr.f32.mxu0 0.0
        %v5667 = vand.u32 %v3140, 4294901760
        %5668 = vmatmul.mubr.f32.gmra.mrb[0].mxu0 %v5667
        %v5669 = vpop.f32.mrb[0].mxu0
        %v5670 = vadd.f32 %v5453, %v5669
        %v5671 = vpop.f32.mrb[0].mxu0
        %5672 = vmatprep.mubr.f32.mxu0 0.0
        %v5673 = vand.u32 %v3146, 4294901760
        %5674 = vmatmul.mubr.f32.gmra.mrb[0].mxu0 %v5673
        %v5675 = vpop.f32.mrb[0].mxu0
        %v5676 = vadd.f32 %v5461, %v5675
        %v5677 = vpop.f32.mrb[0].mxu0
        %5678 = vmatprep.mubr.f32.mxu0 0.0
        %v5679 = vand.u32 %v3152, 4294901760
        %5680 = vmatmul.mubr.f32.gmra.mrb[0].mxu0 %v5679
        %v5681 = vpop.f32.mrb[0].mxu0
        %v5682 = vadd.f32 %v5469, %v5681
        %v5683 = vpop.f32.mrb[0].mxu0
        %5684 = vmatprep.mubr.f32.mxu0 0.0
        %v5685 = vand.u32 %v3158, 4294901760
        %5686 = vmatmul.mubr.f32.gmra.mrb[0].mxu0 %v5685
        %v5687 = vpop.f32.mrb[0].mxu0
        %v5688 = vadd.f32 %v5477, %v5687
        %v5689 = vpop.f32.mrb[0].mxu0
        %5690 = vmatprep.mubr.f32.mxu0 0.0
        %v5691 = vand.u32 %v3164, 4294901760
        %5692 = vmatmul.mubr.f32.gmra.mrb[0].mxu0 %v5691
        %v5693 = vpop.f32.mrb[0].mxu0
        %v5694 = vadd.f32 %v5485, %v5693
        %v5695 = vpop.f32.mrb[0].mxu0
        %5696 = vdwg.mxu0
        %5697 = vmatprep.subr.mxu0 0.0
        %v5698 = vand.u32 %v4476, 4294901760
        %5699 = vmatpush1.msra.mxu0 %v5698
        %5700 = vmatprep.subr.mxu0 0.0
        %v5701 = vand.u32 %v4477, 4294901760
        %5702 = vmatpush1.msra.mxu0 %v5701
        %5703 = vmatprep.subr.mxu0 0.0
        %v5704 = vand.u32 %v4478, 4294901760
        %5705 = vmatpush1.msra.mxu0 %v5704
        %5706 = vmatprep.subr.mxu0 0.0
        %v5707 = vand.u32 %v4479, 4294901760
        %5708 = vmatpush1.msra.mxu0 %v5707
        %5709 = vmatprep.subr.mxu0 0.0
        %v5710 = vand.u32 %v4480, 4294901760
        %5711 = vmatpush1.msra.mxu0 %v5710
        %5712 = vmatprep.subr.mxu0 0.0
        %v5713 = vand.u32 %v4481, 4294901760
        %5714 = vmatpush1.msra.mxu0 %v5713
        %5715 = vmatprep.subr.mxu0 0.0
        %v5716 = vand.u32 %v4482, 4294901760
        %5717 = vmatpush1.msra.mxu0 %v5716
        %5718 = vmatprep.subr.mxu0 0.0
        %v5719 = vand.u32 %v4483, 4294901760
        %5720 = vmatpush1.msra.mxu0 %v5719
        %5721 = vmatprep.subr.mxu0 0.0
        %v5722 = vand.u32 %v4484, 4294901760
        %5723 = vmatpush1.msra.mxu0 %v5722
        %5724 = vmatprep.subr.mxu0 0.0
        %v5725 = vand.u32 %v4485, 4294901760
        %5726 = vmatpush1.msra.mxu0 %v5725
        %5727 = vmatprep.subr.mxu0 0.0
        %v5728 = vand.u32 %v4486, 4294901760
        %5729 = vmatpush1.msra.mxu0 %v5728
        %5730 = vmatprep.subr.mxu0 0.0
        %v5731 = vand.u32 %v4487, 4294901760
        %5732 = vmatpush1.msra.mxu0 %v5731
        %5733 = vmatprep.subr.mxu0 0.0
        %v5734 = vand.u32 %v4488, 4294901760
        %5735 = vmatpush1.msra.mxu0 %v5734
        %5736 = vmatprep.subr.mxu0 0.0
        %v5737 = vand.u32 %v4489, 4294901760
        %5738 = vmatpush1.msra.mxu0 %v5737
        %5739 = vmatprep.subr.mxu0 0.0
        %v5740 = vand.u32 %v4490, 4294901760
        %5741 = vmatpush1.msra.mxu0 %v5740
        %5742 = vmatprep.subr.mxu0 0.0
        %v5743 = vand.u32 %v4491, 4294901760
        %5744 = vmatpush1.msra.mxu0 %v5743
        %5745 = vmatprep.subr.mxu0 0.0
        %5746 = vmatpush1.msra.mxu0 0.0
        %5747 = vmatprep.subr.mxu0 0.0
        %5748 = vmatpush1.msra.mxu0 0.0
        %5749 = vmatprep.subr.mxu0 0.0
        %5750 = vmatpush1.msra.mxu0 0.0
        %5751 = vmatprep.subr.mxu0 0.0
        %5752 = vmatpush1.msra.mxu0 0.0
        %5753 = vmatprep.subr.mxu0 0.0
        %5754 = vmatpush1.msra.mxu0 0.0
        %5755 = vmatprep.subr.mxu0 0.0
        %5756 = vmatpush1.msra.mxu0 0.0
        %5757 = vmatprep.subr.mxu0 0.0
        %5758 = vmatpush1.msra.mxu0 0.0
        %5759 = vmatprep.subr.mxu0 0.0
        %5760 = vmatpush1.msra.mxu0 0.0
        %5761 = vmatprep.subr.mxu0 0.0
        %5762 = vmatpush1.msra.mxu0 0.0
        %5763 = vmatprep.subr.mxu0 0.0
        %5764 = vmatpush1.msra.mxu0 0.0
        %5765 = vmatprep.subr.mxu0 0.0
        %5766 = vmatpush1.msra.mxu0 0.0
        %5767 = vmatprep.subr.mxu0 0.0
        %5768 = vmatpush1.msra.mxu0 0.0
        %5769 = vmatprep.subr.mxu0 0.0
        %5770 = vmatpush1.msra.mxu0 0.0
        %5771 = vmatprep.subr.mxu0 0.0
        %5772 = vmatpush1.msra.mxu0 0.0
        %5773 = vmatprep.subr.mxu0 0.0
        %5774 = vmatpush1.msra.mxu0 0.0
        %5775 = vmatprep.subr.mxu0 0.0
        %5776 = vmatpush1.msra.mxu0 0.0
        %5777 = vmatprep.mubr.f32.mxu0 0.0
        %v5778 = vand.u32 %v3074, 4294901760
        %5779 = vmatmul.mubr.f32.gmra.mrb[0].mxu0 %v5778
        %v5780 = vpop.f32.mrb[0].mxu0
        %v5781 = vadd.f32 %v5604, %v5780
        %v5782 = vpop.f32.mrb[0].mxu0
        %5783 = vmatprep.mubr.f32.mxu0 0.0
        %v5784 = vand.u32 %v3080, 4294901760
        %5785 = vmatmul.mubr.f32.gmra.mrb[0].mxu0 %v5784
        %v5786 = vpop.f32.mrb[0].mxu0
        %v5787 = vadd.f32 %v5610, %v5786
        %v5788 = vpop.f32.mrb[0].mxu0
        %5789 = vmatprep.mubr.f32.mxu0 0.0
        %v5790 = vand.u32 %v3086, 4294901760
        %5791 = vmatmul.mubr.f32.gmra.mrb[0].mxu0 %v5790
        %v5792 = vpop.f32.mrb[0].mxu0
        %v5793 = vadd.f32 %v5616, %v5792
        %v5794 = vpop.f32.mrb[0].mxu0
        %5795 = vmatprep.mubr.f32.mxu0 0.0
        %v5796 = vand.u32 %v3092, 4294901760
        %5797 = vmatmul.mubr.f32.gmra.mrb[0].mxu0 %v5796
        %v5798 = vpop.f32.mrb[0].mxu0
        %v5799 = vadd.f32 %v5622, %v5798
        %v5800 = vpop.f32.mrb[0].mxu0
        %5801 = vmatprep.mubr.f32.mxu0 0.0
        %v5802 = vand.u32 %v3098, 4294901760
        %5803 = vmatmul.mubr.f32.gmra.mrb[0].mxu0 %v5802
        %v5804 = vpop.f32.mrb[0].mxu0
        %v5805 = vadd.f32 %v5628, %v5804
        %v5806 = vpop.f32.mrb[0].mxu0
        %5807 = vmatprep.mubr.f32.mxu0 0.0
        %v5808 = vand.u32 %v3104, 4294901760
        %5809 = vmatmul.mubr.f32.gmra.mrb[0].mxu0 %v5808
        %v5810 = vpop.f32.mrb[0].mxu0
        %v5811 = vadd.f32 %v5634, %v5810
        %v5812 = vpop.f32.mrb[0].mxu0
        %5813 = vmatprep.mubr.f32.mxu0 0.0
        %v5814 = vand.u32 %v3110, 4294901760
        %5815 = vmatmul.mubr.f32.gmra.mrb[0].mxu0 %v5814
        %v5816 = vpop.f32.mrb[0].mxu0
        %v5817 = vadd.f32 %v5640, %v5816
        %v5818 = vpop.f32.mrb[0].mxu0
        %5819 = vmatprep.mubr.f32.mxu0 0.0
        %v5820 = vand.u32 %v3116, 4294901760
        %5821 = vmatmul.mubr.f32.gmra.mrb[0].mxu0 %v5820
        %v5822 = vpop.f32.mrb[0].mxu0
        %v5823 = vadd.f32 %v5646, %v5822
        %v5824 = vpop.f32.mrb[0].mxu0
        %5825 = vmatprep.mubr.f32.mxu0 0.0
        %v5826 = vand.u32 %v3122, 4294901760
        %5827 = vmatmul.mubr.f32.gmra.mrb[0].mxu0 %v5826
        %v5828 = vpop.f32.mrb[0].mxu0
        %v5829 = vadd.f32 %v5652, %v5828
        %v5830 = vpop.f32.mrb[0].mxu0
        %5831 = vmatprep.mubr.f32.mxu0 0.0
        %v5832 = vand.u32 %v3128, 4294901760
        %5833 = vmatmul.mubr.f32.gmra.mrb[0].mxu0 %v5832
        %v5834 = vpop.f32.mrb[0].mxu0
        %v5835 = vadd.f32 %v5658, %v5834
        %v5836 = vpop.f32.mrb[0].mxu0
        %5837 = vmatprep.mubr.f32.mxu0 0.0
        %v5838 = vand.u32 %v3134, 4294901760
        %5839 = vmatmul.mubr.f32.gmra.mrb[0].mxu0 %v5838
        %v5840 = vpop.f32.mrb[0].mxu0
        %v5841 = vadd.f32 %v5664, %v5840
        %v5842 = vpop.f32.mrb[0].mxu0
        %5843 = vmatprep.mubr.f32.mxu0 0.0
        %v5844 = vand.u32 %v3140, 4294901760
        %5845 = vmatmul.mubr.f32.gmra.mrb[0].mxu0 %v5844
        %v5846 = vpop.f32.mrb[0].mxu0
        %v5847 = vadd.f32 %v5670, %v5846
        %v5848 = vpop.f32.mrb[0].mxu0
        %5849 = vmatprep.mubr.f32.mxu0 0.0
        %v5850 = vand.u32 %v3146, 4294901760
        %5851 = vmatmul.mubr.f32.gmra.mrb[0].mxu0 %v5850
        %v5852 = vpop.f32.mrb[0].mxu0
        %v5853 = vadd.f32 %v5676, %v5852
        %v5854 = vpop.f32.mrb[0].mxu0
        %5855 = vmatprep.mubr.f32.mxu0 0.0
        %v5856 = vand.u32 %v3152, 4294901760
        %5857 = vmatmul.mubr.f32.gmra.mrb[0].mxu0 %v5856
        %v5858 = vpop.f32.mrb[0].mxu0
        %v5859 = vadd.f32 %v5682, %v5858
        %v5860 = vpop.f32.mrb[0].mxu0
        %5861 = vmatprep.mubr.f32.mxu0 0.0
        %v5862 = vand.u32 %v3158, 4294901760
        %5863 = vmatmul.mubr.f32.gmra.mrb[0].mxu0 %v5862
        %v5864 = vpop.f32.mrb[0].mxu0
        %v5865 = vadd.f32 %v5688, %v5864
        %v5866 = vpop.f32.mrb[0].mxu0
        %5867 = vmatprep.mubr.f32.mxu0 0.0
        %v5868 = vand.u32 %v3164, 4294901760
        %5869 = vmatmul.mubr.f32.gmra.mrb[0].mxu0 %v5868
        %v5870 = vpop.f32.mrb[0].mxu0
        %v5871 = vadd.f32 %v5694, %v5870
        %v5872 = vpop.f32.mrb[0].mxu0
        %5873 = vdwg.mxu0
        %v5874 = vmax.f32 %v5781, %v5787
        %v5875 = vrot.slane %v5874, 4
        %v5876 = vmax.f32 %v5874, %v5875
        %v5877 = vrot.slane %v5876, 2
        %v5878 = vmax.f32 %v5876, %v5877
        %v5879 = vrot.slane %v5878, 1
        %v5880 = vmax.f32 %v5878, %v5879
        %v5881 = vmax.f32 %v5793, %v5799
        %v5882 = vrot.slane %v5881, 4
        %v5883 = vmax.f32 %v5881, %v5882
        %v5884 = vrot.slane %v5883, 2
        %v5885 = vmax.f32 %v5883, %v5884
        %v5886 = vrot.slane %v5885, 1
        %v5887 = vmax.f32 %v5885, %v5886
        %v5888 = vmax.f32 %v5805, %v5811
        %v5889 = vrot.slane %v5888, 4
        %v5890 = vmax.f32 %v5888, %v5889
        %v5891 = vrot.slane %v5890, 2
        %v5892 = vmax.f32 %v5890, %v5891
        %v5893 = vrot.slane %v5892, 1
        %v5894 = vmax.f32 %v5892, %v5893
        %v5895 = vmax.f32 %v5817, %v5823
        %v5896 = vrot.slane %v5895, 4
        %v5897 = vmax.f32 %v5895, %v5896
        %v5898 = vrot.slane %v5897, 2
        %v5899 = vmax.f32 %v5897, %v5898
        %v5900 = vrot.slane %v5899, 1
        %v5901 = vmax.f32 %v5899, %v5900
        %v5902 = vmax.f32 %v5829, %v5835
        %v5903 = vrot.slane %v5902, 4
        %v5904 = vmax.f32 %v5902, %v5903
        %v5905 = vrot.slane %v5904, 2
        %v5906 = vmax.f32 %v5904, %v5905
        %v5907 = vrot.slane %v5906, 1
        %v5908 = vmax.f32 %v5906, %v5907
        %v5909 = vmax.f32 %v5841, %v5847
        %v5910 = vrot.slane %v5909, 4
        %v5911 = vmax.f32 %v5909, %v5910
        %v5912 = vrot.slane %v5911, 2
        %v5913 = vmax.f32 %v5911, %v5912
        %v5914 = vrot.slane %v5913, 1
        %v5915 = vmax.f32 %v5913, %v5914
        %v5916 = vmax.f32 %v5853, %v5859
        %v5917 = vrot.slane %v5916, 4
        %v5918 = vmax.f32 %v5916, %v5917
        %v5919 = vrot.slane %v5918, 2
        %v5920 = vmax.f32 %v5918, %v5919
        %v5921 = vrot.slane %v5920, 1
        %v5922 = vmax.f32 %v5920, %v5921
        %v5923 = vmax.f32 %v5865, %v5871
        %v5924 = vrot.slane %v5923, 4
        %v5925 = vmax.f32 %v5923, %v5924
        %v5926 = vrot.slane %v5925, 2
        %v5927 = vmax.f32 %v5925, %v5926
        %v5928 = vrot.slane %v5927, 1
        %v5929 = vmax.f32 %v5927, %v5928
        %v5930 = vsub.f32 %v5781, %v5880
        %v5931 = vsub.f32 %v5787, %v5880
        %v5932 = vsub.f32 %v5793, %v5887
        %v5933 = vsub.f32 %v5799, %v5887
        %v5934 = vsub.f32 %v5805, %v5894
        %v5935 = vsub.f32 %v5811, %v5894
        %v5936 = vsub.f32 %v5817, %v5901
        %v5937 = vsub.f32 %v5823, %v5901
        %v5938 = vsub.f32 %v5829, %v5908
        %v5939 = vsub.f32 %v5835, %v5908
        %v5940 = vsub.f32 %v5841, %v5915
        %v5941 = vsub.f32 %v5847, %v5915
        %v5942 = vsub.f32 %v5853, %v5922
        %v5943 = vsub.f32 %v5859, %v5922
        %v5944 = vsub.f32 %v5865, %v5929
        %v5945 = vsub.f32 %v5871, %v5929
        %v5946 = vmul.f32 %v5930, 1.442695
        %v5947 = vpow.pop %v5946
        %v5948 = vmul.f32 %v5931, 1.442695
        %v5949 = vpow.pop %v5948
        %v5950 = vmul.f32 %v5932, 1.442695
        %v5951 = vpow.pop %v5950
        %v5952 = vmul.f32 %v5933, 1.442695
        %v5953 = vpow.pop %v5952
        %v5954 = vmul.f32 %v5934, 1.442695
        %v5955 = vpow.pop %v5954
        %v5956 = vmul.f32 %v5935, 1.442695
        %v5957 = vpow.pop %v5956
        %v5958 = vmul.f32 %v5936, 1.442695
        %v5959 = vpow.pop %v5958
        %v5960 = vmul.f32 %v5937, 1.442695
        %v5961 = vpow.pop %v5960
        %v5962 = vmul.f32 %v5938, 1.442695
        %v5963 = vpow.pop %v5962
        %v5964 = vmul.f32 %v5939, 1.442695
        %v5965 = vpow.pop %v5964
        %v5966 = vmul.f32 %v5940, 1.442695
        %v5967 = vpow.pop %v5966
        %v5968 = vmul.f32 %v5941, 1.442695
        %v5969 = vpow.pop %v5968
        %v5970 = vmul.f32 %v5942, 1.442695
        %v5971 = vpow.pop %v5970
        %v5972 = vmul.f32 %v5943, 1.442695
        %v5973 = vpow.pop %v5972
        %v5974 = vmul.f32 %v5944, 1.442695
        %v5975 = vpow.pop %v5974
        %v5976 = vmul.f32 %v5945, 1.442695
        %v5977 = vpow.pop %v5976
        %v5978 = vadd.f32 %v5947, %v5949
        %v5979 = vrot.slane %v5978, 4
        %v5980 = vadd.f32 %v5978, %v5979
        %v5981 = vrot.slane %v5980, 2
        %v5982 = vadd.f32 %v5980, %v5981
        %v5983 = vrot.slane %v5982, 1
        %v5984 = vadd.f32 %v5982, %v5983
        %v5985 = vadd.f32 %v5951, %v5953
        %v5986 = vrot.slane %v5985, 4
        %v5987 = vadd.f32 %v5985, %v5986
        %v5988 = vrot.slane %v5987, 2
        %v5989 = vadd.f32 %v5987, %v5988
        %v5990 = vrot.slane %v5989, 1
        %v5991 = vadd.f32 %v5989, %v5990
        %v5992 = vadd.f32 %v5955, %v5957
        %v5993 = vrot.slane %v5992, 4
        %v5994 = vadd.f32 %v5992, %v5993
        %v5995 = vrot.slane %v5994, 2
        %v5996 = vadd.f32 %v5994, %v5995
        %v5997 = vrot.slane %v5996, 1
        %v5998 = vadd.f32 %v5996, %v5997
        %v5999 = vadd.f32 %v5959, %v5961
        %v6000 = vrot.slane %v5999, 4
        %v6001 = vadd.f32 %v5999, %v6000
        %v6002 = vrot.slane %v6001, 2
        %v6003 = vadd.f32 %v6001, %v6002
        %v6004 = vrot.slane %v6003, 1
        %v6005 = vadd.f32 %v6003, %v6004
        %v6006 = vadd.f32 %v5963, %v5965
        %v6007 = vrot.slane %v6006, 4
        %v6008 = vadd.f32 %v6006, %v6007
        %v6009 = vrot.slane %v6008, 2
        %v6010 = vadd.f32 %v6008, %v6009
        %v6011 = vrot.slane %v6010, 1
        %v6012 = vadd.f32 %v6010, %v6011
        %v6013 = vadd.f32 %v5967, %v5969
        %v6014 = vrot.slane %v6013, 4
        %v6015 = vadd.f32 %v6013, %v6014
        %v6016 = vrot.slane %v6015, 2
        %v6017 = vadd.f32 %v6015, %v6016
        %v6018 = vrot.slane %v6017, 1
        %v6019 = vadd.f32 %v6017, %v6018
        %v6020 = vadd.f32 %v5971, %v5973
        %v6021 = vrot.slane %v6020, 4
        %v6022 = vadd.f32 %v6020, %v6021
        %v6023 = vrot.slane %v6022, 2
        %v6024 = vadd.f32 %v6022, %v6023
        %v6025 = vrot.slane %v6024, 1
        %v6026 = vadd.f32 %v6024, %v6025
        %v6027 = vadd.f32 %v5975, %v5977
        %v6028 = vrot.slane %v6027, 4
        %v6029 = vadd.f32 %v6027, %v6028
        %v6030 = vrot.slane %v6029, 2
        %v6031 = vadd.f32 %v6029, %v6030
        %v6032 = vrot.slane %v6031, 1
        %v6033 = vadd.f32 %v6031, %v6032
        %v6034 = vrcp.pop %v5984
        %v6035 = vmul.f32 %v5947, %v6034
        %v6036 = vmul.f32 %v5949, %v6034
        %v6037 = vrcp.pop %v5991
        %v6038 = vmul.f32 %v5951, %v6037
        %v6039 = vmul.f32 %v5953, %v6037
        %v6040 = vrcp.pop %v5998
        %v6041 = vmul.f32 %v5955, %v6040
        %v6042 = vmul.f32 %v5957, %v6040
        %v6043 = vrcp.pop %v6005
        %v6044 = vmul.f32 %v5959, %v6043
        %v6045 = vmul.f32 %v5961, %v6043
        %v6046 = vrcp.pop %v6012
        %v6047 = vmul.f32 %v5963, %v6046
        %v6048 = vmul.f32 %v5965, %v6046
        %v6049 = vrcp.pop %v6019
        %v6050 = vmul.f32 %v5967, %v6049
        %v6051 = vmul.f32 %v5969, %v6049
        %v6052 = vrcp.pop %v6026
        %v6053 = vmul.f32 %v5971, %v6052
        %v6054 = vmul.f32 %v5973, %v6052
        %v6055 = vrcp.pop %v6033
        %v6056 = vmul.f32 %v5975, %v6055
        %v6057 = vmul.f32 %v5977, %v6055
        %v6058 = vmul.f32 %v6035, %v4383
        %v6059 = vmul.f32 %v6036, %v4389
        %v6060 = vmul.f32 %v6038, %v4395
        %v6061 = vmul.f32 %v6039, %v4401
        %v6062 = vmul.f32 %v6041, %v4407
        %v6063 = vmul.f32 %v6042, %v4413
        %v6064 = vmul.f32 %v6044, %v4419
        %v6065 = vmul.f32 %v6045, %v4425
        %v6066 = vmul.f32 %v6047, %v4431
        %v6067 = vmul.f32 %v6048, %v4437
        %v6068 = vmul.f32 %v6050, %v4443
        %v6069 = vmul.f32 %v6051, %v4449
        %v6070 = vmul.f32 %v6053, %v4455
        %v6071 = vmul.f32 %v6054, %v4461
        %v6072 = vmul.f32 %v6056, %v4467
        %v6073 = vmul.f32 %v6057, %v4473
        %v6074 = vadd.f32 %v6058, %v6059
        %v6075 = vrot.slane %v6074, 4
        %v6076 = vadd.f32 %v6074, %v6075
        %v6077 = vrot.slane %v6076, 2
        %v6078 = vadd.f32 %v6076, %v6077
        %v6079 = vrot.slane %v6078, 1
        %v6080 = vadd.f32 %v6078, %v6079
        %v6081 = vadd.f32 %v6060, %v6061
        %v6082 = vrot.slane %v6081, 4
        %v6083 = vadd.f32 %v6081, %v6082
        %v6084 = vrot.slane %v6083, 2
        %v6085 = vadd.f32 %v6083, %v6084
        %v6086 = vrot.slane %v6085, 1
        %v6087 = vadd.f32 %v6085, %v6086
        %v6088 = vadd.f32 %v6062, %v6063
        %v6089 = vrot.slane %v6088, 4
        %v6090 = vadd.f32 %v6088, %v6089
        %v6091 = vrot.slane %v6090, 2
        %v6092 = vadd.f32 %v6090, %v6091
        %v6093 = vrot.slane %v6092, 1
        %v6094 = vadd.f32 %v6092, %v6093
        %v6095 = vadd.f32 %v6064, %v6065
        %v6096 = vrot.slane %v6095, 4
        %v6097 = vadd.f32 %v6095, %v6096
        %v6098 = vrot.slane %v6097, 2
        %v6099 = vadd.f32 %v6097, %v6098
        %v6100 = vrot.slane %v6099, 1
        %v6101 = vadd.f32 %v6099, %v6100
        %v6102 = vadd.f32 %v6066, %v6067
        %v6103 = vrot.slane %v6102, 4
        %v6104 = vadd.f32 %v6102, %v6103
        %v6105 = vrot.slane %v6104, 2
        %v6106 = vadd.f32 %v6104, %v6105
        %v6107 = vrot.slane %v6106, 1
        %v6108 = vadd.f32 %v6106, %v6107
        %v6109 = vadd.f32 %v6068, %v6069
        %v6110 = vrot.slane %v6109, 4
        %v6111 = vadd.f32 %v6109, %v6110
        %v6112 = vrot.slane %v6111, 2
        %v6113 = vadd.f32 %v6111, %v6112
        %v6114 = vrot.slane %v6113, 1
        %v6115 = vadd.f32 %v6113, %v6114
        %v6116 = vadd.f32 %v6070, %v6071
        %v6117 = vrot.slane %v6116, 4
        %v6118 = vadd.f32 %v6116, %v6117
        %v6119 = vrot.slane %v6118, 2
        %v6120 = vadd.f32 %v6118, %v6119
        %v6121 = vrot.slane %v6120, 1
        %v6122 = vadd.f32 %v6120, %v6121
        %v6123 = vadd.f32 %v6072, %v6073
        %v6124 = vrot.slane %v6123, 4
        %v6125 = vadd.f32 %v6123, %v6124
        %v6126 = vrot.slane %v6125, 2
        %v6127 = vadd.f32 %v6125, %v6126
        %v6128 = vrot.slane %v6127, 1
        %v6129 = vadd.f32 %v6127, %v6128
        %v6130 = vld [vmem:[#allocation10] sm:$0xff]
        %v6131 = vld [vmem:[#allocation10 + $0x8] sm:$0xff]
        %v6132 = vld [vmem:[#allocation10 + $0x10] sm:$0xff]
        %v6133 = vld [vmem:[#allocation10 + $0x18] sm:$0xff]
        %v6134 = vld [vmem:[#allocation10 + $0x20] sm:$0xff]
        %v6135 = vld [vmem:[#allocation10 + $0x28] sm:$0xff]
        %v6136 = vld [vmem:[#allocation10 + $0x30] sm:$0xff]
        %v6137 = vld [vmem:[#allocation10 + $0x38] sm:$0xff]
        %v6138 = vld [vmem:[#allocation10 + $0x40] sm:$0xff]
        %v6139 = vld [vmem:[#allocation10 + $0x48] sm:$0xff]
        %v6140 = vld [vmem:[#allocation10 + $0x50] sm:$0xff]
        %v6141 = vld [vmem:[#allocation10 + $0x58] sm:$0xff]
        %v6142 = vld [vmem:[#allocation10 + $0x60] sm:$0xff]
        %v6143 = vld [vmem:[#allocation10 + $0x68] sm:$0xff]
        %v6144 = vld [vmem:[#allocation10 + $0x70] sm:$0xff]
        %v6145 = vld [vmem:[#allocation10 + $0x78] sm:$0xff]
        %v6146 = vld [vmem:[%s10] sm:$0x1]
        %v6148 = vlaneseq
        %v6149 = vshrl.u32 %v6148, 7
        %v6150 = vsub.s32 0, %v6149
        %v6151 = vrot.slane %v6146, %v6150
        %vm6161 = vcmask 1041409
        %v6162 = vsel %vm6161, %v6087, %v6080
        %vm6163 = vcmask 1042434
        %v6164 = vsel %vm6163, %v6094, %v6162
        %vm6165 = vcmask 1043459
        %v6166 = vsel %vm6165, %v6101, %v6164
        %vm6167 = vcmask 1044484
        %v6168 = vsel %vm6167, %v6108, %v6166
        %vm6169 = vcmask 1045509
        %v6170 = vsel %vm6169, %v6115, %v6168
        %vm6171 = vcmask 1046534
        %v6172 = vsel %vm6171, %v6122, %v6170
        %vm6173 = vcmask 1047559
        %v6174 = vsel %vm6173, %v6129, %v6172
        %6176 = vmatprep.subr.mxu0 0.0
        %v6177 = vand.u32 %v6130, 4294901760
        %6178 = vmatpush1.msra.mxu0 %v6177
        %6179 = vmatprep.subr.mxu0 0.0
        %v6180 = vand.u32 %v6131, 4294901760
        %6181 = vmatpush1.msra.mxu0 %v6180
        %6182 = vmatprep.subr.mxu0 0.0
        %v6183 = vand.u32 %v6132, 4294901760
        %6184 = vmatpush1.msra.mxu0 %v6183
        %6185 = vmatprep.subr.mxu0 0.0
        %v6186 = vand.u32 %v6133, 4294901760
        %6187 = vmatpush1.msra.mxu0 %v6186
        %6188 = vmatprep.subr.mxu0 0.0
        %v6189 = vand.u32 %v6134, 4294901760
        %6190 = vmatpush1.msra.mxu0 %v6189
        %6191 = vmatprep.subr.mxu0 0.0
        %v6192 = vand.u32 %v6135, 4294901760
        %6193 = vmatpush1.msra.mxu0 %v6192
        %6194 = vmatprep.subr.mxu0 0.0
        %v6195 = vand.u32 %v6136, 4294901760
        %6196 = vmatpush1.msra.mxu0 %v6195
        %6197 = vmatprep.subr.mxu0 0.0
        %v6198 = vand.u32 %v6137, 4294901760
        %6199 = vmatpush1.msra.mxu0 %v6198
        %6200 = vmatprep.subr.mxu0 0.0
        %v6201 = vand.u32 %v6138, 4294901760
        %6202 = vmatpush1.msra.mxu0 %v6201
        %6203 = vmatprep.subr.mxu0 0.0
        %v6204 = vand.u32 %v6139, 4294901760
        %6205 = vmatpush1.msra.mxu0 %v6204
        %6206 = vmatprep.subr.mxu0 0.0
        %v6207 = vand.u32 %v6140, 4294901760
        %6208 = vmatpush1.msra.mxu0 %v6207
        %6209 = vmatprep.subr.mxu0 0.0
        %v6210 = vand.u32 %v6141, 4294901760
        %6211 = vmatpush1.msra.mxu0 %v6210
        %6212 = vmatprep.subr.mxu0 0.0
        %v6213 = vand.u32 %v6142, 4294901760
        %6214 = vmatpush1.msra.mxu0 %v6213
        %6215 = vmatprep.subr.mxu0 0.0
        %v6216 = vand.u32 %v6143, 4294901760
        %6217 = vmatpush1.msra.mxu0 %v6216
        %6218 = vmatprep.subr.mxu0 0.0
        %v6219 = vand.u32 %v6144, 4294901760
        %6220 = vmatpush1.msra.mxu0 %v6219
        %6221 = vmatprep.subr.mxu0 0.0
        %v6222 = vand.u32 %v6145, 4294901760
        %6223 = vmatpush1.msra.mxu0 %v6222
        %6224 = vmatprep.subr.mxu0 0.0
        %6225 = vmatpush1.msra.mxu0 0.0
        %6226 = vmatprep.subr.mxu0 0.0
        %6227 = vmatpush1.msra.mxu0 0.0
        %6228 = vmatprep.subr.mxu0 0.0
        %6229 = vmatpush1.msra.mxu0 0.0
        %6230 = vmatprep.subr.mxu0 0.0
        %6231 = vmatpush1.msra.mxu0 0.0
        %6232 = vmatprep.subr.mxu0 0.0
        %6233 = vmatpush1.msra.mxu0 0.0
        %6234 = vmatprep.subr.mxu0 0.0
        %6235 = vmatpush1.msra.mxu0 0.0
        %6236 = vmatprep.subr.mxu0 0.0
        %6237 = vmatpush1.msra.mxu0 0.0
        %6238 = vmatprep.subr.mxu0 0.0
        %6239 = vmatpush1.msra.mxu0 0.0
        %6240 = vmatprep.subr.mxu0 0.0
        %6241 = vmatpush1.msra.mxu0 0.0
        %6242 = vmatprep.subr.mxu0 0.0
        %6243 = vmatpush1.msra.mxu0 0.0
        %6244 = vmatprep.subr.mxu0 0.0
        %6245 = vmatpush1.msra.mxu0 0.0
        %6246 = vmatprep.subr.mxu0 0.0
        %6247 = vmatpush1.msra.mxu0 0.0
        %6248 = vmatprep.subr.mxu0 0.0
        %6249 = vmatpush1.msra.mxu0 0.0
        %6250 = vmatprep.subr.mxu0 0.0
        %6251 = vmatpush1.msra.mxu0 0.0
        %6252 = vmatprep.subr.mxu0 0.0
        %6253 = vmatpush1.msra.mxu0 0.0
        %6254 = vmatprep.subr.mxu0 0.0
        %6255 = vmatpush1.msra.mxu0 0.0
        %6256 = vmatprep.mubr.f32.mxu0 0.0
        %v6257 = vand.u32 %v6174, 4294901760
        %v6258 = vsub.f32 %v6174, %v6257
        %v6259 = vand.u32 %v6258, 4294901760
        %v6260 = vsub.f32 %v6258, %v6259
        %v6261 = vand.u32 %v6260, 4294901760
        %6262 = vmatmul.mubr.f32.gmra.mrb[0].mxu0 %v6261
        %v6263 = vpop.f32.mrb[0].mxu0
        %v6264 = vadd.f32 %v6151, %v6263
        %v6265 = vpop.f32.mrb[0].mxu0
        %6266 = vdwg.mxu0
        %6267 = vmatprep.subr.mxu0 0.0
        %v6268 = vand.u32 %v6130, 4294901760
        %v6269 = vsub.f32 %v6130, %v6268
        %v6270 = vand.u32 %v6269, 4294901760
        %v6271 = vsub.f32 %v6269, %v6270
        %v6272 = vand.u32 %v6271, 4294901760
        %6273 = vmatpush1.msra.mxu0 %v6272
        %6274 = vmatprep.subr.mxu0 0.0
        %v6275 = vand.u32 %v6131, 4294901760
        %v6276 = vsub.f32 %v6131, %v6275
        %v6277 = vand.u32 %v6276, 4294901760
        %v6278 = vsub.f32 %v6276, %v6277
        %v6279 = vand.u32 %v6278, 4294901760
        %6280 = vmatpush1.msra.mxu0 %v6279
        %6281 = vmatprep.subr.mxu0 0.0
        %v6282 = vand.u32 %v6132, 4294901760
        %v6283 = vsub.f32 %v6132, %v6282
        %v6284 = vand.u32 %v6283, 4294901760
        %v6285 = vsub.f32 %v6283, %v6284
        %v6286 = vand.u32 %v6285, 4294901760
        %6287 = vmatpush1.msra.mxu0 %v6286
        %6288 = vmatprep.subr.mxu0 0.0
        %v6289 = vand.u32 %v6133, 4294901760
        %v6290 = vsub.f32 %v6133, %v6289
        %v6291 = vand.u32 %v6290, 4294901760
        %v6292 = vsub.f32 %v6290, %v6291
        %v6293 = vand.u32 %v6292, 4294901760
        %6294 = vmatpush1.msra.mxu0 %v6293
        %6295 = vmatprep.subr.mxu0 0.0
        %v6296 = vand.u32 %v6134, 4294901760
        %v6297 = vsub.f32 %v6134, %v6296
        %v6298 = vand.u32 %v6297, 4294901760
        %v6299 = vsub.f32 %v6297, %v6298
        %v6300 = vand.u32 %v6299, 4294901760
        %6301 = vmatpush1.msra.mxu0 %v6300
        %6302 = vmatprep.subr.mxu0 0.0
        %v6303 = vand.u32 %v6135, 4294901760
        %v6304 = vsub.f32 %v6135, %v6303
        %v6305 = vand.u32 %v6304, 4294901760
        %v6306 = vsub.f32 %v6304, %v6305
        %v6307 = vand.u32 %v6306, 4294901760
        %6308 = vmatpush1.msra.mxu0 %v6307
        %6309 = vmatprep.subr.mxu0 0.0
        %v6310 = vand.u32 %v6136, 4294901760
        %v6311 = vsub.f32 %v6136, %v6310
        %v6312 = vand.u32 %v6311, 4294901760
        %v6313 = vsub.f32 %v6311, %v6312
        %v6314 = vand.u32 %v6313, 4294901760
        %6315 = vmatpush1.msra.mxu0 %v6314
        %6316 = vmatprep.subr.mxu0 0.0
        %v6317 = vand.u32 %v6137, 4294901760
        %v6318 = vsub.f32 %v6137, %v6317
        %v6319 = vand.u32 %v6318, 4294901760
        %v6320 = vsub.f32 %v6318, %v6319
        %v6321 = vand.u32 %v6320, 4294901760
        %6322 = vmatpush1.msra.mxu0 %v6321
        %6323 = vmatprep.subr.mxu0 0.0
        %v6324 = vand.u32 %v6138, 4294901760
        %v6325 = vsub.f32 %v6138, %v6324
        %v6326 = vand.u32 %v6325, 4294901760
        %v6327 = vsub.f32 %v6325, %v6326
        %v6328 = vand.u32 %v6327, 4294901760
        %6329 = vmatpush1.msra.mxu0 %v6328
        %6330 = vmatprep.subr.mxu0 0.0
        %v6331 = vand.u32 %v6139, 4294901760
        %v6332 = vsub.f32 %v6139, %v6331
        %v6333 = vand.u32 %v6332, 4294901760
        %v6334 = vsub.f32 %v6332, %v6333
        %v6335 = vand.u32 %v6334, 4294901760
        %6336 = vmatpush1.msra.mxu0 %v6335
        %6337 = vmatprep.subr.mxu0 0.0
        %v6338 = vand.u32 %v6140, 4294901760
        %v6339 = vsub.f32 %v6140, %v6338
        %v6340 = vand.u32 %v6339, 4294901760
        %v6341 = vsub.f32 %v6339, %v6340
        %v6342 = vand.u32 %v6341, 4294901760
        %6343 = vmatpush1.msra.mxu0 %v6342
        %6344 = vmatprep.subr.mxu0 0.0
        %v6345 = vand.u32 %v6141, 4294901760
        %v6346 = vsub.f32 %v6141, %v6345
        %v6347 = vand.u32 %v6346, 4294901760
        %v6348 = vsub.f32 %v6346, %v6347
        %v6349 = vand.u32 %v6348, 4294901760
        %6350 = vmatpush1.msra.mxu0 %v6349
        %6351 = vmatprep.subr.mxu0 0.0
        %v6352 = vand.u32 %v6142, 4294901760
        %v6353 = vsub.f32 %v6142, %v6352
        %v6354 = vand.u32 %v6353, 4294901760
        %v6355 = vsub.f32 %v6353, %v6354
        %v6356 = vand.u32 %v6355, 4294901760
        %6357 = vmatpush1.msra.mxu0 %v6356
        %6358 = vmatprep.subr.mxu0 0.0
        %v6359 = vand.u32 %v6143, 4294901760
        %v6360 = vsub.f32 %v6143, %v6359
        %v6361 = vand.u32 %v6360, 4294901760
        %v6362 = vsub.f32 %v6360, %v6361
        %v6363 = vand.u32 %v6362, 4294901760
        %6364 = vmatpush1.msra.mxu0 %v6363
        %6365 = vmatprep.subr.mxu0 0.0
        %v6366 = vand.u32 %v6144, 4294901760
        %v6367 = vsub.f32 %v6144, %v6366
        %v6368 = vand.u32 %v6367, 4294901760
        %v6369 = vsub.f32 %v6367, %v6368
        %v6370 = vand.u32 %v6369, 4294901760
        %6371 = vmatpush1.msra.mxu0 %v6370
        %6372 = vmatprep.subr.mxu0 0.0
        %v6373 = vand.u32 %v6145, 4294901760
        %v6374 = vsub.f32 %v6145, %v6373
        %v6375 = vand.u32 %v6374, 4294901760
        %v6376 = vsub.f32 %v6374, %v6375
        %v6377 = vand.u32 %v6376, 4294901760
        %6378 = vmatpush1.msra.mxu0 %v6377
        %6379 = vmatprep.subr.mxu0 0.0
        %6380 = vmatpush1.msra.mxu0 0.0
        %6381 = vmatprep.subr.mxu0 0.0
        %6382 = vmatpush1.msra.mxu0 0.0
        %6383 = vmatprep.subr.mxu0 0.0
        %6384 = vmatpush1.msra.mxu0 0.0
        %6385 = vmatprep.subr.mxu0 0.0
        %6386 = vmatpush1.msra.mxu0 0.0
        %6387 = vmatprep.subr.mxu0 0.0
        %6388 = vmatpush1.msra.mxu0 0.0
        %6389 = vmatprep.subr.mxu0 0.0
        %6390 = vmatpush1.msra.mxu0 0.0
        %6391 = vmatprep.subr.mxu0 0.0
        %6392 = vmatpush1.msra.mxu0 0.0
        %6393 = vmatprep.subr.mxu0 0.0
        %6394 = vmatpush1.msra.mxu0 0.0
        %6395 = vmatprep.subr.mxu0 0.0
        %6396 = vmatpush1.msra.mxu0 0.0
        %6397 = vmatprep.subr.mxu0 0.0
        %6398 = vmatpush1.msra.mxu0 0.0
        %6399 = vmatprep.subr.mxu0 0.0
        %6400 = vmatpush1.msra.mxu0 0.0
        %6401 = vmatprep.subr.mxu0 0.0
        %6402 = vmatpush1.msra.mxu0 0.0
        %6403 = vmatprep.subr.mxu0 0.0
        %6404 = vmatpush1.msra.mxu0 0.0
        %6405 = vmatprep.subr.mxu0 0.0
        %6406 = vmatpush1.msra.mxu0 0.0
        %6407 = vmatprep.subr.mxu0 0.0
        %6408 = vmatpush1.msra.mxu0 0.0
        %6409 = vmatprep.subr.mxu0 0.0
        %6410 = vmatpush1.msra.mxu0 0.0
        %6411 = vmatprep.mubr.f32.mxu0 0.0
        %v6412 = vand.u32 %v6174, 4294901760
        %6413 = vmatmul.mubr.f32.gmra.mrb[0].mxu0 %v6412
        %v6414 = vpop.f32.mrb[0].mxu0
        %v6415 = vadd.f32 %v6264, %v6414
        %v6416 = vpop.f32.mrb[0].mxu0
        %6417 = vdwg.mxu0
        %6418 = vmatprep.subr.mxu0 0.0
        %v6419 = vand.u32 %v6130, 4294901760
        %v6420 = vsub.f32 %v6130, %v6419
        %6421 = vmatpush1.msra.mxu0 %v6420
        %6422 = vmatprep.subr.mxu0 0.0
        %v6423 = vand.u32 %v6131, 4294901760
        %v6424 = vsub.f32 %v6131, %v6423
        %6425 = vmatpush1.msra.mxu0 %v6424
        %6426 = vmatprep.subr.mxu0 0.0
        %v6427 = vand.u32 %v6132, 4294901760
        %v6428 = vsub.f32 %v6132, %v6427
        %6429 = vmatpush1.msra.mxu0 %v6428
        %6430 = vmatprep.subr.mxu0 0.0
        %v6431 = vand.u32 %v6133, 4294901760
        %v6432 = vsub.f32 %v6133, %v6431
        %6433 = vmatpush1.msra.mxu0 %v6432
        %6434 = vmatprep.subr.mxu0 0.0
        %v6435 = vand.u32 %v6134, 4294901760
        %v6436 = vsub.f32 %v6134, %v6435
        %6437 = vmatpush1.msra.mxu0 %v6436
        %6438 = vmatprep.subr.mxu0 0.0
        %v6439 = vand.u32 %v6135, 4294901760
        %v6440 = vsub.f32 %v6135, %v6439
        %6441 = vmatpush1.msra.mxu0 %v6440
        %6442 = vmatprep.subr.mxu0 0.0
        %v6443 = vand.u32 %v6136, 4294901760
        %v6444 = vsub.f32 %v6136, %v6443
        %6445 = vmatpush1.msra.mxu0 %v6444
        %6446 = vmatprep.subr.mxu0 0.0
        %v6447 = vand.u32 %v6137, 4294901760
        %v6448 = vsub.f32 %v6137, %v6447
        %6449 = vmatpush1.msra.mxu0 %v6448
        %6450 = vmatprep.subr.mxu0 0.0
        %v6451 = vand.u32 %v6138, 4294901760
        %v6452 = vsub.f32 %v6138, %v6451
        %6453 = vmatpush1.msra.mxu0 %v6452
        %6454 = vmatprep.subr.mxu0 0.0
        %v6455 = vand.u32 %v6139, 4294901760
        %v6456 = vsub.f32 %v6139, %v6455
        %6457 = vmatpush1.msra.mxu0 %v6456
        %6458 = vmatprep.subr.mxu0 0.0
        %v6459 = vand.u32 %v6140, 4294901760
        %v6460 = vsub.f32 %v6140, %v6459
        %6461 = vmatpush1.msra.mxu0 %v6460
        %6462 = vmatprep.subr.mxu0 0.0
        %v6463 = vand.u32 %v6141, 4294901760
        %v6464 = vsub.f32 %v6141, %v6463
        %6465 = vmatpush1.msra.mxu0 %v6464
        %6466 = vmatprep.subr.mxu0 0.0
        %v6467 = vand.u32 %v6142, 4294901760
        %v6468 = vsub.f32 %v6142, %v6467
        %6469 = vmatpush1.msra.mxu0 %v6468
        %6470 = vmatprep.subr.mxu0 0.0
        %v6471 = vand.u32 %v6143, 4294901760
        %v6472 = vsub.f32 %v6143, %v6471
        %6473 = vmatpush1.msra.mxu0 %v6472
        %6474 = vmatprep.subr.mxu0 0.0
        %v6475 = vand.u32 %v6144, 4294901760
        %v6476 = vsub.f32 %v6144, %v6475
        %6477 = vmatpush1.msra.mxu0 %v6476
        %6478 = vmatprep.subr.mxu0 0.0
        %v6479 = vand.u32 %v6145, 4294901760
        %v6480 = vsub.f32 %v6145, %v6479
        %6481 = vmatpush1.msra.mxu0 %v6480
        %6482 = vmatprep.subr.mxu0 0.0
        %6483 = vmatpush1.msra.mxu0 0.0
        %6484 = vmatprep.subr.mxu0 0.0
        %6485 = vmatpush1.msra.mxu0 0.0
        %6486 = vmatprep.subr.mxu0 0.0
        %6487 = vmatpush1.msra.mxu0 0.0
        %6488 = vmatprep.subr.mxu0 0.0
        %6489 = vmatpush1.msra.mxu0 0.0
        %6490 = vmatprep.subr.mxu0 0.0
        %6491 = vmatpush1.msra.mxu0 0.0
        %6492 = vmatprep.subr.mxu0 0.0
        %6493 = vmatpush1.msra.mxu0 0.0
        %6494 = vmatprep.subr.mxu0 0.0
        %6495 = vmatpush1.msra.mxu0 0.0
        %6496 = vmatprep.subr.mxu0 0.0
        %6497 = vmatpush1.msra.mxu0 0.0
        %6498 = vmatprep.subr.mxu0 0.0
        %6499 = vmatpush1.msra.mxu0 0.0
        %6500 = vmatprep.subr.mxu0 0.0
        %6501 = vmatpush1.msra.mxu0 0.0
        %6502 = vmatprep.subr.mxu0 0.0
        %6503 = vmatpush1.msra.mxu0 0.0
        %6504 = vmatprep.subr.mxu0 0.0
        %6505 = vmatpush1.msra.mxu0 0.0
        %6506 = vmatprep.subr.mxu0 0.0
        %6507 = vmatpush1.msra.mxu0 0.0
        %6508 = vmatprep.subr.mxu0 0.0
        %6509 = vmatpush1.msra.mxu0 0.0
        %6510 = vmatprep.subr.mxu0 0.0
        %6511 = vmatpush1.msra.mxu0 0.0
        %6512 = vmatprep.subr.mxu0 0.0
        %6513 = vmatpush1.msra.mxu0 0.0
        %6514 = vmatprep.mubr.f32.mxu0 0.0
        %v6515 = vand.u32 %v6174, 4294901760
        %v6516 = vsub.f32 %v6174, %v6515
        %6517 = vmatmul.mubr.f32.gmra.mrb[0].mxu0 %v6516
        %v6518 = vpop.f32.mrb[0].mxu0
        %v6519 = vadd.f32 %v6415, %v6518
        %v6520 = vpop.f32.mrb[0].mxu0
        %6521 = vdwg.mxu0
        %6522 = vmatprep.subr.mxu0 0.0
        %v6523 = vand.u32 %v6130, 4294901760
        %6524 = vmatpush1.msra.mxu0 %v6523
        %6525 = vmatprep.subr.mxu0 0.0
        %v6526 = vand.u32 %v6131, 4294901760
        %6527 = vmatpush1.msra.mxu0 %v6526
        %6528 = vmatprep.subr.mxu0 0.0
        %v6529 = vand.u32 %v6132, 4294901760
        %6530 = vmatpush1.msra.mxu0 %v6529
        %6531 = vmatprep.subr.mxu0 0.0
        %v6532 = vand.u32 %v6133, 4294901760
        %6533 = vmatpush1.msra.mxu0 %v6532
        %6534 = vmatprep.subr.mxu0 0.0
        %v6535 = vand.u32 %v6134, 4294901760
        %6536 = vmatpush1.msra.mxu0 %v6535
        %6537 = vmatprep.subr.mxu0 0.0
        %v6538 = vand.u32 %v6135, 4294901760
        %6539 = vmatpush1.msra.mxu0 %v6538
        %6540 = vmatprep.subr.mxu0 0.0
        %v6541 = vand.u32 %v6136, 4294901760
        %6542 = vmatpush1.msra.mxu0 %v6541
        %6543 = vmatprep.subr.mxu0 0.0
        %v6544 = vand.u32 %v6137, 4294901760
        %6545 = vmatpush1.msra.mxu0 %v6544
        %6546 = vmatprep.subr.mxu0 0.0
        %v6547 = vand.u32 %v6138, 4294901760
        %6548 = vmatpush1.msra.mxu0 %v6547
        %6549 = vmatprep.subr.mxu0 0.0
        %v6550 = vand.u32 %v6139, 4294901760
        %6551 = vmatpush1.msra.mxu0 %v6550
        %6552 = vmatprep.subr.mxu0 0.0
        %v6553 = vand.u32 %v6140, 4294901760
        %6554 = vmatpush1.msra.mxu0 %v6553
        %6555 = vmatprep.subr.mxu0 0.0
        %v6556 = vand.u32 %v6141, 4294901760
        %6557 = vmatpush1.msra.mxu0 %v6556
        %6558 = vmatprep.subr.mxu0 0.0
        %v6559 = vand.u32 %v6142, 4294901760
        %6560 = vmatpush1.msra.mxu0 %v6559
        %6561 = vmatprep.subr.mxu0 0.0
        %v6562 = vand.u32 %v6143, 4294901760
        %6563 = vmatpush1.msra.mxu0 %v6562
        %6564 = vmatprep.subr.mxu0 0.0
        %v6565 = vand.u32 %v6144, 4294901760
        %6566 = vmatpush1.msra.mxu0 %v6565
        %6567 = vmatprep.subr.mxu0 0.0
        %v6568 = vand.u32 %v6145, 4294901760
        %6569 = vmatpush1.msra.mxu0 %v6568
        %6570 = vmatprep.subr.mxu0 0.0
        %6571 = vmatpush1.msra.mxu0 0.0
        %6572 = vmatprep.subr.mxu0 0.0
        %6573 = vmatpush1.msra.mxu0 0.0
        %6574 = vmatprep.subr.mxu0 0.0
        %6575 = vmatpush1.msra.mxu0 0.0
        %6576 = vmatprep.subr.mxu0 0.0
        %6577 = vmatpush1.msra.mxu0 0.0
        %6578 = vmatprep.subr.mxu0 0.0
        %6579 = vmatpush1.msra.mxu0 0.0
        %6580 = vmatprep.subr.mxu0 0.0
        %6581 = vmatpush1.msra.mxu0 0.0
        %6582 = vmatprep.subr.mxu0 0.0
        %6583 = vmatpush1.msra.mxu0 0.0
        %6584 = vmatprep.subr.mxu0 0.0
        %6585 = vmatpush1.msra.mxu0 0.0
        %6586 = vmatprep.subr.mxu0 0.0
        %6587 = vmatpush1.msra.mxu0 0.0
        %6588 = vmatprep.subr.mxu0 0.0
        %6589 = vmatpush1.msra.mxu0 0.0
        %6590 = vmatprep.subr.mxu0 0.0
        %6591 = vmatpush1.msra.mxu0 0.0
        %6592 = vmatprep.subr.mxu0 0.0
        %6593 = vmatpush1.msra.mxu0 0.0
        %6594 = vmatprep.subr.mxu0 0.0
        %6595 = vmatpush1.msra.mxu0 0.0
        %6596 = vmatprep.subr.mxu0 0.0
        %6597 = vmatpush1.msra.mxu0 0.0
        %6598 = vmatprep.subr.mxu0 0.0
        %6599 = vmatpush1.msra.mxu0 0.0
        %6600 = vmatprep.subr.mxu0 0.0
        %6601 = vmatpush1.msra.mxu0 0.0
        %6602 = vmatprep.mubr.f32.mxu0 0.0
        %v6603 = vand.u32 %v6174, 4294901760
        %v6604 = vsub.f32 %v6174, %v6603
        %v6605 = vand.u32 %v6604, 4294901760
        %6606 = vmatmul.mubr.f32.gmra.mrb[0].mxu0 %v6605
        %v6607 = vpop.f32.mrb[0].mxu0
        %v6608 = vadd.f32 %v6519, %v6607
        %v6609 = vpop.f32.mrb[0].mxu0
        %6610 = vdwg.mxu0
        %6611 = vmatprep.subr.mxu0 0.0
        %v6612 = vand.u32 %v6130, 4294901760
        %v6613 = vsub.f32 %v6130, %v6612
        %v6614 = vand.u32 %v6613, 4294901760
        %6615 = vmatpush1.msra.mxu0 %v6614
        %6616 = vmatprep.subr.mxu0 0.0
        %v6617 = vand.u32 %v6131, 4294901760
        %v6618 = vsub.f32 %v6131, %v6617
        %v6619 = vand.u32 %v6618, 4294901760
        %6620 = vmatpush1.msra.mxu0 %v6619
        %6621 = vmatprep.subr.mxu0 0.0
        %v6622 = vand.u32 %v6132, 4294901760
        %v6623 = vsub.f32 %v6132, %v6622
        %v6624 = vand.u32 %v6623, 4294901760
        %6625 = vmatpush1.msra.mxu0 %v6624
        %6626 = vmatprep.subr.mxu0 0.0
        %v6627 = vand.u32 %v6133, 4294901760
        %v6628 = vsub.f32 %v6133, %v6627
        %v6629 = vand.u32 %v6628, 4294901760
        %6630 = vmatpush1.msra.mxu0 %v6629
        %6631 = vmatprep.subr.mxu0 0.0
        %v6632 = vand.u32 %v6134, 4294901760
        %v6633 = vsub.f32 %v6134, %v6632
        %v6634 = vand.u32 %v6633, 4294901760
        %6635 = vmatpush1.msra.mxu0 %v6634
        %6636 = vmatprep.subr.mxu0 0.0
        %v6637 = vand.u32 %v6135, 4294901760
        %v6638 = vsub.f32 %v6135, %v6637
        %v6639 = vand.u32 %v6638, 4294901760
        %6640 = vmatpush1.msra.mxu0 %v6639
        %6641 = vmatprep.subr.mxu0 0.0
        %v6642 = vand.u32 %v6136, 4294901760
        %v6643 = vsub.f32 %v6136, %v6642
        %v6644 = vand.u32 %v6643, 4294901760
        %6645 = vmatpush1.msra.mxu0 %v6644
        %6646 = vmatprep.subr.mxu0 0.0
        %v6647 = vand.u32 %v6137, 4294901760
        %v6648 = vsub.f32 %v6137, %v6647
        %v6649 = vand.u32 %v6648, 4294901760
        %6650 = vmatpush1.msra.mxu0 %v6649
        %6651 = vmatprep.subr.mxu0 0.0
        %v6652 = vand.u32 %v6138, 4294901760
        %v6653 = vsub.f32 %v6138, %v6652
        %v6654 = vand.u32 %v6653, 4294901760
        %6655 = vmatpush1.msra.mxu0 %v6654
        %6656 = vmatprep.subr.mxu0 0.0
        %v6657 = vand.u32 %v6139, 4294901760
        %v6658 = vsub.f32 %v6139, %v6657
        %v6659 = vand.u32 %v6658, 4294901760
        %6660 = vmatpush1.msra.mxu0 %v6659
        %6661 = vmatprep.subr.mxu0 0.0
        %v6662 = vand.u32 %v6140, 4294901760
        %v6663 = vsub.f32 %v6140, %v6662
        %v6664 = vand.u32 %v6663, 4294901760
        %6665 = vmatpush1.msra.mxu0 %v6664
        %6666 = vmatprep.subr.mxu0 0.0
        %v6667 = vand.u32 %v6141, 4294901760
        %v6668 = vsub.f32 %v6141, %v6667
        %v6669 = vand.u32 %v6668, 4294901760
        %6670 = vmatpush1.msra.mxu0 %v6669
        %6671 = vmatprep.subr.mxu0 0.0
        %v6672 = vand.u32 %v6142, 4294901760
        %v6673 = vsub.f32 %v6142, %v6672
        %v6674 = vand.u32 %v6673, 4294901760
        %6675 = vmatpush1.msra.mxu0 %v6674
        %6676 = vmatprep.subr.mxu0 0.0
        %v6677 = vand.u32 %v6143, 4294901760
        %v6678 = vsub.f32 %v6143, %v6677
        %v6679 = vand.u32 %v6678, 4294901760
        %6680 = vmatpush1.msra.mxu0 %v6679
        %6681 = vmatprep.subr.mxu0 0.0
        %v6682 = vand.u32 %v6144, 4294901760
        %v6683 = vsub.f32 %v6144, %v6682
        %v6684 = vand.u32 %v6683, 4294901760
        %6685 = vmatpush1.msra.mxu0 %v6684
        %6686 = vmatprep.subr.mxu0 0.0
        %v6687 = vand.u32 %v6145, 4294901760
        %v6688 = vsub.f32 %v6145, %v6687
        %v6689 = vand.u32 %v6688, 4294901760
        %6690 = vmatpush1.msra.mxu0 %v6689
        %6691 = vmatprep.subr.mxu0 0.0
        %6692 = vmatpush1.msra.mxu0 0.0
        %6693 = vmatprep.subr.mxu0 0.0
        %6694 = vmatpush1.msra.mxu0 0.0
        %6695 = vmatprep.subr.mxu0 0.0
        %6696 = vmatpush1.msra.mxu0 0.0
        %6697 = vmatprep.subr.mxu0 0.0
        %6698 = vmatpush1.msra.mxu0 0.0
        %6699 = vmatprep.subr.mxu0 0.0
        %6700 = vmatpush1.msra.mxu0 0.0
        %6701 = vmatprep.subr.mxu0 0.0
        %6702 = vmatpush1.msra.mxu0 0.0
        %6703 = vmatprep.subr.mxu0 0.0
        %6704 = vmatpush1.msra.mxu0 0.0
        %6705 = vmatprep.subr.mxu0 0.0
        %6706 = vmatpush1.msra.mxu0 0.0
        %6707 = vmatprep.subr.mxu0 0.0
        %6708 = vmatpush1.msra.mxu0 0.0
        %6709 = vmatprep.subr.mxu0 0.0
        %6710 = vmatpush1.msra.mxu0 0.0
        %6711 = vmatprep.subr.mxu0 0.0
        %6712 = vmatpush1.msra.mxu0 0.0
        %6713 = vmatprep.subr.mxu0 0.0
        %6714 = vmatpush1.msra.mxu0 0.0
        %6715 = vmatprep.subr.mxu0 0.0
        %6716 = vmatpush1.msra.mxu0 0.0
        %6717 = vmatprep.subr.mxu0 0.0
        %6718 = vmatpush1.msra.mxu0 0.0
        %6719 = vmatprep.subr.mxu0 0.0
        %6720 = vmatpush1.msra.mxu0 0.0
        %6721 = vmatprep.subr.mxu0 0.0
        %6722 = vmatpush1.msra.mxu0 0.0
        %6723 = vmatprep.mubr.f32.mxu0 0.0
        %v6724 = vand.u32 %v6174, 4294901760
        %6725 = vmatmul.mubr.f32.gmra.mrb[0].mxu0 %v6724
        %v6726 = vpop.f32.mrb[0].mxu0
        %v6727 = vadd.f32 %v6608, %v6726
        %v6728 = vpop.f32.mrb[0].mxu0
        %6729 = vdwg.mxu0
        %6730 = vmatprep.subr.mxu0 0.0
        %v6731 = vand.u32 %v6130, 4294901760
        %6732 = vmatpush1.msra.mxu0 %v6731
        %6733 = vmatprep.subr.mxu0 0.0
        %v6734 = vand.u32 %v6131, 4294901760
        %6735 = vmatpush1.msra.mxu0 %v6734
        %6736 = vmatprep.subr.mxu0 0.0
        %v6737 = vand.u32 %v6132, 4294901760
        %6738 = vmatpush1.msra.mxu0 %v6737
        %6739 = vmatprep.subr.mxu0 0.0
        %v6740 = vand.u32 %v6133, 4294901760
        %6741 = vmatpush1.msra.mxu0 %v6740
        %6742 = vmatprep.subr.mxu0 0.0
        %v6743 = vand.u32 %v6134, 4294901760
        %6744 = vmatpush1.msra.mxu0 %v6743
        %6745 = vmatprep.subr.mxu0 0.0
        %v6746 = vand.u32 %v6135, 4294901760
        %6747 = vmatpush1.msra.mxu0 %v6746
        %6748 = vmatprep.subr.mxu0 0.0
        %v6749 = vand.u32 %v6136, 4294901760
        %6750 = vmatpush1.msra.mxu0 %v6749
        %6751 = vmatprep.subr.mxu0 0.0
        %v6752 = vand.u32 %v6137, 4294901760
        %6753 = vmatpush1.msra.mxu0 %v6752
        %6754 = vmatprep.subr.mxu0 0.0
        %v6755 = vand.u32 %v6138, 4294901760
        %6756 = vmatpush1.msra.mxu0 %v6755
        %6757 = vmatprep.subr.mxu0 0.0
        %v6758 = vand.u32 %v6139, 4294901760
        %6759 = vmatpush1.msra.mxu0 %v6758
        %6760 = vmatprep.subr.mxu0 0.0
        %v6761 = vand.u32 %v6140, 4294901760
        %6762 = vmatpush1.msra.mxu0 %v6761
        %6763 = vmatprep.subr.mxu0 0.0
        %v6764 = vand.u32 %v6141, 4294901760
        %6765 = vmatpush1.msra.mxu0 %v6764
        %6766 = vmatprep.subr.mxu0 0.0
        %v6767 = vand.u32 %v6142, 4294901760
        %6768 = vmatpush1.msra.mxu0 %v6767
        %6769 = vmatprep.subr.mxu0 0.0
        %v6770 = vand.u32 %v6143, 4294901760
        %6771 = vmatpush1.msra.mxu0 %v6770
        %6772 = vmatprep.subr.mxu0 0.0
        %v6773 = vand.u32 %v6144, 4294901760
        %6774 = vmatpush1.msra.mxu0 %v6773
        %6775 = vmatprep.subr.mxu0 0.0
        %v6776 = vand.u32 %v6145, 4294901760
        %6777 = vmatpush1.msra.mxu0 %v6776
        %6778 = vmatprep.subr.mxu0 0.0
        %6779 = vmatpush1.msra.mxu0 0.0
        %6780 = vmatprep.subr.mxu0 0.0
        %6781 = vmatpush1.msra.mxu0 0.0
        %6782 = vmatprep.subr.mxu0 0.0
        %6783 = vmatpush1.msra.mxu0 0.0
        %6784 = vmatprep.subr.mxu0 0.0
        %6785 = vmatpush1.msra.mxu0 0.0
        %6786 = vmatprep.subr.mxu0 0.0
        %6787 = vmatpush1.msra.mxu0 0.0
        %6788 = vmatprep.subr.mxu0 0.0
        %6789 = vmatpush1.msra.mxu0 0.0
        %6790 = vmatprep.subr.mxu0 0.0
        %6791 = vmatpush1.msra.mxu0 0.0
        %6792 = vmatprep.subr.mxu0 0.0
        %6793 = vmatpush1.msra.mxu0 0.0
        %6794 = vmatprep.subr.mxu0 0.0
        %6795 = vmatpush1.msra.mxu0 0.0
        %6796 = vmatprep.subr.mxu0 0.0
        %6797 = vmatpush1.msra.mxu0 0.0
        %6798 = vmatprep.subr.mxu0 0.0
        %6799 = vmatpush1.msra.mxu0 0.0
        %6800 = vmatprep.subr.mxu0 0.0
        %6801 = vmatpush1.msra.mxu0 0.0
        %6802 = vmatprep.subr.mxu0 0.0
        %6803 = vmatpush1.msra.mxu0 0.0
        %6804 = vmatprep.subr.mxu0 0.0
        %6805 = vmatpush1.msra.mxu0 0.0
        %6806 = vmatprep.subr.mxu0 0.0
        %6807 = vmatpush1.msra.mxu0 0.0
        %6808 = vmatprep.subr.mxu0 0.0
        %6809 = vmatpush1.msra.mxu0 0.0
        %6810 = vmatprep.mubr.f32.mxu0 0.0
        %v6811 = vand.u32 %v6174, 4294901760
        %6812 = vmatmul.mubr.f32.gmra.mrb[0].mxu0 %v6811
        %v6813 = vpop.f32.mrb[0].mxu0
        %v6814 = vadd.f32 %v6727, %v6813
        %v6815 = vpop.f32.mrb[0].mxu0
        %6816 = vdwg.mxu0
        %vm6817 = vcmp.gt.f32.partialorder %v6814, 0.0
        %v6818 = vmul.f32 %v6814, 0.01
        %v6819 = vsel %vm6817, %v6814, %v6818
        %6820 = vst [vmem:[%s471] sm:$0xff] %v6819
        %s6821 = sand.u32 %s277, 1
        %s6822 = scalar_lea.sflag [#allocation4], %s6821
        %s6823 = sand.u32 %s277, 1
        %s6824 = smul.addr %s6823, 8
        %s6825 = scalar_lea.vmem [#allocation11], %s6824
        // Predicated region
        $region85: #{tpu_custom_call.1} parent=63 // pred_check
          %p6826 = pneg %p287
        $region86: #{tpu_custom_call.1} parent=63 // pred_check_branch
          %6828 = sbr.rel (%p6826) target = $region88
        $region87: #{tpu_custom_call.1} parent=63 // pred_region
          %s6830 = ssub.s32 128, 128
          %6831 = vsyncadd %s6822, %s6830
          %s6832 = smul.addr %s28, 128
          %s6833 = scalar_lea.hbm %s11, %s6832
          %s6835 = sshll.u32 %s6825, 4
          %s6836 = int_to_ptr.vmem [resolvable:$true] %s6835
          %6838 = dma.vmem_to_hbm [thread:$0]  %s6836, 128, %s6833, %s6822
        $region88: #{tpu_custom_call.1} parent=63 // pred_fallthru
          _
      $region64: #{tpu_custom_call.1} parent=5 // pred_fallthru
        _
      %p6839 = scmp.le.s32.totalorder 2, %s23
      // Predicated region
      $region89: #{tpu_custom_call.1} parent=5 // pred_check
        %p6840 = pneg %p6839
      $region90: #{tpu_custom_call.1} parent=5 // pred_check_branch
        %6842 = sbr.rel (%p6840) target = $region92
      $region91: #{tpu_custom_call.1} parent=5 // pred_region
        %s6843 = ssub.s32 %s23, 2
        // Predicated region
        $region93: #{tpu_custom_call.1} parent=91 // pred_check
          %p6844 = pneg %p293
        $region94: #{tpu_custom_call.1} parent=91 // pred_check_branch
          %6846 = sbr.rel (%p6844) target = $region96
        $region95: #{tpu_custom_call.1} parent=91 // pred_region
          %s6847 = sand.u32 %s278, 1
          %s6848 = scalar_lea.sflag [#allocation4], %s6847
          %s6849 = sand.u32 %s278, 1
          %s6850 = smul.addr %s6849, 8
          %s6851 = scalar_lea.vmem [#allocation11], %s6850
          %6852 = dma.done %s6848, 128
        $region96: #{tpu_custom_call.1} parent=91 // pred_fallthru
          _
      $region92: #{tpu_custom_call.1} parent=5 // pred_fallthru
        _
    $region6: #{tpu_custom_call.1} parent=1 // loop_footer
      %s27 = sadd.s32 1, %s23
    $region7: #{tpu_custom_call.1} parent=1 // loop_footer_branch
      %22 = sbr.rel target = $region3
    $region8: #{tpu_custom_call.1} parent=1 // loop_exit
      _
    %6853 = vsyncpa [#allocation3], 1
    %s6854 = scalar_lea.sflag [#allocation3], 1
    %6855 = vsyncpa %s6854, 1
    %6856 = vsyncpa [#allocation6], 1
    %6857 = vsyncpa [#allocation9], 1
    %6858 = vsyncpa [#allocation4], 1
    %s6859 = scalar_lea.sflag [#allocation4], 1
    %6860 = vsyncpa %s6859, 1

</llo_original>
